<compile_context>
chip_gen: v6e
topology: v6e:2x2x1
jax: 0.10.0
libtpu: 0.0.40
codegen_flags: <defaults>
</compile_context>

<pallas_src>
import jax
import jax.numpy as jnp
from jax import lax
from jax.experimental import pallas as pl
from jax.experimental.pallas import tpu as pltpu

EPS = 1e-5
LANE = 128


def _full_spec(shape):
    n = len(shape)
    return pl.BlockSpec(shape, lambda i, _n=n: (0,) * _n)


def _pad2(a, rows, cols):
    return jnp.pad(a, ((0, rows - a.shape[0]), (0, cols - a.shape[1])))


# ------------------------------ fused kernel ------------------------------ #

def _bottleneck_kernel(x_ref, w1_ref, w2_ref, w3_ref,
                       g1_ref, b1_ref, g2_ref, b2_ref, g3_ref, b3_ref,
                       o_ref, y1p_ref):
    """conv1x1+BN+ReLU -> conv3x3+BN+ReLU -> conv1x1+BN -> +identity -> ReLU.

    x_ref   : (N*H*W, C) f32 input pixels, channels zero-padded to C (lane-dense)
    w*_ref  : bf16 weights, zero-padded to (C, C) / (9, C, C)
    g*/b*   : (1, C) f32 BN affine params (zero in padded lanes)
    o_ref   : (N*H*W, C) f32 output (lane-dense stores)
    y1p_ref : (N, H+2, W+2, C) f32 VMEM scratch (spatially zero-padded y1)
    """
    N, Hp, Wp, C = y1p_ref.shape
    H, W = Hp - 2, Wp - 2
    n_pix = N * H * W
    inv_n = 1.0 / n_pix

    def bn(y, g, b):
        # single-pass per-channel batch stats (divide by the TRUE pixel count;
        # padded channels are isolated columns and never pollute real ones).
        mean = jnp.sum(y, axis=0, keepdims=True) * inv_n
        msq = jnp.sum(y * y, axis=0, keepdims=True) * inv_n
        var = jnp.maximum(msq - mean * mean, 0.0)
        return (y - mean) * lax.rsqrt(var + EPS) * g + b

    # ---- conv1 (1x1) + BN1 + ReLU --------------------------------------
    y1 = jnp.dot(x_ref[...].astype(jnp.bfloat16), w1_ref[...],
                 preferred_element_type=jnp.float32)              # (n_pix, C)
    y1 = jnp.maximum(bn(y1, g1_ref[...], b1_ref[...]), 0.0)

    # ---- stash y1 into a spatially zero-padded VMEM scratch -------------
    y1p_ref[...] = jnp.zeros(y1p_ref.shape, y1p_ref.dtype)        # halo zeros
    y1p_ref[:, 1:H + 1, 1:W + 1, :] = y1.reshape(N, H, W, C)

    # ---- conv2 (3x3, stride 1, pad 1) as 9 shifted-tap matmuls ----------
    y2 = jnp.zeros((n_pix, C), jnp.float32)
    for k in range(9):                       # statically unrolled taps
        dy, dx = k // 3, k % 3
        tap = y1p_ref[:, dy:dy + H, dx:dx + W, :].reshape(n_pix, C)
        y2 = y2 + jnp.dot(tap.astype(jnp.bfloat16), w2_ref[k],
                          preferred_element_type=jnp.float32)
    y2 = jnp.maximum(bn(y2, g2_ref[...], b2_ref[...]), 0.0)

    # ---- conv3 (1x1) + BN3 + identity residual + final ReLU -------------
    y3 = jnp.dot(y2.astype(jnp.bfloat16), w3_ref[...],
                 preferred_element_type=jnp.float32)
    y3 = bn(y3, g3_ref[...], b3_ref[...])
    o_ref[...] = jnp.maximum(y3 + x_ref[...], 0.0)


# ------------------------------- wrapper ----------------------------------- #

@jax.jit
def bottleneck_forward(x_nchw, params):
    w1, g1, b1, w2, g2, b2, w3, g3, b3 = params
    N, C, H, W = x_nchw.shape
    P = w1.shape[1]            # planes
    Cout = w3.shape[1]         # expansion * planes (== C => identity residual)
    n_pix = N * H * W

    # common lane-dense channel width (multiple of 128)
    CP = ((max(C, P, Cout) + LANE - 1) // LANE) * LANE

    # --- boundary layout glue: the PyTorch module presents NCHW -----------
    # TODO(synk): if this block is embedded in a larger NHWC network, drop the
    # entry/exit transposes and keep activations channel-last end to end.
    x_nhwc = jnp.transpose(x_nchw, (0, 2, 3, 1)).astype(jnp.float32)
    x2d = jnp.pad(x_nhwc.reshape(n_pix, C), ((0, 0), (0, CP - C)))

    # weights / BN params zero-padded to the lane width; MXU operands in bf16
    w1p = _pad2(w1, CP, CP).astype(jnp.bfloat16)
    w2p = jnp.pad(w2.reshape(9, P, P),
                  ((0, 0), (0, CP - P), (0, CP - P))).astype(jnp.bfloat16)
    w3p = _pad2(w3, CP, CP).astype(jnp.bfloat16)
    g1p, b1p = _pad2(g1, 1, CP), _pad2(b1, 1, CP)
    g2p, b2p = _pad2(g2, 1, CP), _pad2(b2, 1, CP)
    g3p, b3p = _pad2(g3, 1, CP), _pad2(b3, 1, CP)

    # full-slab fused path: everything for this block lives in VMEM at once.
    vmem_est = (2 * n_pix * CP * 4                 # x in + out (f32)
                + 3 * n_pix * CP * 4               # f32 working slabs / spills
                + N * (H + 2) * (W + 2) * CP * 4   # padded y1 scratch
                + 11 * CP * CP * 2)                # bf16 weights
    assert vmem_est < 24 * 1024 * 1024, (
        "working set too large for the fused full-slab path; "
        "needs the tiled two-pass-BN variant (see TODO)")

    out2d = pl.pallas_call(
        _bottleneck_kernel,
        out_shape=jax.ShapeDtypeStruct((n_pix, CP), jnp.float32),
        grid=(1,),
        in_specs=[_full_spec(a.shape) for a in
                  (x2d, w1p, w2p, w3p, g1p, b1p, g2p, b2p, g3p, b3p)],
        out_specs=_full_spec((n_pix, CP)),
        scratch_shapes=[pltpu.VMEM((N, H + 2, W + 2, CP), jnp.float32)],
        compiler_params=pltpu.CompilerParams(
            dimension_semantics=("arbitrary",),
            vmem_limit_bytes=32 * 1024 * 1024),
    )(x2d, w1p, w2p, w3p, g1p, b1p, g2p, b2p, g3p, b3p)

    # drop padded channels, back to NCHW
    return out2d[:, :Cout].reshape(N, H, W, Cout).transpose(0, 3, 1, 2)


# ---------------------------- params & reference ---------------------------- #

def init_params(key, in_planes, planes):
    expansion = 4
    ks = jax.random.split(key, 9)
    w1 = 0.2 * jax.random.normal(ks[0], (in_planes, planes), jnp.float32)
    w2 = 0.2 * jax.random.normal(ks[1], (3, 3, planes, planes), jnp.float32)
    w3 = 0.2 * jax.random.normal(ks[2], (planes, expansion * planes), jnp.float32)
    g1 = 1.0 + 0.1 * jax.random.normal(ks[3], (1, planes), jnp.float32)
    b1 = 0.1 * jax.random.normal(ks[4], (1, planes), jnp.float32)
    g2 = 1.0 + 0.1 * jax.random.normal(ks[5], (1, planes), jnp.float32)
    b2 = 0.1 * jax.random.normal(ks[6], (1, planes), jnp.float32)
    g3 = 1.0 + 0.1 * jax.random.normal(ks[7], (1, expansion * planes), jnp.float32)
    b3 = 0.1 * jax.random.normal(ks[8], (1, expansion * planes), jnp.float32)
    return (w1, g1, b1, w2, g2, b2, w3, g3, b3)


def reference_forward(x_nchw, params):
    """Pure-JAX f32 reference replicating the PyTorch forward (training-mode BN)."""
    w1, g1, b1, w2, g2, b2, w3, g3, b3 = params

    def bn(y, g, b):
        mean = jnp.mean(y, axis=(0, 1, 2), keepdims=True)
        var = jnp.mean((y - mean) ** 2, axis=(0, 1, 2), keepdims=True)
        return ((y - mean) * lax.rsqrt(var + EPS)
                * g.reshape(1, 1, 1, -1) + b.reshape(1, 1, 1, -1))

    x = jnp.transpose(x_nchw, (0, 2, 3, 1))
    y = jnp.einsum('nhwi,io->nhwo', x, w1, precision=lax.Precision.HIGHEST)
    y = jax.nn.relu(bn(y, g1, b1))
    y = lax.conv_general_dilated(y, w2, (1, 1), 'SAME',
                                 dimension_numbers=('NHWC', 'HWIO', 'NHWC'),
                                 precision=lax.Precision.HIGHEST)
    y = jax.nn.relu(bn(y, g2, b2))
    y = jnp.einsum('nhwi,io->nhwo', y, w3, precision=lax.Precision.HIGHEST)
    y = bn(y, g3, b3)
    y = jax.nn.relu(y + x)
    return jnp.transpose(y, (0, 3, 1, 2))


if __name__ == "__main__":
    # in_planes == expansion*planes and stride == 1 -> downsample is None,
    # identity residual applies (matches the PyTorch module defaults).
    in_planes, planes = 16, 4
    N, H, W = 2, 16, 16

    key = jax.random.PRNGKey(0)
    kx, kp = jax.random.split(key)
    x = jax.random.normal(kx, (N, in_planes, H, W), jnp.float32)   # NCHW like PyTorch
    params = init_params(kp, in_planes, planes)

    out = jax.block_until_ready(bottleneck_forward(x, params))
    ref = reference_forward(x, params)

    assert out.shape == (N, 4 * planes, H, W), out.shape
    # Kernel feeds bf16 operands to the MXU (f32 accumulation) while the
    # reference is all-f32 HIGHEST; three BN-normalized layers amplify the
    # bf16 quantization to ~1e-2 absolute, hence the looser tolerance.
    err = float(jnp.max(jnp.abs(out - ref)))
    assert jnp.allclose(out, ref, atol=5e-2, rtol=5e-2), err
    print("KERNEL_OK")
</pallas_src>

<mosaic_0001>
module attributes {stable_mosaic.version = 11 : i64} {
  func.func @_bottleneck_kernel(%arg0: i32, %arg1: memref<512x128xf32, #tpu.memory_space<vmem>>, %arg2: memref<128x128xbf16, #tpu.memory_space<vmem>>, %arg3: memref<9x128x128xbf16, #tpu.memory_space<vmem>>, %arg4: memref<128x128xbf16, #tpu.memory_space<vmem>>, %arg5: memref<1x128xf32, #tpu.memory_space<vmem>>, %arg6: memref<1x128xf32, #tpu.memory_space<vmem>>, %arg7: memref<1x128xf32, #tpu.memory_space<vmem>>, %arg8: memref<1x128xf32, #tpu.memory_space<vmem>>, %arg9: memref<1x128xf32, #tpu.memory_space<vmem>>, %arg10: memref<1x128xf32, #tpu.memory_space<vmem>>, %arg11: memref<512x128xf32, #tpu.memory_space<vmem>>, %arg12: memref<2x18x18x128xf32, #tpu.memory_space<vmem>>) attributes {dimension_semantics = [#tpu.dimension_semantics<arbitrary>], iteration_bounds = array<i64: 1>, scalar_prefetch = 0 : i64, scratch_operands = 1 : i64, tpu.core_type = #tpu.core_type<tc>, window_params = [{pipeline_mode = #tpu.pipeline_mode<synchronous>, transform_indices = @transform_0, window_bounds = array<i64: 512, 128>}, {pipeline_mode = #tpu.pipeline_mode<synchronous>, transform_indices = @transform_1, window_bounds = array<i64: 128, 128>}, {pipeline_mode = #tpu.pipeline_mode<synchronous>, transform_indices = @transform_2, window_bounds = array<i64: 9, 128, 128>}, {pipeline_mode = #tpu.pipeline_mode<synchronous>, transform_indices = @transform_3, window_bounds = array<i64: 128, 128>}, {pipeline_mode = #tpu.pipeline_mode<synchronous>, transform_indices = @transform_4, window_bounds = array<i64: 1, 128>}, {pipeline_mode = #tpu.pipeline_mode<synchronous>, transform_indices = @transform_5, window_bounds = array<i64: 1, 128>}, {pipeline_mode = #tpu.pipeline_mode<synchronous>, transform_indices = @transform_6, window_bounds = array<i64: 1, 128>}, {pipeline_mode = #tpu.pipeline_mode<synchronous>, transform_indices = @transform_7, window_bounds = array<i64: 1, 128>}, {pipeline_mode = #tpu.pipeline_mode<synchronous>, transform_indices = @transform_8, window_bounds = array<i64: 1, 128>}, {pipeline_mode = #tpu.pipeline_mode<synchronous>, transform_indices = @transform_9, window_bounds = array<i64: 1, 128>}, {pipeline_mode = #tpu.pipeline_mode<synchronous>, transform_indices = @transform_10, window_bounds = array<i64: 512, 128>}]} {
    %c0 = arith.constant 0 : index
    %c0_0 = arith.constant 0 : index
    %0 = vector.load %arg1[%c0, %c0_0] : memref<512x128xf32, #tpu.memory_space<vmem>>, vector<512x128xf32>
    %1 = arith.truncf %0 : vector<512x128xf32> to vector<512x128xbf16>
    %c0_1 = arith.constant 0 : index
    %c0_2 = arith.constant 0 : index
    %2 = vector.load %arg2[%c0_1, %c0_2] : memref<128x128xbf16, #tpu.memory_space<vmem>>, vector<128x128xbf16>
    %cst = arith.constant dense<0.000000e+00> : vector<512x128xf32>
    %3 = tpu.matmul %1, %2, %cst {dimension_numbers = #tpu.dot_dimension_numbers<[1], [0], [0], [1], [0, 0, 1, 1], [], []>} : vector<512x128xbf16>, vector<128x128xbf16>, vector<512x128xf32> -> vector<512x128xf32>
    %c0_3 = arith.constant 0 : index
    %c0_4 = arith.constant 0 : index
    %4 = vector.load %arg5[%c0_3, %c0_4] : memref<1x128xf32, #tpu.memory_space<vmem>>, vector<1x128xf32>
    %c0_5 = arith.constant 0 : index
    %c0_6 = arith.constant 0 : index
    %5 = vector.load %arg6[%c0_5, %c0_6] : memref<1x128xf32, #tpu.memory_space<vmem>>, vector<1x128xf32>
    %cst_7 = arith.constant dense<0.000000e+00> : vector<128xf32>
    %6 = vector.multi_reduction <add>, %3, %cst_7 [0] : vector<512x128xf32> to vector<128xf32>
    %7 = vector.shape_cast %6 : vector<128xf32> to vector<1x128xf32>
    %cst_8 = arith.constant 0.001953125 : f32
    %8 = vector.broadcast %cst_8 : f32 to vector<1x128xf32>
    %9 = arith.mulf %7, %8 : vector<1x128xf32>
    %10 = arith.mulf %3, %3 : vector<512x128xf32>
    %cst_9 = arith.constant dense<0.000000e+00> : vector<128xf32>
    %11 = vector.multi_reduction <add>, %10, %cst_9 [0] : vector<512x128xf32> to vector<128xf32>
    %12 = vector.shape_cast %11 : vector<128xf32> to vector<1x128xf32>
    %cst_10 = arith.constant 0.001953125 : f32
    %13 = vector.broadcast %cst_10 : f32 to vector<1x128xf32>
    %14 = arith.mulf %12, %13 : vector<1x128xf32>
    %15 = arith.mulf %9, %9 : vector<1x128xf32>
    %16 = arith.subf %14, %15 : vector<1x128xf32>
    %cst_11 = arith.constant 0.000000e+00 : f32
    %17 = vector.broadcast %cst_11 : f32 to vector<1x128xf32>
    %18 = arith.maximumf %16, %17 : vector<1x128xf32>
    %19 = vector.broadcast %9 : vector<1x128xf32> to vector<512x128xf32>
    %20 = arith.subf %3, %19 : vector<512x128xf32>
    %cst_12 = arith.constant 9.99999974E-6 : f32
    %21 = vector.broadcast %cst_12 : f32 to vector<1x128xf32>
    %22 = arith.addf %18, %21 : vector<1x128xf32>
    %23 = math.rsqrt %22 : vector<1x128xf32>
    %24 = vector.broadcast %23 : vector<1x128xf32> to vector<512x128xf32>
    %25 = arith.mulf %20, %24 : vector<512x128xf32>
    %26 = vector.broadcast %4 : vector<1x128xf32> to vector<512x128xf32>
    %27 = arith.mulf %25, %26 : vector<512x128xf32>
    %28 = vector.broadcast %5 : vector<1x128xf32> to vector<512x128xf32>
    %29 = arith.addf %27, %28 : vector<512x128xf32>
    %cst_13 = arith.constant 0.000000e+00 : f32
    %30 = vector.broadcast %cst_13 : f32 to vector<512x128xf32>
    %31 = arith.maximumf %29, %30 : vector<512x128xf32>
    %cst_14 = arith.constant 0.000000e+00 : f32
    %32 = vector.broadcast %cst_14 : f32 to vector<2x18x18x128xf32>
    %c0_15 = arith.constant 0 : index
    %c0_16 = arith.constant 0 : index
    %c0_17 = arith.constant 0 : index
    %c0_18 = arith.constant 0 : index
    %33 = vector.load %arg12[%c0_15, %c0_16, %c0_17, %c0_18] : memref<2x18x18x128xf32, #tpu.memory_space<vmem>>, vector<2x18x18x128xf32>
    tpu.vector_store %arg12[%c0_15, %c0_16, %c0_17, %c0_18], %32 {strides = array<i32>} : memref<2x18x18x128xf32, #tpu.memory_space<vmem>>, vector<2x18x18x128xf32>,
    %34 = vector.shape_cast %31 : vector<512x128xf32> to vector<2x16x16x128xf32>
    %c0_19 = arith.constant 0 : index
    %c1 = arith.constant 1 : index
    %c1_20 = arith.constant 1 : index
    %c0_21 = arith.constant 0 : index
    %35 = vector.load %arg12[%c0_19, %c1, %c1_20, %c0_21] : memref<2x18x18x128xf32, #tpu.memory_space<vmem>>, vector<2x16x16x128xf32>
    tpu.vector_store %arg12[%c0_19, %c1, %c1_20, %c0_21], %34 {strides = array<i32>} : memref<2x18x18x128xf32, #tpu.memory_space<vmem>>, vector<2x16x16x128xf32>,
    %cst_22 = arith.constant 0.000000e+00 : f32
    %36 = vector.broadcast %cst_22 : f32 to vector<512x128xf32>
    %c0_23 = arith.constant 0 : index
    %c0_24 = arith.constant 0 : index
    %c0_25 = arith.constant 0 : index
    %c0_26 = arith.constant 0 : index
    %37 = vector.load %arg12[%c0_23, %c0_24, %c0_25, %c0_26] : memref<2x18x18x128xf32, #tpu.memory_space<vmem>>, vector<2x16x16x128xf32>
    %38 = vector.shape_cast %37 : vector<2x16x16x128xf32> to vector<512x128xf32>
    %39 = arith.truncf %38 : vector<512x128xf32> to vector<512x128xbf16>
    %c0_27 = arith.constant 0 : index
    %c0_28 = arith.constant 0 : index
    %c0_29 = arith.constant 0 : index
    %40 = vector.load %arg3[%c0_27, %c0_28, %c0_29] : memref<9x128x128xbf16, #tpu.memory_space<vmem>>, vector<1x128x128xbf16>
    %41 = vector.shape_cast %40 : vector<1x128x128xbf16> to vector<128x128xbf16>
    %cst_30 = arith.constant dense<0.000000e+00> : vector<512x128xf32>
    %42 = tpu.matmul %39, %41, %cst_30 {dimension_numbers = #tpu.dot_dimension_numbers<[1], [0], [0], [1], [0, 0, 1, 1], [], []>} : vector<512x128xbf16>, vector<128x128xbf16>, vector<512x128xf32> -> vector<512x128xf32>
    %43 = arith.addf %36, %42 : vector<512x128xf32>
    %c0_31 = arith.constant 0 : index
    %c0_32 = arith.constant 0 : index
    %c1_33 = arith.constant 1 : index
    %c0_34 = arith.constant 0 : index
    %44 = vector.load %arg12[%c0_31, %c0_32, %c1_33, %c0_34] : memref<2x18x18x128xf32, #tpu.memory_space<vmem>>, vector<2x16x16x128xf32>
    %45 = vector.shape_cast %44 : vector<2x16x16x128xf32> to vector<512x128xf32>
    %46 = arith.truncf %45 : vector<512x128xf32> to vector<512x128xbf16>
    %c1_35 = arith.constant 1 : index
    %c0_36 = arith.constant 0 : index
    %c0_37 = arith.constant 0 : index
    %47 = vector.load %arg3[%c1_35, %c0_36, %c0_37] : memref<9x128x128xbf16, #tpu.memory_space<vmem>>, vector<1x128x128xbf16>
    %48 = vector.shape_cast %47 : vector<1x128x128xbf16> to vector<128x128xbf16>
    %cst_38 = arith.constant dense<0.000000e+00> : vector<512x128xf32>
    %49 = tpu.matmul %46, %48, %cst_38 {dimension_numbers = #tpu.dot_dimension_numbers<[1], [0], [0], [1], [0, 0, 1, 1], [], []>} : vector<512x128xbf16>, vector<128x128xbf16>, vector<512x128xf32> -> vector<512x128xf32>
    %50 = arith.addf %43, %49 : vector<512x128xf32>
    %c0_39 = arith.constant 0 : index
    %c0_40 = arith.constant 0 : index
    %c2 = arith.constant 2 : index
    %c0_41 = arith.constant 0 : index
    %51 = vector.load %arg12[%c0_39, %c0_40, %c2, %c0_41] : memref<2x18x18x128xf32, #tpu.memory_space<vmem>>, vector<2x16x16x128xf32>
    %52 = vector.shape_cast %51 : vector<2x16x16x128xf32> to vector<512x128xf32>
    %53 = arith.truncf %52 : vector<512x128xf32> to vector<512x128xbf16>
    %c2_42 = arith.constant 2 : index
    %c0_43 = arith.constant 0 : index
    %c0_44 = arith.constant 0 : index
    %54 = vector.load %arg3[%c2_42, %c0_43, %c0_44] : memref<9x128x128xbf16, #tpu.memory_space<vmem>>, vector<1x128x128xbf16>
    %55 = vector.shape_cast %54 : vector<1x128x128xbf16> to vector<128x128xbf16>
    %cst_45 = arith.constant dense<0.000000e+00> : vector<512x128xf32>
    %56 = tpu.matmul %53, %55, %cst_45 {dimension_numbers = #tpu.dot_dimension_numbers<[1], [0], [0], [1], [0, 0, 1, 1], [], []>} : vector<512x128xbf16>, vector<128x128xbf16>, vector<512x128xf32> -> vector<512x128xf32>
    %57 = arith.addf %50, %56 : vector<512x128xf32>
    %c0_46 = arith.constant 0 : index
    %c1_47 = arith.constant 1 : index
    %c0_48 = arith.constant 0 : index
    %c0_49 = arith.constant 0 : index
    %58 = vector.load %arg12[%c0_46, %c1_47, %c0_48, %c0_49] : memref<2x18x18x128xf32, #tpu.memory_space<vmem>>, vector<2x16x16x128xf32>
    %59 = vector.shape_cast %58 : vector<2x16x16x128xf32> to vector<512x128xf32>
    %60 = arith.truncf %59 : vector<512x128xf32> to vector<512x128xbf16>
    %c3 = arith.constant 3 : index
    %c0_50 = arith.constant 0 : index
    %c0_51 = arith.constant 0 : index
    %61 = vector.load %arg3[%c3, %c0_50, %c0_51] : memref<9x128x128xbf16, #tpu.memory_space<vmem>>, vector<1x128x128xbf16>
    %62 = vector.shape_cast %61 : vector<1x128x128xbf16> to vector<128x128xbf16>
    %cst_52 = arith.constant dense<0.000000e+00> : vector<512x128xf32>
    %63 = tpu.matmul %60, %62, %cst_52 {dimension_numbers = #tpu.dot_dimension_numbers<[1], [0], [0], [1], [0, 0, 1, 1], [], []>} : vector<512x128xbf16>, vector<128x128xbf16>, vector<512x128xf32> -> vector<512x128xf32>
    %64 = arith.addf %57, %63 : vector<512x128xf32>
    %c0_53 = arith.constant 0 : index
    %c1_54 = arith.constant 1 : index
    %c1_55 = arith.constant 1 : index
    %c0_56 = arith.constant 0 : index
    %65 = vector.load %arg12[%c0_53, %c1_54, %c1_55, %c0_56] : memref<2x18x18x128xf32, #tpu.memory_space<vmem>>, vector<2x16x16x128xf32>
    %66 = vector.shape_cast %65 : vector<2x16x16x128xf32> to vector<512x128xf32>
    %67 = arith.truncf %66 : vector<512x128xf32> to vector<512x128xbf16>
    %c4 = arith.constant 4 : index
    %c0_57 = arith.constant 0 : index
    %c0_58 = arith.constant 0 : index
    %68 = vector.load %arg3[%c4, %c0_57, %c0_58] : memref<9x128x128xbf16, #tpu.memory_space<vmem>>, vector<1x128x128xbf16>
    %69 = vector.shape_cast %68 : vector<1x128x128xbf16> to vector<128x128xbf16>
    %cst_59 = arith.constant dense<0.000000e+00> : vector<512x128xf32>
    %70 = tpu.matmul %67, %69, %cst_59 {dimension_numbers = #tpu.dot_dimension_numbers<[1], [0], [0], [1], [0, 0, 1, 1], [], []>} : vector<512x128xbf16>, vector<128x128xbf16>, vector<512x128xf32> -> vector<512x128xf32>
    %71 = arith.addf %64, %70 : vector<512x128xf32>
    %c0_60 = arith.constant 0 : index
    %c1_61 = arith.constant 1 : index
    %c2_62 = arith.constant 2 : index
    %c0_63 = arith.constant 0 : index
    %72 = vector.load %arg12[%c0_60, %c1_61, %c2_62, %c0_63] : memref<2x18x18x128xf32, #tpu.memory_space<vmem>>, vector<2x16x16x128xf32>
    %73 = vector.shape_cast %72 : vector<2x16x16x128xf32> to vector<512x128xf32>
    %74 = arith.truncf %73 : vector<512x128xf32> to vector<512x128xbf16>
    %c5 = arith.constant 5 : index
    %c0_64 = arith.constant 0 : index
    %c0_65 = arith.constant 0 : index
    %75 = vector.load %arg3[%c5, %c0_64, %c0_65] : memref<9x128x128xbf16, #tpu.memory_space<vmem>>, vector<1x128x128xbf16>
    %76 = vector.shape_cast %75 : vector<1x128x128xbf16> to vector<128x128xbf16>
    %cst_66 = arith.constant dense<0.000000e+00> : vector<512x128xf32>
    %77 = tpu.matmul %74, %76, %cst_66 {dimension_numbers = #tpu.dot_dimension_numbers<[1], [0], [0], [1], [0, 0, 1, 1], [], []>} : vector<512x128xbf16>, vector<128x128xbf16>, vector<512x128xf32> -> vector<512x128xf32>
    %78 = arith.addf %71, %77 : vector<512x128xf32>
    %c0_67 = arith.constant 0 : index
    %c2_68 = arith.constant 2 : index
    %c0_69 = arith.constant 0 : index
    %c0_70 = arith.constant 0 : index
    %79 = vector.load %arg12[%c0_67, %c2_68, %c0_69, %c0_70] : memref<2x18x18x128xf32, #tpu.memory_space<vmem>>, vector<2x16x16x128xf32>
    %80 = vector.shape_cast %79 : vector<2x16x16x128xf32> to vector<512x128xf32>
    %81 = arith.truncf %80 : vector<512x128xf32> to vector<512x128xbf16>
    %c6 = arith.constant 6 : index
    %c0_71 = arith.constant 0 : index
    %c0_72 = arith.constant 0 : index
    %82 = vector.load %arg3[%c6, %c0_71, %c0_72] : memref<9x128x128xbf16, #tpu.memory_space<vmem>>, vector<1x128x128xbf16>
    %83 = vector.shape_cast %82 : vector<1x128x128xbf16> to vector<128x128xbf16>
    %cst_73 = arith.constant dense<0.000000e+00> : vector<512x128xf32>
    %84 = tpu.matmul %81, %83, %cst_73 {dimension_numbers = #tpu.dot_dimension_numbers<[1], [0], [0], [1], [0, 0, 1, 1], [], []>} : vector<512x128xbf16>, vector<128x128xbf16>, vector<512x128xf32> -> vector<512x128xf32>
    %85 = arith.addf %78, %84 : vector<512x128xf32>
    %c0_74 = arith.constant 0 : index
    %c2_75 = arith.constant 2 : index
    %c1_76 = arith.constant 1 : index
    %c0_77 = arith.constant 0 : index
    %86 = vector.load %arg12[%c0_74, %c2_75, %c1_76, %c0_77] : memref<2x18x18x128xf32, #tpu.memory_space<vmem>>, vector<2x16x16x128xf32>
    %87 = vector.shape_cast %86 : vector<2x16x16x128xf32> to vector<512x128xf32>
    %88 = arith.truncf %87 : vector<512x128xf32> to vector<512x128xbf16>
    %c7 = arith.constant 7 : index
    %c0_78 = arith.constant 0 : index
    %c0_79 = arith.constant 0 : index
    %89 = vector.load %arg3[%c7, %c0_78, %c0_79] : memref<9x128x128xbf16, #tpu.memory_space<vmem>>, vector<1x128x128xbf16>
    %90 = vector.shape_cast %89 : vector<1x128x128xbf16> to vector<128x128xbf16>
    %cst_80 = arith.constant dense<0.000000e+00> : vector<512x128xf32>
    %91 = tpu.matmul %88, %90, %cst_80 {dimension_numbers = #tpu.dot_dimension_numbers<[1], [0], [0], [1], [0, 0, 1, 1], [], []>} : vector<512x128xbf16>, vector<128x128xbf16>, vector<512x128xf32> -> vector<512x128xf32>
    %92 = arith.addf %85, %91 : vector<512x128xf32>
    %c0_81 = arith.constant 0 : index
    %c2_82 = arith.constant 2 : index
    %c2_83 = arith.constant 2 : index
    %c0_84 = arith.constant 0 : index
    %93 = vector.load %arg12[%c0_81, %c2_82, %c2_83, %c0_84] : memref<2x18x18x128xf32, #tpu.memory_space<vmem>>, vector<2x16x16x128xf32>
    %94 = vector.shape_cast %93 : vector<2x16x16x128xf32> to vector<512x128xf32>
    %95 = arith.truncf %94 : vector<512x128xf32> to vector<512x128xbf16>
    %c8 = arith.constant 8 : index
    %c0_85 = arith.constant 0 : index
    %c0_86 = arith.constant 0 : index
    %96 = vector.load %arg3[%c8, %c0_85, %c0_86] : memref<9x128x128xbf16, #tpu.memory_space<vmem>>, vector<1x128x128xbf16>
    %97 = vector.shape_cast %96 : vector<1x128x128xbf16> to vector<128x128xbf16>
    %cst_87 = arith.constant dense<0.000000e+00> : vector<512x128xf32>
    %98 = tpu.matmul %95, %97, %cst_87 {dimension_numbers = #tpu.dot_dimension_numbers<[1], [0], [0], [1], [0, 0, 1, 1], [], []>} : vector<512x128xbf16>, vector<128x128xbf16>, vector<512x128xf32> -> vector<512x128xf32>
    %99 = arith.addf %92, %98 : vector<512x128xf32>
    %c0_88 = arith.constant 0 : index
    %c0_89 = arith.constant 0 : index
    %100 = vector.load %arg7[%c0_88, %c0_89] : memref<1x128xf32, #tpu.memory_space<vmem>>, vector<1x128xf32>
    %c0_90 = arith.constant 0 : index
    %c0_91 = arith.constant 0 : index
    %101 = vector.load %arg8[%c0_90, %c0_91] : memref<1x128xf32, #tpu.memory_space<vmem>>, vector<1x128xf32>
    %cst_92 = arith.constant dense<0.000000e+00> : vector<128xf32>
    %102 = vector.multi_reduction <add>, %99, %cst_92 [0] : vector<512x128xf32> to vector<128xf32>
    %103 = vector.shape_cast %102 : vector<128xf32> to vector<1x128xf32>
    %cst_93 = arith.constant 0.001953125 : f32
    %104 = vector.broadcast %cst_93 : f32 to vector<1x128xf32>
    %105 = arith.mulf %103, %104 : vector<1x128xf32>
    %106 = arith.mulf %99, %99 : vector<512x128xf32>
    %cst_94 = arith.constant dense<0.000000e+00> : vector<128xf32>
    %107 = vector.multi_reduction <add>, %106, %cst_94 [0] : vector<512x128xf32> to vector<128xf32>
    %108 = vector.shape_cast %107 : vector<128xf32> to vector<1x128xf32>
    %cst_95 = arith.constant 0.001953125 : f32
    %109 = vector.broadcast %cst_95 : f32 to vector<1x128xf32>
    %110 = arith.mulf %108, %109 : vector<1x128xf32>
    %111 = arith.mulf %105, %105 : vector<1x128xf32>
    %112 = arith.subf %110, %111 : vector<1x128xf32>
    %cst_96 = arith.constant 0.000000e+00 : f32
    %113 = vector.broadcast %cst_96 : f32 to vector<1x128xf32>
    %114 = arith.maximumf %112, %113 : vector<1x128xf32>
    %115 = vector.broadcast %105 : vector<1x128xf32> to vector<512x128xf32>
    %116 = arith.subf %99, %115 : vector<512x128xf32>
    %cst_97 = arith.constant 9.99999974E-6 : f32
    %117 = vector.broadcast %cst_97 : f32 to vector<1x128xf32>
    %118 = arith.addf %114, %117 : vector<1x128xf32>
    %119 = math.rsqrt %118 : vector<1x128xf32>
    %120 = vector.broadcast %119 : vector<1x128xf32> to vector<512x128xf32>
    %121 = arith.mulf %116, %120 : vector<512x128xf32>
    %122 = vector.broadcast %100 : vector<1x128xf32> to vector<512x128xf32>
    %123 = arith.mulf %121, %122 : vector<512x128xf32>
    %124 = vector.broadcast %101 : vector<1x128xf32> to vector<512x128xf32>
    %125 = arith.addf %123, %124 : vector<512x128xf32>
    %cst_98 = arith.constant 0.000000e+00 : f32
    %126 = vector.broadcast %cst_98 : f32 to vector<512x128xf32>
    %127 = arith.maximumf %125, %126 : vector<512x128xf32>
    %128 = arith.truncf %127 : vector<512x128xf32> to vector<512x128xbf16>
    %c0_99 = arith.constant 0 : index
    %c0_100 = arith.constant 0 : index
    %129 = vector.load %arg4[%c0_99, %c0_100] : memref<128x128xbf16, #tpu.memory_space<vmem>>, vector<128x128xbf16>
    %cst_101 = arith.constant dense<0.000000e+00> : vector<512x128xf32>
    %130 = tpu.matmul %128, %129, %cst_101 {dimension_numbers = #tpu.dot_dimension_numbers<[1], [0], [0], [1], [0, 0, 1, 1], [], []>} : vector<512x128xbf16>, vector<128x128xbf16>, vector<512x128xf32> -> vector<512x128xf32>
    %c0_102 = arith.constant 0 : index
    %c0_103 = arith.constant 0 : index
    %131 = vector.load %arg9[%c0_102, %c0_103] : memref<1x128xf32, #tpu.memory_space<vmem>>, vector<1x128xf32>
    %c0_104 = arith.constant 0 : index
    %c0_105 = arith.constant 0 : index
    %132 = vector.load %arg10[%c0_104, %c0_105] : memref<1x128xf32, #tpu.memory_space<vmem>>, vector<1x128xf32>
    %cst_106 = arith.constant dense<0.000000e+00> : vector<128xf32>
    %133 = vector.multi_reduction <add>, %130, %cst_106 [0] : vector<512x128xf32> to vector<128xf32>
    %134 = vector.shape_cast %133 : vector<128xf32> to vector<1x128xf32>
    %cst_107 = arith.constant 0.001953125 : f32
    %135 = vector.broadcast %cst_107 : f32 to vector<1x128xf32>
    %136 = arith.mulf %134, %135 : vector<1x128xf32>
    %137 = arith.mulf %130, %130 : vector<512x128xf32>
    %cst_108 = arith.constant dense<0.000000e+00> : vector<128xf32>
    %138 = vector.multi_reduction <add>, %137, %cst_108 [0] : vector<512x128xf32> to vector<128xf32>
    %139 = vector.shape_cast %138 : vector<128xf32> to vector<1x128xf32>
    %cst_109 = arith.constant 0.001953125 : f32
    %140 = vector.broadcast %cst_109 : f32 to vector<1x128xf32>
    %141 = arith.mulf %139, %140 : vector<1x128xf32>
    %142 = arith.mulf %136, %136 : vector<1x128xf32>
    %143 = arith.subf %141, %142 : vector<1x128xf32>
    %cst_110 = arith.constant 0.000000e+00 : f32
    %144 = vector.broadcast %cst_110 : f32 to vector<1x128xf32>
    %145 = arith.maximumf %143, %144 : vector<1x128xf32>
    %146 = vector.broadcast %136 : vector<1x128xf32> to vector<512x128xf32>
    %147 = arith.subf %130, %146 : vector<512x128xf32>
    %cst_111 = arith.constant 9.99999974E-6 : f32
    %148 = vector.broadcast %cst_111 : f32 to vector<1x128xf32>
    %149 = arith.addf %145, %148 : vector<1x128xf32>
    %150 = math.rsqrt %149 : vector<1x128xf32>
    %151 = vector.broadcast %150 : vector<1x128xf32> to vector<512x128xf32>
    %152 = arith.mulf %147, %151 : vector<512x128xf32>
    %153 = vector.broadcast %131 : vector<1x128xf32> to vector<512x128xf32>
    %154 = arith.mulf %152, %153 : vector<512x128xf32>
    %155 = vector.broadcast %132 : vector<1x128xf32> to vector<512x128xf32>
    %156 = arith.addf %154, %155 : vector<512x128xf32>
    %c0_112 = arith.constant 0 : index
    %c0_113 = arith.constant 0 : index
    %157 = vector.load %arg1[%c0_112, %c0_113] : memref<512x128xf32, #tpu.memory_space<vmem>>, vector<512x128xf32>
    %158 = arith.addf %156, %157 : vector<512x128xf32>
    %cst_114 = arith.constant 0.000000e+00 : f32
    %159 = vector.broadcast %cst_114 : f32 to vector<512x128xf32>
    %160 = arith.maximumf %158, %159 : vector<512x128xf32>
    %c0_115 = arith.constant 0 : index
    %c0_116 = arith.constant 0 : index
    %161 = vector.load %arg11[%c0_115, %c0_116] : memref<512x128xf32, #tpu.memory_space<vmem>>, vector<512x128xf32>
    tpu.vector_store %arg11[%c0_115, %c0_116], %160 {strides = array<i32>} : memref<512x128xf32, #tpu.memory_space<vmem>>, vector<512x128xf32>,
    return
  }
  func.func @transform_0(%arg0: i32) -> (i32, i32) {
    %c0_i32 = arith.constant 0 : i32
    %c0_i32_0 = arith.constant 0 : i32
    %c0_i32_1 = arith.constant 0 : i32
    return %c0_i32, %c0_i32_0 : i32, i32
  }
  func.func @transform_1(%arg0: i32) -> (i32, i32) {
    %c0_i32 = arith.constant 0 : i32
    %c0_i32_0 = arith.constant 0 : i32
    %c0_i32_1 = arith.constant 0 : i32
    return %c0_i32, %c0_i32_0 : i32, i32
  }
  func.func @transform_2(%arg0: i32) -> (i32, i32, i32) {
    %c0_i32 = arith.constant 0 : i32
    %c0_i32_0 = arith.constant 0 : i32
    %c0_i32_1 = arith.constant 0 : i32
    %c0_i32_2 = arith.constant 0 : i32
    return %c0_i32, %c0_i32_0, %c0_i32_1 : i32, i32, i32
  }
  func.func @transform_3(%arg0: i32) -> (i32, i32) {
    %c0_i32 = arith.constant 0 : i32
    %c0_i32_0 = arith.constant 0 : i32
    %c0_i32_1 = arith.constant 0 : i32
    return %c0_i32, %c0_i32_0 : i32, i32
  }
  func.func @transform_4(%arg0: i32) -> (i32, i32) {
    %c0_i32 = arith.constant 0 : i32
    %c0_i32_0 = arith.constant 0 : i32
    %c0_i32_1 = arith.constant 0 : i32
    return %c0_i32, %c0_i32_0 : i32, i32
  }
  func.func @transform_5(%arg0: i32) -> (i32, i32) {
    %c0_i32 = arith.constant 0 : i32
    %c0_i32_0 = arith.constant 0 : i32
    %c0_i32_1 = arith.constant 0 : i32
    return %c0_i32, %c0_i32_0 : i32, i32
  }
  func.func @transform_6(%arg0: i32) -> (i32, i32) {
    %c0_i32 = arith.constant 0 : i32
    %c0_i32_0 = arith.constant 0 : i32
    %c0_i32_1 = arith.constant 0 : i32
    return %c0_i32, %c0_i32_0 : i32, i32
  }
  func.func @transform_7(%arg0: i32) -> (i32, i32) {
    %c0_i32 = arith.constant 0 : i32
    %c0_i32_0 = arith.constant 0 : i32
    %c0_i32_1 = arith.constant 0 : i32
    return %c0_i32, %c0_i32_0 : i32, i32
  }
  func.func @transform_8(%arg0: i32) -> (i32, i32) {
    %c0_i32 = arith.constant 0 : i32
    %c0_i32_0 = arith.constant 0 : i32
    %c0_i32_1 = arith.constant 0 : i32
    return %c0_i32, %c0_i32_0 : i32, i32
  }
  func.func @transform_9(%arg0: i32) -> (i32, i32) {
    %c0_i32 = arith.constant 0 : i32
    %c0_i32_0 = arith.constant 0 : i32
    %c0_i32_1 = arith.constant 0 : i32
    return %c0_i32, %c0_i32_0 : i32, i32
  }
  func.func @transform_10(%arg0: i32) -> (i32, i32) {
    %c0_i32 = arith.constant 0 : i32
    %c0_i32_0 = arith.constant 0 : i32
    %c0_i32_1 = arith.constant 0 : i32
    return %c0_i32, %c0_i32_0 : i32, i32
  }
}

</mosaic_0001>

<llo_original>
// kernel: bottleneck_forward.1
$region0: #{bottleneck_forward.1}
  #allocation0 [shape = 'u32[]', space=smem, size = 0x4, offset = 0x4, fixed_abs, tag = 'smem constant byte address 0x4 - core index']
  #allocation1 [shape = 'u32[144,128]{1,0:T(1,128)}', space=vmem, size = 0x12000, scoped, tag = 'internal scratch']
  #allocation2 [shape = 'f32[2,18,18,128]{3,2,1,0:T(8,128)}', space=vmem, size = 0x6c000, scoped, tag = 'scratch operand']
  %s0 = inlined_call_operand.vmem [shape: f32[512,128], index: 0, kind: input, shape index: {}]
  %s1 = inlined_call_operand.vmem [shape: bf16[128,128], index: 1, kind: input, shape index: {}]
  %s2 = inlined_call_operand.vmem [shape: bf16[9,128,128], index: 2, kind: input, shape index: {}]
  %s3 = inlined_call_operand.vmem [shape: bf16[128,128], index: 3, kind: input, shape index: {}]
  %s4 = inlined_call_operand.vmem [shape: f32[1,128], index: 4, kind: input, shape index: {}]
  %s5 = inlined_call_operand.vmem [shape: f32[1,128], index: 5, kind: input, shape index: {}]
  %s6 = inlined_call_operand.vmem [shape: f32[1,128], index: 6, kind: input, shape index: {}]
  %s7 = inlined_call_operand.vmem [shape: f32[1,128], index: 7, kind: input, shape index: {}]
  %s8 = inlined_call_operand.vmem [shape: f32[1,128], index: 8, kind: input, shape index: {}]
  %s9 = inlined_call_operand.vmem [shape: f32[1,128], index: 9, kind: input, shape index: {}]
  %s10 = inlined_call_operand.vmem [shape: f32[512,128], index: 10, kind: output, shape index: {}]
  %s11 = sld [smem:[#allocation0]]
  $region50: #{bottleneck_forward.1} parent=0
    _
  %s13 = ssub.s32 1, %s11
  %s14 = scalar_select 0, %s13, %s11
  // Predicated region
  $region2: #{bottleneck_forward.1} parent=0 // pred_check
    _
  $region3: #{bottleneck_forward.1} parent=0 // pred_check_branch
    %16 = sbr.rel (0) target = $region5
  $region4: #{bottleneck_forward.1} parent=0 // pred_region
    _
  $region5: #{bottleneck_forward.1} parent=0 // pred_fallthru
    _
  // Predicated region
  $region6: #{bottleneck_forward.1} parent=0 // pred_check
    _
  $region7: #{bottleneck_forward.1} parent=0 // pred_check_branch
    %18 = sbr.rel (0) target = $region9
  $region8: #{bottleneck_forward.1} parent=0 // pred_region
    _
  $region9: #{bottleneck_forward.1} parent=0 // pred_fallthru
    _
  // Predicated region
  $region10: #{bottleneck_forward.1} parent=0 // pred_check
    _
  $region11: #{bottleneck_forward.1} parent=0 // pred_check_branch
    %20 = sbr.rel (0) target = $region13
  $region12: #{bottleneck_forward.1} parent=0 // pred_region
    _
  $region13: #{bottleneck_forward.1} parent=0 // pred_fallthru
    _
  // Predicated region
  $region14: #{bottleneck_forward.1} parent=0 // pred_check
    _
  $region15: #{bottleneck_forward.1} parent=0 // pred_check_branch
    %22 = sbr.rel (0) target = $region17
  $region16: #{bottleneck_forward.1} parent=0 // pred_region
    _
  $region17: #{bottleneck_forward.1} parent=0 // pred_fallthru
    _
  // Predicated region
  $region18: #{bottleneck_forward.1} parent=0 // pred_check
    _
  $region19: #{bottleneck_forward.1} parent=0 // pred_check_branch
    %24 = sbr.rel (0) target = $region21
  $region20: #{bottleneck_forward.1} parent=0 // pred_region
    _
  $region21: #{bottleneck_forward.1} parent=0 // pred_fallthru
    _
  // Predicated region
  $region22: #{bottleneck_forward.1} parent=0 // pred_check
    _
  $region23: #{bottleneck_forward.1} parent=0 // pred_check_branch
    %26 = sbr.rel (0) target = $region25
  $region24: #{bottleneck_forward.1} parent=0 // pred_region
    _
  $region25: #{bottleneck_forward.1} parent=0 // pred_fallthru
    _
  // Predicated region
  $region26: #{bottleneck_forward.1} parent=0 // pred_check
    _
  $region27: #{bottleneck_forward.1} parent=0 // pred_check_branch
    %28 = sbr.rel (0) target = $region29
  $region28: #{bottleneck_forward.1} parent=0 // pred_region
    _
  $region29: #{bottleneck_forward.1} parent=0 // pred_fallthru
    _
  // Predicated region
  $region30: #{bottleneck_forward.1} parent=0 // pred_check
    _
  $region31: #{bottleneck_forward.1} parent=0 // pred_check_branch
    %30 = sbr.rel (0) target = $region33
  $region32: #{bottleneck_forward.1} parent=0 // pred_region
    _
  $region33: #{bottleneck_forward.1} parent=0 // pred_fallthru
    _
  // Predicated region
  $region34: #{bottleneck_forward.1} parent=0 // pred_check
    _
  $region35: #{bottleneck_forward.1} parent=0 // pred_check_branch
    %32 = sbr.rel (0) target = $region37
  $region36: #{bottleneck_forward.1} parent=0 // pred_region
    _
  $region37: #{bottleneck_forward.1} parent=0 // pred_fallthru
    _
  // Predicated region
  $region38: #{bottleneck_forward.1} parent=0 // pred_check
    _
  $region39: #{bottleneck_forward.1} parent=0 // pred_check_branch
    %34 = sbr.rel (0) target = $region41
  $region40: #{bottleneck_forward.1} parent=0 // pred_region
    _
  $region41: #{bottleneck_forward.1} parent=0 // pred_fallthru
    _
  %v36 = vld [vmem:[%s0] sm:$0xff]
  %v37 = vld [vmem:[%s0 + $0x8] sm:$0xff]
  %v38 = vld [vmem:[%s0 + $0x10] sm:$0xff]
  %v39 = vld [vmem:[%s0 + $0x18] sm:$0xff]
  %v40 = vld [vmem:[%s0 + $0x20] sm:$0xff]
  %v41 = vld [vmem:[%s0 + $0x28] sm:$0xff]
  %v42 = vld [vmem:[%s0 + $0x30] sm:$0xff]
  %v43 = vld [vmem:[%s0 + $0x38] sm:$0xff]
  %v44 = vld [vmem:[%s0 + $0x40] sm:$0xff]
  %v45 = vld [vmem:[%s0 + $0x48] sm:$0xff]
  %v46 = vld [vmem:[%s0 + $0x50] sm:$0xff]
  %v47 = vld [vmem:[%s0 + $0x58] sm:$0xff]
  %v48 = vld [vmem:[%s0 + $0x60] sm:$0xff]
  %v49 = vld [vmem:[%s0 + $0x68] sm:$0xff]
  %v50 = vld [vmem:[%s0 + $0x70] sm:$0xff]
  %v51 = vld [vmem:[%s0 + $0x78] sm:$0xff]
  %v52 = vld [vmem:[%s0 + $0x80] sm:$0xff]
  %v53 = vld [vmem:[%s0 + $0x88] sm:$0xff]
  %v54 = vld [vmem:[%s0 + $0x90] sm:$0xff]
  %v55 = vld [vmem:[%s0 + $0x98] sm:$0xff]
  %v56 = vld [vmem:[%s0 + $0xa0] sm:$0xff]
  %v57 = vld [vmem:[%s0 + $0xa8] sm:$0xff]
  %v58 = vld [vmem:[%s0 + $0xb0] sm:$0xff]
  %v59 = vld [vmem:[%s0 + $0xb8] sm:$0xff]
  %v60 = vld [vmem:[%s0 + $0xc0] sm:$0xff]
  %v61 = vld [vmem:[%s0 + $0xc8] sm:$0xff]
  %v62 = vld [vmem:[%s0 + $0xd0] sm:$0xff]
  %v63 = vld [vmem:[%s0 + $0xd8] sm:$0xff]
  %v64 = vld [vmem:[%s0 + $0xe0] sm:$0xff]
  %v65 = vld [vmem:[%s0 + $0xe8] sm:$0xff]
  %v66 = vld [vmem:[%s0 + $0xf0] sm:$0xff]
  %v67 = vld [vmem:[%s0 + $0xf8] sm:$0xff]
  %v68 = vld [vmem:[%s0 + $0x100] sm:$0xff]
  %v69 = vld [vmem:[%s0 + $0x108] sm:$0xff]
  %v70 = vld [vmem:[%s0 + $0x110] sm:$0xff]
  %v71 = vld [vmem:[%s0 + $0x118] sm:$0xff]
  %v72 = vld [vmem:[%s0 + $0x120] sm:$0xff]
  %v73 = vld [vmem:[%s0 + $0x128] sm:$0xff]
  %v74 = vld [vmem:[%s0 + $0x130] sm:$0xff]
  %v75 = vld [vmem:[%s0 + $0x138] sm:$0xff]
  %v76 = vld [vmem:[%s0 + $0x140] sm:$0xff]
  %v77 = vld [vmem:[%s0 + $0x148] sm:$0xff]
  %v78 = vld [vmem:[%s0 + $0x150] sm:$0xff]
  %v79 = vld [vmem:[%s0 + $0x158] sm:$0xff]
  %v80 = vld [vmem:[%s0 + $0x160] sm:$0xff]
  %v81 = vld [vmem:[%s0 + $0x168] sm:$0xff]
  %v82 = vld [vmem:[%s0 + $0x170] sm:$0xff]
  %v83 = vld [vmem:[%s0 + $0x178] sm:$0xff]
  %v84 = vld [vmem:[%s0 + $0x180] sm:$0xff]
  %v85 = vld [vmem:[%s0 + $0x188] sm:$0xff]
  %v86 = vld [vmem:[%s0 + $0x190] sm:$0xff]
  %v87 = vld [vmem:[%s0 + $0x198] sm:$0xff]
  %v88 = vld [vmem:[%s0 + $0x1a0] sm:$0xff]
  %v89 = vld [vmem:[%s0 + $0x1a8] sm:$0xff]
  %v90 = vld [vmem:[%s0 + $0x1b0] sm:$0xff]
  %v91 = vld [vmem:[%s0 + $0x1b8] sm:$0xff]
  %v92 = vld [vmem:[%s0 + $0x1c0] sm:$0xff]
  %v93 = vld [vmem:[%s0 + $0x1c8] sm:$0xff]
  %v94 = vld [vmem:[%s0 + $0x1d0] sm:$0xff]
  %v95 = vld [vmem:[%s0 + $0x1d8] sm:$0xff]
  %v96 = vld [vmem:[%s0 + $0x1e0] sm:$0xff]
  %v97 = vld [vmem:[%s0 + $0x1e8] sm:$0xff]
  %v98 = vld [vmem:[%s0 + $0x1f0] sm:$0xff]
  %v99 = vld [vmem:[%s0 + $0x1f8] sm:$0xff]
  %v100 = vpack.c.bf16 %v37, %v36
  %v101 = vpack.c.bf16 %v39, %v38
  %v102 = vpack.c.bf16 %v41, %v40
  %v103 = vpack.c.bf16 %v43, %v42
  %v104 = vpack.c.bf16 %v45, %v44
  %v105 = vpack.c.bf16 %v47, %v46
  %v106 = vpack.c.bf16 %v49, %v48
  %v107 = vpack.c.bf16 %v51, %v50
  %v108 = vpack.c.bf16 %v53, %v52
  %v109 = vpack.c.bf16 %v55, %v54
  %v110 = vpack.c.bf16 %v57, %v56
  %v111 = vpack.c.bf16 %v59, %v58
  %v112 = vpack.c.bf16 %v61, %v60
  %v113 = vpack.c.bf16 %v63, %v62
  %v114 = vpack.c.bf16 %v65, %v64
  %v115 = vpack.c.bf16 %v67, %v66
  %v116 = vpack.c.bf16 %v69, %v68
  %v117 = vpack.c.bf16 %v71, %v70
  %v118 = vpack.c.bf16 %v73, %v72
  %v119 = vpack.c.bf16 %v75, %v74
  %v120 = vpack.c.bf16 %v77, %v76
  %v121 = vpack.c.bf16 %v79, %v78
  %v122 = vpack.c.bf16 %v81, %v80
  %v123 = vpack.c.bf16 %v83, %v82
  %v124 = vpack.c.bf16 %v85, %v84
  %v125 = vpack.c.bf16 %v87, %v86
  %v126 = vpack.c.bf16 %v89, %v88
  %v127 = vpack.c.bf16 %v91, %v90
  %v128 = vpack.c.bf16 %v93, %v92
  %v129 = vpack.c.bf16 %v95, %v94
  %v130 = vpack.c.bf16 %v97, %v96
  %v131 = vpack.c.bf16 %v99, %v98
  %v132 = vld [vmem:[%s1] sm:$0xf]
  %v133 = vld [vmem:[%s1 + $0x4] sm:$0xf]
  %v134 = vld [vmem:[%s1 + $0x8] sm:$0xf]
  %v135 = vld [vmem:[%s1 + $0xc] sm:$0xf]
  %v136 = vld [vmem:[%s1 + $0x10] sm:$0xf]
  %v137 = vld [vmem:[%s1 + $0x14] sm:$0xf]
  %v138 = vld [vmem:[%s1 + $0x18] sm:$0xf]
  %v139 = vld [vmem:[%s1 + $0x1c] sm:$0xf]
  %v140 = vld [vmem:[%s1 + $0x20] sm:$0xf]
  %v141 = vld [vmem:[%s1 + $0x24] sm:$0xf]
  %v142 = vld [vmem:[%s1 + $0x28] sm:$0xf]
  %v143 = vld [vmem:[%s1 + $0x2c] sm:$0xf]
  %v144 = vld [vmem:[%s1 + $0x30] sm:$0xf]
  %v145 = vld [vmem:[%s1 + $0x34] sm:$0xf]
  %v146 = vld [vmem:[%s1 + $0x38] sm:$0xf]
  %v147 = vld [vmem:[%s1 + $0x3c] sm:$0xf]
  %v164 = vunpack.c.l.b16 %v132
  %v165 = vunpack.c.l.b16 %v133
  %v166 = vunpack.c.l.b16 %v134
  %v167 = vunpack.c.l.b16 %v135
  %v168 = vunpack.c.l.b16 %v136
  %v169 = vunpack.c.l.b16 %v137
  %v170 = vunpack.c.l.b16 %v138
  %v171 = vunpack.c.l.b16 %v139
  %v172 = vunpack.c.l.b16 %v140
  %v173 = vunpack.c.l.b16 %v141
  %v174 = vunpack.c.l.b16 %v142
  %v175 = vunpack.c.l.b16 %v143
  %v176 = vunpack.c.l.b16 %v144
  %v177 = vunpack.c.l.b16 %v145
  %v178 = vunpack.c.l.b16 %v146
  %v179 = vunpack.c.l.b16 %v147
  %v180 = vpack.c.b16 %v165, %v164
  %v181 = vpack.c.b16 %v167, %v166
  %v182 = vpack.c.b16 %v169, %v168
  %v183 = vpack.c.b16 %v171, %v170
  %v184 = vpack.c.b16 %v173, %v172
  %v185 = vpack.c.b16 %v175, %v174
  %v186 = vpack.c.b16 %v177, %v176
  %v187 = vpack.c.b16 %v179, %v178
  %196 = vmatprep.subr.bf16.mxu0 0
  %197 = vmatpush1.bf16.msra.mxu0 %v187
  %198 = vmatprep.subr.bf16.mxu0 0
  %199 = vmatpush1.bf16.msra.mxu0 %v186
  %200 = vmatprep.subr.bf16.mxu0 0
  %201 = vmatpush1.bf16.msra.mxu0 %v185
  %202 = vmatprep.subr.bf16.mxu0 0
  %203 = vmatpush1.bf16.msra.mxu0 %v184
  %204 = vmatprep.subr.bf16.mxu0 0
  %205 = vmatpush1.bf16.msra.mxu0 %v183
  %206 = vmatprep.subr.bf16.mxu0 0
  %207 = vmatpush1.bf16.msra.mxu0 %v182
  %208 = vmatprep.subr.bf16.mxu0 0
  %209 = vmatpush1.bf16.msra.mxu0 %v181
  %210 = vmatprep.subr.bf16.mxu0 0
  %211 = vmatpush1.bf16.msra.mxu0 %v180
  %212 = vmatprep.subr.bf16.mxu0 0
  %213 = vmatpush2.bf16.msra.mxu0 0
  %214 = vmatprep.subr.bf16.mxu0 0
  %215 = vmatpush2.bf16.msra.mxu0 0
  %216 = vmatprep.subr.bf16.mxu0 0
  %217 = vmatpush2.bf16.msra.mxu0 0
  %218 = vmatprep.subr.bf16.mxu0 0
  %219 = vmatpush2.bf16.msra.mxu0 0
  %220 = vmatprep.subr.bf16.mxu0 0
  %221 = vmatpush2.bf16.msra.mxu0 0
  %222 = vmatprep.subr.bf16.mxu0 0
  %223 = vmatpush2.bf16.msra.mxu0 0
  %224 = vmatprep.subr.bf16.mxu0 0
  %225 = vmatpush2.bf16.msra.mxu0 0
  %226 = vmatprep.subr.bf16.mxu0 0
  %227 = vmatpush2.bf16.msra.mxu0 0
  %228 = vmatprep.mubr.bf16.mxu0 0
  %229 = vmatmul.mubr.bf16.gmra.mxu0 %v100
  %v230 = vpop.f32.mrf.mxu0
  %v231 = vadd.f32 0.0, %v230
  %v232 = vpop.f32.mrf.mxu0
  %v233 = vpop.f32.mrf.mxu0
  %v234 = vadd.f32 0.0, %v233
  %v235 = vpop.f32.mrf.mxu0
  %236 = vmatprep.mubr.bf16.mxu0 0
  %237 = vmatmul.mubr.bf16.gmra.mxu0 %v101
  %v238 = vpop.f32.mrf.mxu0
  %v239 = vadd.f32 0.0, %v238
  %v240 = vpop.f32.mrf.mxu0
  %v241 = vpop.f32.mrf.mxu0
  %v242 = vadd.f32 0.0, %v241
  %v243 = vpop.f32.mrf.mxu0
  %244 = vmatprep.mubr.bf16.mxu0 0
  %245 = vmatmul.mubr.bf16.gmra.mxu0 %v102
  %v246 = vpop.f32.mrf.mxu0
  %v247 = vadd.f32 0.0, %v246
  %v248 = vpop.f32.mrf.mxu0
  %v249 = vpop.f32.mrf.mxu0
  %v250 = vadd.f32 0.0, %v249
  %v251 = vpop.f32.mrf.mxu0
  %252 = vmatprep.mubr.bf16.mxu0 0
  %253 = vmatmul.mubr.bf16.gmra.mxu0 %v103
  %v254 = vpop.f32.mrf.mxu0
  %v255 = vadd.f32 0.0, %v254
  %v256 = vpop.f32.mrf.mxu0
  %v257 = vpop.f32.mrf.mxu0
  %v258 = vadd.f32 0.0, %v257
  %v259 = vpop.f32.mrf.mxu0
  %260 = vmatprep.mubr.bf16.mxu0 0
  %261 = vmatmul.mubr.bf16.gmra.mxu0 %v104
  %v262 = vpop.f32.mrf.mxu0
  %v263 = vadd.f32 0.0, %v262
  %v264 = vpop.f32.mrf.mxu0
  %v265 = vpop.f32.mrf.mxu0
  %v266 = vadd.f32 0.0, %v265
  %v267 = vpop.f32.mrf.mxu0
  %268 = vmatprep.mubr.bf16.mxu0 0
  %269 = vmatmul.mubr.bf16.gmra.mxu0 %v105
  %v270 = vpop.f32.mrf.mxu0
  %v271 = vadd.f32 0.0, %v270
  %v272 = vpop.f32.mrf.mxu0
  %v273 = vpop.f32.mrf.mxu0
  %v274 = vadd.f32 0.0, %v273
  %v275 = vpop.f32.mrf.mxu0
  %276 = vmatprep.mubr.bf16.mxu0 0
  %277 = vmatmul.mubr.bf16.gmra.mxu0 %v106
  %v278 = vpop.f32.mrf.mxu0
  %v279 = vadd.f32 0.0, %v278
  %v280 = vpop.f32.mrf.mxu0
  %v281 = vpop.f32.mrf.mxu0
  %v282 = vadd.f32 0.0, %v281
  %v283 = vpop.f32.mrf.mxu0
  %284 = vmatprep.mubr.bf16.mxu0 0
  %285 = vmatmul.mubr.bf16.gmra.mxu0 %v107
  %v286 = vpop.f32.mrf.mxu0
  %v287 = vadd.f32 0.0, %v286
  %v288 = vpop.f32.mrf.mxu0
  %v289 = vpop.f32.mrf.mxu0
  %v290 = vadd.f32 0.0, %v289
  %v291 = vpop.f32.mrf.mxu0
  %292 = vmatprep.mubr.bf16.mxu0 0
  %293 = vmatmul.mubr.bf16.gmra.mxu0 %v108
  %v294 = vpop.f32.mrf.mxu0
  %v295 = vadd.f32 0.0, %v294
  %v296 = vpop.f32.mrf.mxu0
  %v297 = vpop.f32.mrf.mxu0
  %v298 = vadd.f32 0.0, %v297
  %v299 = vpop.f32.mrf.mxu0
  %300 = vmatprep.mubr.bf16.mxu0 0
  %301 = vmatmul.mubr.bf16.gmra.mxu0 %v109
  %v302 = vpop.f32.mrf.mxu0
  %v303 = vadd.f32 0.0, %v302
  %v304 = vpop.f32.mrf.mxu0
  %v305 = vpop.f32.mrf.mxu0
  %v306 = vadd.f32 0.0, %v305
  %v307 = vpop.f32.mrf.mxu0
  %308 = vmatprep.mubr.bf16.mxu0 0
  %309 = vmatmul.mubr.bf16.gmra.mxu0 %v110
  %v310 = vpop.f32.mrf.mxu0
  %v311 = vadd.f32 0.0, %v310
  %v312 = vpop.f32.mrf.mxu0
  %v313 = vpop.f32.mrf.mxu0
  %v314 = vadd.f32 0.0, %v313
  %v315 = vpop.f32.mrf.mxu0
  %316 = vmatprep.mubr.bf16.mxu0 0
  %317 = vmatmul.mubr.bf16.gmra.mxu0 %v111
  %v318 = vpop.f32.mrf.mxu0
  %v319 = vadd.f32 0.0, %v318
  %v320 = vpop.f32.mrf.mxu0
  %v321 = vpop.f32.mrf.mxu0
  %v322 = vadd.f32 0.0, %v321
  %v323 = vpop.f32.mrf.mxu0
  %324 = vmatprep.mubr.bf16.mxu0 0
  %325 = vmatmul.mubr.bf16.gmra.mxu0 %v112
  %v326 = vpop.f32.mrf.mxu0
  %v327 = vadd.f32 0.0, %v326
  %v328 = vpop.f32.mrf.mxu0
  %v329 = vpop.f32.mrf.mxu0
  %v330 = vadd.f32 0.0, %v329
  %v331 = vpop.f32.mrf.mxu0
  %332 = vmatprep.mubr.bf16.mxu0 0
  %333 = vmatmul.mubr.bf16.gmra.mxu0 %v113
  %v334 = vpop.f32.mrf.mxu0
  %v335 = vadd.f32 0.0, %v334
  %v336 = vpop.f32.mrf.mxu0
  %v337 = vpop.f32.mrf.mxu0
  %v338 = vadd.f32 0.0, %v337
  %v339 = vpop.f32.mrf.mxu0
  %340 = vmatprep.mubr.bf16.mxu0 0
  %341 = vmatmul.mubr.bf16.gmra.mxu0 %v114
  %v342 = vpop.f32.mrf.mxu0
  %v343 = vadd.f32 0.0, %v342
  %v344 = vpop.f32.mrf.mxu0
  %v345 = vpop.f32.mrf.mxu0
  %v346 = vadd.f32 0.0, %v345
  %v347 = vpop.f32.mrf.mxu0
  %348 = vmatprep.mubr.bf16.mxu0 0
  %349 = vmatmul.mubr.bf16.gmra.mxu0 %v115
  %v350 = vpop.f32.mrf.mxu0
  %v351 = vadd.f32 0.0, %v350
  %v352 = vpop.f32.mrf.mxu0
  %v353 = vpop.f32.mrf.mxu0
  %v354 = vadd.f32 0.0, %v353
  %v355 = vpop.f32.mrf.mxu0
  %356 = vmatprep.mubr.bf16.mxu0 0
  %357 = vmatmul.mubr.bf16.gmra.mxu0 %v116
  %v358 = vpop.f32.mrf.mxu0
  %v359 = vadd.f32 0.0, %v358
  %v360 = vpop.f32.mrf.mxu0
  %v361 = vpop.f32.mrf.mxu0
  %v362 = vadd.f32 0.0, %v361
  %v363 = vpop.f32.mrf.mxu0
  %364 = vmatprep.mubr.bf16.mxu0 0
  %365 = vmatmul.mubr.bf16.gmra.mxu0 %v117
  %v366 = vpop.f32.mrf.mxu0
  %v367 = vadd.f32 0.0, %v366
  %v368 = vpop.f32.mrf.mxu0
  %v369 = vpop.f32.mrf.mxu0
  %v370 = vadd.f32 0.0, %v369
  %v371 = vpop.f32.mrf.mxu0
  %372 = vmatprep.mubr.bf16.mxu0 0
  %373 = vmatmul.mubr.bf16.gmra.mxu0 %v118
  %v374 = vpop.f32.mrf.mxu0
  %v375 = vadd.f32 0.0, %v374
  %v376 = vpop.f32.mrf.mxu0
  %v377 = vpop.f32.mrf.mxu0
  %v378 = vadd.f32 0.0, %v377
  %v379 = vpop.f32.mrf.mxu0
  %380 = vmatprep.mubr.bf16.mxu0 0
  %381 = vmatmul.mubr.bf16.gmra.mxu0 %v119
  %v382 = vpop.f32.mrf.mxu0
  %v383 = vadd.f32 0.0, %v382
  %v384 = vpop.f32.mrf.mxu0
  %v385 = vpop.f32.mrf.mxu0
  %v386 = vadd.f32 0.0, %v385
  %v387 = vpop.f32.mrf.mxu0
  %388 = vmatprep.mubr.bf16.mxu0 0
  %389 = vmatmul.mubr.bf16.gmra.mxu0 %v120
  %v390 = vpop.f32.mrf.mxu0
  %v391 = vadd.f32 0.0, %v390
  %v392 = vpop.f32.mrf.mxu0
  %v393 = vpop.f32.mrf.mxu0
  %v394 = vadd.f32 0.0, %v393
  %v395 = vpop.f32.mrf.mxu0
  %396 = vmatprep.mubr.bf16.mxu0 0
  %397 = vmatmul.mubr.bf16.gmra.mxu0 %v121
  %v398 = vpop.f32.mrf.mxu0
  %v399 = vadd.f32 0.0, %v398
  %v400 = vpop.f32.mrf.mxu0
  %v401 = vpop.f32.mrf.mxu0
  %v402 = vadd.f32 0.0, %v401
  %v403 = vpop.f32.mrf.mxu0
  %404 = vmatprep.mubr.bf16.mxu0 0
  %405 = vmatmul.mubr.bf16.gmra.mxu0 %v122
  %v406 = vpop.f32.mrf.mxu0
  %v407 = vadd.f32 0.0, %v406
  %v408 = vpop.f32.mrf.mxu0
  %v409 = vpop.f32.mrf.mxu0
  %v410 = vadd.f32 0.0, %v409
  %v411 = vpop.f32.mrf.mxu0
  %412 = vmatprep.mubr.bf16.mxu0 0
  %413 = vmatmul.mubr.bf16.gmra.mxu0 %v123
  %v414 = vpop.f32.mrf.mxu0
  %v415 = vadd.f32 0.0, %v414
  %v416 = vpop.f32.mrf.mxu0
  %v417 = vpop.f32.mrf.mxu0
  %v418 = vadd.f32 0.0, %v417
  %v419 = vpop.f32.mrf.mxu0
  %420 = vmatprep.mubr.bf16.mxu0 0
  %421 = vmatmul.mubr.bf16.gmra.mxu0 %v124
  %v422 = vpop.f32.mrf.mxu0
  %v423 = vadd.f32 0.0, %v422
  %v424 = vpop.f32.mrf.mxu0
  %v425 = vpop.f32.mrf.mxu0
  %v426 = vadd.f32 0.0, %v425
  %v427 = vpop.f32.mrf.mxu0
  %428 = vmatprep.mubr.bf16.mxu0 0
  %429 = vmatmul.mubr.bf16.gmra.mxu0 %v125
  %v430 = vpop.f32.mrf.mxu0
  %v431 = vadd.f32 0.0, %v430
  %v432 = vpop.f32.mrf.mxu0
  %v433 = vpop.f32.mrf.mxu0
  %v434 = vadd.f32 0.0, %v433
  %v435 = vpop.f32.mrf.mxu0
  %436 = vmatprep.mubr.bf16.mxu0 0
  %437 = vmatmul.mubr.bf16.gmra.mxu0 %v126
  %v438 = vpop.f32.mrf.mxu0
  %v439 = vadd.f32 0.0, %v438
  %v440 = vpop.f32.mrf.mxu0
  %v441 = vpop.f32.mrf.mxu0
  %v442 = vadd.f32 0.0, %v441
  %v443 = vpop.f32.mrf.mxu0
  %444 = vmatprep.mubr.bf16.mxu0 0
  %445 = vmatmul.mubr.bf16.gmra.mxu0 %v127
  %v446 = vpop.f32.mrf.mxu0
  %v447 = vadd.f32 0.0, %v446
  %v448 = vpop.f32.mrf.mxu0
  %v449 = vpop.f32.mrf.mxu0
  %v450 = vadd.f32 0.0, %v449
  %v451 = vpop.f32.mrf.mxu0
  %452 = vmatprep.mubr.bf16.mxu0 0
  %453 = vmatmul.mubr.bf16.gmra.mxu0 %v128
  %v454 = vpop.f32.mrf.mxu0
  %v455 = vadd.f32 0.0, %v454
  %v456 = vpop.f32.mrf.mxu0
  %v457 = vpop.f32.mrf.mxu0
  %v458 = vadd.f32 0.0, %v457
  %v459 = vpop.f32.mrf.mxu0
  %460 = vmatprep.mubr.bf16.mxu0 0
  %461 = vmatmul.mubr.bf16.gmra.mxu0 %v129
  %v462 = vpop.f32.mrf.mxu0
  %v463 = vadd.f32 0.0, %v462
  %v464 = vpop.f32.mrf.mxu0
  %v465 = vpop.f32.mrf.mxu0
  %v466 = vadd.f32 0.0, %v465
  %v467 = vpop.f32.mrf.mxu0
  %468 = vmatprep.mubr.bf16.mxu0 0
  %469 = vmatmul.mubr.bf16.gmra.mxu0 %v130
  %v470 = vpop.f32.mrf.mxu0
  %v471 = vadd.f32 0.0, %v470
  %v472 = vpop.f32.mrf.mxu0
  %v473 = vpop.f32.mrf.mxu0
  %v474 = vadd.f32 0.0, %v473
  %v475 = vpop.f32.mrf.mxu0
  %476 = vmatprep.mubr.bf16.mxu0 0
  %477 = vmatmul.mubr.bf16.gmra.mxu0 %v131
  %v478 = vpop.f32.mrf.mxu0
  %v479 = vadd.f32 0.0, %v478
  %v480 = vpop.f32.mrf.mxu0
  %v481 = vpop.f32.mrf.mxu0
  %v482 = vadd.f32 0.0, %v481
  %v483 = vpop.f32.mrf.mxu0
  %484 = vdwg.mxu0
  %v485 = vld [vmem:[%s4] sm:$0x1]
  %v486 = vld [vmem:[%s5] sm:$0x1]
  %v487 = vadd.f32 %v231, %v234
  %v488 = vadd.f32 %v487, %v239
  %v489 = vadd.f32 %v488, %v242
  %v490 = vadd.f32 %v489, %v247
  %v491 = vadd.f32 %v490, %v250
  %v492 = vadd.f32 %v491, %v255
  %v493 = vadd.f32 %v492, %v258
  %v494 = vadd.f32 %v493, %v263
  %v495 = vadd.f32 %v494, %v266
  %v496 = vadd.f32 %v495, %v271
  %v497 = vadd.f32 %v496, %v274
  %v498 = vadd.f32 %v497, %v279
  %v499 = vadd.f32 %v498, %v282
  %v500 = vadd.f32 %v499, %v287
  %v501 = vadd.f32 %v500, %v290
  %v502 = vadd.f32 %v501, %v295
  %v503 = vadd.f32 %v502, %v298
  %v504 = vadd.f32 %v503, %v303
  %v505 = vadd.f32 %v504, %v306
  %v506 = vadd.f32 %v505, %v311
  %v507 = vadd.f32 %v506, %v314
  %v508 = vadd.f32 %v507, %v319
  %v509 = vadd.f32 %v508, %v322
  %v510 = vadd.f32 %v509, %v327
  %v511 = vadd.f32 %v510, %v330
  %v512 = vadd.f32 %v511, %v335
  %v513 = vadd.f32 %v512, %v338
  %v514 = vadd.f32 %v513, %v343
  %v515 = vadd.f32 %v514, %v346
  %v516 = vadd.f32 %v515, %v351
  %v517 = vadd.f32 %v516, %v354
  %v518 = vadd.f32 %v517, %v359
  %v519 = vadd.f32 %v518, %v362
  %v520 = vadd.f32 %v519, %v367
  %v521 = vadd.f32 %v520, %v370
  %v522 = vadd.f32 %v521, %v375
  %v523 = vadd.f32 %v522, %v378
  %v524 = vadd.f32 %v523, %v383
  %v525 = vadd.f32 %v524, %v386
  %v526 = vadd.f32 %v525, %v391
  %v527 = vadd.f32 %v526, %v394
  %v528 = vadd.f32 %v527, %v399
  %v529 = vadd.f32 %v528, %v402
  %v530 = vadd.f32 %v529, %v407
  %v531 = vadd.f32 %v530, %v410
  %v532 = vadd.f32 %v531, %v415
  %v533 = vadd.f32 %v532, %v418
  %v534 = vadd.f32 %v533, %v423
  %v535 = vadd.f32 %v534, %v426
  %v536 = vadd.f32 %v535, %v431
  %v537 = vadd.f32 %v536, %v434
  %v538 = vadd.f32 %v537, %v439
  %v539 = vadd.f32 %v538, %v442
  %v540 = vadd.f32 %v539, %v447
  %v541 = vadd.f32 %v540, %v450
  %v542 = vadd.f32 %v541, %v455
  %v543 = vadd.f32 %v542, %v458
  %v544 = vadd.f32 %v543, %v463
  %v545 = vadd.f32 %v544, %v466
  %v546 = vadd.f32 %v545, %v471
  %v547 = vadd.f32 %v546, %v474
  %v548 = vadd.f32 %v547, %v479
  %v549 = vadd.f32 %v548, %v482
  %v550 = vrot.slane %v549, 4
  %v551 = vadd.f32 %v549, %v550
  %v552 = vrot.slane %v551, 2
  %v553 = vadd.f32 %v551, %v552
  %v554 = vrot.slane %v553, 1
  %v555 = vadd.f32 %v553, %v554
  %v556 = vmul.f32 %v555, 0.001953125
  %v557 = vmul.f32 %v231, %v231
  %v558 = vmul.f32 %v234, %v234
  %v559 = vmul.f32 %v239, %v239
  %v560 = vmul.f32 %v242, %v242
  %v561 = vmul.f32 %v247, %v247
  %v562 = vmul.f32 %v250, %v250
  %v563 = vmul.f32 %v255, %v255
  %v564 = vmul.f32 %v258, %v258
  %v565 = vmul.f32 %v263, %v263
  %v566 = vmul.f32 %v266, %v266
  %v567 = vmul.f32 %v271, %v271
  %v568 = vmul.f32 %v274, %v274
  %v569 = vmul.f32 %v279, %v279
  %v570 = vmul.f32 %v282, %v282
  %v571 = vmul.f32 %v287, %v287
  %v572 = vmul.f32 %v290, %v290
  %v573 = vmul.f32 %v295, %v295
  %v574 = vmul.f32 %v298, %v298
  %v575 = vmul.f32 %v303, %v303
  %v576 = vmul.f32 %v306, %v306
  %v577 = vmul.f32 %v311, %v311
  %v578 = vmul.f32 %v314, %v314
  %v579 = vmul.f32 %v319, %v319
  %v580 = vmul.f32 %v322, %v322
  %v581 = vmul.f32 %v327, %v327
  %v582 = vmul.f32 %v330, %v330
  %v583 = vmul.f32 %v335, %v335
  %v584 = vmul.f32 %v338, %v338
  %v585 = vmul.f32 %v343, %v343
  %v586 = vmul.f32 %v346, %v346
  %v587 = vmul.f32 %v351, %v351
  %v588 = vmul.f32 %v354, %v354
  %v589 = vmul.f32 %v359, %v359
  %v590 = vmul.f32 %v362, %v362
  %v591 = vmul.f32 %v367, %v367
  %v592 = vmul.f32 %v370, %v370
  %v593 = vmul.f32 %v375, %v375
  %v594 = vmul.f32 %v378, %v378
  %v595 = vmul.f32 %v383, %v383
  %v596 = vmul.f32 %v386, %v386
  %v597 = vmul.f32 %v391, %v391
  %v598 = vmul.f32 %v394, %v394
  %v599 = vmul.f32 %v399, %v399
  %v600 = vmul.f32 %v402, %v402
  %v601 = vmul.f32 %v407, %v407
  %v602 = vmul.f32 %v410, %v410
  %v603 = vmul.f32 %v415, %v415
  %v604 = vmul.f32 %v418, %v418
  %v605 = vmul.f32 %v423, %v423
  %v606 = vmul.f32 %v426, %v426
  %v607 = vmul.f32 %v431, %v431
  %v608 = vmul.f32 %v434, %v434
  %v609 = vmul.f32 %v439, %v439
  %v610 = vmul.f32 %v442, %v442
  %v611 = vmul.f32 %v447, %v447
  %v612 = vmul.f32 %v450, %v450
  %v613 = vmul.f32 %v455, %v455
  %v614 = vmul.f32 %v458, %v458
  %v615 = vmul.f32 %v463, %v463
  %v616 = vmul.f32 %v466, %v466
  %v617 = vmul.f32 %v471, %v471
  %v618 = vmul.f32 %v474, %v474
  %v619 = vmul.f32 %v479, %v479
  %v620 = vmul.f32 %v482, %v482
  %v621 = vadd.f32 %v557, %v558
  %v622 = vadd.f32 %v621, %v559
  %v623 = vadd.f32 %v622, %v560
  %v624 = vadd.f32 %v623, %v561
  %v625 = vadd.f32 %v624, %v562
  %v626 = vadd.f32 %v625, %v563
  %v627 = vadd.f32 %v626, %v564
  %v628 = vadd.f32 %v627, %v565
  %v629 = vadd.f32 %v628, %v566
  %v630 = vadd.f32 %v629, %v567
  %v631 = vadd.f32 %v630, %v568
  %v632 = vadd.f32 %v631, %v569
  %v633 = vadd.f32 %v632, %v570
  %v634 = vadd.f32 %v633, %v571
  %v635 = vadd.f32 %v634, %v572
  %v636 = vadd.f32 %v635, %v573
  %v637 = vadd.f32 %v636, %v574
  %v638 = vadd.f32 %v637, %v575
  %v639 = vadd.f32 %v638, %v576
  %v640 = vadd.f32 %v639, %v577
  %v641 = vadd.f32 %v640, %v578
  %v642 = vadd.f32 %v641, %v579
  %v643 = vadd.f32 %v642, %v580
  %v644 = vadd.f32 %v643, %v581
  %v645 = vadd.f32 %v644, %v582
  %v646 = vadd.f32 %v645, %v583
  %v647 = vadd.f32 %v646, %v584
  %v648 = vadd.f32 %v647, %v585
  %v649 = vadd.f32 %v648, %v586
  %v650 = vadd.f32 %v649, %v587
  %v651 = vadd.f32 %v650, %v588
  %v652 = vadd.f32 %v651, %v589
  %v653 = vadd.f32 %v652, %v590
  %v654 = vadd.f32 %v653, %v591
  %v655 = vadd.f32 %v654, %v592
  %v656 = vadd.f32 %v655, %v593
  %v657 = vadd.f32 %v656, %v594
  %v658 = vadd.f32 %v657, %v595
  %v659 = vadd.f32 %v658, %v596
  %v660 = vadd.f32 %v659, %v597
  %v661 = vadd.f32 %v660, %v598
  %v662 = vadd.f32 %v661, %v599
  %v663 = vadd.f32 %v662, %v600
  %v664 = vadd.f32 %v663, %v601
  %v665 = vadd.f32 %v664, %v602
  %v666 = vadd.f32 %v665, %v603
  %v667 = vadd.f32 %v666, %v604
  %v668 = vadd.f32 %v667, %v605
  %v669 = vadd.f32 %v668, %v606
  %v670 = vadd.f32 %v669, %v607
  %v671 = vadd.f32 %v670, %v608
  %v672 = vadd.f32 %v671, %v609
  %v673 = vadd.f32 %v672, %v610
  %v674 = vadd.f32 %v673, %v611
  %v675 = vadd.f32 %v674, %v612
  %v676 = vadd.f32 %v675, %v613
  %v677 = vadd.f32 %v676, %v614
  %v678 = vadd.f32 %v677, %v615
  %v679 = vadd.f32 %v678, %v616
  %v680 = vadd.f32 %v679, %v617
  %v681 = vadd.f32 %v680, %v618
  %v682 = vadd.f32 %v681, %v619
  %v683 = vadd.f32 %v682, %v620
  %v684 = vrot.slane %v683, 4
  %v685 = vadd.f32 %v683, %v684
  %v686 = vrot.slane %v685, 2
  %v687 = vadd.f32 %v685, %v686
  %v688 = vrot.slane %v687, 1
  %v689 = vadd.f32 %v687, %v688
  %v690 = vmul.f32 %v689, 0.001953125
  %v691 = vmul.f32 %v556, %v556
  %v692 = vsub.f32 %v690, %v691
  %v693 = vmax.f32 %v692, 0.0
  %v694 = vsub.f32 %v231, %v556
  %v695 = vsub.f32 %v234, %v556
  %v696 = vsub.f32 %v239, %v556
  %v697 = vsub.f32 %v242, %v556
  %v698 = vsub.f32 %v247, %v556
  %v699 = vsub.f32 %v250, %v556
  %v700 = vsub.f32 %v255, %v556
  %v701 = vsub.f32 %v258, %v556
  %v702 = vsub.f32 %v263, %v556
  %v703 = vsub.f32 %v266, %v556
  %v704 = vsub.f32 %v271, %v556
  %v705 = vsub.f32 %v274, %v556
  %v706 = vsub.f32 %v279, %v556
  %v707 = vsub.f32 %v282, %v556
  %v708 = vsub.f32 %v287, %v556
  %v709 = vsub.f32 %v290, %v556
  %v710 = vsub.f32 %v295, %v556
  %v711 = vsub.f32 %v298, %v556
  %v712 = vsub.f32 %v303, %v556
  %v713 = vsub.f32 %v306, %v556
  %v714 = vsub.f32 %v311, %v556
  %v715 = vsub.f32 %v314, %v556
  %v716 = vsub.f32 %v319, %v556
  %v717 = vsub.f32 %v322, %v556
  %v718 = vsub.f32 %v327, %v556
  %v719 = vsub.f32 %v330, %v556
  %v720 = vsub.f32 %v335, %v556
  %v721 = vsub.f32 %v338, %v556
  %v722 = vsub.f32 %v343, %v556
  %v723 = vsub.f32 %v346, %v556
  %v724 = vsub.f32 %v351, %v556
  %v725 = vsub.f32 %v354, %v556
  %v726 = vsub.f32 %v359, %v556
  %v727 = vsub.f32 %v362, %v556
  %v728 = vsub.f32 %v367, %v556
  %v729 = vsub.f32 %v370, %v556
  %v730 = vsub.f32 %v375, %v556
  %v731 = vsub.f32 %v378, %v556
  %v732 = vsub.f32 %v383, %v556
  %v733 = vsub.f32 %v386, %v556
  %v734 = vsub.f32 %v391, %v556
  %v735 = vsub.f32 %v394, %v556
  %v736 = vsub.f32 %v399, %v556
  %v737 = vsub.f32 %v402, %v556
  %v738 = vsub.f32 %v407, %v556
  %v739 = vsub.f32 %v410, %v556
  %v740 = vsub.f32 %v415, %v556
  %v741 = vsub.f32 %v418, %v556
  %v742 = vsub.f32 %v423, %v556
  %v743 = vsub.f32 %v426, %v556
  %v744 = vsub.f32 %v431, %v556
  %v745 = vsub.f32 %v434, %v556
  %v746 = vsub.f32 %v439, %v556
  %v747 = vsub.f32 %v442, %v556
  %v748 = vsub.f32 %v447, %v556
  %v749 = vsub.f32 %v450, %v556
  %v750 = vsub.f32 %v455, %v556
  %v751 = vsub.f32 %v458, %v556
  %v752 = vsub.f32 %v463, %v556
  %v753 = vsub.f32 %v466, %v556
  %v754 = vsub.f32 %v471, %v556
  %v755 = vsub.f32 %v474, %v556
  %v756 = vsub.f32 %v479, %v556
  %v757 = vsub.f32 %v482, %v556
  %v758 = vadd.f32 %v693, 1e-05
  %v759 = vrsqrt.pop %v758
  %v760 = vmul.f32 %v694, %v759
  %v761 = vmul.f32 %v695, %v759
  %v762 = vmul.f32 %v696, %v759
  %v763 = vmul.f32 %v697, %v759
  %v764 = vmul.f32 %v698, %v759
  %v765 = vmul.f32 %v699, %v759
  %v766 = vmul.f32 %v700, %v759
  %v767 = vmul.f32 %v701, %v759
  %v768 = vmul.f32 %v702, %v759
  %v769 = vmul.f32 %v703, %v759
  %v770 = vmul.f32 %v704, %v759
  %v771 = vmul.f32 %v705, %v759
  %v772 = vmul.f32 %v706, %v759
  %v773 = vmul.f32 %v707, %v759
  %v774 = vmul.f32 %v708, %v759
  %v775 = vmul.f32 %v709, %v759
  %v776 = vmul.f32 %v710, %v759
  %v777 = vmul.f32 %v711, %v759
  %v778 = vmul.f32 %v712, %v759
  %v779 = vmul.f32 %v713, %v759
  %v780 = vmul.f32 %v714, %v759
  %v781 = vmul.f32 %v715, %v759
  %v782 = vmul.f32 %v716, %v759
  %v783 = vmul.f32 %v717, %v759
  %v784 = vmul.f32 %v718, %v759
  %v785 = vmul.f32 %v719, %v759
  %v786 = vmul.f32 %v720, %v759
  %v787 = vmul.f32 %v721, %v759
  %v788 = vmul.f32 %v722, %v759
  %v789 = vmul.f32 %v723, %v759
  %v790 = vmul.f32 %v724, %v759
  %v791 = vmul.f32 %v725, %v759
  %v792 = vmul.f32 %v726, %v759
  %v793 = vmul.f32 %v727, %v759
  %v794 = vmul.f32 %v728, %v759
  %v795 = vmul.f32 %v729, %v759
  %v796 = vmul.f32 %v730, %v759
  %v797 = vmul.f32 %v731, %v759
  %v798 = vmul.f32 %v732, %v759
  %v799 = vmul.f32 %v733, %v759
  %v800 = vmul.f32 %v734, %v759
  %v801 = vmul.f32 %v735, %v759
  %v802 = vmul.f32 %v736, %v759
  %v803 = vmul.f32 %v737, %v759
  %v804 = vmul.f32 %v738, %v759
  %v805 = vmul.f32 %v739, %v759
  %v806 = vmul.f32 %v740, %v759
  %v807 = vmul.f32 %v741, %v759
  %v808 = vmul.f32 %v742, %v759
  %v809 = vmul.f32 %v743, %v759
  %v810 = vmul.f32 %v744, %v759
  %v811 = vmul.f32 %v745, %v759
  %v812 = vmul.f32 %v746, %v759
  %v813 = vmul.f32 %v747, %v759
  %v814 = vmul.f32 %v748, %v759
  %v815 = vmul.f32 %v749, %v759
  %v816 = vmul.f32 %v750, %v759
  %v817 = vmul.f32 %v751, %v759
  %v818 = vmul.f32 %v752, %v759
  %v819 = vmul.f32 %v753, %v759
  %v820 = vmul.f32 %v754, %v759
  %v821 = vmul.f32 %v755, %v759
  %v822 = vmul.f32 %v756, %v759
  %v823 = vmul.f32 %v757, %v759
  %v825 = vlaneseq
  %v826 = vshrl.u32 %v825, 7
  %v827 = vsub.s32 0, %v826
  %v828 = vrot.slane %v485, %v827
  %v830 = vmul.f32 %v760, %v828
  %v831 = vmul.f32 %v761, %v828
  %v832 = vmul.f32 %v762, %v828
  %v833 = vmul.f32 %v763, %v828
  %v834 = vmul.f32 %v764, %v828
  %v835 = vmul.f32 %v765, %v828
  %v836 = vmul.f32 %v766, %v828
  %v837 = vmul.f32 %v767, %v828
  %v838 = vmul.f32 %v768, %v828
  %v839 = vmul.f32 %v769, %v828
  %v840 = vmul.f32 %v770, %v828
  %v841 = vmul.f32 %v771, %v828
  %v842 = vmul.f32 %v772, %v828
  %v843 = vmul.f32 %v773, %v828
  %v844 = vmul.f32 %v774, %v828
  %v845 = vmul.f32 %v775, %v828
  %v846 = vmul.f32 %v776, %v828
  %v847 = vmul.f32 %v777, %v828
  %v848 = vmul.f32 %v778, %v828
  %v849 = vmul.f32 %v779, %v828
  %v850 = vmul.f32 %v780, %v828
  %v851 = vmul.f32 %v781, %v828
  %v852 = vmul.f32 %v782, %v828
  %v853 = vmul.f32 %v783, %v828
  %v854 = vmul.f32 %v784, %v828
  %v855 = vmul.f32 %v785, %v828
  %v856 = vmul.f32 %v786, %v828
  %v857 = vmul.f32 %v787, %v828
  %v858 = vmul.f32 %v788, %v828
  %v859 = vmul.f32 %v789, %v828
  %v860 = vmul.f32 %v790, %v828
  %v861 = vmul.f32 %v791, %v828
  %v862 = vmul.f32 %v792, %v828
  %v863 = vmul.f32 %v793, %v828
  %v864 = vmul.f32 %v794, %v828
  %v865 = vmul.f32 %v795, %v828
  %v866 = vmul.f32 %v796, %v828
  %v867 = vmul.f32 %v797, %v828
  %v868 = vmul.f32 %v798, %v828
  %v869 = vmul.f32 %v799, %v828
  %v870 = vmul.f32 %v800, %v828
  %v871 = vmul.f32 %v801, %v828
  %v872 = vmul.f32 %v802, %v828
  %v873 = vmul.f32 %v803, %v828
  %v874 = vmul.f32 %v804, %v828
  %v875 = vmul.f32 %v805, %v828
  %v876 = vmul.f32 %v806, %v828
  %v877 = vmul.f32 %v807, %v828
  %v878 = vmul.f32 %v808, %v828
  %v879 = vmul.f32 %v809, %v828
  %v880 = vmul.f32 %v810, %v828
  %v881 = vmul.f32 %v811, %v828
  %v882 = vmul.f32 %v812, %v828
  %v883 = vmul.f32 %v813, %v828
  %v884 = vmul.f32 %v814, %v828
  %v885 = vmul.f32 %v815, %v828
  %v886 = vmul.f32 %v816, %v828
  %v887 = vmul.f32 %v817, %v828
  %v888 = vmul.f32 %v818, %v828
  %v889 = vmul.f32 %v819, %v828
  %v890 = vmul.f32 %v820, %v828
  %v891 = vmul.f32 %v821, %v828
  %v892 = vmul.f32 %v822, %v828
  %v893 = vmul.f32 %v823, %v828
  %v895 = vlaneseq
  %v896 = vshrl.u32 %v895, 7
  %v897 = vsub.s32 0, %v896
  %v898 = vrot.slane %v486, %v897
  %v900 = vadd.f32 %v830, %v898
  %v901 = vadd.f32 %v831, %v898
  %v902 = vadd.f32 %v832, %v898
  %v903 = vadd.f32 %v833, %v898
  %v904 = vadd.f32 %v834, %v898
  %v905 = vadd.f32 %v835, %v898
  %v906 = vadd.f32 %v836, %v898
  %v907 = vadd.f32 %v837, %v898
  %v908 = vadd.f32 %v838, %v898
  %v909 = vadd.f32 %v839, %v898
  %v910 = vadd.f32 %v840, %v898
  %v911 = vadd.f32 %v841, %v898
  %v912 = vadd.f32 %v842, %v898
  %v913 = vadd.f32 %v843, %v898
  %v914 = vadd.f32 %v844, %v898
  %v915 = vadd.f32 %v845, %v898
  %v916 = vadd.f32 %v846, %v898
  %v917 = vadd.f32 %v847, %v898
  %v918 = vadd.f32 %v848, %v898
  %v919 = vadd.f32 %v849, %v898
  %v920 = vadd.f32 %v850, %v898
  %v921 = vadd.f32 %v851, %v898
  %v922 = vadd.f32 %v852, %v898
  %v923 = vadd.f32 %v853, %v898
  %v924 = vadd.f32 %v854, %v898
  %v925 = vadd.f32 %v855, %v898
  %v926 = vadd.f32 %v856, %v898
  %v927 = vadd.f32 %v857, %v898
  %v928 = vadd.f32 %v858, %v898
  %v929 = vadd.f32 %v859, %v898
  %v930 = vadd.f32 %v860, %v898
  %v931 = vadd.f32 %v861, %v898
  %v932 = vadd.f32 %v862, %v898
  %v933 = vadd.f32 %v863, %v898
  %v934 = vadd.f32 %v864, %v898
  %v935 = vadd.f32 %v865, %v898
  %v936 = vadd.f32 %v866, %v898
  %v937 = vadd.f32 %v867, %v898
  %v938 = vadd.f32 %v868, %v898
  %v939 = vadd.f32 %v869, %v898
  %v940 = vadd.f32 %v870, %v898
  %v941 = vadd.f32 %v871, %v898
  %v942 = vadd.f32 %v872, %v898
  %v943 = vadd.f32 %v873, %v898
  %v944 = vadd.f32 %v874, %v898
  %v945 = vadd.f32 %v875, %v898
  %v946 = vadd.f32 %v876, %v898
  %v947 = vadd.f32 %v877, %v898
  %v948 = vadd.f32 %v878, %v898
  %v949 = vadd.f32 %v879, %v898
  %v950 = vadd.f32 %v880, %v898
  %v951 = vadd.f32 %v881, %v898
  %v952 = vadd.f32 %v882, %v898
  %v953 = vadd.f32 %v883, %v898
  %v954 = vadd.f32 %v884, %v898
  %v955 = vadd.f32 %v885, %v898
  %v956 = vadd.f32 %v886, %v898
  %v957 = vadd.f32 %v887, %v898
  %v958 = vadd.f32 %v888, %v898
  %v959 = vadd.f32 %v889, %v898
  %v960 = vadd.f32 %v890, %v898
  %v961 = vadd.f32 %v891, %v898
  %v962 = vadd.f32 %v892, %v898
  %v963 = vadd.f32 %v893, %v898
  %v964 = vmax.f32 %v900, 0.0
  %v965 = vmax.f32 %v901, 0.0
  %v966 = vmax.f32 %v902, 0.0
  %v967 = vmax.f32 %v903, 0.0
  %v968 = vmax.f32 %v904, 0.0
  %v969 = vmax.f32 %v905, 0.0
  %v970 = vmax.f32 %v906, 0.0
  %v971 = vmax.f32 %v907, 0.0
  %v972 = vmax.f32 %v908, 0.0
  %v973 = vmax.f32 %v909, 0.0
  %v974 = vmax.f32 %v910, 0.0
  %v975 = vmax.f32 %v911, 0.0
  %v976 = vmax.f32 %v912, 0.0
  %v977 = vmax.f32 %v913, 0.0
  %v978 = vmax.f32 %v914, 0.0
  %v979 = vmax.f32 %v915, 0.0
  %v980 = vmax.f32 %v916, 0.0
  %v981 = vmax.f32 %v917, 0.0
  %v982 = vmax.f32 %v918, 0.0
  %v983 = vmax.f32 %v919, 0.0
  %v984 = vmax.f32 %v920, 0.0
  %v985 = vmax.f32 %v921, 0.0
  %v986 = vmax.f32 %v922, 0.0
  %v987 = vmax.f32 %v923, 0.0
  %v988 = vmax.f32 %v924, 0.0
  %v989 = vmax.f32 %v925, 0.0
  %v990 = vmax.f32 %v926, 0.0
  %v991 = vmax.f32 %v927, 0.0
  %v992 = vmax.f32 %v928, 0.0
  %v993 = vmax.f32 %v929, 0.0
  %v994 = vmax.f32 %v930, 0.0
  %v995 = vmax.f32 %v931, 0.0
  %v996 = vmax.f32 %v932, 0.0
  %v997 = vmax.f32 %v933, 0.0
  %v998 = vmax.f32 %v934, 0.0
  %v999 = vmax.f32 %v935, 0.0
  %v1000 = vmax.f32 %v936, 0.0
  %v1001 = vmax.f32 %v937, 0.0
  %v1002 = vmax.f32 %v938, 0.0
  %v1003 = vmax.f32 %v939, 0.0
  %v1004 = vmax.f32 %v940, 0.0
  %v1005 = vmax.f32 %v941, 0.0
  %v1006 = vmax.f32 %v942, 0.0
  %v1007 = vmax.f32 %v943, 0.0
  %v1008 = vmax.f32 %v944, 0.0
  %v1009 = vmax.f32 %v945, 0.0
  %v1010 = vmax.f32 %v946, 0.0
  %v1011 = vmax.f32 %v947, 0.0
  %v1012 = vmax.f32 %v948, 0.0
  %v1013 = vmax.f32 %v949, 0.0
  %v1014 = vmax.f32 %v950, 0.0
  %v1015 = vmax.f32 %v951, 0.0
  %v1016 = vmax.f32 %v952, 0.0
  %v1017 = vmax.f32 %v953, 0.0
  %v1018 = vmax.f32 %v954, 0.0
  %v1019 = vmax.f32 %v955, 0.0
  %v1020 = vmax.f32 %v956, 0.0
  %v1021 = vmax.f32 %v957, 0.0
  %v1022 = vmax.f32 %v958, 0.0
  %v1023 = vmax.f32 %v959, 0.0
  %v1024 = vmax.f32 %v960, 0.0
  %v1025 = vmax.f32 %v961, 0.0
  %v1026 = vmax.f32 %v962, 0.0
  %v1027 = vmax.f32 %v963, 0.0
  %1028 = vst [vmem:[#allocation2] sm:$0xff] 0.0
  %1029 = vst [vmem:[#allocation2 + $0x8] sm:$0xff] 0.0
  %1030 = vst [vmem:[#allocation2 + $0x10] sm:$0x3] 0.0
  %1031 = vst [vmem:[#allocation2 + $0x18] sm:$0xff] 0.0
  %1032 = vst [vmem:[#allocation2 + $0x20] sm:$0xff] 0.0
  %1033 = vst [vmem:[#allocation2 + $0x28] sm:$0x3] 0.0
  %1034 = vst [vmem:[#allocation2 + $0x30] sm:$0xff] 0.0
  %1035 = vst [vmem:[#allocation2 + $0x38] sm:$0xff] 0.0
  %1036 = vst [vmem:[#allocation2 + $0x40] sm:$0x3] 0.0
  %1037 = vst [vmem:[#allocation2 + $0x48] sm:$0xff] 0.0
  %1038 = vst [vmem:[#allocation2 + $0x50] sm:$0xff] 0.0
  %1039 = vst [vmem:[#allocation2 + $0x58] sm:$0x3] 0.0
  %1040 = vst [vmem:[#allocation2 + $0x60] sm:$0xff] 0.0
  %1041 = vst [vmem:[#allocation2 + $0x68] sm:$0xff] 0.0
  %1042 = vst [vmem:[#allocation2 + $0x70] sm:$0x3] 0.0
  %1043 = vst [vmem:[#allocation2 + $0x78] sm:$0xff] 0.0
  %1044 = vst [vmem:[#allocation2 + $0x80] sm:$0xff] 0.0
  %1045 = vst [vmem:[#allocation2 + $0x88] sm:$0x3] 0.0
  %1046 = vst [vmem:[#allocation2 + $0x90] sm:$0xff] 0.0
  %1047 = vst [vmem:[#allocation2 + $0x98] sm:$0xff] 0.0
  %1048 = vst [vmem:[#allocation2 + $0xa0] sm:$0x3] 0.0
  %1049 = vst [vmem:[#allocation2 + $0xa8] sm:$0xff] 0.0
  %1050 = vst [vmem:[#allocation2 + $0xb0] sm:$0xff] 0.0
  %1051 = vst [vmem:[#allocation2 + $0xb8] sm:$0x3] 0.0
  %1052 = vst [vmem:[#allocation2 + $0xc0] sm:$0xff] 0.0
  %1053 = vst [vmem:[#allocation2 + $0xc8] sm:$0xff] 0.0
  %1054 = vst [vmem:[#allocation2 + $0xd0] sm:$0x3] 0.0
  %1055 = vst [vmem:[#allocation2 + $0xd8] sm:$0xff] 0.0
  %1056 = vst [vmem:[#allocation2 + $0xe0] sm:$0xff] 0.0
  %1057 = vst [vmem:[#allocation2 + $0xe8] sm:$0x3] 0.0
  %1058 = vst [vmem:[#allocation2 + $0xf0] sm:$0xff] 0.0
  %1059 = vst [vmem:[#allocation2 + $0xf8] sm:$0xff] 0.0
  %1060 = vst [vmem:[#allocation2 + $0x100] sm:$0x3] 0.0
  %1061 = vst [vmem:[#allocation2 + $0x108] sm:$0xff] 0.0
  %1062 = vst [vmem:[#allocation2 + $0x110] sm:$0xff] 0.0
  %1063 = vst [vmem:[#allocation2 + $0x118] sm:$0x3] 0.0
  %1064 = vst [vmem:[#allocation2 + $0x120] sm:$0xff] 0.0
  %1065 = vst [vmem:[#allocation2 + $0x128] sm:$0xff] 0.0
  %1066 = vst [vmem:[#allocation2 + $0x130] sm:$0x3] 0.0
  %1067 = vst [vmem:[#allocation2 + $0x138] sm:$0xff] 0.0
  %1068 = vst [vmem:[#allocation2 + $0x140] sm:$0xff] 0.0
  %1069 = vst [vmem:[#allocation2 + $0x148] sm:$0x3] 0.0
  %1070 = vst [vmem:[#allocation2 + $0x150] sm:$0xff] 0.0
  %1071 = vst [vmem:[#allocation2 + $0x158] sm:$0xff] 0.0
  %1072 = vst [vmem:[#allocation2 + $0x160] sm:$0x3] 0.0
  %1073 = vst [vmem:[#allocation2 + $0x168] sm:$0xff] 0.0
  %1074 = vst [vmem:[#allocation2 + $0x170] sm:$0xff] 0.0
  %1075 = vst [vmem:[#allocation2 + $0x178] sm:$0x3] 0.0
  %1076 = vst [vmem:[#allocation2 + $0x180] sm:$0xff] 0.0
  %1077 = vst [vmem:[#allocation2 + $0x188] sm:$0xff] 0.0
  %1078 = vst [vmem:[#allocation2 + $0x190] sm:$0x3] 0.0
  %1079 = vst [vmem:[#allocation2 + $0x198] sm:$0xff] 0.0
  %1080 = vst [vmem:[#allocation2 + $0x1a0] sm:$0xff] 0.0
  %1081 = vst [vmem:[#allocation2 + $0x1a8] sm:$0x3] 0.0
  %1082 = vst [vmem:[#allocation2 + $0x1b0] sm:$0xff] 0.0
  %1083 = vst [vmem:[#allocation2 + $0x1b8] sm:$0xff] 0.0
  %1084 = vst [vmem:[#allocation2 + $0x1c0] sm:$0x3] 0.0
  %1085 = vst [vmem:[#allocation2 + $0x1c8] sm:$0xff] 0.0
  %1086 = vst [vmem:[#allocation2 + $0x1d0] sm:$0xff] 0.0
  %1087 = vst [vmem:[#allocation2 + $0x1d8] sm:$0x3] 0.0
  %1088 = vst [vmem:[#allocation2 + $0x1e0] sm:$0xff] 0.0
  %1089 = vst [vmem:[#allocation2 + $0x1e8] sm:$0xff] 0.0
  %1090 = vst [vmem:[#allocation2 + $0x1f0] sm:$0x3] 0.0
  %1091 = vst [vmem:[#allocation2 + $0x1f8] sm:$0xff] 0.0
  %1092 = vst [vmem:[#allocation2 + $0x200] sm:$0xff] 0.0
  %1093 = vst [vmem:[#allocation2 + $0x208] sm:$0x3] 0.0
  %1094 = vst [vmem:[#allocation2 + $0x210] sm:$0xff] 0.0
  %1095 = vst [vmem:[#allocation2 + $0x218] sm:$0xff] 0.0
  %1096 = vst [vmem:[#allocation2 + $0x220] sm:$0x3] 0.0
  %1097 = vst [vmem:[#allocation2 + $0x228] sm:$0xff] 0.0
  %1098 = vst [vmem:[#allocation2 + $0x230] sm:$0xff] 0.0
  %1099 = vst [vmem:[#allocation2 + $0x238] sm:$0x3] 0.0
  %1100 = vst [vmem:[#allocation2 + $0x240] sm:$0xff] 0.0
  %1101 = vst [vmem:[#allocation2 + $0x248] sm:$0xff] 0.0
  %1102 = vst [vmem:[#allocation2 + $0x250] sm:$0x3] 0.0
  %1103 = vst [vmem:[#allocation2 + $0x258] sm:$0xff] 0.0
  %1104 = vst [vmem:[#allocation2 + $0x260] sm:$0xff] 0.0
  %1105 = vst [vmem:[#allocation2 + $0x268] sm:$0x3] 0.0
  %1106 = vst [vmem:[#allocation2 + $0x270] sm:$0xff] 0.0
  %1107 = vst [vmem:[#allocation2 + $0x278] sm:$0xff] 0.0
  %1108 = vst [vmem:[#allocation2 + $0x280] sm:$0x3] 0.0
  %1109 = vst [vmem:[#allocation2 + $0x288] sm:$0xff] 0.0
  %1110 = vst [vmem:[#allocation2 + $0x290] sm:$0xff] 0.0
  %1111 = vst [vmem:[#allocation2 + $0x298] sm:$0x3] 0.0
  %1112 = vst [vmem:[#allocation2 + $0x2a0] sm:$0xff] 0.0
  %1113 = vst [vmem:[#allocation2 + $0x2a8] sm:$0xff] 0.0
  %1114 = vst [vmem:[#allocation2 + $0x2b0] sm:$0x3] 0.0
  %1115 = vst [vmem:[#allocation2 + $0x2b8] sm:$0xff] 0.0
  %1116 = vst [vmem:[#allocation2 + $0x2c0] sm:$0xff] 0.0
  %1117 = vst [vmem:[#allocation2 + $0x2c8] sm:$0x3] 0.0
  %1118 = vst [vmem:[#allocation2 + $0x2d0] sm:$0xff] 0.0
  %1119 = vst [vmem:[#allocation2 + $0x2d8] sm:$0xff] 0.0
  %1120 = vst [vmem:[#allocation2 + $0x2e0] sm:$0x3] 0.0
  %1121 = vst [vmem:[#allocation2 + $0x2e8] sm:$0xff] 0.0
  %1122 = vst [vmem:[#allocation2 + $0x2f0] sm:$0xff] 0.0
  %1123 = vst [vmem:[#allocation2 + $0x2f8] sm:$0x3] 0.0
  %1124 = vst [vmem:[#allocation2 + $0x300] sm:$0xff] 0.0
  %1125 = vst [vmem:[#allocation2 + $0x308] sm:$0xff] 0.0
  %1126 = vst [vmem:[#allocation2 + $0x310] sm:$0x3] 0.0
  %1127 = vst [vmem:[#allocation2 + $0x318] sm:$0xff] 0.0
  %1128 = vst [vmem:[#allocation2 + $0x320] sm:$0xff] 0.0
  %1129 = vst [vmem:[#allocation2 + $0x328] sm:$0x3] 0.0
  %1130 = vst [vmem:[#allocation2 + $0x330] sm:$0xff] 0.0
  %1131 = vst [vmem:[#allocation2 + $0x338] sm:$0xff] 0.0
  %1132 = vst [vmem:[#allocation2 + $0x340] sm:$0x3] 0.0
  %1133 = vst [vmem:[#allocation2 + $0x348] sm:$0xff] 0.0
  %1134 = vst [vmem:[#allocation2 + $0x350] sm:$0xff] 0.0
  %1135 = vst [vmem:[#allocation2 + $0x358] sm:$0x3] 0.0
  %s1136 = scalar_lea.vmem [#allocation2], 24
  %1137 = vst [vmem:[%s1136 + $0x1] sm:$0xff] %v964
  %1138 = vst [vmem:[%s1136 + $0x9] sm:$0xff] %v965
  %1139 = vst [vmem:[%s1136 + $0x19] sm:$0xff] %v966
  %1140 = vst [vmem:[%s1136 + $0x21] sm:$0xff] %v967
  %1141 = vst [vmem:[%s1136 + $0x31] sm:$0xff] %v968
  %1142 = vst [vmem:[%s1136 + $0x39] sm:$0xff] %v969
  %1143 = vst [vmem:[%s1136 + $0x49] sm:$0xff] %v970
  %1144 = vst [vmem:[%s1136 + $0x51] sm:$0xff] %v971
  %1145 = vst [vmem:[%s1136 + $0x61] sm:$0xff] %v972
  %1146 = vst [vmem:[%s1136 + $0x69] sm:$0xff] %v973
  %1147 = vst [vmem:[%s1136 + $0x79] sm:$0xff] %v974
  %1148 = vst [vmem:[%s1136 + $0x81] sm:$0xff] %v975
  %1149 = vst [vmem:[%s1136 + $0x91] sm:$0xff] %v976
  %1150 = vst [vmem:[%s1136 + $0x99] sm:$0xff] %v977
  %1151 = vst [vmem:[%s1136 + $0xa9] sm:$0xff] %v978
  %1152 = vst [vmem:[%s1136 + $0xb1] sm:$0xff] %v979
  %1153 = vst [vmem:[%s1136 + $0xc1] sm:$0xff] %v980
  %1154 = vst [vmem:[%s1136 + $0xc9] sm:$0xff] %v981
  %1155 = vst [vmem:[%s1136 + $0xd9] sm:$0xff] %v982
  %1156 = vst [vmem:[%s1136 + $0xe1] sm:$0xff] %v983
  %1157 = vst [vmem:[%s1136 + $0xf1] sm:$0xff] %v984
  %1158 = vst [vmem:[%s1136 + $0xf9] sm:$0xff] %v985
  %1159 = vst [vmem:[%s1136 + $0x109] sm:$0xff] %v986
  %1160 = vst [vmem:[%s1136 + $0x111] sm:$0xff] %v987
  %1161 = vst [vmem:[%s1136 + $0x121] sm:$0xff] %v988
  %1162 = vst [vmem:[%s1136 + $0x129] sm:$0xff] %v989
  %1163 = vst [vmem:[%s1136 + $0x139] sm:$0xff] %v990
  %1164 = vst [vmem:[%s1136 + $0x141] sm:$0xff] %v991
  %1165 = vst [vmem:[%s1136 + $0x151] sm:$0xff] %v992
  %1166 = vst [vmem:[%s1136 + $0x159] sm:$0xff] %v993
  %1167 = vst [vmem:[%s1136 + $0x169] sm:$0xff] %v994
  %1168 = vst [vmem:[%s1136 + $0x171] sm:$0xff] %v995
  %1169 = vst [vmem:[%s1136 + $0x1b1] sm:$0xff] %v996
  %1170 = vst [vmem:[%s1136 + $0x1b9] sm:$0xff] %v997
  %1171 = vst [vmem:[%s1136 + $0x1c9] sm:$0xff] %v998
  %1172 = vst [vmem:[%s1136 + $0x1d1] sm:$0xff] %v999
  %1173 = vst [vmem:[%s1136 + $0x1e1] sm:$0xff] %v1000
  %1174 = vst [vmem:[%s1136 + $0x1e9] sm:$0xff] %v1001
  %1175 = vst [vmem:[%s1136 + $0x1f9] sm:$0xff] %v1002
  %1176 = vst [vmem:[%s1136 + $0x201] sm:$0xff] %v1003
  %1177 = vst [vmem:[%s1136 + $0x211] sm:$0xff] %v1004
  %1178 = vst [vmem:[%s1136 + $0x219] sm:$0xff] %v1005
  %1179 = vst [vmem:[%s1136 + $0x229] sm:$0xff] %v1006
  %1180 = vst [vmem:[%s1136 + $0x231] sm:$0xff] %v1007
  %1181 = vst [vmem:[%s1136 + $0x241] sm:$0xff] %v1008
  %1182 = vst [vmem:[%s1136 + $0x249] sm:$0xff] %v1009
  %1183 = vst [vmem:[%s1136 + $0x259] sm:$0xff] %v1010
  %1184 = vst [vmem:[%s1136 + $0x261] sm:$0xff] %v1011
  %1185 = vst [vmem:[%s1136 + $0x271] sm:$0xff] %v1012
  %1186 = vst [vmem:[%s1136 + $0x279] sm:$0xff] %v1013
  %1187 = vst [vmem:[%s1136 + $0x289] sm:$0xff] %v1014
  %1188 = vst [vmem:[%s1136 + $0x291] sm:$0xff] %v1015
  %1189 = vst [vmem:[%s1136 + $0x2a1] sm:$0xff] %v1016
  %1190 = vst [vmem:[%s1136 + $0x2a9] sm:$0xff] %v1017
  %1191 = vst [vmem:[%s1136 + $0x2b9] sm:$0xff] %v1018
  %1192 = vst [vmem:[%s1136 + $0x2c1] sm:$0xff] %v1019
  %1193 = vst [vmem:[%s1136 + $0x2d1] sm:$0xff] %v1020
  %1194 = vst [vmem:[%s1136 + $0x2d9] sm:$0xff] %v1021
  %1195 = vst [vmem:[%s1136 + $0x2e9] sm:$0xff] %v1022
  %1196 = vst [vmem:[%s1136 + $0x2f1] sm:$0xff] %v1023
  %1197 = vst [vmem:[%s1136 + $0x301] sm:$0xff] %v1024
  %1198 = vst [vmem:[%s1136 + $0x309] sm:$0xff] %v1025
  %1199 = vst [vmem:[%s1136 + $0x319] sm:$0xff] %v1026
  %1200 = vst [vmem:[%s1136 + $0x321] sm:$0xff] %v1027
  %v1201 = vld [vmem:[#allocation2] sm:$0xff]
  %v1202 = vld [vmem:[#allocation2 + $0x8] sm:$0xff]
  %v1203 = vld [vmem:[#allocation2 + $0x18] sm:$0xff]
  %v1204 = vld [vmem:[#allocation2 + $0x20] sm:$0xff]
  %v1205 = vld [vmem:[#allocation2 + $0x30] sm:$0xff]
  %v1206 = vld [vmem:[#allocation2 + $0x38] sm:$0xff]
  %v1207 = vld [vmem:[#allocation2 + $0x48] sm:$0xff]
  %v1208 = vld [vmem:[#allocation2 + $0x50] sm:$0xff]
  %v1209 = vld [vmem:[#allocation2 + $0x60] sm:$0xff]
  %v1210 = vld [vmem:[#allocation2 + $0x68] sm:$0xff]
  %v1211 = vld [vmem:[#allocation2 + $0x78] sm:$0xff]
  %v1212 = vld [vmem:[#allocation2 + $0x80] sm:$0xff]
  %v1213 = vld [vmem:[#allocation2 + $0x90] sm:$0xff]
  %v1214 = vld [vmem:[#allocation2 + $0x98] sm:$0xff]
  %v1215 = vld [vmem:[#allocation2 + $0xa8] sm:$0xff]
  %v1216 = vld [vmem:[#allocation2 + $0xb0] sm:$0xff]
  %v1217 = vld [vmem:[#allocation2 + $0xc0] sm:$0xff]
  %v1218 = vld [vmem:[#allocation2 + $0xc8] sm:$0xff]
  %v1219 = vld [vmem:[#allocation2 + $0xd8] sm:$0xff]
  %v1220 = vld [vmem:[#allocation2 + $0xe0] sm:$0xff]
  %v1221 = vld [vmem:[#allocation2 + $0xf0] sm:$0xff]
  %v1222 = vld [vmem:[#allocation2 + $0xf8] sm:$0xff]
  %v1223 = vld [vmem:[#allocation2 + $0x108] sm:$0xff]
  %v1224 = vld [vmem:[#allocation2 + $0x110] sm:$0xff]
  %v1225 = vld [vmem:[#allocation2 + $0x120] sm:$0xff]
  %v1226 = vld [vmem:[#allocation2 + $0x128] sm:$0xff]
  %v1227 = vld [vmem:[#allocation2 + $0x138] sm:$0xff]
  %v1228 = vld [vmem:[#allocation2 + $0x140] sm:$0xff]
  %v1229 = vld [vmem:[#allocation2 + $0x150] sm:$0xff]
  %v1230 = vld [vmem:[#allocation2 + $0x158] sm:$0xff]
  %v1231 = vld [vmem:[#allocation2 + $0x168] sm:$0xff]
  %v1232 = vld [vmem:[#allocation2 + $0x170] sm:$0xff]
  %v1233 = vld [vmem:[#allocation2 + $0x1b0] sm:$0xff]
  %v1234 = vld [vmem:[#allocation2 + $0x1b8] sm:$0xff]
  %v1235 = vld [vmem:[#allocation2 + $0x1c8] sm:$0xff]
  %v1236 = vld [vmem:[#allocation2 + $0x1d0] sm:$0xff]
  %v1237 = vld [vmem:[#allocation2 + $0x1e0] sm:$0xff]
  %v1238 = vld [vmem:[#allocation2 + $0x1e8] sm:$0xff]
  %v1239 = vld [vmem:[#allocation2 + $0x1f8] sm:$0xff]
  %v1240 = vld [vmem:[#allocation2 + $0x200] sm:$0xff]
  %v1241 = vld [vmem:[#allocation2 + $0x210] sm:$0xff]
  %v1242 = vld [vmem:[#allocation2 + $0x218] sm:$0xff]
  %v1243 = vld [vmem:[#allocation2 + $0x228] sm:$0xff]
  %v1244 = vld [vmem:[#allocation2 + $0x230] sm:$0xff]
  %v1245 = vld [vmem:[#allocation2 + $0x240] sm:$0xff]
  %v1246 = vld [vmem:[#allocation2 + $0x248] sm:$0xff]
  %v1247 = vld [vmem:[#allocation2 + $0x258] sm:$0xff]
  %v1248 = vld [vmem:[#allocation2 + $0x260] sm:$0xff]
  %v1249 = vld [vmem:[#allocation2 + $0x270] sm:$0xff]
  %v1250 = vld [vmem:[#allocation2 + $0x278] sm:$0xff]
  %v1251 = vld [vmem:[#allocation2 + $0x288] sm:$0xff]
  %v1252 = vld [vmem:[#allocation2 + $0x290] sm:$0xff]
  %v1253 = vld [vmem:[#allocation2 + $0x2a0] sm:$0xff]
  %v1254 = vld [vmem:[#allocation2 + $0x2a8] sm:$0xff]
  %v1255 = vld [vmem:[#allocation2 + $0x2b8] sm:$0xff]
  %v1256 = vld [vmem:[#allocation2 + $0x2c0] sm:$0xff]
  %v1257 = vld [vmem:[#allocation2 + $0x2d0] sm:$0xff]
  %v1258 = vld [vmem:[#allocation2 + $0x2d8] sm:$0xff]
  %v1259 = vld [vmem:[#allocation2 + $0x2e8] sm:$0xff]
  %v1260 = vld [vmem:[#allocation2 + $0x2f0] sm:$0xff]
  %v1261 = vld [vmem:[#allocation2 + $0x300] sm:$0xff]
  %v1262 = vld [vmem:[#allocation2 + $0x308] sm:$0xff]
  %v1263 = vld [vmem:[#allocation2 + $0x318] sm:$0xff]
  %v1264 = vld [vmem:[#allocation2 + $0x320] sm:$0xff]
  %v1265 = vpack.c.bf16 %v1202, %v1201
  %v1266 = vpack.c.bf16 %v1204, %v1203
  %v1267 = vpack.c.bf16 %v1206, %v1205
  %v1268 = vpack.c.bf16 %v1208, %v1207
  %v1269 = vpack.c.bf16 %v1210, %v1209
  %v1270 = vpack.c.bf16 %v1212, %v1211
  %v1271 = vpack.c.bf16 %v1214, %v1213
  %v1272 = vpack.c.bf16 %v1216, %v1215
  %v1273 = vpack.c.bf16 %v1218, %v1217
  %v1274 = vpack.c.bf16 %v1220, %v1219
  %v1275 = vpack.c.bf16 %v1222, %v1221
  %v1276 = vpack.c.bf16 %v1224, %v1223
  %v1277 = vpack.c.bf16 %v1226, %v1225
  %v1278 = vpack.c.bf16 %v1228, %v1227
  %v1279 = vpack.c.bf16 %v1230, %v1229
  %v1280 = vpack.c.bf16 %v1232, %v1231
  %v1281 = vpack.c.bf16 %v1234, %v1233
  %v1282 = vpack.c.bf16 %v1236, %v1235
  %v1283 = vpack.c.bf16 %v1238, %v1237
  %v1284 = vpack.c.bf16 %v1240, %v1239
  %v1285 = vpack.c.bf16 %v1242, %v1241
  %v1286 = vpack.c.bf16 %v1244, %v1243
  %v1287 = vpack.c.bf16 %v1246, %v1245
  %v1288 = vpack.c.bf16 %v1248, %v1247
  %v1289 = vpack.c.bf16 %v1250, %v1249
  %v1290 = vpack.c.bf16 %v1252, %v1251
  %v1291 = vpack.c.bf16 %v1254, %v1253
  %v1292 = vpack.c.bf16 %v1256, %v1255
  %v1293 = vpack.c.bf16 %v1258, %v1257
  %v1294 = vpack.c.bf16 %v1260, %v1259
  %v1295 = vpack.c.bf16 %v1262, %v1261
  %v1296 = vpack.c.bf16 %v1264, %v1263
  %v1297 = vld [vmem:[%s2] sm:$0xf]
  %v1298 = vld [vmem:[%s2 + $0x4] sm:$0xf]
  %v1299 = vld [vmem:[%s2 + $0x8] sm:$0xf]
  %v1300 = vld [vmem:[%s2 + $0xc] sm:$0xf]
  %v1301 = vld [vmem:[%s2 + $0x10] sm:$0xf]
  %v1302 = vld [vmem:[%s2 + $0x14] sm:$0xf]
  %v1303 = vld [vmem:[%s2 + $0x18] sm:$0xf]
  %v1304 = vld [vmem:[%s2 + $0x1c] sm:$0xf]
  %v1305 = vld [vmem:[%s2 + $0x20] sm:$0xf]
  %v1306 = vld [vmem:[%s2 + $0x24] sm:$0xf]
  %v1307 = vld [vmem:[%s2 + $0x28] sm:$0xf]
  %v1308 = vld [vmem:[%s2 + $0x2c] sm:$0xf]
  %v1309 = vld [vmem:[%s2 + $0x30] sm:$0xf]
  %v1310 = vld [vmem:[%s2 + $0x34] sm:$0xf]
  %v1311 = vld [vmem:[%s2 + $0x38] sm:$0xf]
  %v1312 = vld [vmem:[%s2 + $0x3c] sm:$0xf]
  %v1313 = vld [vmem:[#allocation2 + $0x1] sm:$0xff]
  %v1314 = vld [vmem:[#allocation2 + $0x9] sm:$0xff]
  %v1315 = vld [vmem:[#allocation2 + $0x19] sm:$0xff]
  %v1316 = vld [vmem:[#allocation2 + $0x21] sm:$0xff]
  %v1317 = vld [vmem:[#allocation2 + $0x31] sm:$0xff]
  %v1318 = vld [vmem:[#allocation2 + $0x39] sm:$0xff]
  %v1319 = vld [vmem:[#allocation2 + $0x49] sm:$0xff]
  %v1320 = vld [vmem:[#allocation2 + $0x51] sm:$0xff]
  %v1321 = vld [vmem:[#allocation2 + $0x61] sm:$0xff]
  %v1322 = vld [vmem:[#allocation2 + $0x69] sm:$0xff]
  %v1323 = vld [vmem:[#allocation2 + $0x79] sm:$0xff]
  %v1324 = vld [vmem:[#allocation2 + $0x81] sm:$0xff]
  %v1325 = vld [vmem:[#allocation2 + $0x91] sm:$0xff]
  %v1326 = vld [vmem:[#allocation2 + $0x99] sm:$0xff]
  %v1327 = vld [vmem:[#allocation2 + $0xa9] sm:$0xff]
  %v1328 = vld [vmem:[#allocation2 + $0xb1] sm:$0xff]
  %v1329 = vld [vmem:[#allocation2 + $0xc1] sm:$0xff]
  %v1330 = vld [vmem:[#allocation2 + $0xc9] sm:$0xff]
  %v1331 = vld [vmem:[#allocation2 + $0xd9] sm:$0xff]
  %v1332 = vld [vmem:[#allocation2 + $0xe1] sm:$0xff]
  %v1333 = vld [vmem:[#allocation2 + $0xf1] sm:$0xff]
  %v1334 = vld [vmem:[#allocation2 + $0xf9] sm:$0xff]
  %v1335 = vld [vmem:[#allocation2 + $0x109] sm:$0xff]
  %v1336 = vld [vmem:[#allocation2 + $0x111] sm:$0xff]
  %v1337 = vld [vmem:[#allocation2 + $0x121] sm:$0xff]
  %v1338 = vld [vmem:[#allocation2 + $0x129] sm:$0xff]
  %v1339 = vld [vmem:[#allocation2 + $0x139] sm:$0xff]
  %v1340 = vld [vmem:[#allocation2 + $0x141] sm:$0xff]
  %v1341 = vld [vmem:[#allocation2 + $0x151] sm:$0xff]
  %v1342 = vld [vmem:[#allocation2 + $0x159] sm:$0xff]
  %v1343 = vld [vmem:[#allocation2 + $0x169] sm:$0xff]
  %v1344 = vld [vmem:[#allocation2 + $0x171] sm:$0xff]
  %v1345 = vld [vmem:[#allocation2 + $0x1b1] sm:$0xff]
  %v1346 = vld [vmem:[#allocation2 + $0x1b9] sm:$0xff]
  %v1347 = vld [vmem:[#allocation2 + $0x1c9] sm:$0xff]
  %v1348 = vld [vmem:[#allocation2 + $0x1d1] sm:$0xff]
  %v1349 = vld [vmem:[#allocation2 + $0x1e1] sm:$0xff]
  %v1350 = vld [vmem:[#allocation2 + $0x1e9] sm:$0xff]
  %v1351 = vld [vmem:[#allocation2 + $0x1f9] sm:$0xff]
  %v1352 = vld [vmem:[#allocation2 + $0x201] sm:$0xff]
  %v1353 = vld [vmem:[#allocation2 + $0x211] sm:$0xff]
  %v1354 = vld [vmem:[#allocation2 + $0x219] sm:$0xff]
  %v1355 = vld [vmem:[#allocation2 + $0x229] sm:$0xff]
  %v1356 = vld [vmem:[#allocation2 + $0x231] sm:$0xff]
  %v1357 = vld [vmem:[#allocation2 + $0x241] sm:$0xff]
  %v1358 = vld [vmem:[#allocation2 + $0x249] sm:$0xff]
  %v1359 = vld [vmem:[#allocation2 + $0x259] sm:$0xff]
  %v1360 = vld [vmem:[#allocation2 + $0x261] sm:$0xff]
  %v1361 = vld [vmem:[#allocation2 + $0x271] sm:$0xff]
  %v1362 = vld [vmem:[#allocation2 + $0x279] sm:$0xff]
  %v1363 = vld [vmem:[#allocation2 + $0x289] sm:$0xff]
  %v1364 = vld [vmem:[#allocation2 + $0x291] sm:$0xff]
  %v1365 = vld [vmem:[#allocation2 + $0x2a1] sm:$0xff]
  %v1366 = vld [vmem:[#allocation2 + $0x2a9] sm:$0xff]
  %v1367 = vld [vmem:[#allocation2 + $0x2b9] sm:$0xff]
  %v1368 = vld [vmem:[#allocation2 + $0x2c1] sm:$0xff]
  %v1369 = vld [vmem:[#allocation2 + $0x2d1] sm:$0xff]
  %v1370 = vld [vmem:[#allocation2 + $0x2d9] sm:$0xff]
  %v1371 = vld [vmem:[#allocation2 + $0x2e9] sm:$0xff]
  %v1372 = vld [vmem:[#allocation2 + $0x2f1] sm:$0xff]
  %v1373 = vld [vmem:[#allocation2 + $0x301] sm:$0xff]
  %v1374 = vld [vmem:[#allocation2 + $0x309] sm:$0xff]
  %v1375 = vld [vmem:[#allocation2 + $0x319] sm:$0xff]
  %v1376 = vld [vmem:[#allocation2 + $0x321] sm:$0xff]
  %v1377 = vpack.c.bf16 %v1314, %v1313
  %v1378 = vpack.c.bf16 %v1316, %v1315
  %v1379 = vpack.c.bf16 %v1318, %v1317
  %v1380 = vpack.c.bf16 %v1320, %v1319
  %v1381 = vpack.c.bf16 %v1322, %v1321
  %v1382 = vpack.c.bf16 %v1324, %v1323
  %v1383 = vpack.c.bf16 %v1326, %v1325
  %v1384 = vpack.c.bf16 %v1328, %v1327
  %v1385 = vpack.c.bf16 %v1330, %v1329
  %v1386 = vpack.c.bf16 %v1332, %v1331
  %v1387 = vpack.c.bf16 %v1334, %v1333
  %v1388 = vpack.c.bf16 %v1336, %v1335
  %v1389 = vpack.c.bf16 %v1338, %v1337
  %v1390 = vpack.c.bf16 %v1340, %v1339
  %v1391 = vpack.c.bf16 %v1342, %v1341
  %v1392 = vpack.c.bf16 %v1344, %v1343
  %v1393 = vpack.c.bf16 %v1346, %v1345
  %v1394 = vpack.c.bf16 %v1348, %v1347
  %v1395 = vpack.c.bf16 %v1350, %v1349
  %v1396 = vpack.c.bf16 %v1352, %v1351
  %v1397 = vpack.c.bf16 %v1354, %v1353
  %v1398 = vpack.c.bf16 %v1356, %v1355
  %v1399 = vpack.c.bf16 %v1358, %v1357
  %v1400 = vpack.c.bf16 %v1360, %v1359
  %v1401 = vpack.c.bf16 %v1362, %v1361
  %v1402 = vpack.c.bf16 %v1364, %v1363
  %v1403 = vpack.c.bf16 %v1366, %v1365
  %v1404 = vpack.c.bf16 %v1368, %v1367
  %v1405 = vpack.c.bf16 %v1370, %v1369
  %v1406 = vpack.c.bf16 %v1372, %v1371
  %v1407 = vpack.c.bf16 %v1374, %v1373
  %v1408 = vpack.c.bf16 %v1376, %v1375
  %s1409 = scalar_lea.vmem %s2, 64
  %v1410 = vld [vmem:[%s1409] sm:$0xf]
  %v1411 = vld [vmem:[%s1409 + $0x4] sm:$0xf]
  %v1412 = vld [vmem:[%s1409 + $0x8] sm:$0xf]
  %v1413 = vld [vmem:[%s1409 + $0xc] sm:$0xf]
  %v1414 = vld [vmem:[%s1409 + $0x10] sm:$0xf]
  %v1415 = vld [vmem:[%s1409 + $0x14] sm:$0xf]
  %v1416 = vld [vmem:[%s1409 + $0x18] sm:$0xf]
  %v1417 = vld [vmem:[%s1409 + $0x1c] sm:$0xf]
  %v1418 = vld [vmem:[%s1409 + $0x20] sm:$0xf]
  %v1419 = vld [vmem:[%s1409 + $0x24] sm:$0xf]
  %v1420 = vld [vmem:[%s1409 + $0x28] sm:$0xf]
  %v1421 = vld [vmem:[%s1409 + $0x2c] sm:$0xf]
  %v1422 = vld [vmem:[%s1409 + $0x30] sm:$0xf]
  %v1423 = vld [vmem:[%s1409 + $0x34] sm:$0xf]
  %v1424 = vld [vmem:[%s1409 + $0x38] sm:$0xf]
  %v1425 = vld [vmem:[%s1409 + $0x3c] sm:$0xf]
  %v1442 = vunpack.c.l.b16 %v1410
  %v1443 = vunpack.c.l.b16 %v1411
  %v1444 = vunpack.c.l.b16 %v1412
  %v1445 = vunpack.c.l.b16 %v1413
  %v1446 = vunpack.c.l.b16 %v1414
  %v1447 = vunpack.c.l.b16 %v1415
  %v1448 = vunpack.c.l.b16 %v1416
  %v1449 = vunpack.c.l.b16 %v1417
  %v1450 = vunpack.c.l.b16 %v1418
  %v1451 = vunpack.c.l.b16 %v1419
  %v1452 = vunpack.c.l.b16 %v1420
  %v1453 = vunpack.c.l.b16 %v1421
  %v1454 = vunpack.c.l.b16 %v1422
  %v1455 = vunpack.c.l.b16 %v1423
  %v1456 = vunpack.c.l.b16 %v1424
  %v1457 = vunpack.c.l.b16 %v1425
  %v1458 = vpack.c.b16 %v1443, %v1442
  %v1459 = vpack.c.b16 %v1445, %v1444
  %v1460 = vpack.c.b16 %v1447, %v1446
  %v1461 = vpack.c.b16 %v1449, %v1448
  %v1462 = vpack.c.b16 %v1451, %v1450
  %v1463 = vpack.c.b16 %v1453, %v1452
  %v1464 = vpack.c.b16 %v1455, %v1454
  %v1465 = vpack.c.b16 %v1457, %v1456
  %1474 = vmatprep.subr.bf16.mxu0 0
  %1475 = vmatpush1.bf16.msra.mxu0 %v1465
  %1476 = vmatprep.subr.bf16.mxu0 0
  %1477 = vmatpush1.bf16.msra.mxu0 %v1464
  %1478 = vmatprep.subr.bf16.mxu0 0
  %1479 = vmatpush1.bf16.msra.mxu0 %v1463
  %1480 = vmatprep.subr.bf16.mxu0 0
  %1481 = vmatpush1.bf16.msra.mxu0 %v1462
  %1482 = vmatprep.subr.bf16.mxu0 0
  %1483 = vmatpush1.bf16.msra.mxu0 %v1461
  %1484 = vmatprep.subr.bf16.mxu0 0
  %1485 = vmatpush1.bf16.msra.mxu0 %v1460
  %1486 = vmatprep.subr.bf16.mxu0 0
  %1487 = vmatpush1.bf16.msra.mxu0 %v1459
  %1488 = vmatprep.subr.bf16.mxu0 0
  %1489 = vmatpush1.bf16.msra.mxu0 %v1458
  %1490 = vmatprep.subr.bf16.mxu0 0
  %1491 = vmatpush2.bf16.msra.mxu0 0
  %1492 = vmatprep.subr.bf16.mxu0 0
  %1493 = vmatpush2.bf16.msra.mxu0 0
  %1494 = vmatprep.subr.bf16.mxu0 0
  %1495 = vmatpush2.bf16.msra.mxu0 0
  %1496 = vmatprep.subr.bf16.mxu0 0
  %1497 = vmatpush2.bf16.msra.mxu0 0
  %1498 = vmatprep.subr.bf16.mxu0 0
  %1499 = vmatpush2.bf16.msra.mxu0 0
  %1500 = vmatprep.subr.bf16.mxu0 0
  %1501 = vmatpush2.bf16.msra.mxu0 0
  %1502 = vmatprep.subr.bf16.mxu0 0
  %1503 = vmatpush2.bf16.msra.mxu0 0
  %1504 = vmatprep.subr.bf16.mxu0 0
  %1505 = vmatpush2.bf16.msra.mxu0 0
  %1506 = vmatprep.mubr.bf16.mxu0 0
  %1507 = vmatmul.mubr.bf16.gmra.mxu0 %v1377
  %v1508 = vpop.f32.mrf.mxu0
  %v1509 = vadd.f32 0.0, %v1508
  %v1510 = vpop.f32.mrf.mxu0
  %v1511 = vpop.f32.mrf.mxu0
  %v1512 = vadd.f32 0.0, %v1511
  %v1513 = vpop.f32.mrf.mxu0
  %1514 = vmatprep.mubr.bf16.mxu0 0
  %1515 = vmatmul.mubr.bf16.gmra.mxu0 %v1378
  %v1516 = vpop.f32.mrf.mxu0
  %v1517 = vadd.f32 0.0, %v1516
  %v1518 = vpop.f32.mrf.mxu0
  %v1519 = vpop.f32.mrf.mxu0
  %v1520 = vadd.f32 0.0, %v1519
  %v1521 = vpop.f32.mrf.mxu0
  %1522 = vmatprep.mubr.bf16.mxu0 0
  %1523 = vmatmul.mubr.bf16.gmra.mxu0 %v1379
  %v1524 = vpop.f32.mrf.mxu0
  %v1525 = vadd.f32 0.0, %v1524
  %v1526 = vpop.f32.mrf.mxu0
  %v1527 = vpop.f32.mrf.mxu0
  %v1528 = vadd.f32 0.0, %v1527
  %v1529 = vpop.f32.mrf.mxu0
  %1530 = vmatprep.mubr.bf16.mxu0 0
  %1531 = vmatmul.mubr.bf16.gmra.mxu0 %v1380
  %v1532 = vpop.f32.mrf.mxu0
  %v1533 = vadd.f32 0.0, %v1532
  %v1534 = vpop.f32.mrf.mxu0
  %v1535 = vpop.f32.mrf.mxu0
  %v1536 = vadd.f32 0.0, %v1535
  %v1537 = vpop.f32.mrf.mxu0
  %1538 = vmatprep.mubr.bf16.mxu0 0
  %1539 = vmatmul.mubr.bf16.gmra.mxu0 %v1381
  %v1540 = vpop.f32.mrf.mxu0
  %v1541 = vadd.f32 0.0, %v1540
  %v1542 = vpop.f32.mrf.mxu0
  %v1543 = vpop.f32.mrf.mxu0
  %v1544 = vadd.f32 0.0, %v1543
  %v1545 = vpop.f32.mrf.mxu0
  %1546 = vmatprep.mubr.bf16.mxu0 0
  %1547 = vmatmul.mubr.bf16.gmra.mxu0 %v1382
  %v1548 = vpop.f32.mrf.mxu0
  %v1549 = vadd.f32 0.0, %v1548
  %v1550 = vpop.f32.mrf.mxu0
  %v1551 = vpop.f32.mrf.mxu0
  %v1552 = vadd.f32 0.0, %v1551
  %v1553 = vpop.f32.mrf.mxu0
  %1554 = vmatprep.mubr.bf16.mxu0 0
  %1555 = vmatmul.mubr.bf16.gmra.mxu0 %v1383
  %v1556 = vpop.f32.mrf.mxu0
  %v1557 = vadd.f32 0.0, %v1556
  %v1558 = vpop.f32.mrf.mxu0
  %v1559 = vpop.f32.mrf.mxu0
  %v1560 = vadd.f32 0.0, %v1559
  %v1561 = vpop.f32.mrf.mxu0
  %1562 = vmatprep.mubr.bf16.mxu0 0
  %1563 = vmatmul.mubr.bf16.gmra.mxu0 %v1384
  %v1564 = vpop.f32.mrf.mxu0
  %v1565 = vadd.f32 0.0, %v1564
  %v1566 = vpop.f32.mrf.mxu0
  %v1567 = vpop.f32.mrf.mxu0
  %v1568 = vadd.f32 0.0, %v1567
  %v1569 = vpop.f32.mrf.mxu0
  %1570 = vmatprep.mubr.bf16.mxu0 0
  %1571 = vmatmul.mubr.bf16.gmra.mxu0 %v1385
  %v1572 = vpop.f32.mrf.mxu0
  %v1573 = vadd.f32 0.0, %v1572
  %v1574 = vpop.f32.mrf.mxu0
  %v1575 = vpop.f32.mrf.mxu0
  %v1576 = vadd.f32 0.0, %v1575
  %v1577 = vpop.f32.mrf.mxu0
  %1578 = vmatprep.mubr.bf16.mxu0 0
  %1579 = vmatmul.mubr.bf16.gmra.mxu0 %v1386
  %v1580 = vpop.f32.mrf.mxu0
  %v1581 = vadd.f32 0.0, %v1580
  %v1582 = vpop.f32.mrf.mxu0
  %v1583 = vpop.f32.mrf.mxu0
  %v1584 = vadd.f32 0.0, %v1583
  %v1585 = vpop.f32.mrf.mxu0
  %1586 = vmatprep.mubr.bf16.mxu0 0
  %1587 = vmatmul.mubr.bf16.gmra.mxu0 %v1387
  %v1588 = vpop.f32.mrf.mxu0
  %v1589 = vadd.f32 0.0, %v1588
  %v1590 = vpop.f32.mrf.mxu0
  %v1591 = vpop.f32.mrf.mxu0
  %v1592 = vadd.f32 0.0, %v1591
  %v1593 = vpop.f32.mrf.mxu0
  %1594 = vmatprep.mubr.bf16.mxu0 0
  %1595 = vmatmul.mubr.bf16.gmra.mxu0 %v1388
  %v1596 = vpop.f32.mrf.mxu0
  %v1597 = vadd.f32 0.0, %v1596
  %v1598 = vpop.f32.mrf.mxu0
  %v1599 = vpop.f32.mrf.mxu0
  %v1600 = vadd.f32 0.0, %v1599
  %v1601 = vpop.f32.mrf.mxu0
  %1602 = vmatprep.mubr.bf16.mxu0 0
  %1603 = vmatmul.mubr.bf16.gmra.mxu0 %v1389
  %v1604 = vpop.f32.mrf.mxu0
  %v1605 = vadd.f32 0.0, %v1604
  %v1606 = vpop.f32.mrf.mxu0
  %v1607 = vpop.f32.mrf.mxu0
  %v1608 = vadd.f32 0.0, %v1607
  %v1609 = vpop.f32.mrf.mxu0
  %1610 = vmatprep.mubr.bf16.mxu0 0
  %1611 = vmatmul.mubr.bf16.gmra.mxu0 %v1390
  %v1612 = vpop.f32.mrf.mxu0
  %v1613 = vadd.f32 0.0, %v1612
  %v1614 = vpop.f32.mrf.mxu0
  %v1615 = vpop.f32.mrf.mxu0
  %v1616 = vadd.f32 0.0, %v1615
  %v1617 = vpop.f32.mrf.mxu0
  %1618 = vmatprep.mubr.bf16.mxu0 0
  %1619 = vmatmul.mubr.bf16.gmra.mxu0 %v1391
  %v1620 = vpop.f32.mrf.mxu0
  %v1621 = vadd.f32 0.0, %v1620
  %v1622 = vpop.f32.mrf.mxu0
  %v1623 = vpop.f32.mrf.mxu0
  %v1624 = vadd.f32 0.0, %v1623
  %v1625 = vpop.f32.mrf.mxu0
  %1626 = vmatprep.mubr.bf16.mxu0 0
  %1627 = vmatmul.mubr.bf16.gmra.mxu0 %v1392
  %v1628 = vpop.f32.mrf.mxu0
  %v1629 = vadd.f32 0.0, %v1628
  %v1630 = vpop.f32.mrf.mxu0
  %v1631 = vpop.f32.mrf.mxu0
  %v1632 = vadd.f32 0.0, %v1631
  %v1633 = vpop.f32.mrf.mxu0
  %1634 = vmatprep.mubr.bf16.mxu0 0
  %1635 = vmatmul.mubr.bf16.gmra.mxu0 %v1393
  %v1636 = vpop.f32.mrf.mxu0
  %v1637 = vadd.f32 0.0, %v1636
  %v1638 = vpop.f32.mrf.mxu0
  %v1639 = vpop.f32.mrf.mxu0
  %v1640 = vadd.f32 0.0, %v1639
  %v1641 = vpop.f32.mrf.mxu0
  %1642 = vmatprep.mubr.bf16.mxu0 0
  %1643 = vmatmul.mubr.bf16.gmra.mxu0 %v1394
  %v1644 = vpop.f32.mrf.mxu0
  %v1645 = vadd.f32 0.0, %v1644
  %v1646 = vpop.f32.mrf.mxu0
  %v1647 = vpop.f32.mrf.mxu0
  %v1648 = vadd.f32 0.0, %v1647
  %v1649 = vpop.f32.mrf.mxu0
  %1650 = vmatprep.mubr.bf16.mxu0 0
  %1651 = vmatmul.mubr.bf16.gmra.mxu0 %v1395
  %v1652 = vpop.f32.mrf.mxu0
  %v1653 = vadd.f32 0.0, %v1652
  %v1654 = vpop.f32.mrf.mxu0
  %v1655 = vpop.f32.mrf.mxu0
  %v1656 = vadd.f32 0.0, %v1655
  %v1657 = vpop.f32.mrf.mxu0
  %1658 = vmatprep.mubr.bf16.mxu0 0
  %1659 = vmatmul.mubr.bf16.gmra.mxu0 %v1396
  %v1660 = vpop.f32.mrf.mxu0
  %v1661 = vadd.f32 0.0, %v1660
  %v1662 = vpop.f32.mrf.mxu0
  %v1663 = vpop.f32.mrf.mxu0
  %v1664 = vadd.f32 0.0, %v1663
  %v1665 = vpop.f32.mrf.mxu0
  %1666 = vmatprep.mubr.bf16.mxu0 0
  %1667 = vmatmul.mubr.bf16.gmra.mxu0 %v1397
  %v1668 = vpop.f32.mrf.mxu0
  %v1669 = vadd.f32 0.0, %v1668
  %v1670 = vpop.f32.mrf.mxu0
  %v1671 = vpop.f32.mrf.mxu0
  %v1672 = vadd.f32 0.0, %v1671
  %v1673 = vpop.f32.mrf.mxu0
  %1674 = vmatprep.mubr.bf16.mxu0 0
  %1675 = vmatmul.mubr.bf16.gmra.mxu0 %v1398
  %v1676 = vpop.f32.mrf.mxu0
  %v1677 = vadd.f32 0.0, %v1676
  %v1678 = vpop.f32.mrf.mxu0
  %v1679 = vpop.f32.mrf.mxu0
  %v1680 = vadd.f32 0.0, %v1679
  %v1681 = vpop.f32.mrf.mxu0
  %1682 = vmatprep.mubr.bf16.mxu0 0
  %1683 = vmatmul.mubr.bf16.gmra.mxu0 %v1399
  %v1684 = vpop.f32.mrf.mxu0
  %v1685 = vadd.f32 0.0, %v1684
  %v1686 = vpop.f32.mrf.mxu0
  %v1687 = vpop.f32.mrf.mxu0
  %v1688 = vadd.f32 0.0, %v1687
  %v1689 = vpop.f32.mrf.mxu0
  %1690 = vmatprep.mubr.bf16.mxu0 0
  %1691 = vmatmul.mubr.bf16.gmra.mxu0 %v1400
  %v1692 = vpop.f32.mrf.mxu0
  %v1693 = vadd.f32 0.0, %v1692
  %v1694 = vpop.f32.mrf.mxu0
  %v1695 = vpop.f32.mrf.mxu0
  %v1696 = vadd.f32 0.0, %v1695
  %v1697 = vpop.f32.mrf.mxu0
  %1698 = vmatprep.mubr.bf16.mxu0 0
  %1699 = vmatmul.mubr.bf16.gmra.mxu0 %v1401
  %v1700 = vpop.f32.mrf.mxu0
  %v1701 = vadd.f32 0.0, %v1700
  %v1702 = vpop.f32.mrf.mxu0
  %v1703 = vpop.f32.mrf.mxu0
  %v1704 = vadd.f32 0.0, %v1703
  %v1705 = vpop.f32.mrf.mxu0
  %1706 = vmatprep.mubr.bf16.mxu0 0
  %1707 = vmatmul.mubr.bf16.gmra.mxu0 %v1402
  %v1708 = vpop.f32.mrf.mxu0
  %v1709 = vadd.f32 0.0, %v1708
  %v1710 = vpop.f32.mrf.mxu0
  %v1711 = vpop.f32.mrf.mxu0
  %v1712 = vadd.f32 0.0, %v1711
  %v1713 = vpop.f32.mrf.mxu0
  %1714 = vmatprep.mubr.bf16.mxu0 0
  %1715 = vmatmul.mubr.bf16.gmra.mxu0 %v1403
  %v1716 = vpop.f32.mrf.mxu0
  %v1717 = vadd.f32 0.0, %v1716
  %v1718 = vpop.f32.mrf.mxu0
  %v1719 = vpop.f32.mrf.mxu0
  %v1720 = vadd.f32 0.0, %v1719
  %v1721 = vpop.f32.mrf.mxu0
  %1722 = vmatprep.mubr.bf16.mxu0 0
  %1723 = vmatmul.mubr.bf16.gmra.mxu0 %v1404
  %v1724 = vpop.f32.mrf.mxu0
  %v1725 = vadd.f32 0.0, %v1724
  %v1726 = vpop.f32.mrf.mxu0
  %v1727 = vpop.f32.mrf.mxu0
  %v1728 = vadd.f32 0.0, %v1727
  %v1729 = vpop.f32.mrf.mxu0
  %1730 = vmatprep.mubr.bf16.mxu0 0
  %1731 = vmatmul.mubr.bf16.gmra.mxu0 %v1405
  %v1732 = vpop.f32.mrf.mxu0
  %v1733 = vadd.f32 0.0, %v1732
  %v1734 = vpop.f32.mrf.mxu0
  %v1735 = vpop.f32.mrf.mxu0
  %v1736 = vadd.f32 0.0, %v1735
  %v1737 = vpop.f32.mrf.mxu0
  %1738 = vmatprep.mubr.bf16.mxu0 0
  %1739 = vmatmul.mubr.bf16.gmra.mxu0 %v1406
  %v1740 = vpop.f32.mrf.mxu0
  %v1741 = vadd.f32 0.0, %v1740
  %v1742 = vpop.f32.mrf.mxu0
  %v1743 = vpop.f32.mrf.mxu0
  %v1744 = vadd.f32 0.0, %v1743
  %v1745 = vpop.f32.mrf.mxu0
  %1746 = vmatprep.mubr.bf16.mxu0 0
  %1747 = vmatmul.mubr.bf16.gmra.mxu0 %v1407
  %v1748 = vpop.f32.mrf.mxu0
  %v1749 = vadd.f32 0.0, %v1748
  %v1750 = vpop.f32.mrf.mxu0
  %v1751 = vpop.f32.mrf.mxu0
  %v1752 = vadd.f32 0.0, %v1751
  %v1753 = vpop.f32.mrf.mxu0
  %1754 = vmatprep.mubr.bf16.mxu0 0
  %1755 = vmatmul.mubr.bf16.gmra.mxu0 %v1408
  %v1756 = vpop.f32.mrf.mxu0
  %v1757 = vadd.f32 0.0, %v1756
  %v1758 = vpop.f32.mrf.mxu0
  %v1759 = vpop.f32.mrf.mxu0
  %v1760 = vadd.f32 0.0, %v1759
  %v1761 = vpop.f32.mrf.mxu0
  %1762 = vdwg.mxu0
  %v1779 = vunpack.c.l.b16 %v1297
  %v1780 = vunpack.c.l.b16 %v1298
  %v1781 = vunpack.c.l.b16 %v1299
  %v1782 = vunpack.c.l.b16 %v1300
  %v1783 = vunpack.c.l.b16 %v1301
  %v1784 = vunpack.c.l.b16 %v1302
  %v1785 = vunpack.c.l.b16 %v1303
  %v1786 = vunpack.c.l.b16 %v1304
  %v1787 = vunpack.c.l.b16 %v1305
  %v1788 = vunpack.c.l.b16 %v1306
  %v1789 = vunpack.c.l.b16 %v1307
  %v1790 = vunpack.c.l.b16 %v1308
  %v1791 = vunpack.c.l.b16 %v1309
  %v1792 = vunpack.c.l.b16 %v1310
  %v1793 = vunpack.c.l.b16 %v1311
  %v1794 = vunpack.c.l.b16 %v1312
  %v1795 = vpack.c.b16 %v1780, %v1779
  %v1796 = vpack.c.b16 %v1782, %v1781
  %v1797 = vpack.c.b16 %v1784, %v1783
  %v1798 = vpack.c.b16 %v1786, %v1785
  %v1799 = vpack.c.b16 %v1788, %v1787
  %v1800 = vpack.c.b16 %v1790, %v1789
  %v1801 = vpack.c.b16 %v1792, %v1791
  %v1802 = vpack.c.b16 %v1794, %v1793
  %1811 = vmatprep.subr.bf16.mxu0 0
  %1812 = vmatpush1.bf16.msra.mxu0 %v1802
  %1813 = vmatprep.subr.bf16.mxu0 0
  %1814 = vmatpush1.bf16.msra.mxu0 %v1801
  %1815 = vmatprep.subr.bf16.mxu0 0
  %1816 = vmatpush1.bf16.msra.mxu0 %v1800
  %1817 = vmatprep.subr.bf16.mxu0 0
  %1818 = vmatpush1.bf16.msra.mxu0 %v1799
  %1819 = vmatprep.subr.bf16.mxu0 0
  %1820 = vmatpush1.bf16.msra.mxu0 %v1798
  %1821 = vmatprep.subr.bf16.mxu0 0
  %1822 = vmatpush1.bf16.msra.mxu0 %v1797
  %1823 = vmatprep.subr.bf16.mxu0 0
  %1824 = vmatpush1.bf16.msra.mxu0 %v1796
  %1825 = vmatprep.subr.bf16.mxu0 0
  %1826 = vmatpush1.bf16.msra.mxu0 %v1795
  %1827 = vmatprep.subr.bf16.mxu0 0
  %1828 = vmatpush2.bf16.msra.mxu0 0
  %1829 = vmatprep.subr.bf16.mxu0 0
  %1830 = vmatpush2.bf16.msra.mxu0 0
  %1831 = vmatprep.subr.bf16.mxu0 0
  %1832 = vmatpush2.bf16.msra.mxu0 0
  %1833 = vmatprep.subr.bf16.mxu0 0
  %1834 = vmatpush2.bf16.msra.mxu0 0
  %1835 = vmatprep.subr.bf16.mxu0 0
  %1836 = vmatpush2.bf16.msra.mxu0 0
  %1837 = vmatprep.subr.bf16.mxu0 0
  %1838 = vmatpush2.bf16.msra.mxu0 0
  %1839 = vmatprep.subr.bf16.mxu0 0
  %1840 = vmatpush2.bf16.msra.mxu0 0
  %1841 = vmatprep.subr.bf16.mxu0 0
  %1842 = vmatpush2.bf16.msra.mxu0 0
  %1843 = vmatprep.mubr.bf16.mxu0 0
  %1844 = vmatmul.mubr.bf16.gmra.mxu0 %v1265
  %v1845 = vpop.f32.mrf.mxu0
  %v1846 = vadd.f32 %v1509, %v1845
  %v1847 = vpop.f32.mrf.mxu0
  %v1848 = vpop.f32.mrf.mxu0
  %v1849 = vadd.f32 %v1512, %v1848
  %v1850 = vpop.f32.mrf.mxu0
  %1851 = vmatprep.mubr.bf16.mxu0 0
  %1852 = vmatmul.mubr.bf16.gmra.mxu0 %v1266
  %v1853 = vpop.f32.mrf.mxu0
  %v1854 = vadd.f32 %v1517, %v1853
  %v1855 = vpop.f32.mrf.mxu0
  %v1856 = vpop.f32.mrf.mxu0
  %v1857 = vadd.f32 %v1520, %v1856
  %v1858 = vpop.f32.mrf.mxu0
  %1859 = vmatprep.mubr.bf16.mxu0 0
  %1860 = vmatmul.mubr.bf16.gmra.mxu0 %v1267
  %v1861 = vpop.f32.mrf.mxu0
  %v1862 = vadd.f32 %v1525, %v1861
  %v1863 = vpop.f32.mrf.mxu0
  %v1864 = vpop.f32.mrf.mxu0
  %v1865 = vadd.f32 %v1528, %v1864
  %v1866 = vpop.f32.mrf.mxu0
  %1867 = vmatprep.mubr.bf16.mxu0 0
  %1868 = vmatmul.mubr.bf16.gmra.mxu0 %v1268
  %v1869 = vpop.f32.mrf.mxu0
  %v1870 = vadd.f32 %v1533, %v1869
  %v1871 = vpop.f32.mrf.mxu0
  %v1872 = vpop.f32.mrf.mxu0
  %v1873 = vadd.f32 %v1536, %v1872
  %v1874 = vpop.f32.mrf.mxu0
  %1875 = vmatprep.mubr.bf16.mxu0 0
  %1876 = vmatmul.mubr.bf16.gmra.mxu0 %v1269
  %v1877 = vpop.f32.mrf.mxu0
  %v1878 = vadd.f32 %v1541, %v1877
  %v1879 = vpop.f32.mrf.mxu0
  %v1880 = vpop.f32.mrf.mxu0
  %v1881 = vadd.f32 %v1544, %v1880
  %v1882 = vpop.f32.mrf.mxu0
  %1883 = vmatprep.mubr.bf16.mxu0 0
  %1884 = vmatmul.mubr.bf16.gmra.mxu0 %v1270
  %v1885 = vpop.f32.mrf.mxu0
  %v1886 = vadd.f32 %v1549, %v1885
  %v1887 = vpop.f32.mrf.mxu0
  %v1888 = vpop.f32.mrf.mxu0
  %v1889 = vadd.f32 %v1552, %v1888
  %v1890 = vpop.f32.mrf.mxu0
  %1891 = vmatprep.mubr.bf16.mxu0 0
  %1892 = vmatmul.mubr.bf16.gmra.mxu0 %v1271
  %v1893 = vpop.f32.mrf.mxu0
  %v1894 = vadd.f32 %v1557, %v1893
  %v1895 = vpop.f32.mrf.mxu0
  %v1896 = vpop.f32.mrf.mxu0
  %v1897 = vadd.f32 %v1560, %v1896
  %v1898 = vpop.f32.mrf.mxu0
  %1899 = vmatprep.mubr.bf16.mxu0 0
  %1900 = vmatmul.mubr.bf16.gmra.mxu0 %v1272
  %v1901 = vpop.f32.mrf.mxu0
  %v1902 = vadd.f32 %v1565, %v1901
  %v1903 = vpop.f32.mrf.mxu0
  %v1904 = vpop.f32.mrf.mxu0
  %v1905 = vadd.f32 %v1568, %v1904
  %v1906 = vpop.f32.mrf.mxu0
  %1907 = vmatprep.mubr.bf16.mxu0 0
  %1908 = vmatmul.mubr.bf16.gmra.mxu0 %v1273
  %v1909 = vpop.f32.mrf.mxu0
  %v1910 = vadd.f32 %v1573, %v1909
  %v1911 = vpop.f32.mrf.mxu0
  %v1912 = vpop.f32.mrf.mxu0
  %v1913 = vadd.f32 %v1576, %v1912
  %v1914 = vpop.f32.mrf.mxu0
  %1915 = vmatprep.mubr.bf16.mxu0 0
  %1916 = vmatmul.mubr.bf16.gmra.mxu0 %v1274
  %v1917 = vpop.f32.mrf.mxu0
  %v1918 = vadd.f32 %v1581, %v1917
  %v1919 = vpop.f32.mrf.mxu0
  %v1920 = vpop.f32.mrf.mxu0
  %v1921 = vadd.f32 %v1584, %v1920
  %v1922 = vpop.f32.mrf.mxu0
  %1923 = vmatprep.mubr.bf16.mxu0 0
  %1924 = vmatmul.mubr.bf16.gmra.mxu0 %v1275
  %v1925 = vpop.f32.mrf.mxu0
  %v1926 = vadd.f32 %v1589, %v1925
  %v1927 = vpop.f32.mrf.mxu0
  %v1928 = vpop.f32.mrf.mxu0
  %v1929 = vadd.f32 %v1592, %v1928
  %v1930 = vpop.f32.mrf.mxu0
  %1931 = vmatprep.mubr.bf16.mxu0 0
  %1932 = vmatmul.mubr.bf16.gmra.mxu0 %v1276
  %v1933 = vpop.f32.mrf.mxu0
  %v1934 = vadd.f32 %v1597, %v1933
  %v1935 = vpop.f32.mrf.mxu0
  %v1936 = vpop.f32.mrf.mxu0
  %v1937 = vadd.f32 %v1600, %v1936
  %v1938 = vpop.f32.mrf.mxu0
  %1939 = vmatprep.mubr.bf16.mxu0 0
  %1940 = vmatmul.mubr.bf16.gmra.mxu0 %v1277
  %v1941 = vpop.f32.mrf.mxu0
  %v1942 = vadd.f32 %v1605, %v1941
  %v1943 = vpop.f32.mrf.mxu0
  %v1944 = vpop.f32.mrf.mxu0
  %v1945 = vadd.f32 %v1608, %v1944
  %v1946 = vpop.f32.mrf.mxu0
  %1947 = vmatprep.mubr.bf16.mxu0 0
  %1948 = vmatmul.mubr.bf16.gmra.mxu0 %v1278
  %v1949 = vpop.f32.mrf.mxu0
  %v1950 = vadd.f32 %v1613, %v1949
  %v1951 = vpop.f32.mrf.mxu0
  %v1952 = vpop.f32.mrf.mxu0
  %v1953 = vadd.f32 %v1616, %v1952
  %v1954 = vpop.f32.mrf.mxu0
  %1955 = vmatprep.mubr.bf16.mxu0 0
  %1956 = vmatmul.mubr.bf16.gmra.mxu0 %v1279
  %v1957 = vpop.f32.mrf.mxu0
  %v1958 = vadd.f32 %v1621, %v1957
  %v1959 = vpop.f32.mrf.mxu0
  %v1960 = vpop.f32.mrf.mxu0
  %v1961 = vadd.f32 %v1624, %v1960
  %v1962 = vpop.f32.mrf.mxu0
  %1963 = vmatprep.mubr.bf16.mxu0 0
  %1964 = vmatmul.mubr.bf16.gmra.mxu0 %v1280
  %v1965 = vpop.f32.mrf.mxu0
  %v1966 = vadd.f32 %v1629, %v1965
  %v1967 = vpop.f32.mrf.mxu0
  %v1968 = vpop.f32.mrf.mxu0
  %v1969 = vadd.f32 %v1632, %v1968
  %v1970 = vpop.f32.mrf.mxu0
  %1971 = vmatprep.mubr.bf16.mxu0 0
  %1972 = vmatmul.mubr.bf16.gmra.mxu0 %v1281
  %v1973 = vpop.f32.mrf.mxu0
  %v1974 = vadd.f32 %v1637, %v1973
  %v1975 = vpop.f32.mrf.mxu0
  %v1976 = vpop.f32.mrf.mxu0
  %v1977 = vadd.f32 %v1640, %v1976
  %v1978 = vpop.f32.mrf.mxu0
  %1979 = vmatprep.mubr.bf16.mxu0 0
  %1980 = vmatmul.mubr.bf16.gmra.mxu0 %v1282
  %v1981 = vpop.f32.mrf.mxu0
  %v1982 = vadd.f32 %v1645, %v1981
  %v1983 = vpop.f32.mrf.mxu0
  %v1984 = vpop.f32.mrf.mxu0
  %v1985 = vadd.f32 %v1648, %v1984
  %v1986 = vpop.f32.mrf.mxu0
  %1987 = vmatprep.mubr.bf16.mxu0 0
  %1988 = vmatmul.mubr.bf16.gmra.mxu0 %v1283
  %v1989 = vpop.f32.mrf.mxu0
  %v1990 = vadd.f32 %v1653, %v1989
  %v1991 = vpop.f32.mrf.mxu0
  %v1992 = vpop.f32.mrf.mxu0
  %v1993 = vadd.f32 %v1656, %v1992
  %v1994 = vpop.f32.mrf.mxu0
  %1995 = vmatprep.mubr.bf16.mxu0 0
  %1996 = vmatmul.mubr.bf16.gmra.mxu0 %v1284
  %v1997 = vpop.f32.mrf.mxu0
  %v1998 = vadd.f32 %v1661, %v1997
  %v1999 = vpop.f32.mrf.mxu0
  %v2000 = vpop.f32.mrf.mxu0
  %v2001 = vadd.f32 %v1664, %v2000
  %v2002 = vpop.f32.mrf.mxu0
  %2003 = vmatprep.mubr.bf16.mxu0 0
  %2004 = vmatmul.mubr.bf16.gmra.mxu0 %v1285
  %v2005 = vpop.f32.mrf.mxu0
  %v2006 = vadd.f32 %v1669, %v2005
  %v2007 = vpop.f32.mrf.mxu0
  %v2008 = vpop.f32.mrf.mxu0
  %v2009 = vadd.f32 %v1672, %v2008
  %v2010 = vpop.f32.mrf.mxu0
  %2011 = vmatprep.mubr.bf16.mxu0 0
  %2012 = vmatmul.mubr.bf16.gmra.mxu0 %v1286
  %v2013 = vpop.f32.mrf.mxu0
  %v2014 = vadd.f32 %v1677, %v2013
  %v2015 = vpop.f32.mrf.mxu0
  %v2016 = vpop.f32.mrf.mxu0
  %v2017 = vadd.f32 %v1680, %v2016
  %v2018 = vpop.f32.mrf.mxu0
  %2019 = vmatprep.mubr.bf16.mxu0 0
  %2020 = vmatmul.mubr.bf16.gmra.mxu0 %v1287
  %v2021 = vpop.f32.mrf.mxu0
  %v2022 = vadd.f32 %v1685, %v2021
  %v2023 = vpop.f32.mrf.mxu0
  %v2024 = vpop.f32.mrf.mxu0
  %v2025 = vadd.f32 %v1688, %v2024
  %v2026 = vpop.f32.mrf.mxu0
  %2027 = vmatprep.mubr.bf16.mxu0 0
  %2028 = vmatmul.mubr.bf16.gmra.mxu0 %v1288
  %v2029 = vpop.f32.mrf.mxu0
  %v2030 = vadd.f32 %v1693, %v2029
  %v2031 = vpop.f32.mrf.mxu0
  %v2032 = vpop.f32.mrf.mxu0
  %v2033 = vadd.f32 %v1696, %v2032
  %v2034 = vpop.f32.mrf.mxu0
  %2035 = vmatprep.mubr.bf16.mxu0 0
  %2036 = vmatmul.mubr.bf16.gmra.mxu0 %v1289
  %v2037 = vpop.f32.mrf.mxu0
  %v2038 = vadd.f32 %v1701, %v2037
  %v2039 = vpop.f32.mrf.mxu0
  %v2040 = vpop.f32.mrf.mxu0
  %v2041 = vadd.f32 %v1704, %v2040
  %v2042 = vpop.f32.mrf.mxu0
  %2043 = vmatprep.mubr.bf16.mxu0 0
  %2044 = vmatmul.mubr.bf16.gmra.mxu0 %v1290
  %v2045 = vpop.f32.mrf.mxu0
  %v2046 = vadd.f32 %v1709, %v2045
  %v2047 = vpop.f32.mrf.mxu0
  %v2048 = vpop.f32.mrf.mxu0
  %v2049 = vadd.f32 %v1712, %v2048
  %v2050 = vpop.f32.mrf.mxu0
  %2051 = vmatprep.mubr.bf16.mxu0 0
  %2052 = vmatmul.mubr.bf16.gmra.mxu0 %v1291
  %v2053 = vpop.f32.mrf.mxu0
  %v2054 = vadd.f32 %v1717, %v2053
  %v2055 = vpop.f32.mrf.mxu0
  %v2056 = vpop.f32.mrf.mxu0
  %v2057 = vadd.f32 %v1720, %v2056
  %v2058 = vpop.f32.mrf.mxu0
  %2059 = vmatprep.mubr.bf16.mxu0 0
  %2060 = vmatmul.mubr.bf16.gmra.mxu0 %v1292
  %v2061 = vpop.f32.mrf.mxu0
  %v2062 = vadd.f32 %v1725, %v2061
  %v2063 = vpop.f32.mrf.mxu0
  %v2064 = vpop.f32.mrf.mxu0
  %v2065 = vadd.f32 %v1728, %v2064
  %v2066 = vpop.f32.mrf.mxu0
  %2067 = vmatprep.mubr.bf16.mxu0 0
  %2068 = vmatmul.mubr.bf16.gmra.mxu0 %v1293
  %v2069 = vpop.f32.mrf.mxu0
  %v2070 = vadd.f32 %v1733, %v2069
  %v2071 = vpop.f32.mrf.mxu0
  %v2072 = vpop.f32.mrf.mxu0
  %v2073 = vadd.f32 %v1736, %v2072
  %v2074 = vpop.f32.mrf.mxu0
  %2075 = vmatprep.mubr.bf16.mxu0 0
  %2076 = vmatmul.mubr.bf16.gmra.mxu0 %v1294
  %v2077 = vpop.f32.mrf.mxu0
  %v2078 = vadd.f32 %v1741, %v2077
  %v2079 = vpop.f32.mrf.mxu0
  %v2080 = vpop.f32.mrf.mxu0
  %v2081 = vadd.f32 %v1744, %v2080
  %v2082 = vpop.f32.mrf.mxu0
  %2083 = vmatprep.mubr.bf16.mxu0 0
  %2084 = vmatmul.mubr.bf16.gmra.mxu0 %v1295
  %v2085 = vpop.f32.mrf.mxu0
  %v2086 = vadd.f32 %v1749, %v2085
  %v2087 = vpop.f32.mrf.mxu0
  %v2088 = vpop.f32.mrf.mxu0
  %v2089 = vadd.f32 %v1752, %v2088
  %v2090 = vpop.f32.mrf.mxu0
  %2091 = vmatprep.mubr.bf16.mxu0 0
  %2092 = vmatmul.mubr.bf16.gmra.mxu0 %v1296
  %v2093 = vpop.f32.mrf.mxu0
  %v2094 = vadd.f32 %v1757, %v2093
  %v2095 = vpop.f32.mrf.mxu0
  %v2096 = vpop.f32.mrf.mxu0
  %v2097 = vadd.f32 %v1760, %v2096
  %v2098 = vpop.f32.mrf.mxu0
  %2099 = vdwg.mxu0
  %v2100 = vld [vmem:[#allocation2 + $0x2] sm:$0xff]
  %v2101 = vld [vmem:[#allocation2 + $0xa] sm:$0xff]
  %v2102 = vld [vmem:[#allocation2 + $0x1a] sm:$0xff]
  %v2103 = vld [vmem:[#allocation2 + $0x22] sm:$0xff]
  %v2104 = vld [vmem:[#allocation2 + $0x32] sm:$0xff]
  %v2105 = vld [vmem:[#allocation2 + $0x3a] sm:$0xff]
  %v2106 = vld [vmem:[#allocation2 + $0x4a] sm:$0xff]
  %v2107 = vld [vmem:[#allocation2 + $0x52] sm:$0xff]
  %v2108 = vld [vmem:[#allocation2 + $0x62] sm:$0xff]
  %v2109 = vld [vmem:[#allocation2 + $0x6a] sm:$0xff]
  %v2110 = vld [vmem:[#allocation2 + $0x7a] sm:$0xff]
  %v2111 = vld [vmem:[#allocation2 + $0x82] sm:$0xff]
  %v2112 = vld [vmem:[#allocation2 + $0x92] sm:$0xff]
  %v2113 = vld [vmem:[#allocation2 + $0x9a] sm:$0xff]
  %v2114 = vld [vmem:[#allocation2 + $0xaa] sm:$0xff]
  %v2115 = vld [vmem:[#allocation2 + $0xb2] sm:$0xff]
  %v2116 = vld [vmem:[#allocation2 + $0xc2] sm:$0xff]
  %v2117 = vld [vmem:[#allocation2 + $0xca] sm:$0xff]
  %v2118 = vld [vmem:[#allocation2 + $0xda] sm:$0xff]
  %v2119 = vld [vmem:[#allocation2 + $0xe2] sm:$0xff]
  %v2120 = vld [vmem:[#allocation2 + $0xf2] sm:$0xff]
  %v2121 = vld [vmem:[#allocation2 + $0xfa] sm:$0xff]
  %v2122 = vld [vmem:[#allocation2 + $0x10a] sm:$0xff]
  %v2123 = vld [vmem:[#allocation2 + $0x112] sm:$0xff]
  %v2124 = vld [vmem:[#allocation2 + $0x122] sm:$0xff]
  %v2125 = vld [vmem:[#allocation2 + $0x12a] sm:$0xff]
  %v2126 = vld [vmem:[#allocation2 + $0x13a] sm:$0xff]
  %v2127 = vld [vmem:[#allocation2 + $0x142] sm:$0xff]
  %v2128 = vld [vmem:[#allocation2 + $0x152] sm:$0xff]
  %v2129 = vld [vmem:[#allocation2 + $0x15a] sm:$0xff]
  %v2130 = vld [vmem:[#allocation2 + $0x16a] sm:$0xff]
  %v2131 = vld [vmem:[#allocation2 + $0x172] sm:$0xff]
  %v2132 = vld [vmem:[#allocation2 + $0x1b2] sm:$0xff]
  %v2133 = vld [vmem:[#allocation2 + $0x1ba] sm:$0xff]
  %v2134 = vld [vmem:[#allocation2 + $0x1ca] sm:$0xff]
  %v2135 = vld [vmem:[#allocation2 + $0x1d2] sm:$0xff]
  %v2136 = vld [vmem:[#allocation2 + $0x1e2] sm:$0xff]
  %v2137 = vld [vmem:[#allocation2 + $0x1ea] sm:$0xff]
  %v2138 = vld [vmem:[#allocation2 + $0x1fa] sm:$0xff]
  %v2139 = vld [vmem:[#allocation2 + $0x202] sm:$0xff]
  %v2140 = vld [vmem:[#allocation2 + $0x212] sm:$0xff]
  %v2141 = vld [vmem:[#allocation2 + $0x21a] sm:$0xff]
  %v2142 = vld [vmem:[#allocation2 + $0x22a] sm:$0xff]
  %v2143 = vld [vmem:[#allocation2 + $0x232] sm:$0xff]
  %v2144 = vld [vmem:[#allocation2 + $0x242] sm:$0xff]
  %v2145 = vld [vmem:[#allocation2 + $0x24a] sm:$0xff]
  %v2146 = vld [vmem:[#allocation2 + $0x25a] sm:$0xff]
  %v2147 = vld [vmem:[#allocation2 + $0x262] sm:$0xff]
  %v2148 = vld [vmem:[#allocation2 + $0x272] sm:$0xff]
  %v2149 = vld [vmem:[#allocation2 + $0x27a] sm:$0xff]
  %v2150 = vld [vmem:[#allocation2 + $0x28a] sm:$0xff]
  %v2151 = vld [vmem:[#allocation2 + $0x292] sm:$0xff]
  %v2152 = vld [vmem:[#allocation2 + $0x2a2] sm:$0xff]
  %v2153 = vld [vmem:[#allocation2 + $0x2aa] sm:$0xff]
  %v2154 = vld [vmem:[#allocation2 + $0x2ba] sm:$0xff]
  %v2155 = vld [vmem:[#allocation2 + $0x2c2] sm:$0xff]
  %v2156 = vld [vmem:[#allocation2 + $0x2d2] sm:$0xff]
  %v2157 = vld [vmem:[#allocation2 + $0x2da] sm:$0xff]
  %v2158 = vld [vmem:[#allocation2 + $0x2ea] sm:$0xff]
  %v2159 = vld [vmem:[#allocation2 + $0x2f2] sm:$0xff]
  %v2160 = vld [vmem:[#allocation2 + $0x302] sm:$0xff]
  %v2161 = vld [vmem:[#allocation2 + $0x30a] sm:$0xff]
  %v2162 = vld [vmem:[#allocation2 + $0x31a] sm:$0xff]
  %v2163 = vld [vmem:[#allocation2 + $0x322] sm:$0xff]
  %v2164 = vpack.c.bf16 %v2101, %v2100
  %v2165 = vpack.c.bf16 %v2103, %v2102
  %v2166 = vpack.c.bf16 %v2105, %v2104
  %v2167 = vpack.c.bf16 %v2107, %v2106
  %v2168 = vpack.c.bf16 %v2109, %v2108
  %v2169 = vpack.c.bf16 %v2111, %v2110
  %v2170 = vpack.c.bf16 %v2113, %v2112
  %v2171 = vpack.c.bf16 %v2115, %v2114
  %v2172 = vpack.c.bf16 %v2117, %v2116
  %v2173 = vpack.c.bf16 %v2119, %v2118
  %v2174 = vpack.c.bf16 %v2121, %v2120
  %v2175 = vpack.c.bf16 %v2123, %v2122
  %v2176 = vpack.c.bf16 %v2125, %v2124
  %v2177 = vpack.c.bf16 %v2127, %v2126
  %v2178 = vpack.c.bf16 %v2129, %v2128
  %v2179 = vpack.c.bf16 %v2131, %v2130
  %v2180 = vpack.c.bf16 %v2133, %v2132
  %v2181 = vpack.c.bf16 %v2135, %v2134
  %v2182 = vpack.c.bf16 %v2137, %v2136
  %v2183 = vpack.c.bf16 %v2139, %v2138
  %v2184 = vpack.c.bf16 %v2141, %v2140
  %v2185 = vpack.c.bf16 %v2143, %v2142
  %v2186 = vpack.c.bf16 %v2145, %v2144
  %v2187 = vpack.c.bf16 %v2147, %v2146
  %v2188 = vpack.c.bf16 %v2149, %v2148
  %v2189 = vpack.c.bf16 %v2151, %v2150
  %v2190 = vpack.c.bf16 %v2153, %v2152
  %v2191 = vpack.c.bf16 %v2155, %v2154
  %v2192 = vpack.c.bf16 %v2157, %v2156
  %v2193 = vpack.c.bf16 %v2159, %v2158
  %v2194 = vpack.c.bf16 %v2161, %v2160
  %v2195 = vpack.c.bf16 %v2163, %v2162
  %s2196 = scalar_lea.vmem %s2, 128
  %v2197 = vld [vmem:[%s2196] sm:$0xf]
  %v2198 = vld [vmem:[%s2196 + $0x4] sm:$0xf]
  %v2199 = vld [vmem:[%s2196 + $0x8] sm:$0xf]
  %v2200 = vld [vmem:[%s2196 + $0xc] sm:$0xf]
  %v2201 = vld [vmem:[%s2196 + $0x10] sm:$0xf]
  %v2202 = vld [vmem:[%s2196 + $0x14] sm:$0xf]
  %v2203 = vld [vmem:[%s2196 + $0x18] sm:$0xf]
  %v2204 = vld [vmem:[%s2196 + $0x1c] sm:$0xf]
  %v2205 = vld [vmem:[%s2196 + $0x20] sm:$0xf]
  %v2206 = vld [vmem:[%s2196 + $0x24] sm:$0xf]
  %v2207 = vld [vmem:[%s2196 + $0x28] sm:$0xf]
  %v2208 = vld [vmem:[%s2196 + $0x2c] sm:$0xf]
  %v2209 = vld [vmem:[%s2196 + $0x30] sm:$0xf]
  %v2210 = vld [vmem:[%s2196 + $0x34] sm:$0xf]
  %v2211 = vld [vmem:[%s2196 + $0x38] sm:$0xf]
  %v2212 = vld [vmem:[%s2196 + $0x3c] sm:$0xf]
  %v2229 = vunpack.c.l.b16 %v2197
  %v2230 = vunpack.c.l.b16 %v2198
  %v2231 = vunpack.c.l.b16 %v2199
  %v2232 = vunpack.c.l.b16 %v2200
  %v2233 = vunpack.c.l.b16 %v2201
  %v2234 = vunpack.c.l.b16 %v2202
  %v2235 = vunpack.c.l.b16 %v2203
  %v2236 = vunpack.c.l.b16 %v2204
  %v2237 = vunpack.c.l.b16 %v2205
  %v2238 = vunpack.c.l.b16 %v2206
  %v2239 = vunpack.c.l.b16 %v2207
  %v2240 = vunpack.c.l.b16 %v2208
  %v2241 = vunpack.c.l.b16 %v2209
  %v2242 = vunpack.c.l.b16 %v2210
  %v2243 = vunpack.c.l.b16 %v2211
  %v2244 = vunpack.c.l.b16 %v2212
  %v2245 = vpack.c.b16 %v2230, %v2229
  %v2246 = vpack.c.b16 %v2232, %v2231
  %v2247 = vpack.c.b16 %v2234, %v2233
  %v2248 = vpack.c.b16 %v2236, %v2235
  %v2249 = vpack.c.b16 %v2238, %v2237
  %v2250 = vpack.c.b16 %v2240, %v2239
  %v2251 = vpack.c.b16 %v2242, %v2241
  %v2252 = vpack.c.b16 %v2244, %v2243
  %2261 = vmatprep.subr.bf16.mxu0 0
  %2262 = vmatpush1.bf16.msra.mxu0 %v2252
  %2263 = vmatprep.subr.bf16.mxu0 0
  %2264 = vmatpush1.bf16.msra.mxu0 %v2251
  %2265 = vmatprep.subr.bf16.mxu0 0
  %2266 = vmatpush1.bf16.msra.mxu0 %v2250
  %2267 = vmatprep.subr.bf16.mxu0 0
  %2268 = vmatpush1.bf16.msra.mxu0 %v2249
  %2269 = vmatprep.subr.bf16.mxu0 0
  %2270 = vmatpush1.bf16.msra.mxu0 %v2248
  %2271 = vmatprep.subr.bf16.mxu0 0
  %2272 = vmatpush1.bf16.msra.mxu0 %v2247
  %2273 = vmatprep.subr.bf16.mxu0 0
  %2274 = vmatpush1.bf16.msra.mxu0 %v2246
  %2275 = vmatprep.subr.bf16.mxu0 0
  %2276 = vmatpush1.bf16.msra.mxu0 %v2245
  %2277 = vmatprep.subr.bf16.mxu0 0
  %2278 = vmatpush2.bf16.msra.mxu0 0
  %2279 = vmatprep.subr.bf16.mxu0 0
  %2280 = vmatpush2.bf16.msra.mxu0 0
  %2281 = vmatprep.subr.bf16.mxu0 0
  %2282 = vmatpush2.bf16.msra.mxu0 0
  %2283 = vmatprep.subr.bf16.mxu0 0
  %2284 = vmatpush2.bf16.msra.mxu0 0
  %2285 = vmatprep.subr.bf16.mxu0 0
  %2286 = vmatpush2.bf16.msra.mxu0 0
  %2287 = vmatprep.subr.bf16.mxu0 0
  %2288 = vmatpush2.bf16.msra.mxu0 0
  %2289 = vmatprep.subr.bf16.mxu0 0
  %2290 = vmatpush2.bf16.msra.mxu0 0
  %2291 = vmatprep.subr.bf16.mxu0 0
  %2292 = vmatpush2.bf16.msra.mxu0 0
  %2293 = vmatprep.mubr.bf16.mxu0 0
  %2294 = vmatmul.mubr.bf16.gmra.mxu0 %v2164
  %v2295 = vpop.f32.mrf.mxu0
  %v2296 = vadd.f32 0.0, %v2295
  %v2297 = vpop.f32.mrf.mxu0
  %v2298 = vpop.f32.mrf.mxu0
  %v2299 = vadd.f32 0.0, %v2298
  %v2300 = vpop.f32.mrf.mxu0
  %2301 = vmatprep.mubr.bf16.mxu0 0
  %2302 = vmatmul.mubr.bf16.gmra.mxu0 %v2165
  %v2303 = vpop.f32.mrf.mxu0
  %v2304 = vadd.f32 0.0, %v2303
  %v2305 = vpop.f32.mrf.mxu0
  %v2306 = vpop.f32.mrf.mxu0
  %v2307 = vadd.f32 0.0, %v2306
  %v2308 = vpop.f32.mrf.mxu0
  %2309 = vmatprep.mubr.bf16.mxu0 0
  %2310 = vmatmul.mubr.bf16.gmra.mxu0 %v2166
  %v2311 = vpop.f32.mrf.mxu0
  %v2312 = vadd.f32 0.0, %v2311
  %v2313 = vpop.f32.mrf.mxu0
  %v2314 = vpop.f32.mrf.mxu0
  %v2315 = vadd.f32 0.0, %v2314
  %v2316 = vpop.f32.mrf.mxu0
  %2317 = vmatprep.mubr.bf16.mxu0 0
  %2318 = vmatmul.mubr.bf16.gmra.mxu0 %v2167
  %v2319 = vpop.f32.mrf.mxu0
  %v2320 = vadd.f32 0.0, %v2319
  %v2321 = vpop.f32.mrf.mxu0
  %v2322 = vpop.f32.mrf.mxu0
  %v2323 = vadd.f32 0.0, %v2322
  %v2324 = vpop.f32.mrf.mxu0
  %2325 = vmatprep.mubr.bf16.mxu0 0
  %2326 = vmatmul.mubr.bf16.gmra.mxu0 %v2168
  %v2327 = vpop.f32.mrf.mxu0
  %v2328 = vadd.f32 0.0, %v2327
  %v2329 = vpop.f32.mrf.mxu0
  %v2330 = vpop.f32.mrf.mxu0
  %v2331 = vadd.f32 0.0, %v2330
  %v2332 = vpop.f32.mrf.mxu0
  %2333 = vmatprep.mubr.bf16.mxu0 0
  %2334 = vmatmul.mubr.bf16.gmra.mxu0 %v2169
  %v2335 = vpop.f32.mrf.mxu0
  %v2336 = vadd.f32 0.0, %v2335
  %v2337 = vpop.f32.mrf.mxu0
  %v2338 = vpop.f32.mrf.mxu0
  %v2339 = vadd.f32 0.0, %v2338
  %v2340 = vpop.f32.mrf.mxu0
  %2341 = vmatprep.mubr.bf16.mxu0 0
  %2342 = vmatmul.mubr.bf16.gmra.mxu0 %v2170
  %v2343 = vpop.f32.mrf.mxu0
  %v2344 = vadd.f32 0.0, %v2343
  %v2345 = vpop.f32.mrf.mxu0
  %v2346 = vpop.f32.mrf.mxu0
  %v2347 = vadd.f32 0.0, %v2346
  %v2348 = vpop.f32.mrf.mxu0
  %2349 = vmatprep.mubr.bf16.mxu0 0
  %2350 = vmatmul.mubr.bf16.gmra.mxu0 %v2171
  %v2351 = vpop.f32.mrf.mxu0
  %v2352 = vadd.f32 0.0, %v2351
  %v2353 = vpop.f32.mrf.mxu0
  %v2354 = vpop.f32.mrf.mxu0
  %v2355 = vadd.f32 0.0, %v2354
  %v2356 = vpop.f32.mrf.mxu0
  %2357 = vmatprep.mubr.bf16.mxu0 0
  %2358 = vmatmul.mubr.bf16.gmra.mxu0 %v2172
  %v2359 = vpop.f32.mrf.mxu0
  %v2360 = vadd.f32 0.0, %v2359
  %v2361 = vpop.f32.mrf.mxu0
  %v2362 = vpop.f32.mrf.mxu0
  %v2363 = vadd.f32 0.0, %v2362
  %v2364 = vpop.f32.mrf.mxu0
  %2365 = vmatprep.mubr.bf16.mxu0 0
  %2366 = vmatmul.mubr.bf16.gmra.mxu0 %v2173
  %v2367 = vpop.f32.mrf.mxu0
  %v2368 = vadd.f32 0.0, %v2367
  %v2369 = vpop.f32.mrf.mxu0
  %v2370 = vpop.f32.mrf.mxu0
  %v2371 = vadd.f32 0.0, %v2370
  %v2372 = vpop.f32.mrf.mxu0
  %2373 = vmatprep.mubr.bf16.mxu0 0
  %2374 = vmatmul.mubr.bf16.gmra.mxu0 %v2174
  %v2375 = vpop.f32.mrf.mxu0
  %v2376 = vadd.f32 0.0, %v2375
  %v2377 = vpop.f32.mrf.mxu0
  %v2378 = vpop.f32.mrf.mxu0
  %v2379 = vadd.f32 0.0, %v2378
  %v2380 = vpop.f32.mrf.mxu0
  %2381 = vmatprep.mubr.bf16.mxu0 0
  %2382 = vmatmul.mubr.bf16.gmra.mxu0 %v2175
  %v2383 = vpop.f32.mrf.mxu0
  %v2384 = vadd.f32 0.0, %v2383
  %v2385 = vpop.f32.mrf.mxu0
  %v2386 = vpop.f32.mrf.mxu0
  %v2387 = vadd.f32 0.0, %v2386
  %v2388 = vpop.f32.mrf.mxu0
  %2389 = vmatprep.mubr.bf16.mxu0 0
  %2390 = vmatmul.mubr.bf16.gmra.mxu0 %v2176
  %v2391 = vpop.f32.mrf.mxu0
  %v2392 = vadd.f32 0.0, %v2391
  %v2393 = vpop.f32.mrf.mxu0
  %v2394 = vpop.f32.mrf.mxu0
  %v2395 = vadd.f32 0.0, %v2394
  %v2396 = vpop.f32.mrf.mxu0
  %2397 = vmatprep.mubr.bf16.mxu0 0
  %2398 = vmatmul.mubr.bf16.gmra.mxu0 %v2177
  %v2399 = vpop.f32.mrf.mxu0
  %v2400 = vadd.f32 0.0, %v2399
  %v2401 = vpop.f32.mrf.mxu0
  %v2402 = vpop.f32.mrf.mxu0
  %v2403 = vadd.f32 0.0, %v2402
  %v2404 = vpop.f32.mrf.mxu0
  %2405 = vmatprep.mubr.bf16.mxu0 0
  %2406 = vmatmul.mubr.bf16.gmra.mxu0 %v2178
  %v2407 = vpop.f32.mrf.mxu0
  %v2408 = vadd.f32 0.0, %v2407
  %v2409 = vpop.f32.mrf.mxu0
  %v2410 = vpop.f32.mrf.mxu0
  %v2411 = vadd.f32 0.0, %v2410
  %v2412 = vpop.f32.mrf.mxu0
  %2413 = vmatprep.mubr.bf16.mxu0 0
  %2414 = vmatmul.mubr.bf16.gmra.mxu0 %v2179
  %v2415 = vpop.f32.mrf.mxu0
  %v2416 = vadd.f32 0.0, %v2415
  %v2417 = vpop.f32.mrf.mxu0
  %v2418 = vpop.f32.mrf.mxu0
  %v2419 = vadd.f32 0.0, %v2418
  %v2420 = vpop.f32.mrf.mxu0
  %2421 = vmatprep.mubr.bf16.mxu0 0
  %2422 = vmatmul.mubr.bf16.gmra.mxu0 %v2180
  %v2423 = vpop.f32.mrf.mxu0
  %v2424 = vadd.f32 0.0, %v2423
  %v2425 = vpop.f32.mrf.mxu0
  %v2426 = vpop.f32.mrf.mxu0
  %v2427 = vadd.f32 0.0, %v2426
  %v2428 = vpop.f32.mrf.mxu0
  %2429 = vmatprep.mubr.bf16.mxu0 0
  %2430 = vmatmul.mubr.bf16.gmra.mxu0 %v2181
  %v2431 = vpop.f32.mrf.mxu0
  %v2432 = vadd.f32 0.0, %v2431
  %v2433 = vpop.f32.mrf.mxu0
  %v2434 = vpop.f32.mrf.mxu0
  %v2435 = vadd.f32 0.0, %v2434
  %v2436 = vpop.f32.mrf.mxu0
  %2437 = vmatprep.mubr.bf16.mxu0 0
  %2438 = vmatmul.mubr.bf16.gmra.mxu0 %v2182
  %v2439 = vpop.f32.mrf.mxu0
  %v2440 = vadd.f32 0.0, %v2439
  %v2441 = vpop.f32.mrf.mxu0
  %v2442 = vpop.f32.mrf.mxu0
  %v2443 = vadd.f32 0.0, %v2442
  %v2444 = vpop.f32.mrf.mxu0
  %2445 = vmatprep.mubr.bf16.mxu0 0
  %2446 = vmatmul.mubr.bf16.gmra.mxu0 %v2183
  %v2447 = vpop.f32.mrf.mxu0
  %v2448 = vadd.f32 0.0, %v2447
  %v2449 = vpop.f32.mrf.mxu0
  %v2450 = vpop.f32.mrf.mxu0
  %v2451 = vadd.f32 0.0, %v2450
  %v2452 = vpop.f32.mrf.mxu0
  %2453 = vmatprep.mubr.bf16.mxu0 0
  %2454 = vmatmul.mubr.bf16.gmra.mxu0 %v2184
  %v2455 = vpop.f32.mrf.mxu0
  %v2456 = vadd.f32 0.0, %v2455
  %v2457 = vpop.f32.mrf.mxu0
  %v2458 = vpop.f32.mrf.mxu0
  %v2459 = vadd.f32 0.0, %v2458
  %v2460 = vpop.f32.mrf.mxu0
  %2461 = vmatprep.mubr.bf16.mxu0 0
  %2462 = vmatmul.mubr.bf16.gmra.mxu0 %v2185
  %v2463 = vpop.f32.mrf.mxu0
  %v2464 = vadd.f32 0.0, %v2463
  %v2465 = vpop.f32.mrf.mxu0
  %v2466 = vpop.f32.mrf.mxu0
  %v2467 = vadd.f32 0.0, %v2466
  %v2468 = vpop.f32.mrf.mxu0
  %2469 = vmatprep.mubr.bf16.mxu0 0
  %2470 = vmatmul.mubr.bf16.gmra.mxu0 %v2186
  %v2471 = vpop.f32.mrf.mxu0
  %v2472 = vadd.f32 0.0, %v2471
  %v2473 = vpop.f32.mrf.mxu0
  %v2474 = vpop.f32.mrf.mxu0
  %v2475 = vadd.f32 0.0, %v2474
  %v2476 = vpop.f32.mrf.mxu0
  %2477 = vmatprep.mubr.bf16.mxu0 0
  %2478 = vmatmul.mubr.bf16.gmra.mxu0 %v2187
  %v2479 = vpop.f32.mrf.mxu0
  %v2480 = vadd.f32 0.0, %v2479
  %v2481 = vpop.f32.mrf.mxu0
  %v2482 = vpop.f32.mrf.mxu0
  %v2483 = vadd.f32 0.0, %v2482
  %v2484 = vpop.f32.mrf.mxu0
  %2485 = vmatprep.mubr.bf16.mxu0 0
  %2486 = vmatmul.mubr.bf16.gmra.mxu0 %v2188
  %v2487 = vpop.f32.mrf.mxu0
  %v2488 = vadd.f32 0.0, %v2487
  %v2489 = vpop.f32.mrf.mxu0
  %v2490 = vpop.f32.mrf.mxu0
  %v2491 = vadd.f32 0.0, %v2490
  %v2492 = vpop.f32.mrf.mxu0
  %2493 = vmatprep.mubr.bf16.mxu0 0
  %2494 = vmatmul.mubr.bf16.gmra.mxu0 %v2189
  %v2495 = vpop.f32.mrf.mxu0
  %v2496 = vadd.f32 0.0, %v2495
  %v2497 = vpop.f32.mrf.mxu0
  %v2498 = vpop.f32.mrf.mxu0
  %v2499 = vadd.f32 0.0, %v2498
  %v2500 = vpop.f32.mrf.mxu0
  %2501 = vmatprep.mubr.bf16.mxu0 0
  %2502 = vmatmul.mubr.bf16.gmra.mxu0 %v2190
  %v2503 = vpop.f32.mrf.mxu0
  %v2504 = vadd.f32 0.0, %v2503
  %v2505 = vpop.f32.mrf.mxu0
  %v2506 = vpop.f32.mrf.mxu0
  %v2507 = vadd.f32 0.0, %v2506
  %v2508 = vpop.f32.mrf.mxu0
  %2509 = vmatprep.mubr.bf16.mxu0 0
  %2510 = vmatmul.mubr.bf16.gmra.mxu0 %v2191
  %v2511 = vpop.f32.mrf.mxu0
  %v2512 = vadd.f32 0.0, %v2511
  %v2513 = vpop.f32.mrf.mxu0
  %v2514 = vpop.f32.mrf.mxu0
  %v2515 = vadd.f32 0.0, %v2514
  %v2516 = vpop.f32.mrf.mxu0
  %2517 = vmatprep.mubr.bf16.mxu0 0
  %2518 = vmatmul.mubr.bf16.gmra.mxu0 %v2192
  %v2519 = vpop.f32.mrf.mxu0
  %v2520 = vadd.f32 0.0, %v2519
  %v2521 = vpop.f32.mrf.mxu0
  %v2522 = vpop.f32.mrf.mxu0
  %v2523 = vadd.f32 0.0, %v2522
  %v2524 = vpop.f32.mrf.mxu0
  %2525 = vmatprep.mubr.bf16.mxu0 0
  %2526 = vmatmul.mubr.bf16.gmra.mxu0 %v2193
  %v2527 = vpop.f32.mrf.mxu0
  %v2528 = vadd.f32 0.0, %v2527
  %v2529 = vpop.f32.mrf.mxu0
  %v2530 = vpop.f32.mrf.mxu0
  %v2531 = vadd.f32 0.0, %v2530
  %v2532 = vpop.f32.mrf.mxu0
  %2533 = vmatprep.mubr.bf16.mxu0 0
  %2534 = vmatmul.mubr.bf16.gmra.mxu0 %v2194
  %v2535 = vpop.f32.mrf.mxu0
  %v2536 = vadd.f32 0.0, %v2535
  %v2537 = vpop.f32.mrf.mxu0
  %v2538 = vpop.f32.mrf.mxu0
  %v2539 = vadd.f32 0.0, %v2538
  %v2540 = vpop.f32.mrf.mxu0
  %2541 = vmatprep.mubr.bf16.mxu0 0
  %2542 = vmatmul.mubr.bf16.gmra.mxu0 %v2195
  %v2543 = vpop.f32.mrf.mxu0
  %v2544 = vadd.f32 0.0, %v2543
  %v2545 = vpop.f32.mrf.mxu0
  %v2546 = vpop.f32.mrf.mxu0
  %v2547 = vadd.f32 0.0, %v2546
  %v2548 = vpop.f32.mrf.mxu0
  %2549 = vdwg.mxu0
  %v2550 = vadd.f32 %v1846, %v2296
  %v2551 = vadd.f32 %v1849, %v2299
  %v2552 = vadd.f32 %v1854, %v2304
  %v2553 = vadd.f32 %v1857, %v2307
  %v2554 = vadd.f32 %v1862, %v2312
  %v2555 = vadd.f32 %v1865, %v2315
  %v2556 = vadd.f32 %v1870, %v2320
  %v2557 = vadd.f32 %v1873, %v2323
  %v2558 = vadd.f32 %v1878, %v2328
  %v2559 = vadd.f32 %v1881, %v2331
  %v2560 = vadd.f32 %v1886, %v2336
  %v2561 = vadd.f32 %v1889, %v2339
  %v2562 = vadd.f32 %v1894, %v2344
  %v2563 = vadd.f32 %v1897, %v2347
  %v2564 = vadd.f32 %v1902, %v2352
  %v2565 = vadd.f32 %v1905, %v2355
  %v2566 = vadd.f32 %v1910, %v2360
  %v2567 = vadd.f32 %v1913, %v2363
  %v2568 = vadd.f32 %v1918, %v2368
  %v2569 = vadd.f32 %v1921, %v2371
  %v2570 = vadd.f32 %v1926, %v2376
  %v2571 = vadd.f32 %v1929, %v2379
  %v2572 = vadd.f32 %v1934, %v2384
  %v2573 = vadd.f32 %v1937, %v2387
  %v2574 = vadd.f32 %v1942, %v2392
  %v2575 = vadd.f32 %v1945, %v2395
  %v2576 = vadd.f32 %v1950, %v2400
  %v2577 = vadd.f32 %v1953, %v2403
  %v2578 = vadd.f32 %v1958, %v2408
  %v2579 = vadd.f32 %v1961, %v2411
  %v2580 = vadd.f32 %v1966, %v2416
  %v2581 = vadd.f32 %v1969, %v2419
  %v2582 = vadd.f32 %v1974, %v2424
  %v2583 = vadd.f32 %v1977, %v2427
  %v2584 = vadd.f32 %v1982, %v2432
  %v2585 = vadd.f32 %v1985, %v2435
  %v2586 = vadd.f32 %v1990, %v2440
  %v2587 = vadd.f32 %v1993, %v2443
  %v2588 = vadd.f32 %v1998, %v2448
  %v2589 = vadd.f32 %v2001, %v2451
  %v2590 = vadd.f32 %v2006, %v2456
  %v2591 = vadd.f32 %v2009, %v2459
  %v2592 = vadd.f32 %v2014, %v2464
  %v2593 = vadd.f32 %v2017, %v2467
  %v2594 = vadd.f32 %v2022, %v2472
  %v2595 = vadd.f32 %v2025, %v2475
  %v2596 = vadd.f32 %v2030, %v2480
  %v2597 = vadd.f32 %v2033, %v2483
  %v2598 = vadd.f32 %v2038, %v2488
  %v2599 = vadd.f32 %v2041, %v2491
  %v2600 = vadd.f32 %v2046, %v2496
  %v2601 = vadd.f32 %v2049, %v2499
  %v2602 = vadd.f32 %v2054, %v2504
  %v2603 = vadd.f32 %v2057, %v2507
  %v2604 = vadd.f32 %v2062, %v2512
  %v2605 = vadd.f32 %v2065, %v2515
  %v2606 = vadd.f32 %v2070, %v2520
  %v2607 = vadd.f32 %v2073, %v2523
  %v2608 = vadd.f32 %v2078, %v2528
  %v2609 = vadd.f32 %v2081, %v2531
  %v2610 = vadd.f32 %v2086, %v2536
  %v2611 = vadd.f32 %v2089, %v2539
  %v2612 = vadd.f32 %v2094, %v2544
  %v2613 = vadd.f32 %v2097, %v2547
  %v2614 = vld [vmem:[%s1136] sm:$0xff]
  %v2615 = vld [vmem:[%s1136 + $0x8] sm:$0xff]
  %v2616 = vld [vmem:[%s1136 + $0x18] sm:$0xff]
  %v2617 = vld [vmem:[%s1136 + $0x20] sm:$0xff]
  %v2618 = vld [vmem:[%s1136 + $0x30] sm:$0xff]
  %v2619 = vld [vmem:[%s1136 + $0x38] sm:$0xff]
  %v2620 = vld [vmem:[%s1136 + $0x48] sm:$0xff]
  %v2621 = vld [vmem:[%s1136 + $0x50] sm:$0xff]
  %v2622 = vld [vmem:[%s1136 + $0x60] sm:$0xff]
  %v2623 = vld [vmem:[%s1136 + $0x68] sm:$0xff]
  %v2624 = vld [vmem:[%s1136 + $0x78] sm:$0xff]
  %v2625 = vld [vmem:[%s1136 + $0x80] sm:$0xff]
  %v2626 = vld [vmem:[%s1136 + $0x90] sm:$0xff]
  %v2627 = vld [vmem:[%s1136 + $0x98] sm:$0xff]
  %v2628 = vld [vmem:[%s1136 + $0xa8] sm:$0xff]
  %v2629 = vld [vmem:[%s1136 + $0xb0] sm:$0xff]
  %v2630 = vld [vmem:[%s1136 + $0xc0] sm:$0xff]
  %v2631 = vld [vmem:[%s1136 + $0xc8] sm:$0xff]
  %v2632 = vld [vmem:[%s1136 + $0xd8] sm:$0xff]
  %v2633 = vld [vmem:[%s1136 + $0xe0] sm:$0xff]
  %v2634 = vld [vmem:[%s1136 + $0xf0] sm:$0xff]
  %v2635 = vld [vmem:[%s1136 + $0xf8] sm:$0xff]
  %v2636 = vld [vmem:[%s1136 + $0x108] sm:$0xff]
  %v2637 = vld [vmem:[%s1136 + $0x110] sm:$0xff]
  %v2638 = vld [vmem:[%s1136 + $0x120] sm:$0xff]
  %v2639 = vld [vmem:[%s1136 + $0x128] sm:$0xff]
  %v2640 = vld [vmem:[%s1136 + $0x138] sm:$0xff]
  %v2641 = vld [vmem:[%s1136 + $0x140] sm:$0xff]
  %v2642 = vld [vmem:[%s1136 + $0x150] sm:$0xff]
  %v2643 = vld [vmem:[%s1136 + $0x158] sm:$0xff]
  %v2644 = vld [vmem:[%s1136 + $0x168] sm:$0xff]
  %v2645 = vld [vmem:[%s1136 + $0x170] sm:$0xff]
  %v2646 = vld [vmem:[%s1136 + $0x1b0] sm:$0xff]
  %v2647 = vld [vmem:[%s1136 + $0x1b8] sm:$0xff]
  %v2648 = vld [vmem:[%s1136 + $0x1c8] sm:$0xff]
  %v2649 = vld [vmem:[%s1136 + $0x1d0] sm:$0xff]
  %v2650 = vld [vmem:[%s1136 + $0x1e0] sm:$0xff]
  %v2651 = vld [vmem:[%s1136 + $0x1e8] sm:$0xff]
  %v2652 = vld [vmem:[%s1136 + $0x1f8] sm:$0xff]
  %v2653 = vld [vmem:[%s1136 + $0x200] sm:$0xff]
  %v2654 = vld [vmem:[%s1136 + $0x210] sm:$0xff]
  %v2655 = vld [vmem:[%s1136 + $0x218] sm:$0xff]
  %v2656 = vld [vmem:[%s1136 + $0x228] sm:$0xff]
  %v2657 = vld [vmem:[%s1136 + $0x230] sm:$0xff]
  %v2658 = vld [vmem:[%s1136 + $0x240] sm:$0xff]
  %v2659 = vld [vmem:[%s1136 + $0x248] sm:$0xff]
  %v2660 = vld [vmem:[%s1136 + $0x258] sm:$0xff]
  %v2661 = vld [vmem:[%s1136 + $0x260] sm:$0xff]
  %v2662 = vld [vmem:[%s1136 + $0x270] sm:$0xff]
  %v2663 = vld [vmem:[%s1136 + $0x278] sm:$0xff]
  %v2664 = vld [vmem:[%s1136 + $0x288] sm:$0xff]
  %v2665 = vld [vmem:[%s1136 + $0x290] sm:$0xff]
  %v2666 = vld [vmem:[%s1136 + $0x2a0] sm:$0xff]
  %v2667 = vld [vmem:[%s1136 + $0x2a8] sm:$0xff]
  %v2668 = vld [vmem:[%s1136 + $0x2b8] sm:$0xff]
  %v2669 = vld [vmem:[%s1136 + $0x2c0] sm:$0xff]
  %v2670 = vld [vmem:[%s1136 + $0x2d0] sm:$0xff]
  %v2671 = vld [vmem:[%s1136 + $0x2d8] sm:$0xff]
  %v2672 = vld [vmem:[%s1136 + $0x2e8] sm:$0xff]
  %v2673 = vld [vmem:[%s1136 + $0x2f0] sm:$0xff]
  %v2674 = vld [vmem:[%s1136 + $0x300] sm:$0xff]
  %v2675 = vld [vmem:[%s1136 + $0x308] sm:$0xff]
  %v2676 = vld [vmem:[%s1136 + $0x318] sm:$0xff]
  %v2677 = vld [vmem:[%s1136 + $0x320] sm:$0xff]
  %v2678 = vpack.c.bf16 %v2615, %v2614
  %v2679 = vpack.c.bf16 %v2617, %v2616
  %v2680 = vpack.c.bf16 %v2619, %v2618
  %v2681 = vpack.c.bf16 %v2621, %v2620
  %v2682 = vpack.c.bf16 %v2623, %v2622
  %v2683 = vpack.c.bf16 %v2625, %v2624
  %v2684 = vpack.c.bf16 %v2627, %v2626
  %v2685 = vpack.c.bf16 %v2629, %v2628
  %v2686 = vpack.c.bf16 %v2631, %v2630
  %v2687 = vpack.c.bf16 %v2633, %v2632
  %v2688 = vpack.c.bf16 %v2635, %v2634
  %v2689 = vpack.c.bf16 %v2637, %v2636
  %v2690 = vpack.c.bf16 %v2639, %v2638
  %v2691 = vpack.c.bf16 %v2641, %v2640
  %v2692 = vpack.c.bf16 %v2643, %v2642
  %v2693 = vpack.c.bf16 %v2645, %v2644
  %v2694 = vpack.c.bf16 %v2647, %v2646
  %v2695 = vpack.c.bf16 %v2649, %v2648
  %v2696 = vpack.c.bf16 %v2651, %v2650
  %v2697 = vpack.c.bf16 %v2653, %v2652
  %v2698 = vpack.c.bf16 %v2655, %v2654
  %v2699 = vpack.c.bf16 %v2657, %v2656
  %v2700 = vpack.c.bf16 %v2659, %v2658
  %v2701 = vpack.c.bf16 %v2661, %v2660
  %v2702 = vpack.c.bf16 %v2663, %v2662
  %v2703 = vpack.c.bf16 %v2665, %v2664
  %v2704 = vpack.c.bf16 %v2667, %v2666
  %v2705 = vpack.c.bf16 %v2669, %v2668
  %v2706 = vpack.c.bf16 %v2671, %v2670
  %v2707 = vpack.c.bf16 %v2673, %v2672
  %v2708 = vpack.c.bf16 %v2675, %v2674
  %v2709 = vpack.c.bf16 %v2677, %v2676
  %s2710 = scalar_lea.vmem %s2, 192
  %v2711 = vld [vmem:[%s2710] sm:$0xf]
  %v2712 = vld [vmem:[%s2710 + $0x4] sm:$0xf]
  %v2713 = vld [vmem:[%s2710 + $0x8] sm:$0xf]
  %v2714 = vld [vmem:[%s2710 + $0xc] sm:$0xf]
  %v2715 = vld [vmem:[%s2710 + $0x10] sm:$0xf]
  %v2716 = vld [vmem:[%s2710 + $0x14] sm:$0xf]
  %v2717 = vld [vmem:[%s2710 + $0x18] sm:$0xf]
  %v2718 = vld [vmem:[%s2710 + $0x1c] sm:$0xf]
  %v2719 = vld [vmem:[%s2710 + $0x20] sm:$0xf]
  %v2720 = vld [vmem:[%s2710 + $0x24] sm:$0xf]
  %v2721 = vld [vmem:[%s2710 + $0x28] sm:$0xf]
  %v2722 = vld [vmem:[%s2710 + $0x2c] sm:$0xf]
  %v2723 = vld [vmem:[%s2710 + $0x30] sm:$0xf]
  %v2724 = vld [vmem:[%s2710 + $0x34] sm:$0xf]
  %v2725 = vld [vmem:[%s2710 + $0x38] sm:$0xf]
  %v2726 = vld [vmem:[%s2710 + $0x3c] sm:$0xf]
  %v2743 = vunpack.c.l.b16 %v2711
  %v2744 = vunpack.c.l.b16 %v2712
  %v2745 = vunpack.c.l.b16 %v2713
  %v2746 = vunpack.c.l.b16 %v2714
  %v2747 = vunpack.c.l.b16 %v2715
  %v2748 = vunpack.c.l.b16 %v2716
  %v2749 = vunpack.c.l.b16 %v2717
  %v2750 = vunpack.c.l.b16 %v2718
  %v2751 = vunpack.c.l.b16 %v2719
  %v2752 = vunpack.c.l.b16 %v2720
  %v2753 = vunpack.c.l.b16 %v2721
  %v2754 = vunpack.c.l.b16 %v2722
  %v2755 = vunpack.c.l.b16 %v2723
  %v2756 = vunpack.c.l.b16 %v2724
  %v2757 = vunpack.c.l.b16 %v2725
  %v2758 = vunpack.c.l.b16 %v2726
  %v2759 = vpack.c.b16 %v2744, %v2743
  %v2760 = vpack.c.b16 %v2746, %v2745
  %v2761 = vpack.c.b16 %v2748, %v2747
  %v2762 = vpack.c.b16 %v2750, %v2749
  %v2763 = vpack.c.b16 %v2752, %v2751
  %v2764 = vpack.c.b16 %v2754, %v2753
  %v2765 = vpack.c.b16 %v2756, %v2755
  %v2766 = vpack.c.b16 %v2758, %v2757
  %2775 = vmatprep.subr.bf16.mxu0 0
  %2776 = vmatpush1.bf16.msra.mxu0 %v2766
  %2777 = vmatprep.subr.bf16.mxu0 0
  %2778 = vmatpush1.bf16.msra.mxu0 %v2765
  %2779 = vmatprep.subr.bf16.mxu0 0
  %2780 = vmatpush1.bf16.msra.mxu0 %v2764
  %2781 = vmatprep.subr.bf16.mxu0 0
  %2782 = vmatpush1.bf16.msra.mxu0 %v2763
  %2783 = vmatprep.subr.bf16.mxu0 0
  %2784 = vmatpush1.bf16.msra.mxu0 %v2762
  %2785 = vmatprep.subr.bf16.mxu0 0
  %2786 = vmatpush1.bf16.msra.mxu0 %v2761
  %2787 = vmatprep.subr.bf16.mxu0 0
  %2788 = vmatpush1.bf16.msra.mxu0 %v2760
  %2789 = vmatprep.subr.bf16.mxu0 0
  %2790 = vmatpush1.bf16.msra.mxu0 %v2759
  %2791 = vmatprep.subr.bf16.mxu0 0
  %2792 = vmatpush2.bf16.msra.mxu0 0
  %2793 = vmatprep.subr.bf16.mxu0 0
  %2794 = vmatpush2.bf16.msra.mxu0 0
  %2795 = vmatprep.subr.bf16.mxu0 0
  %2796 = vmatpush2.bf16.msra.mxu0 0
  %2797 = vmatprep.subr.bf16.mxu0 0
  %2798 = vmatpush2.bf16.msra.mxu0 0
  %2799 = vmatprep.subr.bf16.mxu0 0
  %2800 = vmatpush2.bf16.msra.mxu0 0
  %2801 = vmatprep.subr.bf16.mxu0 0
  %2802 = vmatpush2.bf16.msra.mxu0 0
  %2803 = vmatprep.subr.bf16.mxu0 0
  %2804 = vmatpush2.bf16.msra.mxu0 0
  %2805 = vmatprep.subr.bf16.mxu0 0
  %2806 = vmatpush2.bf16.msra.mxu0 0
  %2807 = vmatprep.mubr.bf16.mxu0 0
  %2808 = vmatmul.mubr.bf16.gmra.mxu0 %v2678
  %v2809 = vpop.f32.mrf.mxu0
  %v2810 = vadd.f32 0.0, %v2809
  %v2811 = vpop.f32.mrf.mxu0
  %v2812 = vpop.f32.mrf.mxu0
  %v2813 = vadd.f32 0.0, %v2812
  %v2814 = vpop.f32.mrf.mxu0
  %2815 = vmatprep.mubr.bf16.mxu0 0
  %2816 = vmatmul.mubr.bf16.gmra.mxu0 %v2679
  %v2817 = vpop.f32.mrf.mxu0
  %v2818 = vadd.f32 0.0, %v2817
  %v2819 = vpop.f32.mrf.mxu0
  %v2820 = vpop.f32.mrf.mxu0
  %v2821 = vadd.f32 0.0, %v2820
  %v2822 = vpop.f32.mrf.mxu0
  %2823 = vmatprep.mubr.bf16.mxu0 0
  %2824 = vmatmul.mubr.bf16.gmra.mxu0 %v2680
  %v2825 = vpop.f32.mrf.mxu0
  %v2826 = vadd.f32 0.0, %v2825
  %v2827 = vpop.f32.mrf.mxu0
  %v2828 = vpop.f32.mrf.mxu0
  %v2829 = vadd.f32 0.0, %v2828
  %v2830 = vpop.f32.mrf.mxu0
  %2831 = vmatprep.mubr.bf16.mxu0 0
  %2832 = vmatmul.mubr.bf16.gmra.mxu0 %v2681
  %v2833 = vpop.f32.mrf.mxu0
  %v2834 = vadd.f32 0.0, %v2833
  %v2835 = vpop.f32.mrf.mxu0
  %v2836 = vpop.f32.mrf.mxu0
  %v2837 = vadd.f32 0.0, %v2836
  %v2838 = vpop.f32.mrf.mxu0
  %2839 = vmatprep.mubr.bf16.mxu0 0
  %2840 = vmatmul.mubr.bf16.gmra.mxu0 %v2682
  %v2841 = vpop.f32.mrf.mxu0
  %v2842 = vadd.f32 0.0, %v2841
  %v2843 = vpop.f32.mrf.mxu0
  %v2844 = vpop.f32.mrf.mxu0
  %v2845 = vadd.f32 0.0, %v2844
  %v2846 = vpop.f32.mrf.mxu0
  %2847 = vmatprep.mubr.bf16.mxu0 0
  %2848 = vmatmul.mubr.bf16.gmra.mxu0 %v2683
  %v2849 = vpop.f32.mrf.mxu0
  %v2850 = vadd.f32 0.0, %v2849
  %v2851 = vpop.f32.mrf.mxu0
  %v2852 = vpop.f32.mrf.mxu0
  %v2853 = vadd.f32 0.0, %v2852
  %v2854 = vpop.f32.mrf.mxu0
  %2855 = vmatprep.mubr.bf16.mxu0 0
  %2856 = vmatmul.mubr.bf16.gmra.mxu0 %v2684
  %v2857 = vpop.f32.mrf.mxu0
  %v2858 = vadd.f32 0.0, %v2857
  %v2859 = vpop.f32.mrf.mxu0
  %v2860 = vpop.f32.mrf.mxu0
  %v2861 = vadd.f32 0.0, %v2860
  %v2862 = vpop.f32.mrf.mxu0
  %2863 = vmatprep.mubr.bf16.mxu0 0
  %2864 = vmatmul.mubr.bf16.gmra.mxu0 %v2685
  %v2865 = vpop.f32.mrf.mxu0
  %v2866 = vadd.f32 0.0, %v2865
  %v2867 = vpop.f32.mrf.mxu0
  %v2868 = vpop.f32.mrf.mxu0
  %v2869 = vadd.f32 0.0, %v2868
  %v2870 = vpop.f32.mrf.mxu0
  %2871 = vmatprep.mubr.bf16.mxu0 0
  %2872 = vmatmul.mubr.bf16.gmra.mxu0 %v2686
  %v2873 = vpop.f32.mrf.mxu0
  %v2874 = vadd.f32 0.0, %v2873
  %v2875 = vpop.f32.mrf.mxu0
  %v2876 = vpop.f32.mrf.mxu0
  %v2877 = vadd.f32 0.0, %v2876
  %v2878 = vpop.f32.mrf.mxu0
  %2879 = vmatprep.mubr.bf16.mxu0 0
  %2880 = vmatmul.mubr.bf16.gmra.mxu0 %v2687
  %v2881 = vpop.f32.mrf.mxu0
  %v2882 = vadd.f32 0.0, %v2881
  %v2883 = vpop.f32.mrf.mxu0
  %v2884 = vpop.f32.mrf.mxu0
  %v2885 = vadd.f32 0.0, %v2884
  %v2886 = vpop.f32.mrf.mxu0
  %2887 = vmatprep.mubr.bf16.mxu0 0
  %2888 = vmatmul.mubr.bf16.gmra.mxu0 %v2688
  %v2889 = vpop.f32.mrf.mxu0
  %v2890 = vadd.f32 0.0, %v2889
  %v2891 = vpop.f32.mrf.mxu0
  %v2892 = vpop.f32.mrf.mxu0
  %v2893 = vadd.f32 0.0, %v2892
  %v2894 = vpop.f32.mrf.mxu0
  %2895 = vmatprep.mubr.bf16.mxu0 0
  %2896 = vmatmul.mubr.bf16.gmra.mxu0 %v2689
  %v2897 = vpop.f32.mrf.mxu0
  %v2898 = vadd.f32 0.0, %v2897
  %v2899 = vpop.f32.mrf.mxu0
  %v2900 = vpop.f32.mrf.mxu0
  %v2901 = vadd.f32 0.0, %v2900
  %v2902 = vpop.f32.mrf.mxu0
  %2903 = vmatprep.mubr.bf16.mxu0 0
  %2904 = vmatmul.mubr.bf16.gmra.mxu0 %v2690
  %v2905 = vpop.f32.mrf.mxu0
  %v2906 = vadd.f32 0.0, %v2905
  %v2907 = vpop.f32.mrf.mxu0
  %v2908 = vpop.f32.mrf.mxu0
  %v2909 = vadd.f32 0.0, %v2908
  %v2910 = vpop.f32.mrf.mxu0
  %2911 = vmatprep.mubr.bf16.mxu0 0
  %2912 = vmatmul.mubr.bf16.gmra.mxu0 %v2691
  %v2913 = vpop.f32.mrf.mxu0
  %v2914 = vadd.f32 0.0, %v2913
  %v2915 = vpop.f32.mrf.mxu0
  %v2916 = vpop.f32.mrf.mxu0
  %v2917 = vadd.f32 0.0, %v2916
  %v2918 = vpop.f32.mrf.mxu0
  %2919 = vmatprep.mubr.bf16.mxu0 0
  %2920 = vmatmul.mubr.bf16.gmra.mxu0 %v2692
  %v2921 = vpop.f32.mrf.mxu0
  %v2922 = vadd.f32 0.0, %v2921
  %v2923 = vpop.f32.mrf.mxu0
  %v2924 = vpop.f32.mrf.mxu0
  %v2925 = vadd.f32 0.0, %v2924
  %v2926 = vpop.f32.mrf.mxu0
  %2927 = vmatprep.mubr.bf16.mxu0 0
  %2928 = vmatmul.mubr.bf16.gmra.mxu0 %v2693
  %v2929 = vpop.f32.mrf.mxu0
  %v2930 = vadd.f32 0.0, %v2929
  %v2931 = vpop.f32.mrf.mxu0
  %v2932 = vpop.f32.mrf.mxu0
  %v2933 = vadd.f32 0.0, %v2932
  %v2934 = vpop.f32.mrf.mxu0
  %2935 = vmatprep.mubr.bf16.mxu0 0
  %2936 = vmatmul.mubr.bf16.gmra.mxu0 %v2694
  %v2937 = vpop.f32.mrf.mxu0
  %v2938 = vadd.f32 0.0, %v2937
  %v2939 = vpop.f32.mrf.mxu0
  %v2940 = vpop.f32.mrf.mxu0
  %v2941 = vadd.f32 0.0, %v2940
  %v2942 = vpop.f32.mrf.mxu0
  %2943 = vmatprep.mubr.bf16.mxu0 0
  %2944 = vmatmul.mubr.bf16.gmra.mxu0 %v2695
  %v2945 = vpop.f32.mrf.mxu0
  %v2946 = vadd.f32 0.0, %v2945
  %v2947 = vpop.f32.mrf.mxu0
  %v2948 = vpop.f32.mrf.mxu0
  %v2949 = vadd.f32 0.0, %v2948
  %v2950 = vpop.f32.mrf.mxu0
  %2951 = vmatprep.mubr.bf16.mxu0 0
  %2952 = vmatmul.mubr.bf16.gmra.mxu0 %v2696
  %v2953 = vpop.f32.mrf.mxu0
  %v2954 = vadd.f32 0.0, %v2953
  %v2955 = vpop.f32.mrf.mxu0
  %v2956 = vpop.f32.mrf.mxu0
  %v2957 = vadd.f32 0.0, %v2956
  %v2958 = vpop.f32.mrf.mxu0
  %2959 = vmatprep.mubr.bf16.mxu0 0
  %2960 = vmatmul.mubr.bf16.gmra.mxu0 %v2697
  %v2961 = vpop.f32.mrf.mxu0
  %v2962 = vadd.f32 0.0, %v2961
  %v2963 = vpop.f32.mrf.mxu0
  %v2964 = vpop.f32.mrf.mxu0
  %v2965 = vadd.f32 0.0, %v2964
  %v2966 = vpop.f32.mrf.mxu0
  %2967 = vmatprep.mubr.bf16.mxu0 0
  %2968 = vmatmul.mubr.bf16.gmra.mxu0 %v2698
  %v2969 = vpop.f32.mrf.mxu0
  %v2970 = vadd.f32 0.0, %v2969
  %v2971 = vpop.f32.mrf.mxu0
  %v2972 = vpop.f32.mrf.mxu0
  %v2973 = vadd.f32 0.0, %v2972
  %v2974 = vpop.f32.mrf.mxu0
  %2975 = vmatprep.mubr.bf16.mxu0 0
  %2976 = vmatmul.mubr.bf16.gmra.mxu0 %v2699
  %v2977 = vpop.f32.mrf.mxu0
  %v2978 = vadd.f32 0.0, %v2977
  %v2979 = vpop.f32.mrf.mxu0
  %v2980 = vpop.f32.mrf.mxu0
  %v2981 = vadd.f32 0.0, %v2980
  %v2982 = vpop.f32.mrf.mxu0
  %2983 = vmatprep.mubr.bf16.mxu0 0
  %2984 = vmatmul.mubr.bf16.gmra.mxu0 %v2700
  %v2985 = vpop.f32.mrf.mxu0
  %v2986 = vadd.f32 0.0, %v2985
  %v2987 = vpop.f32.mrf.mxu0
  %v2988 = vpop.f32.mrf.mxu0
  %v2989 = vadd.f32 0.0, %v2988
  %v2990 = vpop.f32.mrf.mxu0
  %2991 = vmatprep.mubr.bf16.mxu0 0
  %2992 = vmatmul.mubr.bf16.gmra.mxu0 %v2701
  %v2993 = vpop.f32.mrf.mxu0
  %v2994 = vadd.f32 0.0, %v2993
  %v2995 = vpop.f32.mrf.mxu0
  %v2996 = vpop.f32.mrf.mxu0
  %v2997 = vadd.f32 0.0, %v2996
  %v2998 = vpop.f32.mrf.mxu0
  %2999 = vmatprep.mubr.bf16.mxu0 0
  %3000 = vmatmul.mubr.bf16.gmra.mxu0 %v2702
  %v3001 = vpop.f32.mrf.mxu0
  %v3002 = vadd.f32 0.0, %v3001
  %v3003 = vpop.f32.mrf.mxu0
  %v3004 = vpop.f32.mrf.mxu0
  %v3005 = vadd.f32 0.0, %v3004
  %v3006 = vpop.f32.mrf.mxu0
  %3007 = vmatprep.mubr.bf16.mxu0 0
  %3008 = vmatmul.mubr.bf16.gmra.mxu0 %v2703
  %v3009 = vpop.f32.mrf.mxu0
  %v3010 = vadd.f32 0.0, %v3009
  %v3011 = vpop.f32.mrf.mxu0
  %v3012 = vpop.f32.mrf.mxu0
  %v3013 = vadd.f32 0.0, %v3012
  %v3014 = vpop.f32.mrf.mxu0
  %3015 = vmatprep.mubr.bf16.mxu0 0
  %3016 = vmatmul.mubr.bf16.gmra.mxu0 %v2704
  %v3017 = vpop.f32.mrf.mxu0
  %v3018 = vadd.f32 0.0, %v3017
  %v3019 = vpop.f32.mrf.mxu0
  %v3020 = vpop.f32.mrf.mxu0
  %v3021 = vadd.f32 0.0, %v3020
  %v3022 = vpop.f32.mrf.mxu0
  %3023 = vmatprep.mubr.bf16.mxu0 0
  %3024 = vmatmul.mubr.bf16.gmra.mxu0 %v2705
  %v3025 = vpop.f32.mrf.mxu0
  %v3026 = vadd.f32 0.0, %v3025
  %v3027 = vpop.f32.mrf.mxu0
  %v3028 = vpop.f32.mrf.mxu0
  %v3029 = vadd.f32 0.0, %v3028
  %v3030 = vpop.f32.mrf.mxu0
  %3031 = vmatprep.mubr.bf16.mxu0 0
  %3032 = vmatmul.mubr.bf16.gmra.mxu0 %v2706
  %v3033 = vpop.f32.mrf.mxu0
  %v3034 = vadd.f32 0.0, %v3033
  %v3035 = vpop.f32.mrf.mxu0
  %v3036 = vpop.f32.mrf.mxu0
  %v3037 = vadd.f32 0.0, %v3036
  %v3038 = vpop.f32.mrf.mxu0
  %3039 = vmatprep.mubr.bf16.mxu0 0
  %3040 = vmatmul.mubr.bf16.gmra.mxu0 %v2707
  %v3041 = vpop.f32.mrf.mxu0
  %v3042 = vadd.f32 0.0, %v3041
  %v3043 = vpop.f32.mrf.mxu0
  %v3044 = vpop.f32.mrf.mxu0
  %v3045 = vadd.f32 0.0, %v3044
  %v3046 = vpop.f32.mrf.mxu0
  %3047 = vmatprep.mubr.bf16.mxu0 0
  %3048 = vmatmul.mubr.bf16.gmra.mxu0 %v2708
  %v3049 = vpop.f32.mrf.mxu0
  %v3050 = vadd.f32 0.0, %v3049
  %v3051 = vpop.f32.mrf.mxu0
  %v3052 = vpop.f32.mrf.mxu0
  %v3053 = vadd.f32 0.0, %v3052
  %v3054 = vpop.f32.mrf.mxu0
  %3055 = vmatprep.mubr.bf16.mxu0 0
  %3056 = vmatmul.mubr.bf16.gmra.mxu0 %v2709
  %v3057 = vpop.f32.mrf.mxu0
  %v3058 = vadd.f32 0.0, %v3057
  %v3059 = vpop.f32.mrf.mxu0
  %v3060 = vpop.f32.mrf.mxu0
  %v3061 = vadd.f32 0.0, %v3060
  %v3062 = vpop.f32.mrf.mxu0
  %3063 = vdwg.mxu0
  %v3064 = vadd.f32 %v2550, %v2810
  %v3065 = vadd.f32 %v2551, %v2813
  %v3066 = vadd.f32 %v2552, %v2818
  %v3067 = vadd.f32 %v2553, %v2821
  %v3068 = vadd.f32 %v2554, %v2826
  %v3069 = vadd.f32 %v2555, %v2829
  %v3070 = vadd.f32 %v2556, %v2834
  %v3071 = vadd.f32 %v2557, %v2837
  %v3072 = vadd.f32 %v2558, %v2842
  %v3073 = vadd.f32 %v2559, %v2845
  %v3074 = vadd.f32 %v2560, %v2850
  %v3075 = vadd.f32 %v2561, %v2853
  %v3076 = vadd.f32 %v2562, %v2858
  %v3077 = vadd.f32 %v2563, %v2861
  %v3078 = vadd.f32 %v2564, %v2866
  %v3079 = vadd.f32 %v2565, %v2869
  %v3080 = vadd.f32 %v2566, %v2874
  %v3081 = vadd.f32 %v2567, %v2877
  %v3082 = vadd.f32 %v2568, %v2882
  %v3083 = vadd.f32 %v2569, %v2885
  %v3084 = vadd.f32 %v2570, %v2890
  %v3085 = vadd.f32 %v2571, %v2893
  %v3086 = vadd.f32 %v2572, %v2898
  %v3087 = vadd.f32 %v2573, %v2901
  %v3088 = vadd.f32 %v2574, %v2906
  %v3089 = vadd.f32 %v2575, %v2909
  %v3090 = vadd.f32 %v2576, %v2914
  %v3091 = vadd.f32 %v2577, %v2917
  %v3092 = vadd.f32 %v2578, %v2922
  %v3093 = vadd.f32 %v2579, %v2925
  %v3094 = vadd.f32 %v2580, %v2930
  %v3095 = vadd.f32 %v2581, %v2933
  %v3096 = vadd.f32 %v2582, %v2938
  %v3097 = vadd.f32 %v2583, %v2941
  %v3098 = vadd.f32 %v2584, %v2946
  %v3099 = vadd.f32 %v2585, %v2949
  %v3100 = vadd.f32 %v2586, %v2954
  %v3101 = vadd.f32 %v2587, %v2957
  %v3102 = vadd.f32 %v2588, %v2962
  %v3103 = vadd.f32 %v2589, %v2965
  %v3104 = vadd.f32 %v2590, %v2970
  %v3105 = vadd.f32 %v2591, %v2973
  %v3106 = vadd.f32 %v2592, %v2978
  %v3107 = vadd.f32 %v2593, %v2981
  %v3108 = vadd.f32 %v2594, %v2986
  %v3109 = vadd.f32 %v2595, %v2989
  %v3110 = vadd.f32 %v2596, %v2994
  %v3111 = vadd.f32 %v2597, %v2997
  %v3112 = vadd.f32 %v2598, %v3002
  %v3113 = vadd.f32 %v2599, %v3005
  %v3114 = vadd.f32 %v2600, %v3010
  %v3115 = vadd.f32 %v2601, %v3013
  %v3116 = vadd.f32 %v2602, %v3018
  %v3117 = vadd.f32 %v2603, %v3021
  %v3118 = vadd.f32 %v2604, %v3026
  %v3119 = vadd.f32 %v2605, %v3029
  %v3120 = vadd.f32 %v2606, %v3034
  %v3121 = vadd.f32 %v2607, %v3037
  %v3122 = vadd.f32 %v2608, %v3042
  %v3123 = vadd.f32 %v2609, %v3045
  %v3124 = vadd.f32 %v2610, %v3050
  %v3125 = vadd.f32 %v2611, %v3053
  %v3126 = vadd.f32 %v2612, %v3058
  %v3127 = vadd.f32 %v2613, %v3061
  %v3128 = vld [vmem:[%s1136 + $0x1] sm:$0xff]
  %v3129 = vld [vmem:[%s1136 + $0x9] sm:$0xff]
  %v3130 = vld [vmem:[%s1136 + $0x19] sm:$0xff]
  %v3131 = vld [vmem:[%s1136 + $0x21] sm:$0xff]
  %v3132 = vld [vmem:[%s1136 + $0x31] sm:$0xff]
  %v3133 = vld [vmem:[%s1136 + $0x39] sm:$0xff]
  %v3134 = vld [vmem:[%s1136 + $0x49] sm:$0xff]
  %v3135 = vld [vmem:[%s1136 + $0x51] sm:$0xff]
  %v3136 = vld [vmem:[%s1136 + $0x61] sm:$0xff]
  %v3137 = vld [vmem:[%s1136 + $0x69] sm:$0xff]
  %v3138 = vld [vmem:[%s1136 + $0x79] sm:$0xff]
  %v3139 = vld [vmem:[%s1136 + $0x81] sm:$0xff]
  %v3140 = vld [vmem:[%s1136 + $0x91] sm:$0xff]
  %v3141 = vld [vmem:[%s1136 + $0x99] sm:$0xff]
  %v3142 = vld [vmem:[%s1136 + $0xa9] sm:$0xff]
  %v3143 = vld [vmem:[%s1136 + $0xb1] sm:$0xff]
  %v3144 = vld [vmem:[%s1136 + $0xc1] sm:$0xff]
  %v3145 = vld [vmem:[%s1136 + $0xc9] sm:$0xff]
  %v3146 = vld [vmem:[%s1136 + $0xd9] sm:$0xff]
  %v3147 = vld [vmem:[%s1136 + $0xe1] sm:$0xff]
  %v3148 = vld [vmem:[%s1136 + $0xf1] sm:$0xff]
  %v3149 = vld [vmem:[%s1136 + $0xf9] sm:$0xff]
  %v3150 = vld [vmem:[%s1136 + $0x109] sm:$0xff]
  %v3151 = vld [vmem:[%s1136 + $0x111] sm:$0xff]
  %v3152 = vld [vmem:[%s1136 + $0x121] sm:$0xff]
  %v3153 = vld [vmem:[%s1136 + $0x129] sm:$0xff]
  %v3154 = vld [vmem:[%s1136 + $0x139] sm:$0xff]
  %v3155 = vld [vmem:[%s1136 + $0x141] sm:$0xff]
  %v3156 = vld [vmem:[%s1136 + $0x151] sm:$0xff]
  %v3157 = vld [vmem:[%s1136 + $0x159] sm:$0xff]
  %v3158 = vld [vmem:[%s1136 + $0x169] sm:$0xff]
  %v3159 = vld [vmem:[%s1136 + $0x171] sm:$0xff]
  %v3160 = vld [vmem:[%s1136 + $0x1b1] sm:$0xff]
  %v3161 = vld [vmem:[%s1136 + $0x1b9] sm:$0xff]
  %v3162 = vld [vmem:[%s1136 + $0x1c9] sm:$0xff]
  %v3163 = vld [vmem:[%s1136 + $0x1d1] sm:$0xff]
  %v3164 = vld [vmem:[%s1136 + $0x1e1] sm:$0xff]
  %v3165 = vld [vmem:[%s1136 + $0x1e9] sm:$0xff]
  %v3166 = vld [vmem:[%s1136 + $0x1f9] sm:$0xff]
  %v3167 = vld [vmem:[%s1136 + $0x201] sm:$0xff]
  %v3168 = vld [vmem:[%s1136 + $0x211] sm:$0xff]
  %v3169 = vld [vmem:[%s1136 + $0x219] sm:$0xff]
  %v3170 = vld [vmem:[%s1136 + $0x229] sm:$0xff]
  %v3171 = vld [vmem:[%s1136 + $0x231] sm:$0xff]
  %v3172 = vld [vmem:[%s1136 + $0x241] sm:$0xff]
  %v3173 = vld [vmem:[%s1136 + $0x249] sm:$0xff]
  %v3174 = vld [vmem:[%s1136 + $0x259] sm:$0xff]
  %v3175 = vld [vmem:[%s1136 + $0x261] sm:$0xff]
  %v3176 = vld [vmem:[%s1136 + $0x271] sm:$0xff]
  %v3177 = vld [vmem:[%s1136 + $0x279] sm:$0xff]
  %v3178 = vld [vmem:[%s1136 + $0x289] sm:$0xff]
  %v3179 = vld [vmem:[%s1136 + $0x291] sm:$0xff]
  %v3180 = vld [vmem:[%s1136 + $0x2a1] sm:$0xff]
  %v3181 = vld [vmem:[%s1136 + $0x2a9] sm:$0xff]
  %v3182 = vld [vmem:[%s1136 + $0x2b9] sm:$0xff]
  %v3183 = vld [vmem:[%s1136 + $0x2c1] sm:$0xff]
  %v3184 = vld [vmem:[%s1136 + $0x2d1] sm:$0xff]
  %v3185 = vld [vmem:[%s1136 + $0x2d9] sm:$0xff]
  %v3186 = vld [vmem:[%s1136 + $0x2e9] sm:$0xff]
  %v3187 = vld [vmem:[%s1136 + $0x2f1] sm:$0xff]
  %v3188 = vld [vmem:[%s1136 + $0x301] sm:$0xff]
  %v3189 = vld [vmem:[%s1136 + $0x309] sm:$0xff]
  %v3190 = vld [vmem:[%s1136 + $0x319] sm:$0xff]
  %v3191 = vld [vmem:[%s1136 + $0x321] sm:$0xff]
  %v3192 = vpack.c.bf16 %v3129, %v3128
  %v3193 = vpack.c.bf16 %v3131, %v3130
  %v3194 = vpack.c.bf16 %v3133, %v3132
  %v3195 = vpack.c.bf16 %v3135, %v3134
  %v3196 = vpack.c.bf16 %v3137, %v3136
  %v3197 = vpack.c.bf16 %v3139, %v3138
  %v3198 = vpack.c.bf16 %v3141, %v3140
  %v3199 = vpack.c.bf16 %v3143, %v3142
  %v3200 = vpack.c.bf16 %v3145, %v3144
  %v3201 = vpack.c.bf16 %v3147, %v3146
  %v3202 = vpack.c.bf16 %v3149, %v3148
  %v3203 = vpack.c.bf16 %v3151, %v3150
  %v3204 = vpack.c.bf16 %v3153, %v3152
  %v3205 = vpack.c.bf16 %v3155, %v3154
  %v3206 = vpack.c.bf16 %v3157, %v3156
  %v3207 = vpack.c.bf16 %v3159, %v3158
  %v3208 = vpack.c.bf16 %v3161, %v3160
  %v3209 = vpack.c.bf16 %v3163, %v3162
  %v3210 = vpack.c.bf16 %v3165, %v3164
  %v3211 = vpack.c.bf16 %v3167, %v3166
  %v3212 = vpack.c.bf16 %v3169, %v3168
  %v3213 = vpack.c.bf16 %v3171, %v3170
  %v3214 = vpack.c.bf16 %v3173, %v3172
  %v3215 = vpack.c.bf16 %v3175, %v3174
  %v3216 = vpack.c.bf16 %v3177, %v3176
  %v3217 = vpack.c.bf16 %v3179, %v3178
  %v3218 = vpack.c.bf16 %v3181, %v3180
  %v3219 = vpack.c.bf16 %v3183, %v3182
  %v3220 = vpack.c.bf16 %v3185, %v3184
  %v3221 = vpack.c.bf16 %v3187, %v3186
  %v3222 = vpack.c.bf16 %v3189, %v3188
  %v3223 = vpack.c.bf16 %v3191, %v3190
  %s3224 = scalar_lea.vmem %s2, 256
  %v3225 = vld [vmem:[%s3224] sm:$0xf]
  %v3226 = vld [vmem:[%s3224 + $0x4] sm:$0xf]
  %v3227 = vld [vmem:[%s3224 + $0x8] sm:$0xf]
  %v3228 = vld [vmem:[%s3224 + $0xc] sm:$0xf]
  %v3229 = vld [vmem:[%s3224 + $0x10] sm:$0xf]
  %v3230 = vld [vmem:[%s3224 + $0x14] sm:$0xf]
  %v3231 = vld [vmem:[%s3224 + $0x18] sm:$0xf]
  %v3232 = vld [vmem:[%s3224 + $0x1c] sm:$0xf]
  %v3233 = vld [vmem:[%s3224 + $0x20] sm:$0xf]
  %v3234 = vld [vmem:[%s3224 + $0x24] sm:$0xf]
  %v3235 = vld [vmem:[%s3224 + $0x28] sm:$0xf]
  %v3236 = vld [vmem:[%s3224 + $0x2c] sm:$0xf]
  %v3237 = vld [vmem:[%s3224 + $0x30] sm:$0xf]
  %v3238 = vld [vmem:[%s3224 + $0x34] sm:$0xf]
  %v3239 = vld [vmem:[%s3224 + $0x38] sm:$0xf]
  %v3240 = vld [vmem:[%s3224 + $0x3c] sm:$0xf]
  %v3257 = vunpack.c.l.b16 %v3225
  %v3258 = vunpack.c.l.b16 %v3226
  %v3259 = vunpack.c.l.b16 %v3227
  %v3260 = vunpack.c.l.b16 %v3228
  %v3261 = vunpack.c.l.b16 %v3229
  %v3262 = vunpack.c.l.b16 %v3230
  %v3263 = vunpack.c.l.b16 %v3231
  %v3264 = vunpack.c.l.b16 %v3232
  %v3265 = vunpack.c.l.b16 %v3233
  %v3266 = vunpack.c.l.b16 %v3234
  %v3267 = vunpack.c.l.b16 %v3235
  %v3268 = vunpack.c.l.b16 %v3236
  %v3269 = vunpack.c.l.b16 %v3237
  %v3270 = vunpack.c.l.b16 %v3238
  %v3271 = vunpack.c.l.b16 %v3239
  %v3272 = vunpack.c.l.b16 %v3240
  %v3273 = vpack.c.b16 %v3258, %v3257
  %v3274 = vpack.c.b16 %v3260, %v3259
  %v3275 = vpack.c.b16 %v3262, %v3261
  %v3276 = vpack.c.b16 %v3264, %v3263
  %v3277 = vpack.c.b16 %v3266, %v3265
  %v3278 = vpack.c.b16 %v3268, %v3267
  %v3279 = vpack.c.b16 %v3270, %v3269
  %v3280 = vpack.c.b16 %v3272, %v3271
  %3289 = vmatprep.subr.bf16.mxu0 0
  %3290 = vmatpush1.bf16.msra.mxu0 %v3280
  %3291 = vmatprep.subr.bf16.mxu0 0
  %3292 = vmatpush1.bf16.msra.mxu0 %v3279
  %3293 = vmatprep.subr.bf16.mxu0 0
  %3294 = vmatpush1.bf16.msra.mxu0 %v3278
  %3295 = vmatprep.subr.bf16.mxu0 0
  %3296 = vmatpush1.bf16.msra.mxu0 %v3277
  %3297 = vmatprep.subr.bf16.mxu0 0
  %3298 = vmatpush1.bf16.msra.mxu0 %v3276
  %3299 = vmatprep.subr.bf16.mxu0 0
  %3300 = vmatpush1.bf16.msra.mxu0 %v3275
  %3301 = vmatprep.subr.bf16.mxu0 0
  %3302 = vmatpush1.bf16.msra.mxu0 %v3274
  %3303 = vmatprep.subr.bf16.mxu0 0
  %3304 = vmatpush1.bf16.msra.mxu0 %v3273
  %3305 = vmatprep.subr.bf16.mxu0 0
  %3306 = vmatpush2.bf16.msra.mxu0 0
  %3307 = vmatprep.subr.bf16.mxu0 0
  %3308 = vmatpush2.bf16.msra.mxu0 0
  %3309 = vmatprep.subr.bf16.mxu0 0
  %3310 = vmatpush2.bf16.msra.mxu0 0
  %3311 = vmatprep.subr.bf16.mxu0 0
  %3312 = vmatpush2.bf16.msra.mxu0 0
  %3313 = vmatprep.subr.bf16.mxu0 0
  %3314 = vmatpush2.bf16.msra.mxu0 0
  %3315 = vmatprep.subr.bf16.mxu0 0
  %3316 = vmatpush2.bf16.msra.mxu0 0
  %3317 = vmatprep.subr.bf16.mxu0 0
  %3318 = vmatpush2.bf16.msra.mxu0 0
  %3319 = vmatprep.subr.bf16.mxu0 0
  %3320 = vmatpush2.bf16.msra.mxu0 0
  %3321 = vmatprep.mubr.bf16.mxu0 0
  %3322 = vmatmul.mubr.bf16.gmra.mxu0 %v3192
  %v3323 = vpop.f32.mrf.mxu0
  %v3324 = vadd.f32 0.0, %v3323
  %v3325 = vpop.f32.mrf.mxu0
  %v3326 = vpop.f32.mrf.mxu0
  %v3327 = vadd.f32 0.0, %v3326
  %v3328 = vpop.f32.mrf.mxu0
  %3329 = vmatprep.mubr.bf16.mxu0 0
  %3330 = vmatmul.mubr.bf16.gmra.mxu0 %v3193
  %v3331 = vpop.f32.mrf.mxu0
  %v3332 = vadd.f32 0.0, %v3331
  %v3333 = vpop.f32.mrf.mxu0
  %v3334 = vpop.f32.mrf.mxu0
  %v3335 = vadd.f32 0.0, %v3334
  %v3336 = vpop.f32.mrf.mxu0
  %3337 = vmatprep.mubr.bf16.mxu0 0
  %3338 = vmatmul.mubr.bf16.gmra.mxu0 %v3194
  %v3339 = vpop.f32.mrf.mxu0
  %v3340 = vadd.f32 0.0, %v3339
  %v3341 = vpop.f32.mrf.mxu0
  %v3342 = vpop.f32.mrf.mxu0
  %v3343 = vadd.f32 0.0, %v3342
  %v3344 = vpop.f32.mrf.mxu0
  %3345 = vmatprep.mubr.bf16.mxu0 0
  %3346 = vmatmul.mubr.bf16.gmra.mxu0 %v3195
  %v3347 = vpop.f32.mrf.mxu0
  %v3348 = vadd.f32 0.0, %v3347
  %v3349 = vpop.f32.mrf.mxu0
  %v3350 = vpop.f32.mrf.mxu0
  %v3351 = vadd.f32 0.0, %v3350
  %v3352 = vpop.f32.mrf.mxu0
  %3353 = vmatprep.mubr.bf16.mxu0 0
  %3354 = vmatmul.mubr.bf16.gmra.mxu0 %v3196
  %v3355 = vpop.f32.mrf.mxu0
  %v3356 = vadd.f32 0.0, %v3355
  %v3357 = vpop.f32.mrf.mxu0
  %v3358 = vpop.f32.mrf.mxu0
  %v3359 = vadd.f32 0.0, %v3358
  %v3360 = vpop.f32.mrf.mxu0
  %3361 = vmatprep.mubr.bf16.mxu0 0
  %3362 = vmatmul.mubr.bf16.gmra.mxu0 %v3197
  %v3363 = vpop.f32.mrf.mxu0
  %v3364 = vadd.f32 0.0, %v3363
  %v3365 = vpop.f32.mrf.mxu0
  %v3366 = vpop.f32.mrf.mxu0
  %v3367 = vadd.f32 0.0, %v3366
  %v3368 = vpop.f32.mrf.mxu0
  %3369 = vmatprep.mubr.bf16.mxu0 0
  %3370 = vmatmul.mubr.bf16.gmra.mxu0 %v3198
  %v3371 = vpop.f32.mrf.mxu0
  %v3372 = vadd.f32 0.0, %v3371
  %v3373 = vpop.f32.mrf.mxu0
  %v3374 = vpop.f32.mrf.mxu0
  %v3375 = vadd.f32 0.0, %v3374
  %v3376 = vpop.f32.mrf.mxu0
  %3377 = vmatprep.mubr.bf16.mxu0 0
  %3378 = vmatmul.mubr.bf16.gmra.mxu0 %v3199
  %v3379 = vpop.f32.mrf.mxu0
  %v3380 = vadd.f32 0.0, %v3379
  %v3381 = vpop.f32.mrf.mxu0
  %v3382 = vpop.f32.mrf.mxu0
  %v3383 = vadd.f32 0.0, %v3382
  %v3384 = vpop.f32.mrf.mxu0
  %3385 = vmatprep.mubr.bf16.mxu0 0
  %3386 = vmatmul.mubr.bf16.gmra.mxu0 %v3200
  %v3387 = vpop.f32.mrf.mxu0
  %v3388 = vadd.f32 0.0, %v3387
  %v3389 = vpop.f32.mrf.mxu0
  %v3390 = vpop.f32.mrf.mxu0
  %v3391 = vadd.f32 0.0, %v3390
  %v3392 = vpop.f32.mrf.mxu0
  %3393 = vmatprep.mubr.bf16.mxu0 0
  %3394 = vmatmul.mubr.bf16.gmra.mxu0 %v3201
  %v3395 = vpop.f32.mrf.mxu0
  %v3396 = vadd.f32 0.0, %v3395
  %v3397 = vpop.f32.mrf.mxu0
  %v3398 = vpop.f32.mrf.mxu0
  %v3399 = vadd.f32 0.0, %v3398
  %v3400 = vpop.f32.mrf.mxu0
  %3401 = vmatprep.mubr.bf16.mxu0 0
  %3402 = vmatmul.mubr.bf16.gmra.mxu0 %v3202
  %v3403 = vpop.f32.mrf.mxu0
  %v3404 = vadd.f32 0.0, %v3403
  %v3405 = vpop.f32.mrf.mxu0
  %v3406 = vpop.f32.mrf.mxu0
  %v3407 = vadd.f32 0.0, %v3406
  %v3408 = vpop.f32.mrf.mxu0
  %3409 = vmatprep.mubr.bf16.mxu0 0
  %3410 = vmatmul.mubr.bf16.gmra.mxu0 %v3203
  %v3411 = vpop.f32.mrf.mxu0
  %v3412 = vadd.f32 0.0, %v3411
  %v3413 = vpop.f32.mrf.mxu0
  %v3414 = vpop.f32.mrf.mxu0
  %v3415 = vadd.f32 0.0, %v3414
  %v3416 = vpop.f32.mrf.mxu0
  %3417 = vmatprep.mubr.bf16.mxu0 0
  %3418 = vmatmul.mubr.bf16.gmra.mxu0 %v3204
  %v3419 = vpop.f32.mrf.mxu0
  %v3420 = vadd.f32 0.0, %v3419
  %v3421 = vpop.f32.mrf.mxu0
  %v3422 = vpop.f32.mrf.mxu0
  %v3423 = vadd.f32 0.0, %v3422
  %v3424 = vpop.f32.mrf.mxu0
  %3425 = vmatprep.mubr.bf16.mxu0 0
  %3426 = vmatmul.mubr.bf16.gmra.mxu0 %v3205
  %v3427 = vpop.f32.mrf.mxu0
  %v3428 = vadd.f32 0.0, %v3427
  %v3429 = vpop.f32.mrf.mxu0
  %v3430 = vpop.f32.mrf.mxu0
  %v3431 = vadd.f32 0.0, %v3430
  %v3432 = vpop.f32.mrf.mxu0
  %3433 = vmatprep.mubr.bf16.mxu0 0
  %3434 = vmatmul.mubr.bf16.gmra.mxu0 %v3206
  %v3435 = vpop.f32.mrf.mxu0
  %v3436 = vadd.f32 0.0, %v3435
  %v3437 = vpop.f32.mrf.mxu0
  %v3438 = vpop.f32.mrf.mxu0
  %v3439 = vadd.f32 0.0, %v3438
  %v3440 = vpop.f32.mrf.mxu0
  %3441 = vmatprep.mubr.bf16.mxu0 0
  %3442 = vmatmul.mubr.bf16.gmra.mxu0 %v3207
  %v3443 = vpop.f32.mrf.mxu0
  %v3444 = vadd.f32 0.0, %v3443
  %v3445 = vpop.f32.mrf.mxu0
  %v3446 = vpop.f32.mrf.mxu0
  %v3447 = vadd.f32 0.0, %v3446
  %v3448 = vpop.f32.mrf.mxu0
  %3449 = vmatprep.mubr.bf16.mxu0 0
  %3450 = vmatmul.mubr.bf16.gmra.mxu0 %v3208
  %v3451 = vpop.f32.mrf.mxu0
  %v3452 = vadd.f32 0.0, %v3451
  %v3453 = vpop.f32.mrf.mxu0
  %v3454 = vpop.f32.mrf.mxu0
  %v3455 = vadd.f32 0.0, %v3454
  %v3456 = vpop.f32.mrf.mxu0
  %3457 = vmatprep.mubr.bf16.mxu0 0
  %3458 = vmatmul.mubr.bf16.gmra.mxu0 %v3209
  %v3459 = vpop.f32.mrf.mxu0
  %v3460 = vadd.f32 0.0, %v3459
  %v3461 = vpop.f32.mrf.mxu0
  %v3462 = vpop.f32.mrf.mxu0
  %v3463 = vadd.f32 0.0, %v3462
  %v3464 = vpop.f32.mrf.mxu0
  %3465 = vmatprep.mubr.bf16.mxu0 0
  %3466 = vmatmul.mubr.bf16.gmra.mxu0 %v3210
  %v3467 = vpop.f32.mrf.mxu0
  %v3468 = vadd.f32 0.0, %v3467
  %v3469 = vpop.f32.mrf.mxu0
  %v3470 = vpop.f32.mrf.mxu0
  %v3471 = vadd.f32 0.0, %v3470
  %v3472 = vpop.f32.mrf.mxu0
  %3473 = vmatprep.mubr.bf16.mxu0 0
  %3474 = vmatmul.mubr.bf16.gmra.mxu0 %v3211
  %v3475 = vpop.f32.mrf.mxu0
  %v3476 = vadd.f32 0.0, %v3475
  %v3477 = vpop.f32.mrf.mxu0
  %v3478 = vpop.f32.mrf.mxu0
  %v3479 = vadd.f32 0.0, %v3478
  %v3480 = vpop.f32.mrf.mxu0
  %3481 = vmatprep.mubr.bf16.mxu0 0
  %3482 = vmatmul.mubr.bf16.gmra.mxu0 %v3212
  %v3483 = vpop.f32.mrf.mxu0
  %v3484 = vadd.f32 0.0, %v3483
  %v3485 = vpop.f32.mrf.mxu0
  %v3486 = vpop.f32.mrf.mxu0
  %v3487 = vadd.f32 0.0, %v3486
  %v3488 = vpop.f32.mrf.mxu0
  %3489 = vmatprep.mubr.bf16.mxu0 0
  %3490 = vmatmul.mubr.bf16.gmra.mxu0 %v3213
  %v3491 = vpop.f32.mrf.mxu0
  %v3492 = vadd.f32 0.0, %v3491
  %v3493 = vpop.f32.mrf.mxu0
  %v3494 = vpop.f32.mrf.mxu0
  %v3495 = vadd.f32 0.0, %v3494
  %v3496 = vpop.f32.mrf.mxu0
  %3497 = vmatprep.mubr.bf16.mxu0 0
  %3498 = vmatmul.mubr.bf16.gmra.mxu0 %v3214
  %v3499 = vpop.f32.mrf.mxu0
  %v3500 = vadd.f32 0.0, %v3499
  %v3501 = vpop.f32.mrf.mxu0
  %v3502 = vpop.f32.mrf.mxu0
  %v3503 = vadd.f32 0.0, %v3502
  %v3504 = vpop.f32.mrf.mxu0
  %3505 = vmatprep.mubr.bf16.mxu0 0
  %3506 = vmatmul.mubr.bf16.gmra.mxu0 %v3215
  %v3507 = vpop.f32.mrf.mxu0
  %v3508 = vadd.f32 0.0, %v3507
  %v3509 = vpop.f32.mrf.mxu0
  %v3510 = vpop.f32.mrf.mxu0
  %v3511 = vadd.f32 0.0, %v3510
  %v3512 = vpop.f32.mrf.mxu0
  %3513 = vmatprep.mubr.bf16.mxu0 0
  %3514 = vmatmul.mubr.bf16.gmra.mxu0 %v3216
  %v3515 = vpop.f32.mrf.mxu0
  %v3516 = vadd.f32 0.0, %v3515
  %v3517 = vpop.f32.mrf.mxu0
  %v3518 = vpop.f32.mrf.mxu0
  %v3519 = vadd.f32 0.0, %v3518
  %v3520 = vpop.f32.mrf.mxu0
  %3521 = vmatprep.mubr.bf16.mxu0 0
  %3522 = vmatmul.mubr.bf16.gmra.mxu0 %v3217
  %v3523 = vpop.f32.mrf.mxu0
  %v3524 = vadd.f32 0.0, %v3523
  %v3525 = vpop.f32.mrf.mxu0
  %v3526 = vpop.f32.mrf.mxu0
  %v3527 = vadd.f32 0.0, %v3526
  %v3528 = vpop.f32.mrf.mxu0
  %3529 = vmatprep.mubr.bf16.mxu0 0
  %3530 = vmatmul.mubr.bf16.gmra.mxu0 %v3218
  %v3531 = vpop.f32.mrf.mxu0
  %v3532 = vadd.f32 0.0, %v3531
  %v3533 = vpop.f32.mrf.mxu0
  %v3534 = vpop.f32.mrf.mxu0
  %v3535 = vadd.f32 0.0, %v3534
  %v3536 = vpop.f32.mrf.mxu0
  %3537 = vmatprep.mubr.bf16.mxu0 0
  %3538 = vmatmul.mubr.bf16.gmra.mxu0 %v3219
  %v3539 = vpop.f32.mrf.mxu0
  %v3540 = vadd.f32 0.0, %v3539
  %v3541 = vpop.f32.mrf.mxu0
  %v3542 = vpop.f32.mrf.mxu0
  %v3543 = vadd.f32 0.0, %v3542
  %v3544 = vpop.f32.mrf.mxu0
  %3545 = vmatprep.mubr.bf16.mxu0 0
  %3546 = vmatmul.mubr.bf16.gmra.mxu0 %v3220
  %v3547 = vpop.f32.mrf.mxu0
  %v3548 = vadd.f32 0.0, %v3547
  %v3549 = vpop.f32.mrf.mxu0
  %v3550 = vpop.f32.mrf.mxu0
  %v3551 = vadd.f32 0.0, %v3550
  %v3552 = vpop.f32.mrf.mxu0
  %3553 = vmatprep.mubr.bf16.mxu0 0
  %3554 = vmatmul.mubr.bf16.gmra.mxu0 %v3221
  %v3555 = vpop.f32.mrf.mxu0
  %v3556 = vadd.f32 0.0, %v3555
  %v3557 = vpop.f32.mrf.mxu0
  %v3558 = vpop.f32.mrf.mxu0
  %v3559 = vadd.f32 0.0, %v3558
  %v3560 = vpop.f32.mrf.mxu0
  %3561 = vmatprep.mubr.bf16.mxu0 0
  %3562 = vmatmul.mubr.bf16.gmra.mxu0 %v3222
  %v3563 = vpop.f32.mrf.mxu0
  %v3564 = vadd.f32 0.0, %v3563
  %v3565 = vpop.f32.mrf.mxu0
  %v3566 = vpop.f32.mrf.mxu0
  %v3567 = vadd.f32 0.0, %v3566
  %v3568 = vpop.f32.mrf.mxu0
  %3569 = vmatprep.mubr.bf16.mxu0 0
  %3570 = vmatmul.mubr.bf16.gmra.mxu0 %v3223
  %v3571 = vpop.f32.mrf.mxu0
  %v3572 = vadd.f32 0.0, %v3571
  %v3573 = vpop.f32.mrf.mxu0
  %v3574 = vpop.f32.mrf.mxu0
  %v3575 = vadd.f32 0.0, %v3574
  %v3576 = vpop.f32.mrf.mxu0
  %3577 = vdwg.mxu0
  %v3578 = vadd.f32 %v3064, %v3324
  %v3579 = vadd.f32 %v3065, %v3327
  %v3580 = vadd.f32 %v3066, %v3332
  %v3581 = vadd.f32 %v3067, %v3335
  %v3582 = vadd.f32 %v3068, %v3340
  %v3583 = vadd.f32 %v3069, %v3343
  %v3584 = vadd.f32 %v3070, %v3348
  %v3585 = vadd.f32 %v3071, %v3351
  %v3586 = vadd.f32 %v3072, %v3356
  %v3587 = vadd.f32 %v3073, %v3359
  %v3588 = vadd.f32 %v3074, %v3364
  %v3589 = vadd.f32 %v3075, %v3367
  %v3590 = vadd.f32 %v3076, %v3372
  %v3591 = vadd.f32 %v3077, %v3375
  %v3592 = vadd.f32 %v3078, %v3380
  %v3593 = vadd.f32 %v3079, %v3383
  %v3594 = vadd.f32 %v3080, %v3388
  %v3595 = vadd.f32 %v3081, %v3391
  %v3596 = vadd.f32 %v3082, %v3396
  %v3597 = vadd.f32 %v3083, %v3399
  %v3598 = vadd.f32 %v3084, %v3404
  %v3599 = vadd.f32 %v3085, %v3407
  %v3600 = vadd.f32 %v3086, %v3412
  %v3601 = vadd.f32 %v3087, %v3415
  %v3602 = vadd.f32 %v3088, %v3420
  %v3603 = vadd.f32 %v3089, %v3423
  %v3604 = vadd.f32 %v3090, %v3428
  %v3605 = vadd.f32 %v3091, %v3431
  %v3606 = vadd.f32 %v3092, %v3436
  %v3607 = vadd.f32 %v3093, %v3439
  %v3608 = vadd.f32 %v3094, %v3444
  %v3609 = vadd.f32 %v3095, %v3447
  %v3610 = vadd.f32 %v3096, %v3452
  %v3611 = vadd.f32 %v3097, %v3455
  %v3612 = vadd.f32 %v3098, %v3460
  %v3613 = vadd.f32 %v3099, %v3463
  %v3614 = vadd.f32 %v3100, %v3468
  %v3615 = vadd.f32 %v3101, %v3471
  %v3616 = vadd.f32 %v3102, %v3476
  %v3617 = vadd.f32 %v3103, %v3479
  %v3618 = vadd.f32 %v3104, %v3484
  %v3619 = vadd.f32 %v3105, %v3487
  %v3620 = vadd.f32 %v3106, %v3492
  %v3621 = vadd.f32 %v3107, %v3495
  %v3622 = vadd.f32 %v3108, %v3500
  %v3623 = vadd.f32 %v3109, %v3503
  %v3624 = vadd.f32 %v3110, %v3508
  %v3625 = vadd.f32 %v3111, %v3511
  %v3626 = vadd.f32 %v3112, %v3516
  %v3627 = vadd.f32 %v3113, %v3519
  %v3628 = vadd.f32 %v3114, %v3524
  %v3629 = vadd.f32 %v3115, %v3527
  %v3630 = vadd.f32 %v3116, %v3532
  %v3631 = vadd.f32 %v3117, %v3535
  %v3632 = vadd.f32 %v3118, %v3540
  %v3633 = vadd.f32 %v3119, %v3543
  %v3634 = vadd.f32 %v3120, %v3548
  %v3635 = vadd.f32 %v3121, %v3551
  %v3636 = vadd.f32 %v3122, %v3556
  %v3637 = vadd.f32 %v3123, %v3559
  %v3638 = vadd.f32 %v3124, %v3564
  %v3639 = vadd.f32 %v3125, %v3567
  %v3640 = vadd.f32 %v3126, %v3572
  %v3641 = vadd.f32 %v3127, %v3575
  %v3642 = vld [vmem:[%s1136 + $0x2] sm:$0xff]
  %v3643 = vld [vmem:[%s1136 + $0xa] sm:$0xff]
  %v3644 = vld [vmem:[%s1136 + $0x1a] sm:$0xff]
  %v3645 = vld [vmem:[%s1136 + $0x22] sm:$0xff]
  %v3646 = vld [vmem:[%s1136 + $0x32] sm:$0xff]
  %v3647 = vld [vmem:[%s1136 + $0x3a] sm:$0xff]
  %v3648 = vld [vmem:[%s1136 + $0x4a] sm:$0xff]
  %v3649 = vld [vmem:[%s1136 + $0x52] sm:$0xff]
  %v3650 = vld [vmem:[%s1136 + $0x62] sm:$0xff]
  %v3651 = vld [vmem:[%s1136 + $0x6a] sm:$0xff]
  %v3652 = vld [vmem:[%s1136 + $0x7a] sm:$0xff]
  %v3653 = vld [vmem:[%s1136 + $0x82] sm:$0xff]
  %v3654 = vld [vmem:[%s1136 + $0x92] sm:$0xff]
  %v3655 = vld [vmem:[%s1136 + $0x9a] sm:$0xff]
  %v3656 = vld [vmem:[%s1136 + $0xaa] sm:$0xff]
  %v3657 = vld [vmem:[%s1136 + $0xb2] sm:$0xff]
  %v3658 = vld [vmem:[%s1136 + $0xc2] sm:$0xff]
  %v3659 = vld [vmem:[%s1136 + $0xca] sm:$0xff]
  %v3660 = vld [vmem:[%s1136 + $0xda] sm:$0xff]
  %v3661 = vld [vmem:[%s1136 + $0xe2] sm:$0xff]
  %v3662 = vld [vmem:[%s1136 + $0xf2] sm:$0xff]
  %v3663 = vld [vmem:[%s1136 + $0xfa] sm:$0xff]
  %v3664 = vld [vmem:[%s1136 + $0x10a] sm:$0xff]
  %v3665 = vld [vmem:[%s1136 + $0x112] sm:$0xff]
  %v3666 = vld [vmem:[%s1136 + $0x122] sm:$0xff]
  %v3667 = vld [vmem:[%s1136 + $0x12a] sm:$0xff]
  %v3668 = vld [vmem:[%s1136 + $0x13a] sm:$0xff]
  %v3669 = vld [vmem:[%s1136 + $0x142] sm:$0xff]
  %v3670 = vld [vmem:[%s1136 + $0x152] sm:$0xff]
  %v3671 = vld [vmem:[%s1136 + $0x15a] sm:$0xff]
  %v3672 = vld [vmem:[%s1136 + $0x16a] sm:$0xff]
  %v3673 = vld [vmem:[%s1136 + $0x172] sm:$0xff]
  %v3674 = vld [vmem:[%s1136 + $0x1b2] sm:$0xff]
  %v3675 = vld [vmem:[%s1136 + $0x1ba] sm:$0xff]
  %v3676 = vld [vmem:[%s1136 + $0x1ca] sm:$0xff]
  %v3677 = vld [vmem:[%s1136 + $0x1d2] sm:$0xff]
  %v3678 = vld [vmem:[%s1136 + $0x1e2] sm:$0xff]
  %v3679 = vld [vmem:[%s1136 + $0x1ea] sm:$0xff]
  %v3680 = vld [vmem:[%s1136 + $0x1fa] sm:$0xff]
  %v3681 = vld [vmem:[%s1136 + $0x202] sm:$0xff]
  %v3682 = vld [vmem:[%s1136 + $0x212] sm:$0xff]
  %v3683 = vld [vmem:[%s1136 + $0x21a] sm:$0xff]
  %v3684 = vld [vmem:[%s1136 + $0x22a] sm:$0xff]
  %v3685 = vld [vmem:[%s1136 + $0x232] sm:$0xff]
  %v3686 = vld [vmem:[%s1136 + $0x242] sm:$0xff]
  %v3687 = vld [vmem:[%s1136 + $0x24a] sm:$0xff]
  %v3688 = vld [vmem:[%s1136 + $0x25a] sm:$0xff]
  %v3689 = vld [vmem:[%s1136 + $0x262] sm:$0xff]
  %v3690 = vld [vmem:[%s1136 + $0x272] sm:$0xff]
  %v3691 = vld [vmem:[%s1136 + $0x27a] sm:$0xff]
  %v3692 = vld [vmem:[%s1136 + $0x28a] sm:$0xff]
  %v3693 = vld [vmem:[%s1136 + $0x292] sm:$0xff]
  %v3694 = vld [vmem:[%s1136 + $0x2a2] sm:$0xff]
  %v3695 = vld [vmem:[%s1136 + $0x2aa] sm:$0xff]
  %v3696 = vld [vmem:[%s1136 + $0x2ba] sm:$0xff]
  %v3697 = vld [vmem:[%s1136 + $0x2c2] sm:$0xff]
  %v3698 = vld [vmem:[%s1136 + $0x2d2] sm:$0xff]
  %v3699 = vld [vmem:[%s1136 + $0x2da] sm:$0xff]
  %v3700 = vld [vmem:[%s1136 + $0x2ea] sm:$0xff]
  %v3701 = vld [vmem:[%s1136 + $0x2f2] sm:$0xff]
  %v3702 = vld [vmem:[%s1136 + $0x302] sm:$0xff]
  %v3703 = vld [vmem:[%s1136 + $0x30a] sm:$0xff]
  %v3704 = vld [vmem:[%s1136 + $0x31a] sm:$0xff]
  %v3705 = vld [vmem:[%s1136 + $0x322] sm:$0xff]
  %v3706 = vpack.c.bf16 %v3643, %v3642
  %v3707 = vpack.c.bf16 %v3645, %v3644
  %v3708 = vpack.c.bf16 %v3647, %v3646
  %v3709 = vpack.c.bf16 %v3649, %v3648
  %v3710 = vpack.c.bf16 %v3651, %v3650
  %v3711 = vpack.c.bf16 %v3653, %v3652
  %v3712 = vpack.c.bf16 %v3655, %v3654
  %v3713 = vpack.c.bf16 %v3657, %v3656
  %v3714 = vpack.c.bf16 %v3659, %v3658
  %v3715 = vpack.c.bf16 %v3661, %v3660
  %v3716 = vpack.c.bf16 %v3663, %v3662
  %v3717 = vpack.c.bf16 %v3665, %v3664
  %v3718 = vpack.c.bf16 %v3667, %v3666
  %v3719 = vpack.c.bf16 %v3669, %v3668
  %v3720 = vpack.c.bf16 %v3671, %v3670
  %v3721 = vpack.c.bf16 %v3673, %v3672
  %v3722 = vpack.c.bf16 %v3675, %v3674
  %v3723 = vpack.c.bf16 %v3677, %v3676
  %v3724 = vpack.c.bf16 %v3679, %v3678
  %v3725 = vpack.c.bf16 %v3681, %v3680
  %v3726 = vpack.c.bf16 %v3683, %v3682
  %v3727 = vpack.c.bf16 %v3685, %v3684
  %v3728 = vpack.c.bf16 %v3687, %v3686
  %v3729 = vpack.c.bf16 %v3689, %v3688
  %v3730 = vpack.c.bf16 %v3691, %v3690
  %v3731 = vpack.c.bf16 %v3693, %v3692
  %v3732 = vpack.c.bf16 %v3695, %v3694
  %v3733 = vpack.c.bf16 %v3697, %v3696
  %v3734 = vpack.c.bf16 %v3699, %v3698
  %v3735 = vpack.c.bf16 %v3701, %v3700
  %v3736 = vpack.c.bf16 %v3703, %v3702
  %v3737 = vpack.c.bf16 %v3705, %v3704
  %s3738 = scalar_lea.vmem %s2, 320
  %v3739 = vld [vmem:[%s3738] sm:$0xf]
  %v3740 = vld [vmem:[%s3738 + $0x4] sm:$0xf]
  %v3741 = vld [vmem:[%s3738 + $0x8] sm:$0xf]
  %v3742 = vld [vmem:[%s3738 + $0xc] sm:$0xf]
  %v3743 = vld [vmem:[%s3738 + $0x10] sm:$0xf]
  %v3744 = vld [vmem:[%s3738 + $0x14] sm:$0xf]
  %v3745 = vld [vmem:[%s3738 + $0x18] sm:$0xf]
  %v3746 = vld [vmem:[%s3738 + $0x1c] sm:$0xf]
  %v3747 = vld [vmem:[%s3738 + $0x20] sm:$0xf]
  %v3748 = vld [vmem:[%s3738 + $0x24] sm:$0xf]
  %v3749 = vld [vmem:[%s3738 + $0x28] sm:$0xf]
  %v3750 = vld [vmem:[%s3738 + $0x2c] sm:$0xf]
  %v3751 = vld [vmem:[%s3738 + $0x30] sm:$0xf]
  %v3752 = vld [vmem:[%s3738 + $0x34] sm:$0xf]
  %v3753 = vld [vmem:[%s3738 + $0x38] sm:$0xf]
  %v3754 = vld [vmem:[%s3738 + $0x3c] sm:$0xf]
  %v3771 = vunpack.c.l.b16 %v3739
  %v3772 = vunpack.c.l.b16 %v3740
  %v3773 = vunpack.c.l.b16 %v3741
  %v3774 = vunpack.c.l.b16 %v3742
  %v3775 = vunpack.c.l.b16 %v3743
  %v3776 = vunpack.c.l.b16 %v3744
  %v3777 = vunpack.c.l.b16 %v3745
  %v3778 = vunpack.c.l.b16 %v3746
  %v3779 = vunpack.c.l.b16 %v3747
  %v3780 = vunpack.c.l.b16 %v3748
  %v3781 = vunpack.c.l.b16 %v3749
  %v3782 = vunpack.c.l.b16 %v3750
  %v3783 = vunpack.c.l.b16 %v3751
  %v3784 = vunpack.c.l.b16 %v3752
  %v3785 = vunpack.c.l.b16 %v3753
  %v3786 = vunpack.c.l.b16 %v3754
  %v3787 = vpack.c.b16 %v3772, %v3771
  %v3788 = vpack.c.b16 %v3774, %v3773
  %v3789 = vpack.c.b16 %v3776, %v3775
  %v3790 = vpack.c.b16 %v3778, %v3777
  %v3791 = vpack.c.b16 %v3780, %v3779
  %v3792 = vpack.c.b16 %v3782, %v3781
  %v3793 = vpack.c.b16 %v3784, %v3783
  %v3794 = vpack.c.b16 %v3786, %v3785
  %3803 = vmatprep.subr.bf16.mxu0 0
  %3804 = vmatpush1.bf16.msra.mxu0 %v3794
  %3805 = vmatprep.subr.bf16.mxu0 0
  %3806 = vmatpush1.bf16.msra.mxu0 %v3793
  %3807 = vmatprep.subr.bf16.mxu0 0
  %3808 = vmatpush1.bf16.msra.mxu0 %v3792
  %3809 = vmatprep.subr.bf16.mxu0 0
  %3810 = vmatpush1.bf16.msra.mxu0 %v3791
  %3811 = vmatprep.subr.bf16.mxu0 0
  %3812 = vmatpush1.bf16.msra.mxu0 %v3790
  %3813 = vmatprep.subr.bf16.mxu0 0
  %3814 = vmatpush1.bf16.msra.mxu0 %v3789
  %3815 = vmatprep.subr.bf16.mxu0 0
  %3816 = vmatpush1.bf16.msra.mxu0 %v3788
  %3817 = vmatprep.subr.bf16.mxu0 0
  %3818 = vmatpush1.bf16.msra.mxu0 %v3787
  %3819 = vmatprep.subr.bf16.mxu0 0
  %3820 = vmatpush2.bf16.msra.mxu0 0
  %3821 = vmatprep.subr.bf16.mxu0 0
  %3822 = vmatpush2.bf16.msra.mxu0 0
  %3823 = vmatprep.subr.bf16.mxu0 0
  %3824 = vmatpush2.bf16.msra.mxu0 0
  %3825 = vmatprep.subr.bf16.mxu0 0
  %3826 = vmatpush2.bf16.msra.mxu0 0
  %3827 = vmatprep.subr.bf16.mxu0 0
  %3828 = vmatpush2.bf16.msra.mxu0 0
  %3829 = vmatprep.subr.bf16.mxu0 0
  %3830 = vmatpush2.bf16.msra.mxu0 0
  %3831 = vmatprep.subr.bf16.mxu0 0
  %3832 = vmatpush2.bf16.msra.mxu0 0
  %3833 = vmatprep.subr.bf16.mxu0 0
  %3834 = vmatpush2.bf16.msra.mxu0 0
  %3835 = vmatprep.mubr.bf16.mxu0 0
  %3836 = vmatmul.mubr.bf16.gmra.mxu0 %v3706
  %v3837 = vpop.f32.mrf.mxu0
  %v3838 = vadd.f32 0.0, %v3837
  %v3839 = vpop.f32.mrf.mxu0
  %v3840 = vpop.f32.mrf.mxu0
  %v3841 = vadd.f32 0.0, %v3840
  %v3842 = vpop.f32.mrf.mxu0
  %3843 = vmatprep.mubr.bf16.mxu0 0
  %3844 = vmatmul.mubr.bf16.gmra.mxu0 %v3707
  %v3845 = vpop.f32.mrf.mxu0
  %v3846 = vadd.f32 0.0, %v3845
  %v3847 = vpop.f32.mrf.mxu0
  %v3848 = vpop.f32.mrf.mxu0
  %v3849 = vadd.f32 0.0, %v3848
  %v3850 = vpop.f32.mrf.mxu0
  %3851 = vmatprep.mubr.bf16.mxu0 0
  %3852 = vmatmul.mubr.bf16.gmra.mxu0 %v3708
  %v3853 = vpop.f32.mrf.mxu0
  %v3854 = vadd.f32 0.0, %v3853
  %v3855 = vpop.f32.mrf.mxu0
  %v3856 = vpop.f32.mrf.mxu0
  %v3857 = vadd.f32 0.0, %v3856
  %v3858 = vpop.f32.mrf.mxu0
  %3859 = vmatprep.mubr.bf16.mxu0 0
  %3860 = vmatmul.mubr.bf16.gmra.mxu0 %v3709
  %v3861 = vpop.f32.mrf.mxu0
  %v3862 = vadd.f32 0.0, %v3861
  %v3863 = vpop.f32.mrf.mxu0
  %v3864 = vpop.f32.mrf.mxu0
  %v3865 = vadd.f32 0.0, %v3864
  %v3866 = vpop.f32.mrf.mxu0
  %3867 = vmatprep.mubr.bf16.mxu0 0
  %3868 = vmatmul.mubr.bf16.gmra.mxu0 %v3710
  %v3869 = vpop.f32.mrf.mxu0
  %v3870 = vadd.f32 0.0, %v3869
  %v3871 = vpop.f32.mrf.mxu0
  %v3872 = vpop.f32.mrf.mxu0
  %v3873 = vadd.f32 0.0, %v3872
  %v3874 = vpop.f32.mrf.mxu0
  %3875 = vmatprep.mubr.bf16.mxu0 0
  %3876 = vmatmul.mubr.bf16.gmra.mxu0 %v3711
  %v3877 = vpop.f32.mrf.mxu0
  %v3878 = vadd.f32 0.0, %v3877
  %v3879 = vpop.f32.mrf.mxu0
  %v3880 = vpop.f32.mrf.mxu0
  %v3881 = vadd.f32 0.0, %v3880
  %v3882 = vpop.f32.mrf.mxu0
  %3883 = vmatprep.mubr.bf16.mxu0 0
  %3884 = vmatmul.mubr.bf16.gmra.mxu0 %v3712
  %v3885 = vpop.f32.mrf.mxu0
  %v3886 = vadd.f32 0.0, %v3885
  %v3887 = vpop.f32.mrf.mxu0
  %v3888 = vpop.f32.mrf.mxu0
  %v3889 = vadd.f32 0.0, %v3888
  %v3890 = vpop.f32.mrf.mxu0
  %3891 = vmatprep.mubr.bf16.mxu0 0
  %3892 = vmatmul.mubr.bf16.gmra.mxu0 %v3713
  %v3893 = vpop.f32.mrf.mxu0
  %v3894 = vadd.f32 0.0, %v3893
  %v3895 = vpop.f32.mrf.mxu0
  %v3896 = vpop.f32.mrf.mxu0
  %v3897 = vadd.f32 0.0, %v3896
  %v3898 = vpop.f32.mrf.mxu0
  %3899 = vmatprep.mubr.bf16.mxu0 0
  %3900 = vmatmul.mubr.bf16.gmra.mxu0 %v3714
  %v3901 = vpop.f32.mrf.mxu0
  %v3902 = vadd.f32 0.0, %v3901
  %v3903 = vpop.f32.mrf.mxu0
  %v3904 = vpop.f32.mrf.mxu0
  %v3905 = vadd.f32 0.0, %v3904
  %v3906 = vpop.f32.mrf.mxu0
  %3907 = vmatprep.mubr.bf16.mxu0 0
  %3908 = vmatmul.mubr.bf16.gmra.mxu0 %v3715
  %v3909 = vpop.f32.mrf.mxu0
  %v3910 = vadd.f32 0.0, %v3909
  %v3911 = vpop.f32.mrf.mxu0
  %v3912 = vpop.f32.mrf.mxu0
  %v3913 = vadd.f32 0.0, %v3912
  %v3914 = vpop.f32.mrf.mxu0
  %3915 = vmatprep.mubr.bf16.mxu0 0
  %3916 = vmatmul.mubr.bf16.gmra.mxu0 %v3716
  %v3917 = vpop.f32.mrf.mxu0
  %v3918 = vadd.f32 0.0, %v3917
  %v3919 = vpop.f32.mrf.mxu0
  %v3920 = vpop.f32.mrf.mxu0
  %v3921 = vadd.f32 0.0, %v3920
  %v3922 = vpop.f32.mrf.mxu0
  %3923 = vmatprep.mubr.bf16.mxu0 0
  %3924 = vmatmul.mubr.bf16.gmra.mxu0 %v3717
  %v3925 = vpop.f32.mrf.mxu0
  %v3926 = vadd.f32 0.0, %v3925
  %v3927 = vpop.f32.mrf.mxu0
  %v3928 = vpop.f32.mrf.mxu0
  %v3929 = vadd.f32 0.0, %v3928
  %v3930 = vpop.f32.mrf.mxu0
  %3931 = vmatprep.mubr.bf16.mxu0 0
  %3932 = vmatmul.mubr.bf16.gmra.mxu0 %v3718
  %v3933 = vpop.f32.mrf.mxu0
  %v3934 = vadd.f32 0.0, %v3933
  %v3935 = vpop.f32.mrf.mxu0
  %v3936 = vpop.f32.mrf.mxu0
  %v3937 = vadd.f32 0.0, %v3936
  %v3938 = vpop.f32.mrf.mxu0
  %3939 = vmatprep.mubr.bf16.mxu0 0
  %3940 = vmatmul.mubr.bf16.gmra.mxu0 %v3719
  %v3941 = vpop.f32.mrf.mxu0
  %v3942 = vadd.f32 0.0, %v3941
  %v3943 = vpop.f32.mrf.mxu0
  %v3944 = vpop.f32.mrf.mxu0
  %v3945 = vadd.f32 0.0, %v3944
  %v3946 = vpop.f32.mrf.mxu0
  %3947 = vmatprep.mubr.bf16.mxu0 0
  %3948 = vmatmul.mubr.bf16.gmra.mxu0 %v3720
  %v3949 = vpop.f32.mrf.mxu0
  %v3950 = vadd.f32 0.0, %v3949
  %v3951 = vpop.f32.mrf.mxu0
  %v3952 = vpop.f32.mrf.mxu0
  %v3953 = vadd.f32 0.0, %v3952
  %v3954 = vpop.f32.mrf.mxu0
  %3955 = vmatprep.mubr.bf16.mxu0 0
  %3956 = vmatmul.mubr.bf16.gmra.mxu0 %v3721
  %v3957 = vpop.f32.mrf.mxu0
  %v3958 = vadd.f32 0.0, %v3957
  %v3959 = vpop.f32.mrf.mxu0
  %v3960 = vpop.f32.mrf.mxu0
  %v3961 = vadd.f32 0.0, %v3960
  %v3962 = vpop.f32.mrf.mxu0
  %3963 = vmatprep.mubr.bf16.mxu0 0
  %3964 = vmatmul.mubr.bf16.gmra.mxu0 %v3722
  %v3965 = vpop.f32.mrf.mxu0
  %v3966 = vadd.f32 0.0, %v3965
  %v3967 = vpop.f32.mrf.mxu0
  %v3968 = vpop.f32.mrf.mxu0
  %v3969 = vadd.f32 0.0, %v3968
  %v3970 = vpop.f32.mrf.mxu0
  %3971 = vmatprep.mubr.bf16.mxu0 0
  %3972 = vmatmul.mubr.bf16.gmra.mxu0 %v3723
  %v3973 = vpop.f32.mrf.mxu0
  %v3974 = vadd.f32 0.0, %v3973
  %v3975 = vpop.f32.mrf.mxu0
  %v3976 = vpop.f32.mrf.mxu0
  %v3977 = vadd.f32 0.0, %v3976
  %v3978 = vpop.f32.mrf.mxu0
  %3979 = vmatprep.mubr.bf16.mxu0 0
  %3980 = vmatmul.mubr.bf16.gmra.mxu0 %v3724
  %v3981 = vpop.f32.mrf.mxu0
  %v3982 = vadd.f32 0.0, %v3981
  %v3983 = vpop.f32.mrf.mxu0
  %v3984 = vpop.f32.mrf.mxu0
  %v3985 = vadd.f32 0.0, %v3984
  %v3986 = vpop.f32.mrf.mxu0
  %3987 = vmatprep.mubr.bf16.mxu0 0
  %3988 = vmatmul.mubr.bf16.gmra.mxu0 %v3725
  %v3989 = vpop.f32.mrf.mxu0
  %v3990 = vadd.f32 0.0, %v3989
  %v3991 = vpop.f32.mrf.mxu0
  %v3992 = vpop.f32.mrf.mxu0
  %v3993 = vadd.f32 0.0, %v3992
  %v3994 = vpop.f32.mrf.mxu0
  %3995 = vmatprep.mubr.bf16.mxu0 0
  %3996 = vmatmul.mubr.bf16.gmra.mxu0 %v3726
  %v3997 = vpop.f32.mrf.mxu0
  %v3998 = vadd.f32 0.0, %v3997
  %v3999 = vpop.f32.mrf.mxu0
  %v4000 = vpop.f32.mrf.mxu0
  %v4001 = vadd.f32 0.0, %v4000
  %v4002 = vpop.f32.mrf.mxu0
  %4003 = vmatprep.mubr.bf16.mxu0 0
  %4004 = vmatmul.mubr.bf16.gmra.mxu0 %v3727
  %v4005 = vpop.f32.mrf.mxu0
  %v4006 = vadd.f32 0.0, %v4005
  %v4007 = vpop.f32.mrf.mxu0
  %v4008 = vpop.f32.mrf.mxu0
  %v4009 = vadd.f32 0.0, %v4008
  %v4010 = vpop.f32.mrf.mxu0
  %4011 = vmatprep.mubr.bf16.mxu0 0
  %4012 = vmatmul.mubr.bf16.gmra.mxu0 %v3728
  %v4013 = vpop.f32.mrf.mxu0
  %v4014 = vadd.f32 0.0, %v4013
  %v4015 = vpop.f32.mrf.mxu0
  %v4016 = vpop.f32.mrf.mxu0
  %v4017 = vadd.f32 0.0, %v4016
  %v4018 = vpop.f32.mrf.mxu0
  %4019 = vmatprep.mubr.bf16.mxu0 0
  %4020 = vmatmul.mubr.bf16.gmra.mxu0 %v3729
  %v4021 = vpop.f32.mrf.mxu0
  %v4022 = vadd.f32 0.0, %v4021
  %v4023 = vpop.f32.mrf.mxu0
  %v4024 = vpop.f32.mrf.mxu0
  %v4025 = vadd.f32 0.0, %v4024
  %v4026 = vpop.f32.mrf.mxu0
  %4027 = vmatprep.mubr.bf16.mxu0 0
  %4028 = vmatmul.mubr.bf16.gmra.mxu0 %v3730
  %v4029 = vpop.f32.mrf.mxu0
  %v4030 = vadd.f32 0.0, %v4029
  %v4031 = vpop.f32.mrf.mxu0
  %v4032 = vpop.f32.mrf.mxu0
  %v4033 = vadd.f32 0.0, %v4032
  %v4034 = vpop.f32.mrf.mxu0
  %4035 = vmatprep.mubr.bf16.mxu0 0
  %4036 = vmatmul.mubr.bf16.gmra.mxu0 %v3731
  %v4037 = vpop.f32.mrf.mxu0
  %v4038 = vadd.f32 0.0, %v4037
  %v4039 = vpop.f32.mrf.mxu0
  %v4040 = vpop.f32.mrf.mxu0
  %v4041 = vadd.f32 0.0, %v4040
  %v4042 = vpop.f32.mrf.mxu0
  %4043 = vmatprep.mubr.bf16.mxu0 0
  %4044 = vmatmul.mubr.bf16.gmra.mxu0 %v3732
  %v4045 = vpop.f32.mrf.mxu0
  %v4046 = vadd.f32 0.0, %v4045
  %v4047 = vpop.f32.mrf.mxu0
  %v4048 = vpop.f32.mrf.mxu0
  %v4049 = vadd.f32 0.0, %v4048
  %v4050 = vpop.f32.mrf.mxu0
  %4051 = vmatprep.mubr.bf16.mxu0 0
  %4052 = vmatmul.mubr.bf16.gmra.mxu0 %v3733
  %v4053 = vpop.f32.mrf.mxu0
  %v4054 = vadd.f32 0.0, %v4053
  %v4055 = vpop.f32.mrf.mxu0
  %v4056 = vpop.f32.mrf.mxu0
  %v4057 = vadd.f32 0.0, %v4056
  %v4058 = vpop.f32.mrf.mxu0
  %4059 = vmatprep.mubr.bf16.mxu0 0
  %4060 = vmatmul.mubr.bf16.gmra.mxu0 %v3734
  %v4061 = vpop.f32.mrf.mxu0
  %v4062 = vadd.f32 0.0, %v4061
  %v4063 = vpop.f32.mrf.mxu0
  %v4064 = vpop.f32.mrf.mxu0
  %v4065 = vadd.f32 0.0, %v4064
  %v4066 = vpop.f32.mrf.mxu0
  %4067 = vmatprep.mubr.bf16.mxu0 0
  %4068 = vmatmul.mubr.bf16.gmra.mxu0 %v3735
  %v4069 = vpop.f32.mrf.mxu0
  %v4070 = vadd.f32 0.0, %v4069
  %v4071 = vpop.f32.mrf.mxu0
  %v4072 = vpop.f32.mrf.mxu0
  %v4073 = vadd.f32 0.0, %v4072
  %v4074 = vpop.f32.mrf.mxu0
  %4075 = vmatprep.mubr.bf16.mxu0 0
  %4076 = vmatmul.mubr.bf16.gmra.mxu0 %v3736
  %v4077 = vpop.f32.mrf.mxu0
  %v4078 = vadd.f32 0.0, %v4077
  %v4079 = vpop.f32.mrf.mxu0
  %v4080 = vpop.f32.mrf.mxu0
  %v4081 = vadd.f32 0.0, %v4080
  %v4082 = vpop.f32.mrf.mxu0
  %4083 = vmatprep.mubr.bf16.mxu0 0
  %4084 = vmatmul.mubr.bf16.gmra.mxu0 %v3737
  %v4085 = vpop.f32.mrf.mxu0
  %v4086 = vadd.f32 0.0, %v4085
  %v4087 = vpop.f32.mrf.mxu0
  %v4088 = vpop.f32.mrf.mxu0
  %v4089 = vadd.f32 0.0, %v4088
  %v4090 = vpop.f32.mrf.mxu0
  %4091 = vdwg.mxu0
  %v4092 = vadd.f32 %v3578, %v3838
  %v4093 = vadd.f32 %v3579, %v3841
  %v4094 = vadd.f32 %v3580, %v3846
  %v4095 = vadd.f32 %v3581, %v3849
  %v4096 = vadd.f32 %v3582, %v3854
  %v4097 = vadd.f32 %v3583, %v3857
  %v4098 = vadd.f32 %v3584, %v3862
  %v4099 = vadd.f32 %v3585, %v3865
  %v4100 = vadd.f32 %v3586, %v3870
  %v4101 = vadd.f32 %v3587, %v3873
  %v4102 = vadd.f32 %v3588, %v3878
  %v4103 = vadd.f32 %v3589, %v3881
  %v4104 = vadd.f32 %v3590, %v3886
  %v4105 = vadd.f32 %v3591, %v3889
  %v4106 = vadd.f32 %v3592, %v3894
  %v4107 = vadd.f32 %v3593, %v3897
  %v4108 = vadd.f32 %v3594, %v3902
  %v4109 = vadd.f32 %v3595, %v3905
  %v4110 = vadd.f32 %v3596, %v3910
  %v4111 = vadd.f32 %v3597, %v3913
  %v4112 = vadd.f32 %v3598, %v3918
  %v4113 = vadd.f32 %v3599, %v3921
  %v4114 = vadd.f32 %v3600, %v3926
  %v4115 = vadd.f32 %v3601, %v3929
  %v4116 = vadd.f32 %v3602, %v3934
  %v4117 = vadd.f32 %v3603, %v3937
  %v4118 = vadd.f32 %v3604, %v3942
  %v4119 = vadd.f32 %v3605, %v3945
  %v4120 = vadd.f32 %v3606, %v3950
  %v4121 = vadd.f32 %v3607, %v3953
  %v4122 = vadd.f32 %v3608, %v3958
  %v4123 = vadd.f32 %v3609, %v3961
  %v4124 = vadd.f32 %v3610, %v3966
  %v4125 = vadd.f32 %v3611, %v3969
  %v4126 = vadd.f32 %v3612, %v3974
  %v4127 = vadd.f32 %v3613, %v3977
  %v4128 = vadd.f32 %v3614, %v3982
  %v4129 = vadd.f32 %v3615, %v3985
  %v4130 = vadd.f32 %v3616, %v3990
  %v4131 = vadd.f32 %v3617, %v3993
  %v4132 = vadd.f32 %v3618, %v3998
  %v4133 = vadd.f32 %v3619, %v4001
  %v4134 = vadd.f32 %v3620, %v4006
  %v4135 = vadd.f32 %v3621, %v4009
  %v4136 = vadd.f32 %v3622, %v4014
  %v4137 = vadd.f32 %v3623, %v4017
  %v4138 = vadd.f32 %v3624, %v4022
  %v4139 = vadd.f32 %v3625, %v4025
  %v4140 = vadd.f32 %v3626, %v4030
  %v4141 = vadd.f32 %v3627, %v4033
  %v4142 = vadd.f32 %v3628, %v4038
  %v4143 = vadd.f32 %v3629, %v4041
  %v4144 = vadd.f32 %v3630, %v4046
  %v4145 = vadd.f32 %v3631, %v4049
  %v4146 = vadd.f32 %v3632, %v4054
  %v4147 = vadd.f32 %v3633, %v4057
  %v4148 = vadd.f32 %v3634, %v4062
  %v4149 = vadd.f32 %v3635, %v4065
  %v4150 = vadd.f32 %v3636, %v4070
  %v4151 = vadd.f32 %v3637, %v4073
  %v4152 = vadd.f32 %v3638, %v4078
  %v4153 = vadd.f32 %v3639, %v4081
  %v4154 = vadd.f32 %v3640, %v4086
  %v4155 = vadd.f32 %v3641, %v4089
  %s4156 = scalar_lea.vmem [#allocation2], 48
  %v4157 = vld [vmem:[%s4156] sm:$0xff]
  %v4158 = vld [vmem:[%s4156 + $0x8] sm:$0xff]
  %v4159 = vld [vmem:[%s4156 + $0x18] sm:$0xff]
  %v4160 = vld [vmem:[%s4156 + $0x20] sm:$0xff]
  %v4161 = vld [vmem:[%s4156 + $0x30] sm:$0xff]
  %v4162 = vld [vmem:[%s4156 + $0x38] sm:$0xff]
  %v4163 = vld [vmem:[%s4156 + $0x48] sm:$0xff]
  %v4164 = vld [vmem:[%s4156 + $0x50] sm:$0xff]
  %v4165 = vld [vmem:[%s4156 + $0x60] sm:$0xff]
  %v4166 = vld [vmem:[%s4156 + $0x68] sm:$0xff]
  %v4167 = vld [vmem:[%s4156 + $0x78] sm:$0xff]
  %v4168 = vld [vmem:[%s4156 + $0x80] sm:$0xff]
  %v4169 = vld [vmem:[%s4156 + $0x90] sm:$0xff]
  %v4170 = vld [vmem:[%s4156 + $0x98] sm:$0xff]
  %v4171 = vld [vmem:[%s4156 + $0xa8] sm:$0xff]
  %v4172 = vld [vmem:[%s4156 + $0xb0] sm:$0xff]
  %v4173 = vld [vmem:[%s4156 + $0xc0] sm:$0xff]
  %v4174 = vld [vmem:[%s4156 + $0xc8] sm:$0xff]
  %v4175 = vld [vmem:[%s4156 + $0xd8] sm:$0xff]
  %v4176 = vld [vmem:[%s4156 + $0xe0] sm:$0xff]
  %v4177 = vld [vmem:[%s4156 + $0xf0] sm:$0xff]
  %v4178 = vld [vmem:[%s4156 + $0xf8] sm:$0xff]
  %v4179 = vld [vmem:[%s4156 + $0x108] sm:$0xff]
  %v4180 = vld [vmem:[%s4156 + $0x110] sm:$0xff]
  %v4181 = vld [vmem:[%s4156 + $0x120] sm:$0xff]
  %v4182 = vld [vmem:[%s4156 + $0x128] sm:$0xff]
  %v4183 = vld [vmem:[%s4156 + $0x138] sm:$0xff]
  %v4184 = vld [vmem:[%s4156 + $0x140] sm:$0xff]
  %v4185 = vld [vmem:[%s4156 + $0x150] sm:$0xff]
  %v4186 = vld [vmem:[%s4156 + $0x158] sm:$0xff]
  %v4187 = vld [vmem:[%s4156 + $0x168] sm:$0xff]
  %v4188 = vld [vmem:[%s4156 + $0x170] sm:$0xff]
  %v4189 = vld [vmem:[%s4156 + $0x1b0] sm:$0xff]
  %v4190 = vld [vmem:[%s4156 + $0x1b8] sm:$0xff]
  %v4191 = vld [vmem:[%s4156 + $0x1c8] sm:$0xff]
  %v4192 = vld [vmem:[%s4156 + $0x1d0] sm:$0xff]
  %v4193 = vld [vmem:[%s4156 + $0x1e0] sm:$0xff]
  %v4194 = vld [vmem:[%s4156 + $0x1e8] sm:$0xff]
  %v4195 = vld [vmem:[%s4156 + $0x1f8] sm:$0xff]
  %v4196 = vld [vmem:[%s4156 + $0x200] sm:$0xff]
  %v4197 = vld [vmem:[%s4156 + $0x210] sm:$0xff]
  %v4198 = vld [vmem:[%s4156 + $0x218] sm:$0xff]
  %v4199 = vld [vmem:[%s4156 + $0x228] sm:$0xff]
  %v4200 = vld [vmem:[%s4156 + $0x230] sm:$0xff]
  %v4201 = vld [vmem:[%s4156 + $0x240] sm:$0xff]
  %v4202 = vld [vmem:[%s4156 + $0x248] sm:$0xff]
  %v4203 = vld [vmem:[%s4156 + $0x258] sm:$0xff]
  %v4204 = vld [vmem:[%s4156 + $0x260] sm:$0xff]
  %v4205 = vld [vmem:[%s4156 + $0x270] sm:$0xff]
  %v4206 = vld [vmem:[%s4156 + $0x278] sm:$0xff]
  %v4207 = vld [vmem:[%s4156 + $0x288] sm:$0xff]
  %v4208 = vld [vmem:[%s4156 + $0x290] sm:$0xff]
  %v4209 = vld [vmem:[%s4156 + $0x2a0] sm:$0xff]
  %v4210 = vld [vmem:[%s4156 + $0x2a8] sm:$0xff]
  %v4211 = vld [vmem:[%s4156 + $0x2b8] sm:$0xff]
  %v4212 = vld [vmem:[%s4156 + $0x2c0] sm:$0xff]
  %v4213 = vld [vmem:[%s4156 + $0x2d0] sm:$0xff]
  %v4214 = vld [vmem:[%s4156 + $0x2d8] sm:$0xff]
  %v4215 = vld [vmem:[%s4156 + $0x2e8] sm:$0xff]
  %v4216 = vld [vmem:[%s4156 + $0x2f0] sm:$0xff]
  %v4217 = vld [vmem:[%s4156 + $0x300] sm:$0xff]
  %v4218 = vld [vmem:[%s4156 + $0x308] sm:$0xff]
  %v4219 = vld [vmem:[%s4156 + $0x318] sm:$0xff]
  %v4220 = vld [vmem:[%s4156 + $0x320] sm:$0xff]
  %v4221 = vpack.c.bf16 %v4158, %v4157
  %v4222 = vpack.c.bf16 %v4160, %v4159
  %v4223 = vpack.c.bf16 %v4162, %v4161
  %v4224 = vpack.c.bf16 %v4164, %v4163
  %v4225 = vpack.c.bf16 %v4166, %v4165
  %v4226 = vpack.c.bf16 %v4168, %v4167
  %v4227 = vpack.c.bf16 %v4170, %v4169
  %v4228 = vpack.c.bf16 %v4172, %v4171
  %v4229 = vpack.c.bf16 %v4174, %v4173
  %v4230 = vpack.c.bf16 %v4176, %v4175
  %v4231 = vpack.c.bf16 %v4178, %v4177
  %v4232 = vpack.c.bf16 %v4180, %v4179
  %v4233 = vpack.c.bf16 %v4182, %v4181
  %v4234 = vpack.c.bf16 %v4184, %v4183
  %v4235 = vpack.c.bf16 %v4186, %v4185
  %v4236 = vpack.c.bf16 %v4188, %v4187
  %v4237 = vpack.c.bf16 %v4190, %v4189
  %v4238 = vpack.c.bf16 %v4192, %v4191
  %v4239 = vpack.c.bf16 %v4194, %v4193
  %v4240 = vpack.c.bf16 %v4196, %v4195
  %v4241 = vpack.c.bf16 %v4198, %v4197
  %v4242 = vpack.c.bf16 %v4200, %v4199
  %v4243 = vpack.c.bf16 %v4202, %v4201
  %v4244 = vpack.c.bf16 %v4204, %v4203
  %v4245 = vpack.c.bf16 %v4206, %v4205
  %v4246 = vpack.c.bf16 %v4208, %v4207
  %v4247 = vpack.c.bf16 %v4210, %v4209
  %v4248 = vpack.c.bf16 %v4212, %v4211
  %v4249 = vpack.c.bf16 %v4214, %v4213
  %v4250 = vpack.c.bf16 %v4216, %v4215
  %v4251 = vpack.c.bf16 %v4218, %v4217
  %v4252 = vpack.c.bf16 %v4220, %v4219
  %s4253 = scalar_lea.vmem %s2, 384
  %v4254 = vld [vmem:[%s4253] sm:$0xf]
  %v4255 = vld [vmem:[%s4253 + $0x4] sm:$0xf]
  %v4256 = vld [vmem:[%s4253 + $0x8] sm:$0xf]
  %v4257 = vld [vmem:[%s4253 + $0xc] sm:$0xf]
  %v4258 = vld [vmem:[%s4253 + $0x10] sm:$0xf]
  %v4259 = vld [vmem:[%s4253 + $0x14] sm:$0xf]
  %v4260 = vld [vmem:[%s4253 + $0x18] sm:$0xf]
  %v4261 = vld [vmem:[%s4253 + $0x1c] sm:$0xf]
  %v4262 = vld [vmem:[%s4253 + $0x20] sm:$0xf]
  %v4263 = vld [vmem:[%s4253 + $0x24] sm:$0xf]
  %v4264 = vld [vmem:[%s4253 + $0x28] sm:$0xf]
  %v4265 = vld [vmem:[%s4253 + $0x2c] sm:$0xf]
  %v4266 = vld [vmem:[%s4253 + $0x30] sm:$0xf]
  %v4267 = vld [vmem:[%s4253 + $0x34] sm:$0xf]
  %v4268 = vld [vmem:[%s4253 + $0x38] sm:$0xf]
  %v4269 = vld [vmem:[%s4253 + $0x3c] sm:$0xf]
  %v4286 = vunpack.c.l.b16 %v4254
  %v4287 = vunpack.c.l.b16 %v4255
  %v4288 = vunpack.c.l.b16 %v4256
  %v4289 = vunpack.c.l.b16 %v4257
  %v4290 = vunpack.c.l.b16 %v4258
  %v4291 = vunpack.c.l.b16 %v4259
  %v4292 = vunpack.c.l.b16 %v4260
  %v4293 = vunpack.c.l.b16 %v4261
  %v4294 = vunpack.c.l.b16 %v4262
  %v4295 = vunpack.c.l.b16 %v4263
  %v4296 = vunpack.c.l.b16 %v4264
  %v4297 = vunpack.c.l.b16 %v4265
  %v4298 = vunpack.c.l.b16 %v4266
  %v4299 = vunpack.c.l.b16 %v4267
  %v4300 = vunpack.c.l.b16 %v4268
  %v4301 = vunpack.c.l.b16 %v4269
  %v4302 = vpack.c.b16 %v4287, %v4286
  %v4303 = vpack.c.b16 %v4289, %v4288
  %v4304 = vpack.c.b16 %v4291, %v4290
  %v4305 = vpack.c.b16 %v4293, %v4292
  %v4306 = vpack.c.b16 %v4295, %v4294
  %v4307 = vpack.c.b16 %v4297, %v4296
  %v4308 = vpack.c.b16 %v4299, %v4298
  %v4309 = vpack.c.b16 %v4301, %v4300
  %4318 = vmatprep.subr.bf16.mxu0 0
  %4319 = vmatpush1.bf16.msra.mxu0 %v4309
  %4320 = vmatprep.subr.bf16.mxu0 0
  %4321 = vmatpush1.bf16.msra.mxu0 %v4308
  %4322 = vmatprep.subr.bf16.mxu0 0
  %4323 = vmatpush1.bf16.msra.mxu0 %v4307
  %4324 = vmatprep.subr.bf16.mxu0 0
  %4325 = vmatpush1.bf16.msra.mxu0 %v4306
  %4326 = vmatprep.subr.bf16.mxu0 0
  %4327 = vmatpush1.bf16.msra.mxu0 %v4305
  %4328 = vmatprep.subr.bf16.mxu0 0
  %4329 = vmatpush1.bf16.msra.mxu0 %v4304
  %4330 = vmatprep.subr.bf16.mxu0 0
  %4331 = vmatpush1.bf16.msra.mxu0 %v4303
  %4332 = vmatprep.subr.bf16.mxu0 0
  %4333 = vmatpush1.bf16.msra.mxu0 %v4302
  %4334 = vmatprep.subr.bf16.mxu0 0
  %4335 = vmatpush2.bf16.msra.mxu0 0
  %4336 = vmatprep.subr.bf16.mxu0 0
  %4337 = vmatpush2.bf16.msra.mxu0 0
  %4338 = vmatprep.subr.bf16.mxu0 0
  %4339 = vmatpush2.bf16.msra.mxu0 0
  %4340 = vmatprep.subr.bf16.mxu0 0
  %4341 = vmatpush2.bf16.msra.mxu0 0
  %4342 = vmatprep.subr.bf16.mxu0 0
  %4343 = vmatpush2.bf16.msra.mxu0 0
  %4344 = vmatprep.subr.bf16.mxu0 0
  %4345 = vmatpush2.bf16.msra.mxu0 0
  %4346 = vmatprep.subr.bf16.mxu0 0
  %4347 = vmatpush2.bf16.msra.mxu0 0
  %4348 = vmatprep.subr.bf16.mxu0 0
  %4349 = vmatpush2.bf16.msra.mxu0 0
  %4350 = vmatprep.mubr.bf16.mxu0 0
  %4351 = vmatmul.mubr.bf16.gmra.mxu0 %v4221
  %v4352 = vpop.f32.mrf.mxu0
  %v4353 = vadd.f32 0.0, %v4352
  %v4354 = vpop.f32.mrf.mxu0
  %v4355 = vpop.f32.mrf.mxu0
  %v4356 = vadd.f32 0.0, %v4355
  %v4357 = vpop.f32.mrf.mxu0
  %4358 = vmatprep.mubr.bf16.mxu0 0
  %4359 = vmatmul.mubr.bf16.gmra.mxu0 %v4222
  %v4360 = vpop.f32.mrf.mxu0
  %v4361 = vadd.f32 0.0, %v4360
  %v4362 = vpop.f32.mrf.mxu0
  %v4363 = vpop.f32.mrf.mxu0
  %v4364 = vadd.f32 0.0, %v4363
  %v4365 = vpop.f32.mrf.mxu0
  %4366 = vmatprep.mubr.bf16.mxu0 0
  %4367 = vmatmul.mubr.bf16.gmra.mxu0 %v4223
  %v4368 = vpop.f32.mrf.mxu0
  %v4369 = vadd.f32 0.0, %v4368
  %v4370 = vpop.f32.mrf.mxu0
  %v4371 = vpop.f32.mrf.mxu0
  %v4372 = vadd.f32 0.0, %v4371
  %v4373 = vpop.f32.mrf.mxu0
  %4374 = vmatprep.mubr.bf16.mxu0 0
  %4375 = vmatmul.mubr.bf16.gmra.mxu0 %v4224
  %v4376 = vpop.f32.mrf.mxu0
  %v4377 = vadd.f32 0.0, %v4376
  %v4378 = vpop.f32.mrf.mxu0
  %v4379 = vpop.f32.mrf.mxu0
  %v4380 = vadd.f32 0.0, %v4379
  %v4381 = vpop.f32.mrf.mxu0
  %4382 = vmatprep.mubr.bf16.mxu0 0
  %4383 = vmatmul.mubr.bf16.gmra.mxu0 %v4225
  %v4384 = vpop.f32.mrf.mxu0
  %v4385 = vadd.f32 0.0, %v4384
  %v4386 = vpop.f32.mrf.mxu0
  %v4387 = vpop.f32.mrf.mxu0
  %v4388 = vadd.f32 0.0, %v4387
  %v4389 = vpop.f32.mrf.mxu0
  %4390 = vmatprep.mubr.bf16.mxu0 0
  %4391 = vmatmul.mubr.bf16.gmra.mxu0 %v4226
  %v4392 = vpop.f32.mrf.mxu0
  %v4393 = vadd.f32 0.0, %v4392
  %v4394 = vpop.f32.mrf.mxu0
  %v4395 = vpop.f32.mrf.mxu0
  %v4396 = vadd.f32 0.0, %v4395
  %v4397 = vpop.f32.mrf.mxu0
  %4398 = vmatprep.mubr.bf16.mxu0 0
  %4399 = vmatmul.mubr.bf16.gmra.mxu0 %v4227
  %v4400 = vpop.f32.mrf.mxu0
  %v4401 = vadd.f32 0.0, %v4400
  %v4402 = vpop.f32.mrf.mxu0
  %v4403 = vpop.f32.mrf.mxu0
  %v4404 = vadd.f32 0.0, %v4403
  %v4405 = vpop.f32.mrf.mxu0
  %4406 = vmatprep.mubr.bf16.mxu0 0
  %4407 = vmatmul.mubr.bf16.gmra.mxu0 %v4228
  %v4408 = vpop.f32.mrf.mxu0
  %v4409 = vadd.f32 0.0, %v4408
  %v4410 = vpop.f32.mrf.mxu0
  %v4411 = vpop.f32.mrf.mxu0
  %v4412 = vadd.f32 0.0, %v4411
  %v4413 = vpop.f32.mrf.mxu0
  %4414 = vmatprep.mubr.bf16.mxu0 0
  %4415 = vmatmul.mubr.bf16.gmra.mxu0 %v4229
  %v4416 = vpop.f32.mrf.mxu0
  %v4417 = vadd.f32 0.0, %v4416
  %v4418 = vpop.f32.mrf.mxu0
  %v4419 = vpop.f32.mrf.mxu0
  %v4420 = vadd.f32 0.0, %v4419
  %v4421 = vpop.f32.mrf.mxu0
  %4422 = vmatprep.mubr.bf16.mxu0 0
  %4423 = vmatmul.mubr.bf16.gmra.mxu0 %v4230
  %v4424 = vpop.f32.mrf.mxu0
  %v4425 = vadd.f32 0.0, %v4424
  %v4426 = vpop.f32.mrf.mxu0
  %v4427 = vpop.f32.mrf.mxu0
  %v4428 = vadd.f32 0.0, %v4427
  %v4429 = vpop.f32.mrf.mxu0
  %4430 = vmatprep.mubr.bf16.mxu0 0
  %4431 = vmatmul.mubr.bf16.gmra.mxu0 %v4231
  %v4432 = vpop.f32.mrf.mxu0
  %v4433 = vadd.f32 0.0, %v4432
  %v4434 = vpop.f32.mrf.mxu0
  %v4435 = vpop.f32.mrf.mxu0
  %v4436 = vadd.f32 0.0, %v4435
  %v4437 = vpop.f32.mrf.mxu0
  %4438 = vmatprep.mubr.bf16.mxu0 0
  %4439 = vmatmul.mubr.bf16.gmra.mxu0 %v4232
  %v4440 = vpop.f32.mrf.mxu0
  %v4441 = vadd.f32 0.0, %v4440
  %v4442 = vpop.f32.mrf.mxu0
  %v4443 = vpop.f32.mrf.mxu0
  %v4444 = vadd.f32 0.0, %v4443
  %v4445 = vpop.f32.mrf.mxu0
  %4446 = vmatprep.mubr.bf16.mxu0 0
  %4447 = vmatmul.mubr.bf16.gmra.mxu0 %v4233
  %v4448 = vpop.f32.mrf.mxu0
  %v4449 = vadd.f32 0.0, %v4448
  %v4450 = vpop.f32.mrf.mxu0
  %v4451 = vpop.f32.mrf.mxu0
  %v4452 = vadd.f32 0.0, %v4451
  %v4453 = vpop.f32.mrf.mxu0
  %4454 = vmatprep.mubr.bf16.mxu0 0
  %4455 = vmatmul.mubr.bf16.gmra.mxu0 %v4234
  %v4456 = vpop.f32.mrf.mxu0
  %v4457 = vadd.f32 0.0, %v4456
  %v4458 = vpop.f32.mrf.mxu0
  %v4459 = vpop.f32.mrf.mxu0
  %v4460 = vadd.f32 0.0, %v4459
  %v4461 = vpop.f32.mrf.mxu0
  %4462 = vmatprep.mubr.bf16.mxu0 0
  %4463 = vmatmul.mubr.bf16.gmra.mxu0 %v4235
  %v4464 = vpop.f32.mrf.mxu0
  %v4465 = vadd.f32 0.0, %v4464
  %v4466 = vpop.f32.mrf.mxu0
  %v4467 = vpop.f32.mrf.mxu0
  %v4468 = vadd.f32 0.0, %v4467
  %v4469 = vpop.f32.mrf.mxu0
  %4470 = vmatprep.mubr.bf16.mxu0 0
  %4471 = vmatmul.mubr.bf16.gmra.mxu0 %v4236
  %v4472 = vpop.f32.mrf.mxu0
  %v4473 = vadd.f32 0.0, %v4472
  %v4474 = vpop.f32.mrf.mxu0
  %v4475 = vpop.f32.mrf.mxu0
  %v4476 = vadd.f32 0.0, %v4475
  %v4477 = vpop.f32.mrf.mxu0
  %4478 = vmatprep.mubr.bf16.mxu0 0
  %4479 = vmatmul.mubr.bf16.gmra.mxu0 %v4237
  %v4480 = vpop.f32.mrf.mxu0
  %v4481 = vadd.f32 0.0, %v4480
  %v4482 = vpop.f32.mrf.mxu0
  %v4483 = vpop.f32.mrf.mxu0
  %v4484 = vadd.f32 0.0, %v4483
  %v4485 = vpop.f32.mrf.mxu0
  %4486 = vmatprep.mubr.bf16.mxu0 0
  %4487 = vmatmul.mubr.bf16.gmra.mxu0 %v4238
  %v4488 = vpop.f32.mrf.mxu0
  %v4489 = vadd.f32 0.0, %v4488
  %v4490 = vpop.f32.mrf.mxu0
  %v4491 = vpop.f32.mrf.mxu0
  %v4492 = vadd.f32 0.0, %v4491
  %v4493 = vpop.f32.mrf.mxu0
  %4494 = vmatprep.mubr.bf16.mxu0 0
  %4495 = vmatmul.mubr.bf16.gmra.mxu0 %v4239
  %v4496 = vpop.f32.mrf.mxu0
  %v4497 = vadd.f32 0.0, %v4496
  %v4498 = vpop.f32.mrf.mxu0
  %v4499 = vpop.f32.mrf.mxu0
  %v4500 = vadd.f32 0.0, %v4499
  %v4501 = vpop.f32.mrf.mxu0
  %4502 = vmatprep.mubr.bf16.mxu0 0
  %4503 = vmatmul.mubr.bf16.gmra.mxu0 %v4240
  %v4504 = vpop.f32.mrf.mxu0
  %v4505 = vadd.f32 0.0, %v4504
  %v4506 = vpop.f32.mrf.mxu0
  %v4507 = vpop.f32.mrf.mxu0
  %v4508 = vadd.f32 0.0, %v4507
  %v4509 = vpop.f32.mrf.mxu0
  %4510 = vmatprep.mubr.bf16.mxu0 0
  %4511 = vmatmul.mubr.bf16.gmra.mxu0 %v4241
  %v4512 = vpop.f32.mrf.mxu0
  %v4513 = vadd.f32 0.0, %v4512
  %v4514 = vpop.f32.mrf.mxu0
  %v4515 = vpop.f32.mrf.mxu0
  %v4516 = vadd.f32 0.0, %v4515
  %v4517 = vpop.f32.mrf.mxu0
  %4518 = vmatprep.mubr.bf16.mxu0 0
  %4519 = vmatmul.mubr.bf16.gmra.mxu0 %v4242
  %v4520 = vpop.f32.mrf.mxu0
  %v4521 = vadd.f32 0.0, %v4520
  %v4522 = vpop.f32.mrf.mxu0
  %v4523 = vpop.f32.mrf.mxu0
  %v4524 = vadd.f32 0.0, %v4523
  %v4525 = vpop.f32.mrf.mxu0
  %4526 = vmatprep.mubr.bf16.mxu0 0
  %4527 = vmatmul.mubr.bf16.gmra.mxu0 %v4243
  %v4528 = vpop.f32.mrf.mxu0
  %v4529 = vadd.f32 0.0, %v4528
  %v4530 = vpop.f32.mrf.mxu0
  %v4531 = vpop.f32.mrf.mxu0
  %v4532 = vadd.f32 0.0, %v4531
  %v4533 = vpop.f32.mrf.mxu0
  %4534 = vmatprep.mubr.bf16.mxu0 0
  %4535 = vmatmul.mubr.bf16.gmra.mxu0 %v4244
  %v4536 = vpop.f32.mrf.mxu0
  %v4537 = vadd.f32 0.0, %v4536
  %v4538 = vpop.f32.mrf.mxu0
  %v4539 = vpop.f32.mrf.mxu0
  %v4540 = vadd.f32 0.0, %v4539
  %v4541 = vpop.f32.mrf.mxu0
  %4542 = vmatprep.mubr.bf16.mxu0 0
  %4543 = vmatmul.mubr.bf16.gmra.mxu0 %v4245
  %v4544 = vpop.f32.mrf.mxu0
  %v4545 = vadd.f32 0.0, %v4544
  %v4546 = vpop.f32.mrf.mxu0
  %v4547 = vpop.f32.mrf.mxu0
  %v4548 = vadd.f32 0.0, %v4547
  %v4549 = vpop.f32.mrf.mxu0
  %4550 = vmatprep.mubr.bf16.mxu0 0
  %4551 = vmatmul.mubr.bf16.gmra.mxu0 %v4246
  %v4552 = vpop.f32.mrf.mxu0
  %v4553 = vadd.f32 0.0, %v4552
  %v4554 = vpop.f32.mrf.mxu0
  %v4555 = vpop.f32.mrf.mxu0
  %v4556 = vadd.f32 0.0, %v4555
  %v4557 = vpop.f32.mrf.mxu0
  %4558 = vmatprep.mubr.bf16.mxu0 0
  %4559 = vmatmul.mubr.bf16.gmra.mxu0 %v4247
  %v4560 = vpop.f32.mrf.mxu0
  %v4561 = vadd.f32 0.0, %v4560
  %v4562 = vpop.f32.mrf.mxu0
  %v4563 = vpop.f32.mrf.mxu0
  %v4564 = vadd.f32 0.0, %v4563
  %v4565 = vpop.f32.mrf.mxu0
  %4566 = vmatprep.mubr.bf16.mxu0 0
  %4567 = vmatmul.mubr.bf16.gmra.mxu0 %v4248
  %v4568 = vpop.f32.mrf.mxu0
  %v4569 = vadd.f32 0.0, %v4568
  %v4570 = vpop.f32.mrf.mxu0
  %v4571 = vpop.f32.mrf.mxu0
  %v4572 = vadd.f32 0.0, %v4571
  %v4573 = vpop.f32.mrf.mxu0
  %4574 = vmatprep.mubr.bf16.mxu0 0
  %4575 = vmatmul.mubr.bf16.gmra.mxu0 %v4249
  %v4576 = vpop.f32.mrf.mxu0
  %v4577 = vadd.f32 0.0, %v4576
  %v4578 = vpop.f32.mrf.mxu0
  %v4579 = vpop.f32.mrf.mxu0
  %v4580 = vadd.f32 0.0, %v4579
  %v4581 = vpop.f32.mrf.mxu0
  %4582 = vmatprep.mubr.bf16.mxu0 0
  %4583 = vmatmul.mubr.bf16.gmra.mxu0 %v4250
  %v4584 = vpop.f32.mrf.mxu0
  %v4585 = vadd.f32 0.0, %v4584
  %v4586 = vpop.f32.mrf.mxu0
  %v4587 = vpop.f32.mrf.mxu0
  %v4588 = vadd.f32 0.0, %v4587
  %v4589 = vpop.f32.mrf.mxu0
  %4590 = vmatprep.mubr.bf16.mxu0 0
  %4591 = vmatmul.mubr.bf16.gmra.mxu0 %v4251
  %v4592 = vpop.f32.mrf.mxu0
  %v4593 = vadd.f32 0.0, %v4592
  %v4594 = vpop.f32.mrf.mxu0
  %v4595 = vpop.f32.mrf.mxu0
  %v4596 = vadd.f32 0.0, %v4595
  %v4597 = vpop.f32.mrf.mxu0
  %4598 = vmatprep.mubr.bf16.mxu0 0
  %4599 = vmatmul.mubr.bf16.gmra.mxu0 %v4252
  %v4600 = vpop.f32.mrf.mxu0
  %v4601 = vadd.f32 0.0, %v4600
  %v4602 = vpop.f32.mrf.mxu0
  %v4603 = vpop.f32.mrf.mxu0
  %v4604 = vadd.f32 0.0, %v4603
  %v4605 = vpop.f32.mrf.mxu0
  %4606 = vdwg.mxu0
  %v4607 = vadd.f32 %v4092, %v4353
  %v4608 = vadd.f32 %v4093, %v4356
  %v4609 = vadd.f32 %v4094, %v4361
  %v4610 = vadd.f32 %v4095, %v4364
  %v4611 = vadd.f32 %v4096, %v4369
  %v4612 = vadd.f32 %v4097, %v4372
  %v4613 = vadd.f32 %v4098, %v4377
  %v4614 = vadd.f32 %v4099, %v4380
  %v4615 = vadd.f32 %v4100, %v4385
  %v4616 = vadd.f32 %v4101, %v4388
  %v4617 = vadd.f32 %v4102, %v4393
  %v4618 = vadd.f32 %v4103, %v4396
  %v4619 = vadd.f32 %v4104, %v4401
  %v4620 = vadd.f32 %v4105, %v4404
  %v4621 = vadd.f32 %v4106, %v4409
  %v4622 = vadd.f32 %v4107, %v4412
  %v4623 = vadd.f32 %v4108, %v4417
  %v4624 = vadd.f32 %v4109, %v4420
  %v4625 = vadd.f32 %v4110, %v4425
  %v4626 = vadd.f32 %v4111, %v4428
  %v4627 = vadd.f32 %v4112, %v4433
  %v4628 = vadd.f32 %v4113, %v4436
  %v4629 = vadd.f32 %v4114, %v4441
  %v4630 = vadd.f32 %v4115, %v4444
  %v4631 = vadd.f32 %v4116, %v4449
  %v4632 = vadd.f32 %v4117, %v4452
  %v4633 = vadd.f32 %v4118, %v4457
  %v4634 = vadd.f32 %v4119, %v4460
  %v4635 = vadd.f32 %v4120, %v4465
  %v4636 = vadd.f32 %v4121, %v4468
  %v4637 = vadd.f32 %v4122, %v4473
  %v4638 = vadd.f32 %v4123, %v4476
  %v4639 = vadd.f32 %v4124, %v4481
  %v4640 = vadd.f32 %v4125, %v4484
  %v4641 = vadd.f32 %v4126, %v4489
  %v4642 = vadd.f32 %v4127, %v4492
  %v4643 = vadd.f32 %v4128, %v4497
  %v4644 = vadd.f32 %v4129, %v4500
  %v4645 = vadd.f32 %v4130, %v4505
  %v4646 = vadd.f32 %v4131, %v4508
  %v4647 = vadd.f32 %v4132, %v4513
  %v4648 = vadd.f32 %v4133, %v4516
  %v4649 = vadd.f32 %v4134, %v4521
  %v4650 = vadd.f32 %v4135, %v4524
  %v4651 = vadd.f32 %v4136, %v4529
  %v4652 = vadd.f32 %v4137, %v4532
  %v4653 = vadd.f32 %v4138, %v4537
  %v4654 = vadd.f32 %v4139, %v4540
  %v4655 = vadd.f32 %v4140, %v4545
  %v4656 = vadd.f32 %v4141, %v4548
  %v4657 = vadd.f32 %v4142, %v4553
  %v4658 = vadd.f32 %v4143, %v4556
  %v4659 = vadd.f32 %v4144, %v4561
  %v4660 = vadd.f32 %v4145, %v4564
  %v4661 = vadd.f32 %v4146, %v4569
  %v4662 = vadd.f32 %v4147, %v4572
  %v4663 = vadd.f32 %v4148, %v4577
  %v4664 = vadd.f32 %v4149, %v4580
  %v4665 = vadd.f32 %v4150, %v4585
  %v4666 = vadd.f32 %v4151, %v4588
  %v4667 = vadd.f32 %v4152, %v4593
  %v4668 = vadd.f32 %v4153, %v4596
  %v4669 = vadd.f32 %v4154, %v4601
  %v4670 = vadd.f32 %v4155, %v4604
  %v4671 = vld [vmem:[%s4156 + $0x1] sm:$0xff]
  %v4672 = vld [vmem:[%s4156 + $0x9] sm:$0xff]
  %v4673 = vld [vmem:[%s4156 + $0x19] sm:$0xff]
  %v4674 = vld [vmem:[%s4156 + $0x21] sm:$0xff]
  %v4675 = vld [vmem:[%s4156 + $0x31] sm:$0xff]
  %v4676 = vld [vmem:[%s4156 + $0x39] sm:$0xff]
  %v4677 = vld [vmem:[%s4156 + $0x49] sm:$0xff]
  %v4678 = vld [vmem:[%s4156 + $0x51] sm:$0xff]
  %v4679 = vld [vmem:[%s4156 + $0x61] sm:$0xff]
  %v4680 = vld [vmem:[%s4156 + $0x69] sm:$0xff]
  %v4681 = vld [vmem:[%s4156 + $0x79] sm:$0xff]
  %v4682 = vld [vmem:[%s4156 + $0x81] sm:$0xff]
  %v4683 = vld [vmem:[%s4156 + $0x91] sm:$0xff]
  %v4684 = vld [vmem:[%s4156 + $0x99] sm:$0xff]
  %v4685 = vld [vmem:[%s4156 + $0xa9] sm:$0xff]
  %v4686 = vld [vmem:[%s4156 + $0xb1] sm:$0xff]
  %v4687 = vld [vmem:[%s4156 + $0xc1] sm:$0xff]
  %v4688 = vld [vmem:[%s4156 + $0xc9] sm:$0xff]
  %v4689 = vld [vmem:[%s4156 + $0xd9] sm:$0xff]
  %v4690 = vld [vmem:[%s4156 + $0xe1] sm:$0xff]
  %v4691 = vld [vmem:[%s4156 + $0xf1] sm:$0xff]
  %v4692 = vld [vmem:[%s4156 + $0xf9] sm:$0xff]
  %v4693 = vld [vmem:[%s4156 + $0x109] sm:$0xff]
  %v4694 = vld [vmem:[%s4156 + $0x111] sm:$0xff]
  %v4695 = vld [vmem:[%s4156 + $0x121] sm:$0xff]
  %v4696 = vld [vmem:[%s4156 + $0x129] sm:$0xff]
  %v4697 = vld [vmem:[%s4156 + $0x139] sm:$0xff]
  %v4698 = vld [vmem:[%s4156 + $0x141] sm:$0xff]
  %v4699 = vld [vmem:[%s4156 + $0x151] sm:$0xff]
  %v4700 = vld [vmem:[%s4156 + $0x159] sm:$0xff]
  %v4701 = vld [vmem:[%s4156 + $0x169] sm:$0xff]
  %v4702 = vld [vmem:[%s4156 + $0x171] sm:$0xff]
  %v4703 = vld [vmem:[%s4156 + $0x1b1] sm:$0xff]
  %v4704 = vld [vmem:[%s4156 + $0x1b9] sm:$0xff]
  %v4705 = vld [vmem:[%s4156 + $0x1c9] sm:$0xff]
  %v4706 = vld [vmem:[%s4156 + $0x1d1] sm:$0xff]
  %v4707 = vld [vmem:[%s4156 + $0x1e1] sm:$0xff]
  %v4708 = vld [vmem:[%s4156 + $0x1e9] sm:$0xff]
  %v4709 = vld [vmem:[%s4156 + $0x1f9] sm:$0xff]
  %v4710 = vld [vmem:[%s4156 + $0x201] sm:$0xff]
  %v4711 = vld [vmem:[%s4156 + $0x211] sm:$0xff]
  %v4712 = vld [vmem:[%s4156 + $0x219] sm:$0xff]
  %v4713 = vld [vmem:[%s4156 + $0x229] sm:$0xff]
  %v4714 = vld [vmem:[%s4156 + $0x231] sm:$0xff]
  %v4715 = vld [vmem:[%s4156 + $0x241] sm:$0xff]
  %v4716 = vld [vmem:[%s4156 + $0x249] sm:$0xff]
  %v4717 = vld [vmem:[%s4156 + $0x259] sm:$0xff]
  %v4718 = vld [vmem:[%s4156 + $0x261] sm:$0xff]
  %v4719 = vld [vmem:[%s4156 + $0x271] sm:$0xff]
  %v4720 = vld [vmem:[%s4156 + $0x279] sm:$0xff]
  %v4721 = vld [vmem:[%s4156 + $0x289] sm:$0xff]
  %v4722 = vld [vmem:[%s4156 + $0x291] sm:$0xff]
  %v4723 = vld [vmem:[%s4156 + $0x2a1] sm:$0xff]
  %v4724 = vld [vmem:[%s4156 + $0x2a9] sm:$0xff]
  %v4725 = vld [vmem:[%s4156 + $0x2b9] sm:$0xff]
  %v4726 = vld [vmem:[%s4156 + $0x2c1] sm:$0xff]
  %v4727 = vld [vmem:[%s4156 + $0x2d1] sm:$0xff]
  %v4728 = vld [vmem:[%s4156 + $0x2d9] sm:$0xff]
  %v4729 = vld [vmem:[%s4156 + $0x2e9] sm:$0xff]
  %v4730 = vld [vmem:[%s4156 + $0x2f1] sm:$0xff]
  %v4731 = vld [vmem:[%s4156 + $0x301] sm:$0xff]
  %v4732 = vld [vmem:[%s4156 + $0x309] sm:$0xff]
  %v4733 = vld [vmem:[%s4156 + $0x319] sm:$0xff]
  %v4734 = vld [vmem:[%s4156 + $0x321] sm:$0xff]
  %v4735 = vpack.c.bf16 %v4672, %v4671
  %v4736 = vpack.c.bf16 %v4674, %v4673
  %v4737 = vpack.c.bf16 %v4676, %v4675
  %v4738 = vpack.c.bf16 %v4678, %v4677
  %v4739 = vpack.c.bf16 %v4680, %v4679
  %v4740 = vpack.c.bf16 %v4682, %v4681
  %v4741 = vpack.c.bf16 %v4684, %v4683
  %v4742 = vpack.c.bf16 %v4686, %v4685
  %v4743 = vpack.c.bf16 %v4688, %v4687
  %v4744 = vpack.c.bf16 %v4690, %v4689
  %v4745 = vpack.c.bf16 %v4692, %v4691
  %v4746 = vpack.c.bf16 %v4694, %v4693
  %v4747 = vpack.c.bf16 %v4696, %v4695
  %v4748 = vpack.c.bf16 %v4698, %v4697
  %v4749 = vpack.c.bf16 %v4700, %v4699
  %v4750 = vpack.c.bf16 %v4702, %v4701
  %v4751 = vpack.c.bf16 %v4704, %v4703
  %v4752 = vpack.c.bf16 %v4706, %v4705
  %v4753 = vpack.c.bf16 %v4708, %v4707
  %v4754 = vpack.c.bf16 %v4710, %v4709
  %v4755 = vpack.c.bf16 %v4712, %v4711
  %v4756 = vpack.c.bf16 %v4714, %v4713
  %v4757 = vpack.c.bf16 %v4716, %v4715
  %v4758 = vpack.c.bf16 %v4718, %v4717
  %v4759 = vpack.c.bf16 %v4720, %v4719
  %v4760 = vpack.c.bf16 %v4722, %v4721
  %v4761 = vpack.c.bf16 %v4724, %v4723
  %v4762 = vpack.c.bf16 %v4726, %v4725
  %v4763 = vpack.c.bf16 %v4728, %v4727
  %v4764 = vpack.c.bf16 %v4730, %v4729
  %v4765 = vpack.c.bf16 %v4732, %v4731
  %v4766 = vpack.c.bf16 %v4734, %v4733
  %s4767 = scalar_lea.vmem %s2, 448
  %v4768 = vld [vmem:[%s4767] sm:$0xf]
  %v4769 = vld [vmem:[%s4767 + $0x4] sm:$0xf]
  %v4770 = vld [vmem:[%s4767 + $0x8] sm:$0xf]
  %v4771 = vld [vmem:[%s4767 + $0xc] sm:$0xf]
  %v4772 = vld [vmem:[%s4767 + $0x10] sm:$0xf]
  %v4773 = vld [vmem:[%s4767 + $0x14] sm:$0xf]
  %v4774 = vld [vmem:[%s4767 + $0x18] sm:$0xf]
  %v4775 = vld [vmem:[%s4767 + $0x1c] sm:$0xf]
  %v4776 = vld [vmem:[%s4767 + $0x20] sm:$0xf]
  %v4777 = vld [vmem:[%s4767 + $0x24] sm:$0xf]
  %v4778 = vld [vmem:[%s4767 + $0x28] sm:$0xf]
  %v4779 = vld [vmem:[%s4767 + $0x2c] sm:$0xf]
  %v4780 = vld [vmem:[%s4767 + $0x30] sm:$0xf]
  %v4781 = vld [vmem:[%s4767 + $0x34] sm:$0xf]
  %v4782 = vld [vmem:[%s4767 + $0x38] sm:$0xf]
  %v4783 = vld [vmem:[%s4767 + $0x3c] sm:$0xf]
  %v4800 = vunpack.c.l.b16 %v4768
  %v4801 = vunpack.c.l.b16 %v4769
  %v4802 = vunpack.c.l.b16 %v4770
  %v4803 = vunpack.c.l.b16 %v4771
  %v4804 = vunpack.c.l.b16 %v4772
  %v4805 = vunpack.c.l.b16 %v4773
  %v4806 = vunpack.c.l.b16 %v4774
  %v4807 = vunpack.c.l.b16 %v4775
  %v4808 = vunpack.c.l.b16 %v4776
  %v4809 = vunpack.c.l.b16 %v4777
  %v4810 = vunpack.c.l.b16 %v4778
  %v4811 = vunpack.c.l.b16 %v4779
  %v4812 = vunpack.c.l.b16 %v4780
  %v4813 = vunpack.c.l.b16 %v4781
  %v4814 = vunpack.c.l.b16 %v4782
  %v4815 = vunpack.c.l.b16 %v4783
  %v4816 = vpack.c.b16 %v4801, %v4800
  %v4817 = vpack.c.b16 %v4803, %v4802
  %v4818 = vpack.c.b16 %v4805, %v4804
  %v4819 = vpack.c.b16 %v4807, %v4806
  %v4820 = vpack.c.b16 %v4809, %v4808
  %v4821 = vpack.c.b16 %v4811, %v4810
  %v4822 = vpack.c.b16 %v4813, %v4812
  %v4823 = vpack.c.b16 %v4815, %v4814
  %4832 = vmatprep.subr.bf16.mxu0 0
  %4833 = vmatpush1.bf16.msra.mxu0 %v4823
  %4834 = vmatprep.subr.bf16.mxu0 0
  %4835 = vmatpush1.bf16.msra.mxu0 %v4822
  %4836 = vmatprep.subr.bf16.mxu0 0
  %4837 = vmatpush1.bf16.msra.mxu0 %v4821
  %4838 = vmatprep.subr.bf16.mxu0 0
  %4839 = vmatpush1.bf16.msra.mxu0 %v4820
  %4840 = vmatprep.subr.bf16.mxu0 0
  %4841 = vmatpush1.bf16.msra.mxu0 %v4819
  %4842 = vmatprep.subr.bf16.mxu0 0
  %4843 = vmatpush1.bf16.msra.mxu0 %v4818
  %4844 = vmatprep.subr.bf16.mxu0 0
  %4845 = vmatpush1.bf16.msra.mxu0 %v4817
  %4846 = vmatprep.subr.bf16.mxu0 0
  %4847 = vmatpush1.bf16.msra.mxu0 %v4816
  %4848 = vmatprep.subr.bf16.mxu0 0
  %4849 = vmatpush2.bf16.msra.mxu0 0
  %4850 = vmatprep.subr.bf16.mxu0 0
  %4851 = vmatpush2.bf16.msra.mxu0 0
  %4852 = vmatprep.subr.bf16.mxu0 0
  %4853 = vmatpush2.bf16.msra.mxu0 0
  %4854 = vmatprep.subr.bf16.mxu0 0
  %4855 = vmatpush2.bf16.msra.mxu0 0
  %4856 = vmatprep.subr.bf16.mxu0 0
  %4857 = vmatpush2.bf16.msra.mxu0 0
  %4858 = vmatprep.subr.bf16.mxu0 0
  %4859 = vmatpush2.bf16.msra.mxu0 0
  %4860 = vmatprep.subr.bf16.mxu0 0
  %4861 = vmatpush2.bf16.msra.mxu0 0
  %4862 = vmatprep.subr.bf16.mxu0 0
  %4863 = vmatpush2.bf16.msra.mxu0 0
  %4864 = vmatprep.mubr.bf16.mxu0 0
  %4865 = vmatmul.mubr.bf16.gmra.mxu0 %v4735
  %v4866 = vpop.f32.mrf.mxu0
  %v4867 = vadd.f32 0.0, %v4866
  %v4868 = vpop.f32.mrf.mxu0
  %v4869 = vpop.f32.mrf.mxu0
  %v4870 = vadd.f32 0.0, %v4869
  %v4871 = vpop.f32.mrf.mxu0
  %4872 = vmatprep.mubr.bf16.mxu0 0
  %4873 = vmatmul.mubr.bf16.gmra.mxu0 %v4736
  %v4874 = vpop.f32.mrf.mxu0
  %v4875 = vadd.f32 0.0, %v4874
  %v4876 = vpop.f32.mrf.mxu0
  %v4877 = vpop.f32.mrf.mxu0
  %v4878 = vadd.f32 0.0, %v4877
  %v4879 = vpop.f32.mrf.mxu0
  %4880 = vmatprep.mubr.bf16.mxu0 0
  %4881 = vmatmul.mubr.bf16.gmra.mxu0 %v4737
  %v4882 = vpop.f32.mrf.mxu0
  %v4883 = vadd.f32 0.0, %v4882
  %v4884 = vpop.f32.mrf.mxu0
  %v4885 = vpop.f32.mrf.mxu0
  %v4886 = vadd.f32 0.0, %v4885
  %v4887 = vpop.f32.mrf.mxu0
  %4888 = vmatprep.mubr.bf16.mxu0 0
  %4889 = vmatmul.mubr.bf16.gmra.mxu0 %v4738
  %v4890 = vpop.f32.mrf.mxu0
  %v4891 = vadd.f32 0.0, %v4890
  %v4892 = vpop.f32.mrf.mxu0
  %v4893 = vpop.f32.mrf.mxu0
  %v4894 = vadd.f32 0.0, %v4893
  %v4895 = vpop.f32.mrf.mxu0
  %4896 = vmatprep.mubr.bf16.mxu0 0
  %4897 = vmatmul.mubr.bf16.gmra.mxu0 %v4739
  %v4898 = vpop.f32.mrf.mxu0
  %v4899 = vadd.f32 0.0, %v4898
  %v4900 = vpop.f32.mrf.mxu0
  %v4901 = vpop.f32.mrf.mxu0
  %v4902 = vadd.f32 0.0, %v4901
  %v4903 = vpop.f32.mrf.mxu0
  %4904 = vmatprep.mubr.bf16.mxu0 0
  %4905 = vmatmul.mubr.bf16.gmra.mxu0 %v4740
  %v4906 = vpop.f32.mrf.mxu0
  %v4907 = vadd.f32 0.0, %v4906
  %v4908 = vpop.f32.mrf.mxu0
  %v4909 = vpop.f32.mrf.mxu0
  %v4910 = vadd.f32 0.0, %v4909
  %v4911 = vpop.f32.mrf.mxu0
  %4912 = vmatprep.mubr.bf16.mxu0 0
  %4913 = vmatmul.mubr.bf16.gmra.mxu0 %v4741
  %v4914 = vpop.f32.mrf.mxu0
  %v4915 = vadd.f32 0.0, %v4914
  %v4916 = vpop.f32.mrf.mxu0
  %v4917 = vpop.f32.mrf.mxu0
  %v4918 = vadd.f32 0.0, %v4917
  %v4919 = vpop.f32.mrf.mxu0
  %4920 = vmatprep.mubr.bf16.mxu0 0
  %4921 = vmatmul.mubr.bf16.gmra.mxu0 %v4742
  %v4922 = vpop.f32.mrf.mxu0
  %v4923 = vadd.f32 0.0, %v4922
  %v4924 = vpop.f32.mrf.mxu0
  %v4925 = vpop.f32.mrf.mxu0
  %v4926 = vadd.f32 0.0, %v4925
  %v4927 = vpop.f32.mrf.mxu0
  %4928 = vmatprep.mubr.bf16.mxu0 0
  %4929 = vmatmul.mubr.bf16.gmra.mxu0 %v4743
  %v4930 = vpop.f32.mrf.mxu0
  %v4931 = vadd.f32 0.0, %v4930
  %v4932 = vpop.f32.mrf.mxu0
  %v4933 = vpop.f32.mrf.mxu0
  %v4934 = vadd.f32 0.0, %v4933
  %v4935 = vpop.f32.mrf.mxu0
  %4936 = vmatprep.mubr.bf16.mxu0 0
  %4937 = vmatmul.mubr.bf16.gmra.mxu0 %v4744
  %v4938 = vpop.f32.mrf.mxu0
  %v4939 = vadd.f32 0.0, %v4938
  %v4940 = vpop.f32.mrf.mxu0
  %v4941 = vpop.f32.mrf.mxu0
  %v4942 = vadd.f32 0.0, %v4941
  %v4943 = vpop.f32.mrf.mxu0
  %4944 = vmatprep.mubr.bf16.mxu0 0
  %4945 = vmatmul.mubr.bf16.gmra.mxu0 %v4745
  %v4946 = vpop.f32.mrf.mxu0
  %v4947 = vadd.f32 0.0, %v4946
  %v4948 = vpop.f32.mrf.mxu0
  %v4949 = vpop.f32.mrf.mxu0
  %v4950 = vadd.f32 0.0, %v4949
  %v4951 = vpop.f32.mrf.mxu0
  %4952 = vmatprep.mubr.bf16.mxu0 0
  %4953 = vmatmul.mubr.bf16.gmra.mxu0 %v4746
  %v4954 = vpop.f32.mrf.mxu0
  %v4955 = vadd.f32 0.0, %v4954
  %v4956 = vpop.f32.mrf.mxu0
  %v4957 = vpop.f32.mrf.mxu0
  %v4958 = vadd.f32 0.0, %v4957
  %v4959 = vpop.f32.mrf.mxu0
  %4960 = vmatprep.mubr.bf16.mxu0 0
  %4961 = vmatmul.mubr.bf16.gmra.mxu0 %v4747
  %v4962 = vpop.f32.mrf.mxu0
  %v4963 = vadd.f32 0.0, %v4962
  %v4964 = vpop.f32.mrf.mxu0
  %v4965 = vpop.f32.mrf.mxu0
  %v4966 = vadd.f32 0.0, %v4965
  %v4967 = vpop.f32.mrf.mxu0
  %4968 = vmatprep.mubr.bf16.mxu0 0
  %4969 = vmatmul.mubr.bf16.gmra.mxu0 %v4748
  %v4970 = vpop.f32.mrf.mxu0
  %v4971 = vadd.f32 0.0, %v4970
  %v4972 = vpop.f32.mrf.mxu0
  %v4973 = vpop.f32.mrf.mxu0
  %v4974 = vadd.f32 0.0, %v4973
  %v4975 = vpop.f32.mrf.mxu0
  %4976 = vmatprep.mubr.bf16.mxu0 0
  %4977 = vmatmul.mubr.bf16.gmra.mxu0 %v4749
  %v4978 = vpop.f32.mrf.mxu0
  %v4979 = vadd.f32 0.0, %v4978
  %v4980 = vpop.f32.mrf.mxu0
  %v4981 = vpop.f32.mrf.mxu0
  %v4982 = vadd.f32 0.0, %v4981
  %v4983 = vpop.f32.mrf.mxu0
  %4984 = vmatprep.mubr.bf16.mxu0 0
  %4985 = vmatmul.mubr.bf16.gmra.mxu0 %v4750
  %v4986 = vpop.f32.mrf.mxu0
  %v4987 = vadd.f32 0.0, %v4986
  %v4988 = vpop.f32.mrf.mxu0
  %v4989 = vpop.f32.mrf.mxu0
  %v4990 = vadd.f32 0.0, %v4989
  %v4991 = vpop.f32.mrf.mxu0
  %4992 = vmatprep.mubr.bf16.mxu0 0
  %4993 = vmatmul.mubr.bf16.gmra.mxu0 %v4751
  %v4994 = vpop.f32.mrf.mxu0
  %v4995 = vadd.f32 0.0, %v4994
  %v4996 = vpop.f32.mrf.mxu0
  %v4997 = vpop.f32.mrf.mxu0
  %v4998 = vadd.f32 0.0, %v4997
  %v4999 = vpop.f32.mrf.mxu0
  %5000 = vmatprep.mubr.bf16.mxu0 0
  %5001 = vmatmul.mubr.bf16.gmra.mxu0 %v4752
  %v5002 = vpop.f32.mrf.mxu0
  %v5003 = vadd.f32 0.0, %v5002
  %v5004 = vpop.f32.mrf.mxu0
  %v5005 = vpop.f32.mrf.mxu0
  %v5006 = vadd.f32 0.0, %v5005
  %v5007 = vpop.f32.mrf.mxu0
  %5008 = vmatprep.mubr.bf16.mxu0 0
  %5009 = vmatmul.mubr.bf16.gmra.mxu0 %v4753
  %v5010 = vpop.f32.mrf.mxu0
  %v5011 = vadd.f32 0.0, %v5010
  %v5012 = vpop.f32.mrf.mxu0
  %v5013 = vpop.f32.mrf.mxu0
  %v5014 = vadd.f32 0.0, %v5013
  %v5015 = vpop.f32.mrf.mxu0
  %5016 = vmatprep.mubr.bf16.mxu0 0
  %5017 = vmatmul.mubr.bf16.gmra.mxu0 %v4754
  %v5018 = vpop.f32.mrf.mxu0
  %v5019 = vadd.f32 0.0, %v5018
  %v5020 = vpop.f32.mrf.mxu0
  %v5021 = vpop.f32.mrf.mxu0
  %v5022 = vadd.f32 0.0, %v5021
  %v5023 = vpop.f32.mrf.mxu0
  %5024 = vmatprep.mubr.bf16.mxu0 0
  %5025 = vmatmul.mubr.bf16.gmra.mxu0 %v4755
  %v5026 = vpop.f32.mrf.mxu0
  %v5027 = vadd.f32 0.0, %v5026
  %v5028 = vpop.f32.mrf.mxu0
  %v5029 = vpop.f32.mrf.mxu0
  %v5030 = vadd.f32 0.0, %v5029
  %v5031 = vpop.f32.mrf.mxu0
  %5032 = vmatprep.mubr.bf16.mxu0 0
  %5033 = vmatmul.mubr.bf16.gmra.mxu0 %v4756
  %v5034 = vpop.f32.mrf.mxu0
  %v5035 = vadd.f32 0.0, %v5034
  %v5036 = vpop.f32.mrf.mxu0
  %v5037 = vpop.f32.mrf.mxu0
  %v5038 = vadd.f32 0.0, %v5037
  %v5039 = vpop.f32.mrf.mxu0
  %5040 = vmatprep.mubr.bf16.mxu0 0
  %5041 = vmatmul.mubr.bf16.gmra.mxu0 %v4757
  %v5042 = vpop.f32.mrf.mxu0
  %v5043 = vadd.f32 0.0, %v5042
  %v5044 = vpop.f32.mrf.mxu0
  %v5045 = vpop.f32.mrf.mxu0
  %v5046 = vadd.f32 0.0, %v5045
  %v5047 = vpop.f32.mrf.mxu0
  %5048 = vmatprep.mubr.bf16.mxu0 0
  %5049 = vmatmul.mubr.bf16.gmra.mxu0 %v4758
  %v5050 = vpop.f32.mrf.mxu0
  %v5051 = vadd.f32 0.0, %v5050
  %v5052 = vpop.f32.mrf.mxu0
  %v5053 = vpop.f32.mrf.mxu0
  %v5054 = vadd.f32 0.0, %v5053
  %v5055 = vpop.f32.mrf.mxu0
  %5056 = vmatprep.mubr.bf16.mxu0 0
  %5057 = vmatmul.mubr.bf16.gmra.mxu0 %v4759
  %v5058 = vpop.f32.mrf.mxu0
  %v5059 = vadd.f32 0.0, %v5058
  %v5060 = vpop.f32.mrf.mxu0
  %v5061 = vpop.f32.mrf.mxu0
  %v5062 = vadd.f32 0.0, %v5061
  %v5063 = vpop.f32.mrf.mxu0
  %5064 = vmatprep.mubr.bf16.mxu0 0
  %5065 = vmatmul.mubr.bf16.gmra.mxu0 %v4760
  %v5066 = vpop.f32.mrf.mxu0
  %v5067 = vadd.f32 0.0, %v5066
  %v5068 = vpop.f32.mrf.mxu0
  %v5069 = vpop.f32.mrf.mxu0
  %v5070 = vadd.f32 0.0, %v5069
  %v5071 = vpop.f32.mrf.mxu0
  %5072 = vmatprep.mubr.bf16.mxu0 0
  %5073 = vmatmul.mubr.bf16.gmra.mxu0 %v4761
  %v5074 = vpop.f32.mrf.mxu0
  %v5075 = vadd.f32 0.0, %v5074
  %v5076 = vpop.f32.mrf.mxu0
  %v5077 = vpop.f32.mrf.mxu0
  %v5078 = vadd.f32 0.0, %v5077
  %v5079 = vpop.f32.mrf.mxu0
  %5080 = vmatprep.mubr.bf16.mxu0 0
  %5081 = vmatmul.mubr.bf16.gmra.mxu0 %v4762
  %v5082 = vpop.f32.mrf.mxu0
  %v5083 = vadd.f32 0.0, %v5082
  %v5084 = vpop.f32.mrf.mxu0
  %v5085 = vpop.f32.mrf.mxu0
  %v5086 = vadd.f32 0.0, %v5085
  %v5087 = vpop.f32.mrf.mxu0
  %5088 = vmatprep.mubr.bf16.mxu0 0
  %5089 = vmatmul.mubr.bf16.gmra.mxu0 %v4763
  %v5090 = vpop.f32.mrf.mxu0
  %v5091 = vadd.f32 0.0, %v5090
  %v5092 = vpop.f32.mrf.mxu0
  %v5093 = vpop.f32.mrf.mxu0
  %v5094 = vadd.f32 0.0, %v5093
  %v5095 = vpop.f32.mrf.mxu0
  %5096 = vmatprep.mubr.bf16.mxu0 0
  %5097 = vmatmul.mubr.bf16.gmra.mxu0 %v4764
  %v5098 = vpop.f32.mrf.mxu0
  %v5099 = vadd.f32 0.0, %v5098
  %v5100 = vpop.f32.mrf.mxu0
  %v5101 = vpop.f32.mrf.mxu0
  %v5102 = vadd.f32 0.0, %v5101
  %v5103 = vpop.f32.mrf.mxu0
  %5104 = vmatprep.mubr.bf16.mxu0 0
  %5105 = vmatmul.mubr.bf16.gmra.mxu0 %v4765
  %v5106 = vpop.f32.mrf.mxu0
  %v5107 = vadd.f32 0.0, %v5106
  %v5108 = vpop.f32.mrf.mxu0
  %v5109 = vpop.f32.mrf.mxu0
  %v5110 = vadd.f32 0.0, %v5109
  %v5111 = vpop.f32.mrf.mxu0
  %5112 = vmatprep.mubr.bf16.mxu0 0
  %5113 = vmatmul.mubr.bf16.gmra.mxu0 %v4766
  %v5114 = vpop.f32.mrf.mxu0
  %v5115 = vadd.f32 0.0, %v5114
  %v5116 = vpop.f32.mrf.mxu0
  %v5117 = vpop.f32.mrf.mxu0
  %v5118 = vadd.f32 0.0, %v5117
  %v5119 = vpop.f32.mrf.mxu0
  %5120 = vdwg.mxu0
  %v5121 = vadd.f32 %v4607, %v4867
  %v5122 = vadd.f32 %v4608, %v4870
  %v5123 = vadd.f32 %v4609, %v4875
  %v5124 = vadd.f32 %v4610, %v4878
  %v5125 = vadd.f32 %v4611, %v4883
  %v5126 = vadd.f32 %v4612, %v4886
  %v5127 = vadd.f32 %v4613, %v4891
  %v5128 = vadd.f32 %v4614, %v4894
  %v5129 = vadd.f32 %v4615, %v4899
  %v5130 = vadd.f32 %v4616, %v4902
  %v5131 = vadd.f32 %v4617, %v4907
  %v5132 = vadd.f32 %v4618, %v4910
  %v5133 = vadd.f32 %v4619, %v4915
  %v5134 = vadd.f32 %v4620, %v4918
  %v5135 = vadd.f32 %v4621, %v4923
  %v5136 = vadd.f32 %v4622, %v4926
  %v5137 = vadd.f32 %v4623, %v4931
  %v5138 = vadd.f32 %v4624, %v4934
  %v5139 = vadd.f32 %v4625, %v4939
  %v5140 = vadd.f32 %v4626, %v4942
  %v5141 = vadd.f32 %v4627, %v4947
  %v5142 = vadd.f32 %v4628, %v4950
  %v5143 = vadd.f32 %v4629, %v4955
  %v5144 = vadd.f32 %v4630, %v4958
  %v5145 = vadd.f32 %v4631, %v4963
  %v5146 = vadd.f32 %v4632, %v4966
  %v5147 = vadd.f32 %v4633, %v4971
  %v5148 = vadd.f32 %v4634, %v4974
  %v5149 = vadd.f32 %v4635, %v4979
  %v5150 = vadd.f32 %v4636, %v4982
  %v5151 = vadd.f32 %v4637, %v4987
  %v5152 = vadd.f32 %v4638, %v4990
  %v5153 = vadd.f32 %v4639, %v4995
  %v5154 = vadd.f32 %v4640, %v4998
  %v5155 = vadd.f32 %v4641, %v5003
  %v5156 = vadd.f32 %v4642, %v5006
  %v5157 = vadd.f32 %v4643, %v5011
  %v5158 = vadd.f32 %v4644, %v5014
  %v5159 = vadd.f32 %v4645, %v5019
  %v5160 = vadd.f32 %v4646, %v5022
  %v5161 = vadd.f32 %v4647, %v5027
  %v5162 = vadd.f32 %v4648, %v5030
  %v5163 = vadd.f32 %v4649, %v5035
  %v5164 = vadd.f32 %v4650, %v5038
  %v5165 = vadd.f32 %v4651, %v5043
  %v5166 = vadd.f32 %v4652, %v5046
  %v5167 = vadd.f32 %v4653, %v5051
  %v5168 = vadd.f32 %v4654, %v5054
  %v5169 = vadd.f32 %v4655, %v5059
  %v5170 = vadd.f32 %v4656, %v5062
  %v5171 = vadd.f32 %v4657, %v5067
  %v5172 = vadd.f32 %v4658, %v5070
  %v5173 = vadd.f32 %v4659, %v5075
  %v5174 = vadd.f32 %v4660, %v5078
  %v5175 = vadd.f32 %v4661, %v5083
  %v5176 = vadd.f32 %v4662, %v5086
  %v5177 = vadd.f32 %v4663, %v5091
  %v5178 = vadd.f32 %v4664, %v5094
  %v5179 = vadd.f32 %v4665, %v5099
  %v5180 = vadd.f32 %v4666, %v5102
  %v5181 = vadd.f32 %v4667, %v5107
  %v5182 = vadd.f32 %v4668, %v5110
  %v5183 = vadd.f32 %v4669, %v5115
  %v5184 = vadd.f32 %v4670, %v5118
  %v5185 = vld [vmem:[%s4156 + $0x2] sm:$0xff]
  %v5186 = vld [vmem:[%s4156 + $0xa] sm:$0xff]
  %v5187 = vld [vmem:[%s4156 + $0x1a] sm:$0xff]
  %v5188 = vld [vmem:[%s4156 + $0x22] sm:$0xff]
  %v5189 = vld [vmem:[%s4156 + $0x32] sm:$0xff]
  %v5190 = vld [vmem:[%s4156 + $0x3a] sm:$0xff]
  %v5191 = vld [vmem:[%s4156 + $0x4a] sm:$0xff]
  %v5192 = vld [vmem:[%s4156 + $0x52] sm:$0xff]
  %v5193 = vld [vmem:[%s4156 + $0x62] sm:$0xff]
  %v5194 = vld [vmem:[%s4156 + $0x6a] sm:$0xff]
  %v5195 = vld [vmem:[%s4156 + $0x7a] sm:$0xff]
  %v5196 = vld [vmem:[%s4156 + $0x82] sm:$0xff]
  %v5197 = vld [vmem:[%s4156 + $0x92] sm:$0xff]
  %v5198 = vld [vmem:[%s4156 + $0x9a] sm:$0xff]
  %v5199 = vld [vmem:[%s4156 + $0xaa] sm:$0xff]
  %v5200 = vld [vmem:[%s4156 + $0xb2] sm:$0xff]
  %v5201 = vld [vmem:[%s4156 + $0xc2] sm:$0xff]
  %v5202 = vld [vmem:[%s4156 + $0xca] sm:$0xff]
  %v5203 = vld [vmem:[%s4156 + $0xda] sm:$0xff]
  %v5204 = vld [vmem:[%s4156 + $0xe2] sm:$0xff]
  %v5205 = vld [vmem:[%s4156 + $0xf2] sm:$0xff]
  %v5206 = vld [vmem:[%s4156 + $0xfa] sm:$0xff]
  %v5207 = vld [vmem:[%s4156 + $0x10a] sm:$0xff]
  %v5208 = vld [vmem:[%s4156 + $0x112] sm:$0xff]
  %v5209 = vld [vmem:[%s4156 + $0x122] sm:$0xff]
  %v5210 = vld [vmem:[%s4156 + $0x12a] sm:$0xff]
  %v5211 = vld [vmem:[%s4156 + $0x13a] sm:$0xff]
  %v5212 = vld [vmem:[%s4156 + $0x142] sm:$0xff]
  %v5213 = vld [vmem:[%s4156 + $0x152] sm:$0xff]
  %v5214 = vld [vmem:[%s4156 + $0x15a] sm:$0xff]
  %v5215 = vld [vmem:[%s4156 + $0x16a] sm:$0xff]
  %v5216 = vld [vmem:[%s4156 + $0x172] sm:$0xff]
  %v5217 = vld [vmem:[%s4156 + $0x1b2] sm:$0xff]
  %v5218 = vld [vmem:[%s4156 + $0x1ba] sm:$0xff]
  %v5219 = vld [vmem:[%s4156 + $0x1ca] sm:$0xff]
  %v5220 = vld [vmem:[%s4156 + $0x1d2] sm:$0xff]
  %v5221 = vld [vmem:[%s4156 + $0x1e2] sm:$0xff]
  %v5222 = vld [vmem:[%s4156 + $0x1ea] sm:$0xff]
  %v5223 = vld [vmem:[%s4156 + $0x1fa] sm:$0xff]
  %v5224 = vld [vmem:[%s4156 + $0x202] sm:$0xff]
  %v5225 = vld [vmem:[%s4156 + $0x212] sm:$0xff]
  %v5226 = vld [vmem:[%s4156 + $0x21a] sm:$0xff]
  %v5227 = vld [vmem:[%s4156 + $0x22a] sm:$0xff]
  %v5228 = vld [vmem:[%s4156 + $0x232] sm:$0xff]
  %v5229 = vld [vmem:[%s4156 + $0x242] sm:$0xff]
  %v5230 = vld [vmem:[%s4156 + $0x24a] sm:$0xff]
  %v5231 = vld [vmem:[%s4156 + $0x25a] sm:$0xff]
  %v5232 = vld [vmem:[%s4156 + $0x262] sm:$0xff]
  %v5233 = vld [vmem:[%s4156 + $0x272] sm:$0xff]
  %v5234 = vld [vmem:[%s4156 + $0x27a] sm:$0xff]
  %v5235 = vld [vmem:[%s4156 + $0x28a] sm:$0xff]
  %v5236 = vld [vmem:[%s4156 + $0x292] sm:$0xff]
  %v5237 = vld [vmem:[%s4156 + $0x2a2] sm:$0xff]
  %v5238 = vld [vmem:[%s4156 + $0x2aa] sm:$0xff]
  %v5239 = vld [vmem:[%s4156 + $0x2ba] sm:$0xff]
  %v5240 = vld [vmem:[%s4156 + $0x2c2] sm:$0xff]
  %v5241 = vld [vmem:[%s4156 + $0x2d2] sm:$0xff]
  %v5242 = vld [vmem:[%s4156 + $0x2da] sm:$0xff]
  %v5243 = vld [vmem:[%s4156 + $0x2ea] sm:$0xff]
  %v5244 = vld [vmem:[%s4156 + $0x2f2] sm:$0xff]
  %v5245 = vld [vmem:[%s4156 + $0x302] sm:$0xff]
  %v5246 = vld [vmem:[%s4156 + $0x30a] sm:$0xff]
  %v5247 = vld [vmem:[%s4156 + $0x31a] sm:$0xff]
  %v5248 = vld [vmem:[%s4156 + $0x322] sm:$0xff]
  %v5249 = vpack.c.bf16 %v5186, %v5185
  %v5250 = vpack.c.bf16 %v5188, %v5187
  %v5251 = vpack.c.bf16 %v5190, %v5189
  %v5252 = vpack.c.bf16 %v5192, %v5191
  %v5253 = vpack.c.bf16 %v5194, %v5193
  %v5254 = vpack.c.bf16 %v5196, %v5195
  %v5255 = vpack.c.bf16 %v5198, %v5197
  %v5256 = vpack.c.bf16 %v5200, %v5199
  %v5257 = vpack.c.bf16 %v5202, %v5201
  %v5258 = vpack.c.bf16 %v5204, %v5203
  %v5259 = vpack.c.bf16 %v5206, %v5205
  %v5260 = vpack.c.bf16 %v5208, %v5207
  %v5261 = vpack.c.bf16 %v5210, %v5209
  %v5262 = vpack.c.bf16 %v5212, %v5211
  %v5263 = vpack.c.bf16 %v5214, %v5213
  %v5264 = vpack.c.bf16 %v5216, %v5215
  %v5265 = vpack.c.bf16 %v5218, %v5217
  %v5266 = vpack.c.bf16 %v5220, %v5219
  %v5267 = vpack.c.bf16 %v5222, %v5221
  %v5268 = vpack.c.bf16 %v5224, %v5223
  %v5269 = vpack.c.bf16 %v5226, %v5225
  %v5270 = vpack.c.bf16 %v5228, %v5227
  %v5271 = vpack.c.bf16 %v5230, %v5229
  %v5272 = vpack.c.bf16 %v5232, %v5231
  %v5273 = vpack.c.bf16 %v5234, %v5233
  %v5274 = vpack.c.bf16 %v5236, %v5235
  %v5275 = vpack.c.bf16 %v5238, %v5237
  %v5276 = vpack.c.bf16 %v5240, %v5239
  %v5277 = vpack.c.bf16 %v5242, %v5241
  %v5278 = vpack.c.bf16 %v5244, %v5243
  %v5279 = vpack.c.bf16 %v5246, %v5245
  %v5280 = vpack.c.bf16 %v5248, %v5247
  %s5281 = scalar_lea.vmem %s2, 512
  %v5282 = vld [vmem:[%s5281] sm:$0xf]
  %v5283 = vld [vmem:[%s5281 + $0x4] sm:$0xf]
  %v5284 = vld [vmem:[%s5281 + $0x8] sm:$0xf]
  %v5285 = vld [vmem:[%s5281 + $0xc] sm:$0xf]
  %v5286 = vld [vmem:[%s5281 + $0x10] sm:$0xf]
  %v5287 = vld [vmem:[%s5281 + $0x14] sm:$0xf]
  %v5288 = vld [vmem:[%s5281 + $0x18] sm:$0xf]
  %v5289 = vld [vmem:[%s5281 + $0x1c] sm:$0xf]
  %v5290 = vld [vmem:[%s5281 + $0x20] sm:$0xf]
  %v5291 = vld [vmem:[%s5281 + $0x24] sm:$0xf]
  %v5292 = vld [vmem:[%s5281 + $0x28] sm:$0xf]
  %v5293 = vld [vmem:[%s5281 + $0x2c] sm:$0xf]
  %v5294 = vld [vmem:[%s5281 + $0x30] sm:$0xf]
  %v5295 = vld [vmem:[%s5281 + $0x34] sm:$0xf]
  %v5296 = vld [vmem:[%s5281 + $0x38] sm:$0xf]
  %v5297 = vld [vmem:[%s5281 + $0x3c] sm:$0xf]
  %v5314 = vunpack.c.l.b16 %v5282
  %v5315 = vunpack.c.l.b16 %v5283
  %v5316 = vunpack.c.l.b16 %v5284
  %v5317 = vunpack.c.l.b16 %v5285
  %v5318 = vunpack.c.l.b16 %v5286
  %v5319 = vunpack.c.l.b16 %v5287
  %v5320 = vunpack.c.l.b16 %v5288
  %v5321 = vunpack.c.l.b16 %v5289
  %v5322 = vunpack.c.l.b16 %v5290
  %v5323 = vunpack.c.l.b16 %v5291
  %v5324 = vunpack.c.l.b16 %v5292
  %v5325 = vunpack.c.l.b16 %v5293
  %v5326 = vunpack.c.l.b16 %v5294
  %v5327 = vunpack.c.l.b16 %v5295
  %v5328 = vunpack.c.l.b16 %v5296
  %v5329 = vunpack.c.l.b16 %v5297
  %v5330 = vpack.c.b16 %v5315, %v5314
  %v5331 = vpack.c.b16 %v5317, %v5316
  %v5332 = vpack.c.b16 %v5319, %v5318
  %v5333 = vpack.c.b16 %v5321, %v5320
  %v5334 = vpack.c.b16 %v5323, %v5322
  %v5335 = vpack.c.b16 %v5325, %v5324
  %v5336 = vpack.c.b16 %v5327, %v5326
  %v5337 = vpack.c.b16 %v5329, %v5328
  %5346 = vmatprep.subr.bf16.mxu0 0
  %5347 = vmatpush1.bf16.msra.mxu0 %v5337
  %5348 = vmatprep.subr.bf16.mxu0 0
  %5349 = vmatpush1.bf16.msra.mxu0 %v5336
  %5350 = vmatprep.subr.bf16.mxu0 0
  %5351 = vmatpush1.bf16.msra.mxu0 %v5335
  %5352 = vmatprep.subr.bf16.mxu0 0
  %5353 = vmatpush1.bf16.msra.mxu0 %v5334
  %5354 = vmatprep.subr.bf16.mxu0 0
  %5355 = vmatpush1.bf16.msra.mxu0 %v5333
  %5356 = vmatprep.subr.bf16.mxu0 0
  %5357 = vmatpush1.bf16.msra.mxu0 %v5332
  %5358 = vmatprep.subr.bf16.mxu0 0
  %5359 = vmatpush1.bf16.msra.mxu0 %v5331
  %5360 = vmatprep.subr.bf16.mxu0 0
  %5361 = vmatpush1.bf16.msra.mxu0 %v5330
  %5362 = vmatprep.subr.bf16.mxu0 0
  %5363 = vmatpush2.bf16.msra.mxu0 0
  %5364 = vmatprep.subr.bf16.mxu0 0
  %5365 = vmatpush2.bf16.msra.mxu0 0
  %5366 = vmatprep.subr.bf16.mxu0 0
  %5367 = vmatpush2.bf16.msra.mxu0 0
  %5368 = vmatprep.subr.bf16.mxu0 0
  %5369 = vmatpush2.bf16.msra.mxu0 0
  %5370 = vmatprep.subr.bf16.mxu0 0
  %5371 = vmatpush2.bf16.msra.mxu0 0
  %5372 = vmatprep.subr.bf16.mxu0 0
  %5373 = vmatpush2.bf16.msra.mxu0 0
  %5374 = vmatprep.subr.bf16.mxu0 0
  %5375 = vmatpush2.bf16.msra.mxu0 0
  %5376 = vmatprep.subr.bf16.mxu0 0
  %5377 = vmatpush2.bf16.msra.mxu0 0
  %5378 = vmatprep.mubr.bf16.mxu0 0
  %5379 = vmatmul.mubr.bf16.gmra.mxu0 %v5249
  %v5380 = vpop.f32.mrf.mxu0
  %v5381 = vadd.f32 0.0, %v5380
  %v5382 = vpop.f32.mrf.mxu0
  %v5383 = vpop.f32.mrf.mxu0
  %v5384 = vadd.f32 0.0, %v5383
  %v5385 = vpop.f32.mrf.mxu0
  %5386 = vmatprep.mubr.bf16.mxu0 0
  %5387 = vmatmul.mubr.bf16.gmra.mxu0 %v5250
  %v5388 = vpop.f32.mrf.mxu0
  %v5389 = vadd.f32 0.0, %v5388
  %v5390 = vpop.f32.mrf.mxu0
  %v5391 = vpop.f32.mrf.mxu0
  %v5392 = vadd.f32 0.0, %v5391
  %v5393 = vpop.f32.mrf.mxu0
  %5394 = vmatprep.mubr.bf16.mxu0 0
  %5395 = vmatmul.mubr.bf16.gmra.mxu0 %v5251
  %v5396 = vpop.f32.mrf.mxu0
  %v5397 = vadd.f32 0.0, %v5396
  %v5398 = vpop.f32.mrf.mxu0
  %v5399 = vpop.f32.mrf.mxu0
  %v5400 = vadd.f32 0.0, %v5399
  %v5401 = vpop.f32.mrf.mxu0
  %5402 = vmatprep.mubr.bf16.mxu0 0
  %5403 = vmatmul.mubr.bf16.gmra.mxu0 %v5252
  %v5404 = vpop.f32.mrf.mxu0
  %v5405 = vadd.f32 0.0, %v5404
  %v5406 = vpop.f32.mrf.mxu0
  %v5407 = vpop.f32.mrf.mxu0
  %v5408 = vadd.f32 0.0, %v5407
  %v5409 = vpop.f32.mrf.mxu0
  %5410 = vmatprep.mubr.bf16.mxu0 0
  %5411 = vmatmul.mubr.bf16.gmra.mxu0 %v5253
  %v5412 = vpop.f32.mrf.mxu0
  %v5413 = vadd.f32 0.0, %v5412
  %v5414 = vpop.f32.mrf.mxu0
  %v5415 = vpop.f32.mrf.mxu0
  %v5416 = vadd.f32 0.0, %v5415
  %v5417 = vpop.f32.mrf.mxu0
  %5418 = vmatprep.mubr.bf16.mxu0 0
  %5419 = vmatmul.mubr.bf16.gmra.mxu0 %v5254
  %v5420 = vpop.f32.mrf.mxu0
  %v5421 = vadd.f32 0.0, %v5420
  %v5422 = vpop.f32.mrf.mxu0
  %v5423 = vpop.f32.mrf.mxu0
  %v5424 = vadd.f32 0.0, %v5423
  %v5425 = vpop.f32.mrf.mxu0
  %5426 = vmatprep.mubr.bf16.mxu0 0
  %5427 = vmatmul.mubr.bf16.gmra.mxu0 %v5255
  %v5428 = vpop.f32.mrf.mxu0
  %v5429 = vadd.f32 0.0, %v5428
  %v5430 = vpop.f32.mrf.mxu0
  %v5431 = vpop.f32.mrf.mxu0
  %v5432 = vadd.f32 0.0, %v5431
  %v5433 = vpop.f32.mrf.mxu0
  %5434 = vmatprep.mubr.bf16.mxu0 0
  %5435 = vmatmul.mubr.bf16.gmra.mxu0 %v5256
  %v5436 = vpop.f32.mrf.mxu0
  %v5437 = vadd.f32 0.0, %v5436
  %v5438 = vpop.f32.mrf.mxu0
  %v5439 = vpop.f32.mrf.mxu0
  %v5440 = vadd.f32 0.0, %v5439
  %v5441 = vpop.f32.mrf.mxu0
  %5442 = vmatprep.mubr.bf16.mxu0 0
  %5443 = vmatmul.mubr.bf16.gmra.mxu0 %v5257
  %v5444 = vpop.f32.mrf.mxu0
  %v5445 = vadd.f32 0.0, %v5444
  %v5446 = vpop.f32.mrf.mxu0
  %v5447 = vpop.f32.mrf.mxu0
  %v5448 = vadd.f32 0.0, %v5447
  %v5449 = vpop.f32.mrf.mxu0
  %5450 = vmatprep.mubr.bf16.mxu0 0
  %5451 = vmatmul.mubr.bf16.gmra.mxu0 %v5258
  %v5452 = vpop.f32.mrf.mxu0
  %v5453 = vadd.f32 0.0, %v5452
  %v5454 = vpop.f32.mrf.mxu0
  %v5455 = vpop.f32.mrf.mxu0
  %v5456 = vadd.f32 0.0, %v5455
  %v5457 = vpop.f32.mrf.mxu0
  %5458 = vmatprep.mubr.bf16.mxu0 0
  %5459 = vmatmul.mubr.bf16.gmra.mxu0 %v5259
  %v5460 = vpop.f32.mrf.mxu0
  %v5461 = vadd.f32 0.0, %v5460
  %v5462 = vpop.f32.mrf.mxu0
  %v5463 = vpop.f32.mrf.mxu0
  %v5464 = vadd.f32 0.0, %v5463
  %v5465 = vpop.f32.mrf.mxu0
  %5466 = vmatprep.mubr.bf16.mxu0 0
  %5467 = vmatmul.mubr.bf16.gmra.mxu0 %v5260
  %v5468 = vpop.f32.mrf.mxu0
  %v5469 = vadd.f32 0.0, %v5468
  %v5470 = vpop.f32.mrf.mxu0
  %v5471 = vpop.f32.mrf.mxu0
  %v5472 = vadd.f32 0.0, %v5471
  %v5473 = vpop.f32.mrf.mxu0
  %5474 = vmatprep.mubr.bf16.mxu0 0
  %5475 = vmatmul.mubr.bf16.gmra.mxu0 %v5261
  %v5476 = vpop.f32.mrf.mxu0
  %v5477 = vadd.f32 0.0, %v5476
  %v5478 = vpop.f32.mrf.mxu0
  %v5479 = vpop.f32.mrf.mxu0
  %v5480 = vadd.f32 0.0, %v5479
  %v5481 = vpop.f32.mrf.mxu0
  %5482 = vmatprep.mubr.bf16.mxu0 0
  %5483 = vmatmul.mubr.bf16.gmra.mxu0 %v5262
  %v5484 = vpop.f32.mrf.mxu0
  %v5485 = vadd.f32 0.0, %v5484
  %v5486 = vpop.f32.mrf.mxu0
  %v5487 = vpop.f32.mrf.mxu0
  %v5488 = vadd.f32 0.0, %v5487
  %v5489 = vpop.f32.mrf.mxu0
  %5490 = vmatprep.mubr.bf16.mxu0 0
  %5491 = vmatmul.mubr.bf16.gmra.mxu0 %v5263
  %v5492 = vpop.f32.mrf.mxu0
  %v5493 = vadd.f32 0.0, %v5492
  %v5494 = vpop.f32.mrf.mxu0
  %v5495 = vpop.f32.mrf.mxu0
  %v5496 = vadd.f32 0.0, %v5495
  %v5497 = vpop.f32.mrf.mxu0
  %5498 = vmatprep.mubr.bf16.mxu0 0
  %5499 = vmatmul.mubr.bf16.gmra.mxu0 %v5264
  %v5500 = vpop.f32.mrf.mxu0
  %v5501 = vadd.f32 0.0, %v5500
  %v5502 = vpop.f32.mrf.mxu0
  %v5503 = vpop.f32.mrf.mxu0
  %v5504 = vadd.f32 0.0, %v5503
  %v5505 = vpop.f32.mrf.mxu0
  %5506 = vmatprep.mubr.bf16.mxu0 0
  %5507 = vmatmul.mubr.bf16.gmra.mxu0 %v5265
  %v5508 = vpop.f32.mrf.mxu0
  %v5509 = vadd.f32 0.0, %v5508
  %v5510 = vpop.f32.mrf.mxu0
  %v5511 = vpop.f32.mrf.mxu0
  %v5512 = vadd.f32 0.0, %v5511
  %v5513 = vpop.f32.mrf.mxu0
  %5514 = vmatprep.mubr.bf16.mxu0 0
  %5515 = vmatmul.mubr.bf16.gmra.mxu0 %v5266
  %v5516 = vpop.f32.mrf.mxu0
  %v5517 = vadd.f32 0.0, %v5516
  %v5518 = vpop.f32.mrf.mxu0
  %v5519 = vpop.f32.mrf.mxu0
  %v5520 = vadd.f32 0.0, %v5519
  %v5521 = vpop.f32.mrf.mxu0
  %5522 = vmatprep.mubr.bf16.mxu0 0
  %5523 = vmatmul.mubr.bf16.gmra.mxu0 %v5267
  %v5524 = vpop.f32.mrf.mxu0
  %v5525 = vadd.f32 0.0, %v5524
  %v5526 = vpop.f32.mrf.mxu0
  %v5527 = vpop.f32.mrf.mxu0
  %v5528 = vadd.f32 0.0, %v5527
  %v5529 = vpop.f32.mrf.mxu0
  %5530 = vmatprep.mubr.bf16.mxu0 0
  %5531 = vmatmul.mubr.bf16.gmra.mxu0 %v5268
  %v5532 = vpop.f32.mrf.mxu0
  %v5533 = vadd.f32 0.0, %v5532
  %v5534 = vpop.f32.mrf.mxu0
  %v5535 = vpop.f32.mrf.mxu0
  %v5536 = vadd.f32 0.0, %v5535
  %v5537 = vpop.f32.mrf.mxu0
  %5538 = vmatprep.mubr.bf16.mxu0 0
  %5539 = vmatmul.mubr.bf16.gmra.mxu0 %v5269
  %v5540 = vpop.f32.mrf.mxu0
  %v5541 = vadd.f32 0.0, %v5540
  %v5542 = vpop.f32.mrf.mxu0
  %v5543 = vpop.f32.mrf.mxu0
  %v5544 = vadd.f32 0.0, %v5543
  %v5545 = vpop.f32.mrf.mxu0
  %5546 = vmatprep.mubr.bf16.mxu0 0
  %5547 = vmatmul.mubr.bf16.gmra.mxu0 %v5270
  %v5548 = vpop.f32.mrf.mxu0
  %v5549 = vadd.f32 0.0, %v5548
  %v5550 = vpop.f32.mrf.mxu0
  %v5551 = vpop.f32.mrf.mxu0
  %v5552 = vadd.f32 0.0, %v5551
  %v5553 = vpop.f32.mrf.mxu0
  %5554 = vmatprep.mubr.bf16.mxu0 0
  %5555 = vmatmul.mubr.bf16.gmra.mxu0 %v5271
  %v5556 = vpop.f32.mrf.mxu0
  %v5557 = vadd.f32 0.0, %v5556
  %v5558 = vpop.f32.mrf.mxu0
  %v5559 = vpop.f32.mrf.mxu0
  %v5560 = vadd.f32 0.0, %v5559
  %v5561 = vpop.f32.mrf.mxu0
  %5562 = vmatprep.mubr.bf16.mxu0 0
  %5563 = vmatmul.mubr.bf16.gmra.mxu0 %v5272
  %v5564 = vpop.f32.mrf.mxu0
  %v5565 = vadd.f32 0.0, %v5564
  %v5566 = vpop.f32.mrf.mxu0
  %v5567 = vpop.f32.mrf.mxu0
  %v5568 = vadd.f32 0.0, %v5567
  %v5569 = vpop.f32.mrf.mxu0
  %5570 = vmatprep.mubr.bf16.mxu0 0
  %5571 = vmatmul.mubr.bf16.gmra.mxu0 %v5273
  %v5572 = vpop.f32.mrf.mxu0
  %v5573 = vadd.f32 0.0, %v5572
  %v5574 = vpop.f32.mrf.mxu0
  %v5575 = vpop.f32.mrf.mxu0
  %v5576 = vadd.f32 0.0, %v5575
  %v5577 = vpop.f32.mrf.mxu0
  %5578 = vmatprep.mubr.bf16.mxu0 0
  %5579 = vmatmul.mubr.bf16.gmra.mxu0 %v5274
  %v5580 = vpop.f32.mrf.mxu0
  %v5581 = vadd.f32 0.0, %v5580
  %v5582 = vpop.f32.mrf.mxu0
  %v5583 = vpop.f32.mrf.mxu0
  %v5584 = vadd.f32 0.0, %v5583
  %v5585 = vpop.f32.mrf.mxu0
  %5586 = vmatprep.mubr.bf16.mxu0 0
  %5587 = vmatmul.mubr.bf16.gmra.mxu0 %v5275
  %v5588 = vpop.f32.mrf.mxu0
  %v5589 = vadd.f32 0.0, %v5588
  %v5590 = vpop.f32.mrf.mxu0
  %v5591 = vpop.f32.mrf.mxu0
  %v5592 = vadd.f32 0.0, %v5591
  %v5593 = vpop.f32.mrf.mxu0
  %5594 = vmatprep.mubr.bf16.mxu0 0
  %5595 = vmatmul.mubr.bf16.gmra.mxu0 %v5276
  %v5596 = vpop.f32.mrf.mxu0
  %v5597 = vadd.f32 0.0, %v5596
  %v5598 = vpop.f32.mrf.mxu0
  %v5599 = vpop.f32.mrf.mxu0
  %v5600 = vadd.f32 0.0, %v5599
  %v5601 = vpop.f32.mrf.mxu0
  %5602 = vmatprep.mubr.bf16.mxu0 0
  %5603 = vmatmul.mubr.bf16.gmra.mxu0 %v5277
  %v5604 = vpop.f32.mrf.mxu0
  %v5605 = vadd.f32 0.0, %v5604
  %v5606 = vpop.f32.mrf.mxu0
  %v5607 = vpop.f32.mrf.mxu0
  %v5608 = vadd.f32 0.0, %v5607
  %v5609 = vpop.f32.mrf.mxu0
  %5610 = vmatprep.mubr.bf16.mxu0 0
  %5611 = vmatmul.mubr.bf16.gmra.mxu0 %v5278
  %v5612 = vpop.f32.mrf.mxu0
  %v5613 = vadd.f32 0.0, %v5612
  %v5614 = vpop.f32.mrf.mxu0
  %v5615 = vpop.f32.mrf.mxu0
  %v5616 = vadd.f32 0.0, %v5615
  %v5617 = vpop.f32.mrf.mxu0
  %5618 = vmatprep.mubr.bf16.mxu0 0
  %5619 = vmatmul.mubr.bf16.gmra.mxu0 %v5279
  %v5620 = vpop.f32.mrf.mxu0
  %v5621 = vadd.f32 0.0, %v5620
  %v5622 = vpop.f32.mrf.mxu0
  %v5623 = vpop.f32.mrf.mxu0
  %v5624 = vadd.f32 0.0, %v5623
  %v5625 = vpop.f32.mrf.mxu0
  %5626 = vmatprep.mubr.bf16.mxu0 0
  %5627 = vmatmul.mubr.bf16.gmra.mxu0 %v5280
  %v5628 = vpop.f32.mrf.mxu0
  %v5629 = vadd.f32 0.0, %v5628
  %v5630 = vpop.f32.mrf.mxu0
  %v5631 = vpop.f32.mrf.mxu0
  %v5632 = vadd.f32 0.0, %v5631
  %v5633 = vpop.f32.mrf.mxu0
  %5634 = vdwg.mxu0
  %v5635 = vadd.f32 %v5121, %v5381
  %v5636 = vadd.f32 %v5122, %v5384
  %v5637 = vadd.f32 %v5123, %v5389
  %v5638 = vadd.f32 %v5124, %v5392
  %v5639 = vadd.f32 %v5125, %v5397
  %v5640 = vadd.f32 %v5126, %v5400
  %v5641 = vadd.f32 %v5127, %v5405
  %v5642 = vadd.f32 %v5128, %v5408
  %v5643 = vadd.f32 %v5129, %v5413
  %v5644 = vadd.f32 %v5130, %v5416
  %v5645 = vadd.f32 %v5131, %v5421
  %v5646 = vadd.f32 %v5132, %v5424
  %v5647 = vadd.f32 %v5133, %v5429
  %v5648 = vadd.f32 %v5134, %v5432
  %v5649 = vadd.f32 %v5135, %v5437
  %v5650 = vadd.f32 %v5136, %v5440
  %v5651 = vadd.f32 %v5137, %v5445
  %v5652 = vadd.f32 %v5138, %v5448
  %v5653 = vadd.f32 %v5139, %v5453
  %v5654 = vadd.f32 %v5140, %v5456
  %v5655 = vadd.f32 %v5141, %v5461
  %v5656 = vadd.f32 %v5142, %v5464
  %v5657 = vadd.f32 %v5143, %v5469
  %v5658 = vadd.f32 %v5144, %v5472
  %v5659 = vadd.f32 %v5145, %v5477
  %v5660 = vadd.f32 %v5146, %v5480
  %v5661 = vadd.f32 %v5147, %v5485
  %v5662 = vadd.f32 %v5148, %v5488
  %v5663 = vadd.f32 %v5149, %v5493
  %v5664 = vadd.f32 %v5150, %v5496
  %v5665 = vadd.f32 %v5151, %v5501
  %v5666 = vadd.f32 %v5152, %v5504
  %v5667 = vadd.f32 %v5153, %v5509
  %v5668 = vadd.f32 %v5154, %v5512
  %v5669 = vadd.f32 %v5155, %v5517
  %v5670 = vadd.f32 %v5156, %v5520
  %v5671 = vadd.f32 %v5157, %v5525
  %v5672 = vadd.f32 %v5158, %v5528
  %v5673 = vadd.f32 %v5159, %v5533
  %v5674 = vadd.f32 %v5160, %v5536
  %v5675 = vadd.f32 %v5161, %v5541
  %v5676 = vadd.f32 %v5162, %v5544
  %v5677 = vadd.f32 %v5163, %v5549
  %v5678 = vadd.f32 %v5164, %v5552
  %v5679 = vadd.f32 %v5165, %v5557
  %v5680 = vadd.f32 %v5166, %v5560
  %v5681 = vadd.f32 %v5167, %v5565
  %v5682 = vadd.f32 %v5168, %v5568
  %v5683 = vadd.f32 %v5169, %v5573
  %v5684 = vadd.f32 %v5170, %v5576
  %v5685 = vadd.f32 %v5171, %v5581
  %v5686 = vadd.f32 %v5172, %v5584
  %v5687 = vadd.f32 %v5173, %v5589
  %v5688 = vadd.f32 %v5174, %v5592
  %v5689 = vadd.f32 %v5175, %v5597
  %v5690 = vadd.f32 %v5176, %v5600
  %v5691 = vadd.f32 %v5177, %v5605
  %v5692 = vadd.f32 %v5178, %v5608
  %v5693 = vadd.f32 %v5179, %v5613
  %v5694 = vadd.f32 %v5180, %v5616
  %v5695 = vadd.f32 %v5181, %v5621
  %v5696 = vadd.f32 %v5182, %v5624
  %v5697 = vadd.f32 %v5183, %v5629
  %v5698 = vadd.f32 %v5184, %v5632
  %v5699 = vld [vmem:[%s6] sm:$0x1]
  %v5700 = vld [vmem:[%s7] sm:$0x1]
  %v5701 = vadd.f32 %v5635, %v5636
  %v5702 = vadd.f32 %v5701, %v5637
  %v5703 = vadd.f32 %v5702, %v5638
  %v5704 = vadd.f32 %v5703, %v5639
  %v5705 = vadd.f32 %v5704, %v5640
  %v5706 = vadd.f32 %v5705, %v5641
  %v5707 = vadd.f32 %v5706, %v5642
  %v5708 = vadd.f32 %v5707, %v5643
  %v5709 = vadd.f32 %v5708, %v5644
  %v5710 = vadd.f32 %v5709, %v5645
  %v5711 = vadd.f32 %v5710, %v5646
  %v5712 = vadd.f32 %v5711, %v5647
  %v5713 = vadd.f32 %v5712, %v5648
  %v5714 = vadd.f32 %v5713, %v5649
  %v5715 = vadd.f32 %v5714, %v5650
  %v5716 = vadd.f32 %v5715, %v5651
  %v5717 = vadd.f32 %v5716, %v5652
  %v5718 = vadd.f32 %v5717, %v5653
  %v5719 = vadd.f32 %v5718, %v5654
  %v5720 = vadd.f32 %v5719, %v5655
  %v5721 = vadd.f32 %v5720, %v5656
  %v5722 = vadd.f32 %v5721, %v5657
  %v5723 = vadd.f32 %v5722, %v5658
  %v5724 = vadd.f32 %v5723, %v5659
  %v5725 = vadd.f32 %v5724, %v5660
  %v5726 = vadd.f32 %v5725, %v5661
  %v5727 = vadd.f32 %v5726, %v5662
  %v5728 = vadd.f32 %v5727, %v5663
  %v5729 = vadd.f32 %v5728, %v5664
  %v5730 = vadd.f32 %v5729, %v5665
  %v5731 = vadd.f32 %v5730, %v5666
  %v5732 = vadd.f32 %v5731, %v5667
  %v5733 = vadd.f32 %v5732, %v5668
  %v5734 = vadd.f32 %v5733, %v5669
  %v5735 = vadd.f32 %v5734, %v5670
  %v5736 = vadd.f32 %v5735, %v5671
  %v5737 = vadd.f32 %v5736, %v5672
  %v5738 = vadd.f32 %v5737, %v5673
  %v5739 = vadd.f32 %v5738, %v5674
  %v5740 = vadd.f32 %v5739, %v5675
  %v5741 = vadd.f32 %v5740, %v5676
  %v5742 = vadd.f32 %v5741, %v5677
  %v5743 = vadd.f32 %v5742, %v5678
  %v5744 = vadd.f32 %v5743, %v5679
  %v5745 = vadd.f32 %v5744, %v5680
  %v5746 = vadd.f32 %v5745, %v5681
  %v5747 = vadd.f32 %v5746, %v5682
  %v5748 = vadd.f32 %v5747, %v5683
  %v5749 = vadd.f32 %v5748, %v5684
  %v5750 = vadd.f32 %v5749, %v5685
  %v5751 = vadd.f32 %v5750, %v5686
  %v5752 = vadd.f32 %v5751, %v5687
  %v5753 = vadd.f32 %v5752, %v5688
  %v5754 = vadd.f32 %v5753, %v5689
  %v5755 = vadd.f32 %v5754, %v5690
  %v5756 = vadd.f32 %v5755, %v5691
  %v5757 = vadd.f32 %v5756, %v5692
  %v5758 = vadd.f32 %v5757, %v5693
  %v5759 = vadd.f32 %v5758, %v5694
  %v5760 = vadd.f32 %v5759, %v5695
  %v5761 = vadd.f32 %v5760, %v5696
  %v5762 = vadd.f32 %v5761, %v5697
  %v5763 = vadd.f32 %v5762, %v5698
  %v5764 = vrot.slane %v5763, 4
  %v5765 = vadd.f32 %v5763, %v5764
  %v5766 = vrot.slane %v5765, 2
  %v5767 = vadd.f32 %v5765, %v5766
  %v5768 = vrot.slane %v5767, 1
  %v5769 = vadd.f32 %v5767, %v5768
  %v5770 = vmul.f32 %v5769, 0.001953125
  %v5771 = vmul.f32 %v5635, %v5635
  %v5772 = vmul.f32 %v5636, %v5636
  %v5773 = vmul.f32 %v5637, %v5637
  %v5774 = vmul.f32 %v5638, %v5638
  %v5775 = vmul.f32 %v5639, %v5639
  %v5776 = vmul.f32 %v5640, %v5640
  %v5777 = vmul.f32 %v5641, %v5641
  %v5778 = vmul.f32 %v5642, %v5642
  %v5779 = vmul.f32 %v5643, %v5643
  %v5780 = vmul.f32 %v5644, %v5644
  %v5781 = vmul.f32 %v5645, %v5645
  %v5782 = vmul.f32 %v5646, %v5646
  %v5783 = vmul.f32 %v5647, %v5647
  %v5784 = vmul.f32 %v5648, %v5648
  %v5785 = vmul.f32 %v5649, %v5649
  %v5786 = vmul.f32 %v5650, %v5650
  %v5787 = vmul.f32 %v5651, %v5651
  %v5788 = vmul.f32 %v5652, %v5652
  %v5789 = vmul.f32 %v5653, %v5653
  %v5790 = vmul.f32 %v5654, %v5654
  %v5791 = vmul.f32 %v5655, %v5655
  %v5792 = vmul.f32 %v5656, %v5656
  %v5793 = vmul.f32 %v5657, %v5657
  %v5794 = vmul.f32 %v5658, %v5658
  %v5795 = vmul.f32 %v5659, %v5659
  %v5796 = vmul.f32 %v5660, %v5660
  %v5797 = vmul.f32 %v5661, %v5661
  %v5798 = vmul.f32 %v5662, %v5662
  %v5799 = vmul.f32 %v5663, %v5663
  %v5800 = vmul.f32 %v5664, %v5664
  %v5801 = vmul.f32 %v5665, %v5665
  %v5802 = vmul.f32 %v5666, %v5666
  %v5803 = vmul.f32 %v5667, %v5667
  %v5804 = vmul.f32 %v5668, %v5668
  %v5805 = vmul.f32 %v5669, %v5669
  %v5806 = vmul.f32 %v5670, %v5670
  %v5807 = vmul.f32 %v5671, %v5671
  %v5808 = vmul.f32 %v5672, %v5672
  %v5809 = vmul.f32 %v5673, %v5673
  %v5810 = vmul.f32 %v5674, %v5674
  %v5811 = vmul.f32 %v5675, %v5675
  %v5812 = vmul.f32 %v5676, %v5676
  %v5813 = vmul.f32 %v5677, %v5677
  %v5814 = vmul.f32 %v5678, %v5678
  %v5815 = vmul.f32 %v5679, %v5679
  %v5816 = vmul.f32 %v5680, %v5680
  %v5817 = vmul.f32 %v5681, %v5681
  %v5818 = vmul.f32 %v5682, %v5682
  %v5819 = vmul.f32 %v5683, %v5683
  %v5820 = vmul.f32 %v5684, %v5684
  %v5821 = vmul.f32 %v5685, %v5685
  %v5822 = vmul.f32 %v5686, %v5686
  %v5823 = vmul.f32 %v5687, %v5687
  %v5824 = vmul.f32 %v5688, %v5688
  %v5825 = vmul.f32 %v5689, %v5689
  %v5826 = vmul.f32 %v5690, %v5690
  %v5827 = vmul.f32 %v5691, %v5691
  %v5828 = vmul.f32 %v5692, %v5692
  %v5829 = vmul.f32 %v5693, %v5693
  %v5830 = vmul.f32 %v5694, %v5694
  %v5831 = vmul.f32 %v5695, %v5695
  %v5832 = vmul.f32 %v5696, %v5696
  %v5833 = vmul.f32 %v5697, %v5697
  %v5834 = vmul.f32 %v5698, %v5698
  %v5835 = vadd.f32 %v5771, %v5772
  %v5836 = vadd.f32 %v5835, %v5773
  %v5837 = vadd.f32 %v5836, %v5774
  %v5838 = vadd.f32 %v5837, %v5775
  %v5839 = vadd.f32 %v5838, %v5776
  %v5840 = vadd.f32 %v5839, %v5777
  %v5841 = vadd.f32 %v5840, %v5778
  %v5842 = vadd.f32 %v5841, %v5779
  %v5843 = vadd.f32 %v5842, %v5780
  %v5844 = vadd.f32 %v5843, %v5781
  %v5845 = vadd.f32 %v5844, %v5782
  %v5846 = vadd.f32 %v5845, %v5783
  %v5847 = vadd.f32 %v5846, %v5784
  %v5848 = vadd.f32 %v5847, %v5785
  %v5849 = vadd.f32 %v5848, %v5786
  %v5850 = vadd.f32 %v5849, %v5787
  %v5851 = vadd.f32 %v5850, %v5788
  %v5852 = vadd.f32 %v5851, %v5789
  %v5853 = vadd.f32 %v5852, %v5790
  %v5854 = vadd.f32 %v5853, %v5791
  %v5855 = vadd.f32 %v5854, %v5792
  %v5856 = vadd.f32 %v5855, %v5793
  %v5857 = vadd.f32 %v5856, %v5794
  %v5858 = vadd.f32 %v5857, %v5795
  %v5859 = vadd.f32 %v5858, %v5796
  %v5860 = vadd.f32 %v5859, %v5797
  %v5861 = vadd.f32 %v5860, %v5798
  %v5862 = vadd.f32 %v5861, %v5799
  %v5863 = vadd.f32 %v5862, %v5800
  %v5864 = vadd.f32 %v5863, %v5801
  %v5865 = vadd.f32 %v5864, %v5802
  %v5866 = vadd.f32 %v5865, %v5803
  %v5867 = vadd.f32 %v5866, %v5804
  %v5868 = vadd.f32 %v5867, %v5805
  %v5869 = vadd.f32 %v5868, %v5806
  %v5870 = vadd.f32 %v5869, %v5807
  %v5871 = vadd.f32 %v5870, %v5808
  %v5872 = vadd.f32 %v5871, %v5809
  %v5873 = vadd.f32 %v5872, %v5810
  %v5874 = vadd.f32 %v5873, %v5811
  %v5875 = vadd.f32 %v5874, %v5812
  %v5876 = vadd.f32 %v5875, %v5813
  %v5877 = vadd.f32 %v5876, %v5814
  %v5878 = vadd.f32 %v5877, %v5815
  %v5879 = vadd.f32 %v5878, %v5816
  %v5880 = vadd.f32 %v5879, %v5817
  %v5881 = vadd.f32 %v5880, %v5818
  %v5882 = vadd.f32 %v5881, %v5819
  %v5883 = vadd.f32 %v5882, %v5820
  %v5884 = vadd.f32 %v5883, %v5821
  %v5885 = vadd.f32 %v5884, %v5822
  %v5886 = vadd.f32 %v5885, %v5823
  %v5887 = vadd.f32 %v5886, %v5824
  %v5888 = vadd.f32 %v5887, %v5825
  %v5889 = vadd.f32 %v5888, %v5826
  %v5890 = vadd.f32 %v5889, %v5827
  %v5891 = vadd.f32 %v5890, %v5828
  %v5892 = vadd.f32 %v5891, %v5829
  %v5893 = vadd.f32 %v5892, %v5830
  %v5894 = vadd.f32 %v5893, %v5831
  %v5895 = vadd.f32 %v5894, %v5832
  %v5896 = vadd.f32 %v5895, %v5833
  %v5897 = vadd.f32 %v5896, %v5834
  %v5898 = vrot.slane %v5897, 4
  %v5899 = vadd.f32 %v5897, %v5898
  %v5900 = vrot.slane %v5899, 2
  %v5901 = vadd.f32 %v5899, %v5900
  %v5902 = vrot.slane %v5901, 1
  %v5903 = vadd.f32 %v5901, %v5902
  %v5904 = vmul.f32 %v5903, 0.001953125
  %v5905 = vmul.f32 %v5770, %v5770
  %v5906 = vsub.f32 %v5904, %v5905
  %v5907 = vmax.f32 %v5906, 0.0
  %v5908 = vsub.f32 %v5635, %v5770
  %v5909 = vsub.f32 %v5636, %v5770
  %v5910 = vsub.f32 %v5637, %v5770
  %v5911 = vsub.f32 %v5638, %v5770
  %v5912 = vsub.f32 %v5639, %v5770
  %v5913 = vsub.f32 %v5640, %v5770
  %v5914 = vsub.f32 %v5641, %v5770
  %v5915 = vsub.f32 %v5642, %v5770
  %v5916 = vsub.f32 %v5643, %v5770
  %v5917 = vsub.f32 %v5644, %v5770
  %v5918 = vsub.f32 %v5645, %v5770
  %v5919 = vsub.f32 %v5646, %v5770
  %v5920 = vsub.f32 %v5647, %v5770
  %v5921 = vsub.f32 %v5648, %v5770
  %v5922 = vsub.f32 %v5649, %v5770
  %v5923 = vsub.f32 %v5650, %v5770
  %v5924 = vsub.f32 %v5651, %v5770
  %v5925 = vsub.f32 %v5652, %v5770
  %v5926 = vsub.f32 %v5653, %v5770
  %v5927 = vsub.f32 %v5654, %v5770
  %v5928 = vsub.f32 %v5655, %v5770
  %v5929 = vsub.f32 %v5656, %v5770
  %v5930 = vsub.f32 %v5657, %v5770
  %v5931 = vsub.f32 %v5658, %v5770
  %v5932 = vsub.f32 %v5659, %v5770
  %v5933 = vsub.f32 %v5660, %v5770
  %v5934 = vsub.f32 %v5661, %v5770
  %v5935 = vsub.f32 %v5662, %v5770
  %v5936 = vsub.f32 %v5663, %v5770
  %v5937 = vsub.f32 %v5664, %v5770
  %v5938 = vsub.f32 %v5665, %v5770
  %v5939 = vsub.f32 %v5666, %v5770
  %v5940 = vsub.f32 %v5667, %v5770
  %v5941 = vsub.f32 %v5668, %v5770
  %v5942 = vsub.f32 %v5669, %v5770
  %v5943 = vsub.f32 %v5670, %v5770
  %v5944 = vsub.f32 %v5671, %v5770
  %v5945 = vsub.f32 %v5672, %v5770
  %v5946 = vsub.f32 %v5673, %v5770
  %v5947 = vsub.f32 %v5674, %v5770
  %v5948 = vsub.f32 %v5675, %v5770
  %v5949 = vsub.f32 %v5676, %v5770
  %v5950 = vsub.f32 %v5677, %v5770
  %v5951 = vsub.f32 %v5678, %v5770
  %v5952 = vsub.f32 %v5679, %v5770
  %v5953 = vsub.f32 %v5680, %v5770
  %v5954 = vsub.f32 %v5681, %v5770
  %v5955 = vsub.f32 %v5682, %v5770
  %v5956 = vsub.f32 %v5683, %v5770
  %v5957 = vsub.f32 %v5684, %v5770
  %v5958 = vsub.f32 %v5685, %v5770
  %v5959 = vsub.f32 %v5686, %v5770
  %v5960 = vsub.f32 %v5687, %v5770
  %v5961 = vsub.f32 %v5688, %v5770
  %v5962 = vsub.f32 %v5689, %v5770
  %v5963 = vsub.f32 %v5690, %v5770
  %v5964 = vsub.f32 %v5691, %v5770
  %v5965 = vsub.f32 %v5692, %v5770
  %v5966 = vsub.f32 %v5693, %v5770
  %v5967 = vsub.f32 %v5694, %v5770
  %v5968 = vsub.f32 %v5695, %v5770
  %v5969 = vsub.f32 %v5696, %v5770
  %v5970 = vsub.f32 %v5697, %v5770
  %v5971 = vsub.f32 %v5698, %v5770
  %v5972 = vadd.f32 %v5907, 1e-05
  %v5973 = vrsqrt.pop %v5972
  %v5974 = vmul.f32 %v5908, %v5973
  %v5975 = vmul.f32 %v5909, %v5973
  %v5976 = vmul.f32 %v5910, %v5973
  %v5977 = vmul.f32 %v5911, %v5973
  %v5978 = vmul.f32 %v5912, %v5973
  %v5979 = vmul.f32 %v5913, %v5973
  %v5980 = vmul.f32 %v5914, %v5973
  %v5981 = vmul.f32 %v5915, %v5973
  %v5982 = vmul.f32 %v5916, %v5973
  %v5983 = vmul.f32 %v5917, %v5973
  %v5984 = vmul.f32 %v5918, %v5973
  %v5985 = vmul.f32 %v5919, %v5973
  %v5986 = vmul.f32 %v5920, %v5973
  %v5987 = vmul.f32 %v5921, %v5973
  %v5988 = vmul.f32 %v5922, %v5973
  %v5989 = vmul.f32 %v5923, %v5973
  %v5990 = vmul.f32 %v5924, %v5973
  %v5991 = vmul.f32 %v5925, %v5973
  %v5992 = vmul.f32 %v5926, %v5973
  %v5993 = vmul.f32 %v5927, %v5973
  %v5994 = vmul.f32 %v5928, %v5973
  %v5995 = vmul.f32 %v5929, %v5973
  %v5996 = vmul.f32 %v5930, %v5973
  %v5997 = vmul.f32 %v5931, %v5973
  %v5998 = vmul.f32 %v5932, %v5973
  %v5999 = vmul.f32 %v5933, %v5973
  %v6000 = vmul.f32 %v5934, %v5973
  %v6001 = vmul.f32 %v5935, %v5973
  %v6002 = vmul.f32 %v5936, %v5973
  %v6003 = vmul.f32 %v5937, %v5973
  %v6004 = vmul.f32 %v5938, %v5973
  %v6005 = vmul.f32 %v5939, %v5973
  %v6006 = vmul.f32 %v5940, %v5973
  %v6007 = vmul.f32 %v5941, %v5973
  %v6008 = vmul.f32 %v5942, %v5973
  %v6009 = vmul.f32 %v5943, %v5973
  %v6010 = vmul.f32 %v5944, %v5973
  %v6011 = vmul.f32 %v5945, %v5973
  %v6012 = vmul.f32 %v5946, %v5973
  %v6013 = vmul.f32 %v5947, %v5973
  %v6014 = vmul.f32 %v5948, %v5973
  %v6015 = vmul.f32 %v5949, %v5973
  %v6016 = vmul.f32 %v5950, %v5973
  %v6017 = vmul.f32 %v5951, %v5973
  %v6018 = vmul.f32 %v5952, %v5973
  %v6019 = vmul.f32 %v5953, %v5973
  %v6020 = vmul.f32 %v5954, %v5973
  %v6021 = vmul.f32 %v5955, %v5973
  %v6022 = vmul.f32 %v5956, %v5973
  %v6023 = vmul.f32 %v5957, %v5973
  %v6024 = vmul.f32 %v5958, %v5973
  %v6025 = vmul.f32 %v5959, %v5973
  %v6026 = vmul.f32 %v5960, %v5973
  %v6027 = vmul.f32 %v5961, %v5973
  %v6028 = vmul.f32 %v5962, %v5973
  %v6029 = vmul.f32 %v5963, %v5973
  %v6030 = vmul.f32 %v5964, %v5973
  %v6031 = vmul.f32 %v5965, %v5973
  %v6032 = vmul.f32 %v5966, %v5973
  %v6033 = vmul.f32 %v5967, %v5973
  %v6034 = vmul.f32 %v5968, %v5973
  %v6035 = vmul.f32 %v5969, %v5973
  %v6036 = vmul.f32 %v5970, %v5973
  %v6037 = vmul.f32 %v5971, %v5973
  %v6039 = vlaneseq
  %v6040 = vshrl.u32 %v6039, 7
  %v6041 = vsub.s32 0, %v6040
  %v6042 = vrot.slane %v5699, %v6041
  %v6044 = vmul.f32 %v5974, %v6042
  %v6045 = vmul.f32 %v5975, %v6042
  %v6046 = vmul.f32 %v5976, %v6042
  %v6047 = vmul.f32 %v5977, %v6042
  %v6048 = vmul.f32 %v5978, %v6042
  %v6049 = vmul.f32 %v5979, %v6042
  %v6050 = vmul.f32 %v5980, %v6042
  %v6051 = vmul.f32 %v5981, %v6042
  %v6052 = vmul.f32 %v5982, %v6042
  %v6053 = vmul.f32 %v5983, %v6042
  %v6054 = vmul.f32 %v5984, %v6042
  %v6055 = vmul.f32 %v5985, %v6042
  %v6056 = vmul.f32 %v5986, %v6042
  %v6057 = vmul.f32 %v5987, %v6042
  %v6058 = vmul.f32 %v5988, %v6042
  %v6059 = vmul.f32 %v5989, %v6042
  %v6060 = vmul.f32 %v5990, %v6042
  %v6061 = vmul.f32 %v5991, %v6042
  %v6062 = vmul.f32 %v5992, %v6042
  %v6063 = vmul.f32 %v5993, %v6042
  %v6064 = vmul.f32 %v5994, %v6042
  %v6065 = vmul.f32 %v5995, %v6042
  %v6066 = vmul.f32 %v5996, %v6042
  %v6067 = vmul.f32 %v5997, %v6042
  %v6068 = vmul.f32 %v5998, %v6042
  %v6069 = vmul.f32 %v5999, %v6042
  %v6070 = vmul.f32 %v6000, %v6042
  %v6071 = vmul.f32 %v6001, %v6042
  %v6072 = vmul.f32 %v6002, %v6042
  %v6073 = vmul.f32 %v6003, %v6042
  %v6074 = vmul.f32 %v6004, %v6042
  %v6075 = vmul.f32 %v6005, %v6042
  %v6076 = vmul.f32 %v6006, %v6042
  %v6077 = vmul.f32 %v6007, %v6042
  %v6078 = vmul.f32 %v6008, %v6042
  %v6079 = vmul.f32 %v6009, %v6042
  %v6080 = vmul.f32 %v6010, %v6042
  %v6081 = vmul.f32 %v6011, %v6042
  %v6082 = vmul.f32 %v6012, %v6042
  %v6083 = vmul.f32 %v6013, %v6042
  %v6084 = vmul.f32 %v6014, %v6042
  %v6085 = vmul.f32 %v6015, %v6042
  %v6086 = vmul.f32 %v6016, %v6042
  %v6087 = vmul.f32 %v6017, %v6042
  %v6088 = vmul.f32 %v6018, %v6042
  %v6089 = vmul.f32 %v6019, %v6042
  %v6090 = vmul.f32 %v6020, %v6042
  %v6091 = vmul.f32 %v6021, %v6042
  %v6092 = vmul.f32 %v6022, %v6042
  %v6093 = vmul.f32 %v6023, %v6042
  %v6094 = vmul.f32 %v6024, %v6042
  %v6095 = vmul.f32 %v6025, %v6042
  %v6096 = vmul.f32 %v6026, %v6042
  %v6097 = vmul.f32 %v6027, %v6042
  %v6098 = vmul.f32 %v6028, %v6042
  %v6099 = vmul.f32 %v6029, %v6042
  %v6100 = vmul.f32 %v6030, %v6042
  %v6101 = vmul.f32 %v6031, %v6042
  %v6102 = vmul.f32 %v6032, %v6042
  %v6103 = vmul.f32 %v6033, %v6042
  %v6104 = vmul.f32 %v6034, %v6042
  %v6105 = vmul.f32 %v6035, %v6042
  %v6106 = vmul.f32 %v6036, %v6042
  %v6107 = vmul.f32 %v6037, %v6042
  %v6109 = vlaneseq
  %v6110 = vshrl.u32 %v6109, 7
  %v6111 = vsub.s32 0, %v6110
  %v6112 = vrot.slane %v5700, %v6111
  %v6114 = vadd.f32 %v6044, %v6112
  %v6115 = vadd.f32 %v6045, %v6112
  %v6116 = vadd.f32 %v6046, %v6112
  %v6117 = vadd.f32 %v6047, %v6112
  %v6118 = vadd.f32 %v6048, %v6112
  %v6119 = vadd.f32 %v6049, %v6112
  %v6120 = vadd.f32 %v6050, %v6112
  %v6121 = vadd.f32 %v6051, %v6112
  %v6122 = vadd.f32 %v6052, %v6112
  %v6123 = vadd.f32 %v6053, %v6112
  %v6124 = vadd.f32 %v6054, %v6112
  %v6125 = vadd.f32 %v6055, %v6112
  %v6126 = vadd.f32 %v6056, %v6112
  %v6127 = vadd.f32 %v6057, %v6112
  %v6128 = vadd.f32 %v6058, %v6112
  %v6129 = vadd.f32 %v6059, %v6112
  %v6130 = vadd.f32 %v6060, %v6112
  %v6131 = vadd.f32 %v6061, %v6112
  %v6132 = vadd.f32 %v6062, %v6112
  %v6133 = vadd.f32 %v6063, %v6112
  %v6134 = vadd.f32 %v6064, %v6112
  %v6135 = vadd.f32 %v6065, %v6112
  %v6136 = vadd.f32 %v6066, %v6112
  %v6137 = vadd.f32 %v6067, %v6112
  %v6138 = vadd.f32 %v6068, %v6112
  %v6139 = vadd.f32 %v6069, %v6112
  %v6140 = vadd.f32 %v6070, %v6112
  %v6141 = vadd.f32 %v6071, %v6112
  %v6142 = vadd.f32 %v6072, %v6112
  %v6143 = vadd.f32 %v6073, %v6112
  %v6144 = vadd.f32 %v6074, %v6112
  %v6145 = vadd.f32 %v6075, %v6112
  %v6146 = vadd.f32 %v6076, %v6112
  %v6147 = vadd.f32 %v6077, %v6112
  %v6148 = vadd.f32 %v6078, %v6112
  %v6149 = vadd.f32 %v6079, %v6112
  %v6150 = vadd.f32 %v6080, %v6112
  %v6151 = vadd.f32 %v6081, %v6112
  %v6152 = vadd.f32 %v6082, %v6112
  %v6153 = vadd.f32 %v6083, %v6112
  %v6154 = vadd.f32 %v6084, %v6112
  %v6155 = vadd.f32 %v6085, %v6112
  %v6156 = vadd.f32 %v6086, %v6112
  %v6157 = vadd.f32 %v6087, %v6112
  %v6158 = vadd.f32 %v6088, %v6112
  %v6159 = vadd.f32 %v6089, %v6112
  %v6160 = vadd.f32 %v6090, %v6112
  %v6161 = vadd.f32 %v6091, %v6112
  %v6162 = vadd.f32 %v6092, %v6112
  %v6163 = vadd.f32 %v6093, %v6112
  %v6164 = vadd.f32 %v6094, %v6112
  %v6165 = vadd.f32 %v6095, %v6112
  %v6166 = vadd.f32 %v6096, %v6112
  %v6167 = vadd.f32 %v6097, %v6112
  %v6168 = vadd.f32 %v6098, %v6112
  %v6169 = vadd.f32 %v6099, %v6112
  %v6170 = vadd.f32 %v6100, %v6112
  %v6171 = vadd.f32 %v6101, %v6112
  %v6172 = vadd.f32 %v6102, %v6112
  %v6173 = vadd.f32 %v6103, %v6112
  %v6174 = vadd.f32 %v6104, %v6112
  %v6175 = vadd.f32 %v6105, %v6112
  %v6176 = vadd.f32 %v6106, %v6112
  %v6177 = vadd.f32 %v6107, %v6112
  %v6178 = vmax.f32 %v6114, 0.0
  %v6179 = vmax.f32 %v6115, 0.0
  %v6180 = vmax.f32 %v6116, 0.0
  %v6181 = vmax.f32 %v6117, 0.0
  %v6182 = vmax.f32 %v6118, 0.0
  %v6183 = vmax.f32 %v6119, 0.0
  %v6184 = vmax.f32 %v6120, 0.0
  %v6185 = vmax.f32 %v6121, 0.0
  %v6186 = vmax.f32 %v6122, 0.0
  %v6187 = vmax.f32 %v6123, 0.0
  %v6188 = vmax.f32 %v6124, 0.0
  %v6189 = vmax.f32 %v6125, 0.0
  %v6190 = vmax.f32 %v6126, 0.0
  %v6191 = vmax.f32 %v6127, 0.0
  %v6192 = vmax.f32 %v6128, 0.0
  %v6193 = vmax.f32 %v6129, 0.0
  %v6194 = vmax.f32 %v6130, 0.0
  %v6195 = vmax.f32 %v6131, 0.0
  %v6196 = vmax.f32 %v6132, 0.0
  %v6197 = vmax.f32 %v6133, 0.0
  %v6198 = vmax.f32 %v6134, 0.0
  %v6199 = vmax.f32 %v6135, 0.0
  %v6200 = vmax.f32 %v6136, 0.0
  %v6201 = vmax.f32 %v6137, 0.0
  %v6202 = vmax.f32 %v6138, 0.0
  %v6203 = vmax.f32 %v6139, 0.0
  %v6204 = vmax.f32 %v6140, 0.0
  %v6205 = vmax.f32 %v6141, 0.0
  %v6206 = vmax.f32 %v6142, 0.0
  %v6207 = vmax.f32 %v6143, 0.0
  %v6208 = vmax.f32 %v6144, 0.0
  %v6209 = vmax.f32 %v6145, 0.0
  %v6210 = vmax.f32 %v6146, 0.0
  %v6211 = vmax.f32 %v6147, 0.0
  %v6212 = vmax.f32 %v6148, 0.0
  %v6213 = vmax.f32 %v6149, 0.0
  %v6214 = vmax.f32 %v6150, 0.0
  %v6215 = vmax.f32 %v6151, 0.0
  %v6216 = vmax.f32 %v6152, 0.0
  %v6217 = vmax.f32 %v6153, 0.0
  %v6218 = vmax.f32 %v6154, 0.0
  %v6219 = vmax.f32 %v6155, 0.0
  %v6220 = vmax.f32 %v6156, 0.0
  %v6221 = vmax.f32 %v6157, 0.0
  %v6222 = vmax.f32 %v6158, 0.0
  %v6223 = vmax.f32 %v6159, 0.0
  %v6224 = vmax.f32 %v6160, 0.0
  %v6225 = vmax.f32 %v6161, 0.0
  %v6226 = vmax.f32 %v6162, 0.0
  %v6227 = vmax.f32 %v6163, 0.0
  %v6228 = vmax.f32 %v6164, 0.0
  %v6229 = vmax.f32 %v6165, 0.0
  %v6230 = vmax.f32 %v6166, 0.0
  %v6231 = vmax.f32 %v6167, 0.0
  %v6232 = vmax.f32 %v6168, 0.0
  %v6233 = vmax.f32 %v6169, 0.0
  %v6234 = vmax.f32 %v6170, 0.0
  %v6235 = vmax.f32 %v6171, 0.0
  %v6236 = vmax.f32 %v6172, 0.0
  %v6237 = vmax.f32 %v6173, 0.0
  %v6238 = vmax.f32 %v6174, 0.0
  %v6239 = vmax.f32 %v6175, 0.0
  %v6240 = vmax.f32 %v6176, 0.0
  %v6241 = vmax.f32 %v6177, 0.0
  %v6242 = vpack.c.bf16 %v6179, %v6178
  %v6243 = vpack.c.bf16 %v6181, %v6180
  %v6244 = vpack.c.bf16 %v6183, %v6182
  %v6245 = vpack.c.bf16 %v6185, %v6184
  %v6246 = vpack.c.bf16 %v6187, %v6186
  %v6247 = vpack.c.bf16 %v6189, %v6188
  %v6248 = vpack.c.bf16 %v6191, %v6190
  %v6249 = vpack.c.bf16 %v6193, %v6192
  %v6250 = vpack.c.bf16 %v6195, %v6194
  %v6251 = vpack.c.bf16 %v6197, %v6196
  %v6252 = vpack.c.bf16 %v6199, %v6198
  %v6253 = vpack.c.bf16 %v6201, %v6200
  %v6254 = vpack.c.bf16 %v6203, %v6202
  %v6255 = vpack.c.bf16 %v6205, %v6204
  %v6256 = vpack.c.bf16 %v6207, %v6206
  %v6257 = vpack.c.bf16 %v6209, %v6208
  %v6258 = vpack.c.bf16 %v6211, %v6210
  %v6259 = vpack.c.bf16 %v6213, %v6212
  %v6260 = vpack.c.bf16 %v6215, %v6214
  %v6261 = vpack.c.bf16 %v6217, %v6216
  %v6262 = vpack.c.bf16 %v6219, %v6218
  %v6263 = vpack.c.bf16 %v6221, %v6220
  %v6264 = vpack.c.bf16 %v6223, %v6222
  %v6265 = vpack.c.bf16 %v6225, %v6224
  %v6266 = vpack.c.bf16 %v6227, %v6226
  %v6267 = vpack.c.bf16 %v6229, %v6228
  %v6268 = vpack.c.bf16 %v6231, %v6230
  %v6269 = vpack.c.bf16 %v6233, %v6232
  %v6270 = vpack.c.bf16 %v6235, %v6234
  %v6271 = vpack.c.bf16 %v6237, %v6236
  %v6272 = vpack.c.bf16 %v6239, %v6238
  %v6273 = vpack.c.bf16 %v6241, %v6240
  %v6274 = vld [vmem:[%s3] sm:$0xf]
  %v6275 = vld [vmem:[%s3 + $0x4] sm:$0xf]
  %v6276 = vld [vmem:[%s3 + $0x8] sm:$0xf]
  %v6277 = vld [vmem:[%s3 + $0xc] sm:$0xf]
  %v6278 = vld [vmem:[%s3 + $0x10] sm:$0xf]
  %v6279 = vld [vmem:[%s3 + $0x14] sm:$0xf]
  %v6280 = vld [vmem:[%s3 + $0x18] sm:$0xf]
  %v6281 = vld [vmem:[%s3 + $0x1c] sm:$0xf]
  %v6282 = vld [vmem:[%s3 + $0x20] sm:$0xf]
  %v6283 = vld [vmem:[%s3 + $0x24] sm:$0xf]
  %v6284 = vld [vmem:[%s3 + $0x28] sm:$0xf]
  %v6285 = vld [vmem:[%s3 + $0x2c] sm:$0xf]
  %v6286 = vld [vmem:[%s3 + $0x30] sm:$0xf]
  %v6287 = vld [vmem:[%s3 + $0x34] sm:$0xf]
  %v6288 = vld [vmem:[%s3 + $0x38] sm:$0xf]
  %v6289 = vld [vmem:[%s3 + $0x3c] sm:$0xf]
  %v6306 = vunpack.c.l.b16 %v6274
  %v6307 = vunpack.c.l.b16 %v6275
  %v6308 = vunpack.c.l.b16 %v6276
  %v6309 = vunpack.c.l.b16 %v6277
  %v6310 = vunpack.c.l.b16 %v6278
  %v6311 = vunpack.c.l.b16 %v6279
  %v6312 = vunpack.c.l.b16 %v6280
  %v6313 = vunpack.c.l.b16 %v6281
  %v6314 = vunpack.c.l.b16 %v6282
  %v6315 = vunpack.c.l.b16 %v6283
  %v6316 = vunpack.c.l.b16 %v6284
  %v6317 = vunpack.c.l.b16 %v6285
  %v6318 = vunpack.c.l.b16 %v6286
  %v6319 = vunpack.c.l.b16 %v6287
  %v6320 = vunpack.c.l.b16 %v6288
  %v6321 = vunpack.c.l.b16 %v6289
  %v6322 = vpack.c.b16 %v6307, %v6306
  %v6323 = vpack.c.b16 %v6309, %v6308
  %v6324 = vpack.c.b16 %v6311, %v6310
  %v6325 = vpack.c.b16 %v6313, %v6312
  %v6326 = vpack.c.b16 %v6315, %v6314
  %v6327 = vpack.c.b16 %v6317, %v6316
  %v6328 = vpack.c.b16 %v6319, %v6318
  %v6329 = vpack.c.b16 %v6321, %v6320
  %6338 = vmatprep.subr.bf16.mxu0 0
  %6339 = vmatpush1.bf16.msra.mxu0 %v6329
  %6340 = vmatprep.subr.bf16.mxu0 0
  %6341 = vmatpush1.bf16.msra.mxu0 %v6328
  %6342 = vmatprep.subr.bf16.mxu0 0
  %6343 = vmatpush1.bf16.msra.mxu0 %v6327
  %6344 = vmatprep.subr.bf16.mxu0 0
  %6345 = vmatpush1.bf16.msra.mxu0 %v6326
  %6346 = vmatprep.subr.bf16.mxu0 0
  %6347 = vmatpush1.bf16.msra.mxu0 %v6325
  %6348 = vmatprep.subr.bf16.mxu0 0
  %6349 = vmatpush1.bf16.msra.mxu0 %v6324
  %6350 = vmatprep.subr.bf16.mxu0 0
  %6351 = vmatpush1.bf16.msra.mxu0 %v6323
  %6352 = vmatprep.subr.bf16.mxu0 0
  %6353 = vmatpush1.bf16.msra.mxu0 %v6322
  %6354 = vmatprep.subr.bf16.mxu0 0
  %6355 = vmatpush2.bf16.msra.mxu0 0
  %6356 = vmatprep.subr.bf16.mxu0 0
  %6357 = vmatpush2.bf16.msra.mxu0 0
  %6358 = vmatprep.subr.bf16.mxu0 0
  %6359 = vmatpush2.bf16.msra.mxu0 0
  %6360 = vmatprep.subr.bf16.mxu0 0
  %6361 = vmatpush2.bf16.msra.mxu0 0
  %6362 = vmatprep.subr.bf16.mxu0 0
  %6363 = vmatpush2.bf16.msra.mxu0 0
  %6364 = vmatprep.subr.bf16.mxu0 0
  %6365 = vmatpush2.bf16.msra.mxu0 0
  %6366 = vmatprep.subr.bf16.mxu0 0
  %6367 = vmatpush2.bf16.msra.mxu0 0
  %6368 = vmatprep.subr.bf16.mxu0 0
  %6369 = vmatpush2.bf16.msra.mxu0 0
  %6370 = vmatprep.mubr.bf16.mxu0 0
  %6371 = vmatmul.mubr.bf16.gmra.mxu0 %v6242
  %v6372 = vpop.f32.mrf.mxu0
  %v6373 = vadd.f32 0.0, %v6372
  %v6374 = vpop.f32.mrf.mxu0
  %v6375 = vpop.f32.mrf.mxu0
  %v6376 = vadd.f32 0.0, %v6375
  %v6377 = vpop.f32.mrf.mxu0
  %6378 = vmatprep.mubr.bf16.mxu0 0
  %6379 = vmatmul.mubr.bf16.gmra.mxu0 %v6243
  %v6380 = vpop.f32.mrf.mxu0
  %v6381 = vadd.f32 0.0, %v6380
  %v6382 = vpop.f32.mrf.mxu0
  %v6383 = vpop.f32.mrf.mxu0
  %v6384 = vadd.f32 0.0, %v6383
  %v6385 = vpop.f32.mrf.mxu0
  %6386 = vmatprep.mubr.bf16.mxu0 0
  %6387 = vmatmul.mubr.bf16.gmra.mxu0 %v6244
  %v6388 = vpop.f32.mrf.mxu0
  %v6389 = vadd.f32 0.0, %v6388
  %v6390 = vpop.f32.mrf.mxu0
  %v6391 = vpop.f32.mrf.mxu0
  %v6392 = vadd.f32 0.0, %v6391
  %v6393 = vpop.f32.mrf.mxu0
  %6394 = vmatprep.mubr.bf16.mxu0 0
  %6395 = vmatmul.mubr.bf16.gmra.mxu0 %v6245
  %v6396 = vpop.f32.mrf.mxu0
  %v6397 = vadd.f32 0.0, %v6396
  %v6398 = vpop.f32.mrf.mxu0
  %v6399 = vpop.f32.mrf.mxu0
  %v6400 = vadd.f32 0.0, %v6399
  %v6401 = vpop.f32.mrf.mxu0
  %6402 = vmatprep.mubr.bf16.mxu0 0
  %6403 = vmatmul.mubr.bf16.gmra.mxu0 %v6246
  %v6404 = vpop.f32.mrf.mxu0
  %v6405 = vadd.f32 0.0, %v6404
  %v6406 = vpop.f32.mrf.mxu0
  %v6407 = vpop.f32.mrf.mxu0
  %v6408 = vadd.f32 0.0, %v6407
  %v6409 = vpop.f32.mrf.mxu0
  %6410 = vmatprep.mubr.bf16.mxu0 0
  %6411 = vmatmul.mubr.bf16.gmra.mxu0 %v6247
  %v6412 = vpop.f32.mrf.mxu0
  %v6413 = vadd.f32 0.0, %v6412
  %v6414 = vpop.f32.mrf.mxu0
  %v6415 = vpop.f32.mrf.mxu0
  %v6416 = vadd.f32 0.0, %v6415
  %v6417 = vpop.f32.mrf.mxu0
  %6418 = vmatprep.mubr.bf16.mxu0 0
  %6419 = vmatmul.mubr.bf16.gmra.mxu0 %v6248
  %v6420 = vpop.f32.mrf.mxu0
  %v6421 = vadd.f32 0.0, %v6420
  %v6422 = vpop.f32.mrf.mxu0
  %v6423 = vpop.f32.mrf.mxu0
  %v6424 = vadd.f32 0.0, %v6423
  %v6425 = vpop.f32.mrf.mxu0
  %6426 = vmatprep.mubr.bf16.mxu0 0
  %6427 = vmatmul.mubr.bf16.gmra.mxu0 %v6249
  %v6428 = vpop.f32.mrf.mxu0
  %v6429 = vadd.f32 0.0, %v6428
  %v6430 = vpop.f32.mrf.mxu0
  %v6431 = vpop.f32.mrf.mxu0
  %v6432 = vadd.f32 0.0, %v6431
  %v6433 = vpop.f32.mrf.mxu0
  %6434 = vmatprep.mubr.bf16.mxu0 0
  %6435 = vmatmul.mubr.bf16.gmra.mxu0 %v6250
  %v6436 = vpop.f32.mrf.mxu0
  %v6437 = vadd.f32 0.0, %v6436
  %v6438 = vpop.f32.mrf.mxu0
  %v6439 = vpop.f32.mrf.mxu0
  %v6440 = vadd.f32 0.0, %v6439
  %v6441 = vpop.f32.mrf.mxu0
  %6442 = vmatprep.mubr.bf16.mxu0 0
  %6443 = vmatmul.mubr.bf16.gmra.mxu0 %v6251
  %v6444 = vpop.f32.mrf.mxu0
  %v6445 = vadd.f32 0.0, %v6444
  %v6446 = vpop.f32.mrf.mxu0
  %v6447 = vpop.f32.mrf.mxu0
  %v6448 = vadd.f32 0.0, %v6447
  %v6449 = vpop.f32.mrf.mxu0
  %6450 = vmatprep.mubr.bf16.mxu0 0
  %6451 = vmatmul.mubr.bf16.gmra.mxu0 %v6252
  %v6452 = vpop.f32.mrf.mxu0
  %v6453 = vadd.f32 0.0, %v6452
  %v6454 = vpop.f32.mrf.mxu0
  %v6455 = vpop.f32.mrf.mxu0
  %v6456 = vadd.f32 0.0, %v6455
  %v6457 = vpop.f32.mrf.mxu0
  %6458 = vmatprep.mubr.bf16.mxu0 0
  %6459 = vmatmul.mubr.bf16.gmra.mxu0 %v6253
  %v6460 = vpop.f32.mrf.mxu0
  %v6461 = vadd.f32 0.0, %v6460
  %v6462 = vpop.f32.mrf.mxu0
  %v6463 = vpop.f32.mrf.mxu0
  %v6464 = vadd.f32 0.0, %v6463
  %v6465 = vpop.f32.mrf.mxu0
  %6466 = vmatprep.mubr.bf16.mxu0 0
  %6467 = vmatmul.mubr.bf16.gmra.mxu0 %v6254
  %v6468 = vpop.f32.mrf.mxu0
  %v6469 = vadd.f32 0.0, %v6468
  %v6470 = vpop.f32.mrf.mxu0
  %v6471 = vpop.f32.mrf.mxu0
  %v6472 = vadd.f32 0.0, %v6471
  %v6473 = vpop.f32.mrf.mxu0
  %6474 = vmatprep.mubr.bf16.mxu0 0
  %6475 = vmatmul.mubr.bf16.gmra.mxu0 %v6255
  %v6476 = vpop.f32.mrf.mxu0
  %v6477 = vadd.f32 0.0, %v6476
  %v6478 = vpop.f32.mrf.mxu0
  %v6479 = vpop.f32.mrf.mxu0
  %v6480 = vadd.f32 0.0, %v6479
  %v6481 = vpop.f32.mrf.mxu0
  %6482 = vmatprep.mubr.bf16.mxu0 0
  %6483 = vmatmul.mubr.bf16.gmra.mxu0 %v6256
  %v6484 = vpop.f32.mrf.mxu0
  %v6485 = vadd.f32 0.0, %v6484
  %v6486 = vpop.f32.mrf.mxu0
  %v6487 = vpop.f32.mrf.mxu0
  %v6488 = vadd.f32 0.0, %v6487
  %v6489 = vpop.f32.mrf.mxu0
  %6490 = vmatprep.mubr.bf16.mxu0 0
  %6491 = vmatmul.mubr.bf16.gmra.mxu0 %v6257
  %v6492 = vpop.f32.mrf.mxu0
  %v6493 = vadd.f32 0.0, %v6492
  %v6494 = vpop.f32.mrf.mxu0
  %v6495 = vpop.f32.mrf.mxu0
  %v6496 = vadd.f32 0.0, %v6495
  %v6497 = vpop.f32.mrf.mxu0
  %6498 = vmatprep.mubr.bf16.mxu0 0
  %6499 = vmatmul.mubr.bf16.gmra.mxu0 %v6258
  %v6500 = vpop.f32.mrf.mxu0
  %v6501 = vadd.f32 0.0, %v6500
  %v6502 = vpop.f32.mrf.mxu0
  %v6503 = vpop.f32.mrf.mxu0
  %v6504 = vadd.f32 0.0, %v6503
  %v6505 = vpop.f32.mrf.mxu0
  %6506 = vmatprep.mubr.bf16.mxu0 0
  %6507 = vmatmul.mubr.bf16.gmra.mxu0 %v6259
  %v6508 = vpop.f32.mrf.mxu0
  %v6509 = vadd.f32 0.0, %v6508
  %v6510 = vpop.f32.mrf.mxu0
  %v6511 = vpop.f32.mrf.mxu0
  %v6512 = vadd.f32 0.0, %v6511
  %v6513 = vpop.f32.mrf.mxu0
  %6514 = vmatprep.mubr.bf16.mxu0 0
  %6515 = vmatmul.mubr.bf16.gmra.mxu0 %v6260
  %v6516 = vpop.f32.mrf.mxu0
  %v6517 = vadd.f32 0.0, %v6516
  %v6518 = vpop.f32.mrf.mxu0
  %v6519 = vpop.f32.mrf.mxu0
  %v6520 = vadd.f32 0.0, %v6519
  %v6521 = vpop.f32.mrf.mxu0
  %6522 = vmatprep.mubr.bf16.mxu0 0
  %6523 = vmatmul.mubr.bf16.gmra.mxu0 %v6261
  %v6524 = vpop.f32.mrf.mxu0
  %v6525 = vadd.f32 0.0, %v6524
  %v6526 = vpop.f32.mrf.mxu0
  %v6527 = vpop.f32.mrf.mxu0
  %v6528 = vadd.f32 0.0, %v6527
  %v6529 = vpop.f32.mrf.mxu0
  %6530 = vmatprep.mubr.bf16.mxu0 0
  %6531 = vmatmul.mubr.bf16.gmra.mxu0 %v6262
  %v6532 = vpop.f32.mrf.mxu0
  %v6533 = vadd.f32 0.0, %v6532
  %v6534 = vpop.f32.mrf.mxu0
  %v6535 = vpop.f32.mrf.mxu0
  %v6536 = vadd.f32 0.0, %v6535
  %v6537 = vpop.f32.mrf.mxu0
  %6538 = vmatprep.mubr.bf16.mxu0 0
  %6539 = vmatmul.mubr.bf16.gmra.mxu0 %v6263
  %v6540 = vpop.f32.mrf.mxu0
  %v6541 = vadd.f32 0.0, %v6540
  %v6542 = vpop.f32.mrf.mxu0
  %v6543 = vpop.f32.mrf.mxu0
  %v6544 = vadd.f32 0.0, %v6543
  %v6545 = vpop.f32.mrf.mxu0
  %6546 = vmatprep.mubr.bf16.mxu0 0
  %6547 = vmatmul.mubr.bf16.gmra.mxu0 %v6264
  %v6548 = vpop.f32.mrf.mxu0
  %v6549 = vadd.f32 0.0, %v6548
  %v6550 = vpop.f32.mrf.mxu0
  %v6551 = vpop.f32.mrf.mxu0
  %v6552 = vadd.f32 0.0, %v6551
  %v6553 = vpop.f32.mrf.mxu0
  %6554 = vmatprep.mubr.bf16.mxu0 0
  %6555 = vmatmul.mubr.bf16.gmra.mxu0 %v6265
  %v6556 = vpop.f32.mrf.mxu0
  %v6557 = vadd.f32 0.0, %v6556
  %v6558 = vpop.f32.mrf.mxu0
  %v6559 = vpop.f32.mrf.mxu0
  %v6560 = vadd.f32 0.0, %v6559
  %v6561 = vpop.f32.mrf.mxu0
  %6562 = vmatprep.mubr.bf16.mxu0 0
  %6563 = vmatmul.mubr.bf16.gmra.mxu0 %v6266
  %v6564 = vpop.f32.mrf.mxu0
  %v6565 = vadd.f32 0.0, %v6564
  %v6566 = vpop.f32.mrf.mxu0
  %v6567 = vpop.f32.mrf.mxu0
  %v6568 = vadd.f32 0.0, %v6567
  %v6569 = vpop.f32.mrf.mxu0
  %6570 = vmatprep.mubr.bf16.mxu0 0
  %6571 = vmatmul.mubr.bf16.gmra.mxu0 %v6267
  %v6572 = vpop.f32.mrf.mxu0
  %v6573 = vadd.f32 0.0, %v6572
  %v6574 = vpop.f32.mrf.mxu0
  %v6575 = vpop.f32.mrf.mxu0
  %v6576 = vadd.f32 0.0, %v6575
  %v6577 = vpop.f32.mrf.mxu0
  %6578 = vmatprep.mubr.bf16.mxu0 0
  %6579 = vmatmul.mubr.bf16.gmra.mxu0 %v6268
  %v6580 = vpop.f32.mrf.mxu0
  %v6581 = vadd.f32 0.0, %v6580
  %v6582 = vpop.f32.mrf.mxu0
  %v6583 = vpop.f32.mrf.mxu0
  %v6584 = vadd.f32 0.0, %v6583
  %v6585 = vpop.f32.mrf.mxu0
  %6586 = vmatprep.mubr.bf16.mxu0 0
  %6587 = vmatmul.mubr.bf16.gmra.mxu0 %v6269
  %v6588 = vpop.f32.mrf.mxu0
  %v6589 = vadd.f32 0.0, %v6588
  %v6590 = vpop.f32.mrf.mxu0
  %v6591 = vpop.f32.mrf.mxu0
  %v6592 = vadd.f32 0.0, %v6591
  %v6593 = vpop.f32.mrf.mxu0
  %6594 = vmatprep.mubr.bf16.mxu0 0
  %6595 = vmatmul.mubr.bf16.gmra.mxu0 %v6270
  %v6596 = vpop.f32.mrf.mxu0
  %v6597 = vadd.f32 0.0, %v6596
  %v6598 = vpop.f32.mrf.mxu0
  %v6599 = vpop.f32.mrf.mxu0
  %v6600 = vadd.f32 0.0, %v6599
  %v6601 = vpop.f32.mrf.mxu0
  %6602 = vmatprep.mubr.bf16.mxu0 0
  %6603 = vmatmul.mubr.bf16.gmra.mxu0 %v6271
  %v6604 = vpop.f32.mrf.mxu0
  %v6605 = vadd.f32 0.0, %v6604
  %v6606 = vpop.f32.mrf.mxu0
  %v6607 = vpop.f32.mrf.mxu0
  %v6608 = vadd.f32 0.0, %v6607
  %v6609 = vpop.f32.mrf.mxu0
  %6610 = vmatprep.mubr.bf16.mxu0 0
  %6611 = vmatmul.mubr.bf16.gmra.mxu0 %v6272
  %v6612 = vpop.f32.mrf.mxu0
  %v6613 = vadd.f32 0.0, %v6612
  %v6614 = vpop.f32.mrf.mxu0
  %v6615 = vpop.f32.mrf.mxu0
  %v6616 = vadd.f32 0.0, %v6615
  %v6617 = vpop.f32.mrf.mxu0
  %6618 = vmatprep.mubr.bf16.mxu0 0
  %6619 = vmatmul.mubr.bf16.gmra.mxu0 %v6273
  %v6620 = vpop.f32.mrf.mxu0
  %v6621 = vadd.f32 0.0, %v6620
  %v6622 = vpop.f32.mrf.mxu0
  %v6623 = vpop.f32.mrf.mxu0
  %v6624 = vadd.f32 0.0, %v6623
  %v6625 = vpop.f32.mrf.mxu0
  %6626 = vdwg.mxu0
  %v6627 = vld [vmem:[%s8] sm:$0x1]
  %v6628 = vld [vmem:[%s9] sm:$0x1]
  %v6629 = vadd.f32 %v6373, %v6376
  %v6630 = vadd.f32 %v6629, %v6381
  %v6631 = vadd.f32 %v6630, %v6384
  %v6632 = vadd.f32 %v6631, %v6389
  %v6633 = vadd.f32 %v6632, %v6392
  %v6634 = vadd.f32 %v6633, %v6397
  %v6635 = vadd.f32 %v6634, %v6400
  %v6636 = vadd.f32 %v6635, %v6405
  %v6637 = vadd.f32 %v6636, %v6408
  %v6638 = vadd.f32 %v6637, %v6413
  %v6639 = vadd.f32 %v6638, %v6416
  %v6640 = vadd.f32 %v6639, %v6421
  %v6641 = vadd.f32 %v6640, %v6424
  %v6642 = vadd.f32 %v6641, %v6429
  %v6643 = vadd.f32 %v6642, %v6432
  %v6644 = vadd.f32 %v6643, %v6437
  %v6645 = vadd.f32 %v6644, %v6440
  %v6646 = vadd.f32 %v6645, %v6445
  %v6647 = vadd.f32 %v6646, %v6448
  %v6648 = vadd.f32 %v6647, %v6453
  %v6649 = vadd.f32 %v6648, %v6456
  %v6650 = vadd.f32 %v6649, %v6461
  %v6651 = vadd.f32 %v6650, %v6464
  %v6652 = vadd.f32 %v6651, %v6469
  %v6653 = vadd.f32 %v6652, %v6472
  %v6654 = vadd.f32 %v6653, %v6477
  %v6655 = vadd.f32 %v6654, %v6480
  %v6656 = vadd.f32 %v6655, %v6485
  %v6657 = vadd.f32 %v6656, %v6488
  %v6658 = vadd.f32 %v6657, %v6493
  %v6659 = vadd.f32 %v6658, %v6496
  %v6660 = vadd.f32 %v6659, %v6501
  %v6661 = vadd.f32 %v6660, %v6504
  %v6662 = vadd.f32 %v6661, %v6509
  %v6663 = vadd.f32 %v6662, %v6512
  %v6664 = vadd.f32 %v6663, %v6517
  %v6665 = vadd.f32 %v6664, %v6520
  %v6666 = vadd.f32 %v6665, %v6525
  %v6667 = vadd.f32 %v6666, %v6528
  %v6668 = vadd.f32 %v6667, %v6533
  %v6669 = vadd.f32 %v6668, %v6536
  %v6670 = vadd.f32 %v6669, %v6541
  %v6671 = vadd.f32 %v6670, %v6544
  %v6672 = vadd.f32 %v6671, %v6549
  %v6673 = vadd.f32 %v6672, %v6552
  %v6674 = vadd.f32 %v6673, %v6557
  %v6675 = vadd.f32 %v6674, %v6560
  %v6676 = vadd.f32 %v6675, %v6565
  %v6677 = vadd.f32 %v6676, %v6568
  %v6678 = vadd.f32 %v6677, %v6573
  %v6679 = vadd.f32 %v6678, %v6576
  %v6680 = vadd.f32 %v6679, %v6581
  %v6681 = vadd.f32 %v6680, %v6584
  %v6682 = vadd.f32 %v6681, %v6589
  %v6683 = vadd.f32 %v6682, %v6592
  %v6684 = vadd.f32 %v6683, %v6597
  %v6685 = vadd.f32 %v6684, %v6600
  %v6686 = vadd.f32 %v6685, %v6605
  %v6687 = vadd.f32 %v6686, %v6608
  %v6688 = vadd.f32 %v6687, %v6613
  %v6689 = vadd.f32 %v6688, %v6616
  %v6690 = vadd.f32 %v6689, %v6621
  %v6691 = vadd.f32 %v6690, %v6624
  %v6692 = vrot.slane %v6691, 4
  %v6693 = vadd.f32 %v6691, %v6692
  %v6694 = vrot.slane %v6693, 2
  %v6695 = vadd.f32 %v6693, %v6694
  %v6696 = vrot.slane %v6695, 1
  %v6697 = vadd.f32 %v6695, %v6696
  %v6698 = vmul.f32 %v6697, 0.001953125
  %v6699 = vmul.f32 %v6373, %v6373
  %v6700 = vmul.f32 %v6376, %v6376
  %v6701 = vmul.f32 %v6381, %v6381
  %v6702 = vmul.f32 %v6384, %v6384
  %v6703 = vmul.f32 %v6389, %v6389
  %v6704 = vmul.f32 %v6392, %v6392
  %v6705 = vmul.f32 %v6397, %v6397
  %v6706 = vmul.f32 %v6400, %v6400
  %v6707 = vmul.f32 %v6405, %v6405
  %v6708 = vmul.f32 %v6408, %v6408
  %v6709 = vmul.f32 %v6413, %v6413
  %v6710 = vmul.f32 %v6416, %v6416
  %v6711 = vmul.f32 %v6421, %v6421
  %v6712 = vmul.f32 %v6424, %v6424
  %v6713 = vmul.f32 %v6429, %v6429
  %v6714 = vmul.f32 %v6432, %v6432
  %v6715 = vmul.f32 %v6437, %v6437
  %v6716 = vmul.f32 %v6440, %v6440
  %v6717 = vmul.f32 %v6445, %v6445
  %v6718 = vmul.f32 %v6448, %v6448
  %v6719 = vmul.f32 %v6453, %v6453
  %v6720 = vmul.f32 %v6456, %v6456
  %v6721 = vmul.f32 %v6461, %v6461
  %v6722 = vmul.f32 %v6464, %v6464
  %v6723 = vmul.f32 %v6469, %v6469
  %v6724 = vmul.f32 %v6472, %v6472
  %v6725 = vmul.f32 %v6477, %v6477
  %v6726 = vmul.f32 %v6480, %v6480
  %v6727 = vmul.f32 %v6485, %v6485
  %v6728 = vmul.f32 %v6488, %v6488
  %v6729 = vmul.f32 %v6493, %v6493
  %v6730 = vmul.f32 %v6496, %v6496
  %v6731 = vmul.f32 %v6501, %v6501
  %v6732 = vmul.f32 %v6504, %v6504
  %v6733 = vmul.f32 %v6509, %v6509
  %v6734 = vmul.f32 %v6512, %v6512
  %v6735 = vmul.f32 %v6517, %v6517
  %v6736 = vmul.f32 %v6520, %v6520
  %v6737 = vmul.f32 %v6525, %v6525
  %v6738 = vmul.f32 %v6528, %v6528
  %v6739 = vmul.f32 %v6533, %v6533
  %v6740 = vmul.f32 %v6536, %v6536
  %v6741 = vmul.f32 %v6541, %v6541
  %v6742 = vmul.f32 %v6544, %v6544
  %v6743 = vmul.f32 %v6549, %v6549
  %v6744 = vmul.f32 %v6552, %v6552
  %v6745 = vmul.f32 %v6557, %v6557
  %v6746 = vmul.f32 %v6560, %v6560
  %v6747 = vmul.f32 %v6565, %v6565
  %v6748 = vmul.f32 %v6568, %v6568
  %v6749 = vmul.f32 %v6573, %v6573
  %v6750 = vmul.f32 %v6576, %v6576
  %v6751 = vmul.f32 %v6581, %v6581
  %v6752 = vmul.f32 %v6584, %v6584
  %v6753 = vmul.f32 %v6589, %v6589
  %v6754 = vmul.f32 %v6592, %v6592
  %v6755 = vmul.f32 %v6597, %v6597
  %v6756 = vmul.f32 %v6600, %v6600
  %v6757 = vmul.f32 %v6605, %v6605
  %v6758 = vmul.f32 %v6608, %v6608
  %v6759 = vmul.f32 %v6613, %v6613
  %v6760 = vmul.f32 %v6616, %v6616
  %v6761 = vmul.f32 %v6621, %v6621
  %v6762 = vmul.f32 %v6624, %v6624
  %v6763 = vadd.f32 %v6699, %v6700
  %v6764 = vadd.f32 %v6763, %v6701
  %v6765 = vadd.f32 %v6764, %v6702
  %v6766 = vadd.f32 %v6765, %v6703
  %v6767 = vadd.f32 %v6766, %v6704
  %v6768 = vadd.f32 %v6767, %v6705
  %v6769 = vadd.f32 %v6768, %v6706
  %v6770 = vadd.f32 %v6769, %v6707
  %v6771 = vadd.f32 %v6770, %v6708
  %v6772 = vadd.f32 %v6771, %v6709
  %v6773 = vadd.f32 %v6772, %v6710
  %v6774 = vadd.f32 %v6773, %v6711
  %v6775 = vadd.f32 %v6774, %v6712
  %v6776 = vadd.f32 %v6775, %v6713
  %v6777 = vadd.f32 %v6776, %v6714
  %v6778 = vadd.f32 %v6777, %v6715
  %v6779 = vadd.f32 %v6778, %v6716
  %v6780 = vadd.f32 %v6779, %v6717
  %v6781 = vadd.f32 %v6780, %v6718
  %v6782 = vadd.f32 %v6781, %v6719
  %v6783 = vadd.f32 %v6782, %v6720
  %v6784 = vadd.f32 %v6783, %v6721
  %v6785 = vadd.f32 %v6784, %v6722
  %v6786 = vadd.f32 %v6785, %v6723
  %v6787 = vadd.f32 %v6786, %v6724
  %v6788 = vadd.f32 %v6787, %v6725
  %v6789 = vadd.f32 %v6788, %v6726
  %v6790 = vadd.f32 %v6789, %v6727
  %v6791 = vadd.f32 %v6790, %v6728
  %v6792 = vadd.f32 %v6791, %v6729
  %v6793 = vadd.f32 %v6792, %v6730
  %v6794 = vadd.f32 %v6793, %v6731
  %v6795 = vadd.f32 %v6794, %v6732
  %v6796 = vadd.f32 %v6795, %v6733
  %v6797 = vadd.f32 %v6796, %v6734
  %v6798 = vadd.f32 %v6797, %v6735
  %v6799 = vadd.f32 %v6798, %v6736
  %v6800 = vadd.f32 %v6799, %v6737
  %v6801 = vadd.f32 %v6800, %v6738
  %v6802 = vadd.f32 %v6801, %v6739
  %v6803 = vadd.f32 %v6802, %v6740
  %v6804 = vadd.f32 %v6803, %v6741
  %v6805 = vadd.f32 %v6804, %v6742
  %v6806 = vadd.f32 %v6805, %v6743
  %v6807 = vadd.f32 %v6806, %v6744
  %v6808 = vadd.f32 %v6807, %v6745
  %v6809 = vadd.f32 %v6808, %v6746
  %v6810 = vadd.f32 %v6809, %v6747
  %v6811 = vadd.f32 %v6810, %v6748
  %v6812 = vadd.f32 %v6811, %v6749
  %v6813 = vadd.f32 %v6812, %v6750
  %v6814 = vadd.f32 %v6813, %v6751
  %v6815 = vadd.f32 %v6814, %v6752
  %v6816 = vadd.f32 %v6815, %v6753
  %v6817 = vadd.f32 %v6816, %v6754
  %v6818 = vadd.f32 %v6817, %v6755
  %v6819 = vadd.f32 %v6818, %v6756
  %v6820 = vadd.f32 %v6819, %v6757
  %v6821 = vadd.f32 %v6820, %v6758
  %v6822 = vadd.f32 %v6821, %v6759
  %v6823 = vadd.f32 %v6822, %v6760
  %v6824 = vadd.f32 %v6823, %v6761
  %v6825 = vadd.f32 %v6824, %v6762
  %v6826 = vrot.slane %v6825, 4
  %v6827 = vadd.f32 %v6825, %v6826
  %v6828 = vrot.slane %v6827, 2
  %v6829 = vadd.f32 %v6827, %v6828
  %v6830 = vrot.slane %v6829, 1
  %v6831 = vadd.f32 %v6829, %v6830
  %v6832 = vmul.f32 %v6831, 0.001953125
  %v6833 = vmul.f32 %v6698, %v6698
  %v6834 = vsub.f32 %v6832, %v6833
  %v6835 = vmax.f32 %v6834, 0.0
  %v6836 = vsub.f32 %v6373, %v6698
  %v6837 = vsub.f32 %v6376, %v6698
  %v6838 = vsub.f32 %v6381, %v6698
  %v6839 = vsub.f32 %v6384, %v6698
  %v6840 = vsub.f32 %v6389, %v6698
  %v6841 = vsub.f32 %v6392, %v6698
  %v6842 = vsub.f32 %v6397, %v6698
  %v6843 = vsub.f32 %v6400, %v6698
  %v6844 = vsub.f32 %v6405, %v6698
  %v6845 = vsub.f32 %v6408, %v6698
  %v6846 = vsub.f32 %v6413, %v6698
  %v6847 = vsub.f32 %v6416, %v6698
  %v6848 = vsub.f32 %v6421, %v6698
  %v6849 = vsub.f32 %v6424, %v6698
  %v6850 = vsub.f32 %v6429, %v6698
  %v6851 = vsub.f32 %v6432, %v6698
  %v6852 = vsub.f32 %v6437, %v6698
  %v6853 = vsub.f32 %v6440, %v6698
  %v6854 = vsub.f32 %v6445, %v6698
  %v6855 = vsub.f32 %v6448, %v6698
  %v6856 = vsub.f32 %v6453, %v6698
  %v6857 = vsub.f32 %v6456, %v6698
  %v6858 = vsub.f32 %v6461, %v6698
  %v6859 = vsub.f32 %v6464, %v6698
  %v6860 = vsub.f32 %v6469, %v6698
  %v6861 = vsub.f32 %v6472, %v6698
  %v6862 = vsub.f32 %v6477, %v6698
  %v6863 = vsub.f32 %v6480, %v6698
  %v6864 = vsub.f32 %v6485, %v6698
  %v6865 = vsub.f32 %v6488, %v6698
  %v6866 = vsub.f32 %v6493, %v6698
  %v6867 = vsub.f32 %v6496, %v6698
  %v6868 = vsub.f32 %v6501, %v6698
  %v6869 = vsub.f32 %v6504, %v6698
  %v6870 = vsub.f32 %v6509, %v6698
  %v6871 = vsub.f32 %v6512, %v6698
  %v6872 = vsub.f32 %v6517, %v6698
  %v6873 = vsub.f32 %v6520, %v6698
  %v6874 = vsub.f32 %v6525, %v6698
  %v6875 = vsub.f32 %v6528, %v6698
  %v6876 = vsub.f32 %v6533, %v6698
  %v6877 = vsub.f32 %v6536, %v6698
  %v6878 = vsub.f32 %v6541, %v6698
  %v6879 = vsub.f32 %v6544, %v6698
  %v6880 = vsub.f32 %v6549, %v6698
  %v6881 = vsub.f32 %v6552, %v6698
  %v6882 = vsub.f32 %v6557, %v6698
  %v6883 = vsub.f32 %v6560, %v6698
  %v6884 = vsub.f32 %v6565, %v6698
  %v6885 = vsub.f32 %v6568, %v6698
  %v6886 = vsub.f32 %v6573, %v6698
  %v6887 = vsub.f32 %v6576, %v6698
  %v6888 = vsub.f32 %v6581, %v6698
  %v6889 = vsub.f32 %v6584, %v6698
  %v6890 = vsub.f32 %v6589, %v6698
  %v6891 = vsub.f32 %v6592, %v6698
  %v6892 = vsub.f32 %v6597, %v6698
  %v6893 = vsub.f32 %v6600, %v6698
  %v6894 = vsub.f32 %v6605, %v6698
  %v6895 = vsub.f32 %v6608, %v6698
  %v6896 = vsub.f32 %v6613, %v6698
  %v6897 = vsub.f32 %v6616, %v6698
  %v6898 = vsub.f32 %v6621, %v6698
  %v6899 = vsub.f32 %v6624, %v6698
  %v6900 = vadd.f32 %v6835, 1e-05
  %v6901 = vrsqrt.pop %v6900
  %v6902 = vmul.f32 %v6836, %v6901
  %v6903 = vmul.f32 %v6837, %v6901
  %v6904 = vmul.f32 %v6838, %v6901
  %v6905 = vmul.f32 %v6839, %v6901
  %v6906 = vmul.f32 %v6840, %v6901
  %v6907 = vmul.f32 %v6841, %v6901
  %v6908 = vmul.f32 %v6842, %v6901
  %v6909 = vmul.f32 %v6843, %v6901
  %v6910 = vmul.f32 %v6844, %v6901
  %v6911 = vmul.f32 %v6845, %v6901
  %v6912 = vmul.f32 %v6846, %v6901
  %v6913 = vmul.f32 %v6847, %v6901
  %v6914 = vmul.f32 %v6848, %v6901
  %v6915 = vmul.f32 %v6849, %v6901
  %v6916 = vmul.f32 %v6850, %v6901
  %v6917 = vmul.f32 %v6851, %v6901
  %v6918 = vmul.f32 %v6852, %v6901
  %v6919 = vmul.f32 %v6853, %v6901
  %v6920 = vmul.f32 %v6854, %v6901
  %v6921 = vmul.f32 %v6855, %v6901
  %v6922 = vmul.f32 %v6856, %v6901
  %v6923 = vmul.f32 %v6857, %v6901
  %v6924 = vmul.f32 %v6858, %v6901
  %v6925 = vmul.f32 %v6859, %v6901
  %v6926 = vmul.f32 %v6860, %v6901
  %v6927 = vmul.f32 %v6861, %v6901
  %v6928 = vmul.f32 %v6862, %v6901
  %v6929 = vmul.f32 %v6863, %v6901
  %v6930 = vmul.f32 %v6864, %v6901
  %v6931 = vmul.f32 %v6865, %v6901
  %v6932 = vmul.f32 %v6866, %v6901
  %v6933 = vmul.f32 %v6867, %v6901
  %v6934 = vmul.f32 %v6868, %v6901
  %v6935 = vmul.f32 %v6869, %v6901
  %v6936 = vmul.f32 %v6870, %v6901
  %v6937 = vmul.f32 %v6871, %v6901
  %v6938 = vmul.f32 %v6872, %v6901
  %v6939 = vmul.f32 %v6873, %v6901
  %v6940 = vmul.f32 %v6874, %v6901
  %v6941 = vmul.f32 %v6875, %v6901
  %v6942 = vmul.f32 %v6876, %v6901
  %v6943 = vmul.f32 %v6877, %v6901
  %v6944 = vmul.f32 %v6878, %v6901
  %v6945 = vmul.f32 %v6879, %v6901
  %v6946 = vmul.f32 %v6880, %v6901
  %v6947 = vmul.f32 %v6881, %v6901
  %v6948 = vmul.f32 %v6882, %v6901
  %v6949 = vmul.f32 %v6883, %v6901
  %v6950 = vmul.f32 %v6884, %v6901
  %v6951 = vmul.f32 %v6885, %v6901
  %v6952 = vmul.f32 %v6886, %v6901
  %v6953 = vmul.f32 %v6887, %v6901
  %v6954 = vmul.f32 %v6888, %v6901
  %v6955 = vmul.f32 %v6889, %v6901
  %v6956 = vmul.f32 %v6890, %v6901
  %v6957 = vmul.f32 %v6891, %v6901
  %v6958 = vmul.f32 %v6892, %v6901
  %v6959 = vmul.f32 %v6893, %v6901
  %v6960 = vmul.f32 %v6894, %v6901
  %v6961 = vmul.f32 %v6895, %v6901
  %v6962 = vmul.f32 %v6896, %v6901
  %v6963 = vmul.f32 %v6897, %v6901
  %v6964 = vmul.f32 %v6898, %v6901
  %v6965 = vmul.f32 %v6899, %v6901
  %v6967 = vlaneseq
  %v6968 = vshrl.u32 %v6967, 7
  %v6969 = vsub.s32 0, %v6968
  %v6970 = vrot.slane %v6627, %v6969
  %v6972 = vmul.f32 %v6902, %v6970
  %v6973 = vmul.f32 %v6903, %v6970
  %v6974 = vmul.f32 %v6904, %v6970
  %v6975 = vmul.f32 %v6905, %v6970
  %v6976 = vmul.f32 %v6906, %v6970
  %v6977 = vmul.f32 %v6907, %v6970
  %v6978 = vmul.f32 %v6908, %v6970
  %v6979 = vmul.f32 %v6909, %v6970
  %v6980 = vmul.f32 %v6910, %v6970
  %v6981 = vmul.f32 %v6911, %v6970
  %v6982 = vmul.f32 %v6912, %v6970
  %v6983 = vmul.f32 %v6913, %v6970
  %v6984 = vmul.f32 %v6914, %v6970
  %v6985 = vmul.f32 %v6915, %v6970
  %v6986 = vmul.f32 %v6916, %v6970
  %v6987 = vmul.f32 %v6917, %v6970
  %v6988 = vmul.f32 %v6918, %v6970
  %v6989 = vmul.f32 %v6919, %v6970
  %v6990 = vmul.f32 %v6920, %v6970
  %v6991 = vmul.f32 %v6921, %v6970
  %v6992 = vmul.f32 %v6922, %v6970
  %v6993 = vmul.f32 %v6923, %v6970
  %v6994 = vmul.f32 %v6924, %v6970
  %v6995 = vmul.f32 %v6925, %v6970
  %v6996 = vmul.f32 %v6926, %v6970
  %v6997 = vmul.f32 %v6927, %v6970
  %v6998 = vmul.f32 %v6928, %v6970
  %v6999 = vmul.f32 %v6929, %v6970
  %v7000 = vmul.f32 %v6930, %v6970
  %v7001 = vmul.f32 %v6931, %v6970
  %v7002 = vmul.f32 %v6932, %v6970
  %v7003 = vmul.f32 %v6933, %v6970
  %v7004 = vmul.f32 %v6934, %v6970
  %v7005 = vmul.f32 %v6935, %v6970
  %v7006 = vmul.f32 %v6936, %v6970
  %v7007 = vmul.f32 %v6937, %v6970
  %v7008 = vmul.f32 %v6938, %v6970
  %v7009 = vmul.f32 %v6939, %v6970
  %v7010 = vmul.f32 %v6940, %v6970
  %v7011 = vmul.f32 %v6941, %v6970
  %v7012 = vmul.f32 %v6942, %v6970
  %v7013 = vmul.f32 %v6943, %v6970
  %v7014 = vmul.f32 %v6944, %v6970
  %v7015 = vmul.f32 %v6945, %v6970
  %v7016 = vmul.f32 %v6946, %v6970
  %v7017 = vmul.f32 %v6947, %v6970
  %v7018 = vmul.f32 %v6948, %v6970
  %v7019 = vmul.f32 %v6949, %v6970
  %v7020 = vmul.f32 %v6950, %v6970
  %v7021 = vmul.f32 %v6951, %v6970
  %v7022 = vmul.f32 %v6952, %v6970
  %v7023 = vmul.f32 %v6953, %v6970
  %v7024 = vmul.f32 %v6954, %v6970
  %v7025 = vmul.f32 %v6955, %v6970
  %v7026 = vmul.f32 %v6956, %v6970
  %v7027 = vmul.f32 %v6957, %v6970
  %v7028 = vmul.f32 %v6958, %v6970
  %v7029 = vmul.f32 %v6959, %v6970
  %v7030 = vmul.f32 %v6960, %v6970
  %v7031 = vmul.f32 %v6961, %v6970
  %v7032 = vmul.f32 %v6962, %v6970
  %v7033 = vmul.f32 %v6963, %v6970
  %v7034 = vmul.f32 %v6964, %v6970
  %v7035 = vmul.f32 %v6965, %v6970
  %v7037 = vlaneseq
  %v7038 = vshrl.u32 %v7037, 7
  %v7039 = vsub.s32 0, %v7038
  %v7040 = vrot.slane %v6628, %v7039
  %v7042 = vadd.f32 %v6972, %v7040
  %v7043 = vadd.f32 %v6973, %v7040
  %v7044 = vadd.f32 %v6974, %v7040
  %v7045 = vadd.f32 %v6975, %v7040
  %v7046 = vadd.f32 %v6976, %v7040
  %v7047 = vadd.f32 %v6977, %v7040
  %v7048 = vadd.f32 %v6978, %v7040
  %v7049 = vadd.f32 %v6979, %v7040
  %v7050 = vadd.f32 %v6980, %v7040
  %v7051 = vadd.f32 %v6981, %v7040
  %v7052 = vadd.f32 %v6982, %v7040
  %v7053 = vadd.f32 %v6983, %v7040
  %v7054 = vadd.f32 %v6984, %v7040
  %v7055 = vadd.f32 %v6985, %v7040
  %v7056 = vadd.f32 %v6986, %v7040
  %v7057 = vadd.f32 %v6987, %v7040
  %v7058 = vadd.f32 %v6988, %v7040
  %v7059 = vadd.f32 %v6989, %v7040
  %v7060 = vadd.f32 %v6990, %v7040
  %v7061 = vadd.f32 %v6991, %v7040
  %v7062 = vadd.f32 %v6992, %v7040
  %v7063 = vadd.f32 %v6993, %v7040
  %v7064 = vadd.f32 %v6994, %v7040
  %v7065 = vadd.f32 %v6995, %v7040
  %v7066 = vadd.f32 %v6996, %v7040
  %v7067 = vadd.f32 %v6997, %v7040
  %v7068 = vadd.f32 %v6998, %v7040
  %v7069 = vadd.f32 %v6999, %v7040
  %v7070 = vadd.f32 %v7000, %v7040
  %v7071 = vadd.f32 %v7001, %v7040
  %v7072 = vadd.f32 %v7002, %v7040
  %v7073 = vadd.f32 %v7003, %v7040
  %v7074 = vadd.f32 %v7004, %v7040
  %v7075 = vadd.f32 %v7005, %v7040
  %v7076 = vadd.f32 %v7006, %v7040
  %v7077 = vadd.f32 %v7007, %v7040
  %v7078 = vadd.f32 %v7008, %v7040
  %v7079 = vadd.f32 %v7009, %v7040
  %v7080 = vadd.f32 %v7010, %v7040
  %v7081 = vadd.f32 %v7011, %v7040
  %v7082 = vadd.f32 %v7012, %v7040
  %v7083 = vadd.f32 %v7013, %v7040
  %v7084 = vadd.f32 %v7014, %v7040
  %v7085 = vadd.f32 %v7015, %v7040
  %v7086 = vadd.f32 %v7016, %v7040
  %v7087 = vadd.f32 %v7017, %v7040
  %v7088 = vadd.f32 %v7018, %v7040
  %v7089 = vadd.f32 %v7019, %v7040
  %v7090 = vadd.f32 %v7020, %v7040
  %v7091 = vadd.f32 %v7021, %v7040
  %v7092 = vadd.f32 %v7022, %v7040
  %v7093 = vadd.f32 %v7023, %v7040
  %v7094 = vadd.f32 %v7024, %v7040
  %v7095 = vadd.f32 %v7025, %v7040
  %v7096 = vadd.f32 %v7026, %v7040
  %v7097 = vadd.f32 %v7027, %v7040
  %v7098 = vadd.f32 %v7028, %v7040
  %v7099 = vadd.f32 %v7029, %v7040
  %v7100 = vadd.f32 %v7030, %v7040
  %v7101 = vadd.f32 %v7031, %v7040
  %v7102 = vadd.f32 %v7032, %v7040
  %v7103 = vadd.f32 %v7033, %v7040
  %v7104 = vadd.f32 %v7034, %v7040
  %v7105 = vadd.f32 %v7035, %v7040
  %v7106 = vld [vmem:[%s0] sm:$0xff]
  %v7107 = vld [vmem:[%s0 + $0x8] sm:$0xff]
  %v7108 = vld [vmem:[%s0 + $0x10] sm:$0xff]
  %v7109 = vld [vmem:[%s0 + $0x18] sm:$0xff]
  %v7110 = vld [vmem:[%s0 + $0x20] sm:$0xff]
  %v7111 = vld [vmem:[%s0 + $0x28] sm:$0xff]
  %v7112 = vld [vmem:[%s0 + $0x30] sm:$0xff]
  %v7113 = vld [vmem:[%s0 + $0x38] sm:$0xff]
  %v7114 = vld [vmem:[%s0 + $0x40] sm:$0xff]
  %v7115 = vld [vmem:[%s0 + $0x48] sm:$0xff]
  %v7116 = vld [vmem:[%s0 + $0x50] sm:$0xff]
  %v7117 = vld [vmem:[%s0 + $0x58] sm:$0xff]
  %v7118 = vld [vmem:[%s0 + $0x60] sm:$0xff]
  %v7119 = vld [vmem:[%s0 + $0x68] sm:$0xff]
  %v7120 = vld [vmem:[%s0 + $0x70] sm:$0xff]
  %v7121 = vld [vmem:[%s0 + $0x78] sm:$0xff]
  %v7122 = vld [vmem:[%s0 + $0x80] sm:$0xff]
  %v7123 = vld [vmem:[%s0 + $0x88] sm:$0xff]
  %v7124 = vld [vmem:[%s0 + $0x90] sm:$0xff]
  %v7125 = vld [vmem:[%s0 + $0x98] sm:$0xff]
  %v7126 = vld [vmem:[%s0 + $0xa0] sm:$0xff]
  %v7127 = vld [vmem:[%s0 + $0xa8] sm:$0xff]
  %v7128 = vld [vmem:[%s0 + $0xb0] sm:$0xff]
  %v7129 = vld [vmem:[%s0 + $0xb8] sm:$0xff]
  %v7130 = vld [vmem:[%s0 + $0xc0] sm:$0xff]
  %v7131 = vld [vmem:[%s0 + $0xc8] sm:$0xff]
  %v7132 = vld [vmem:[%s0 + $0xd0] sm:$0xff]
  %v7133 = vld [vmem:[%s0 + $0xd8] sm:$0xff]
  %v7134 = vld [vmem:[%s0 + $0xe0] sm:$0xff]
  %v7135 = vld [vmem:[%s0 + $0xe8] sm:$0xff]
  %v7136 = vld [vmem:[%s0 + $0xf0] sm:$0xff]
  %v7137 = vld [vmem:[%s0 + $0xf8] sm:$0xff]
  %v7138 = vld [vmem:[%s0 + $0x100] sm:$0xff]
  %v7139 = vld [vmem:[%s0 + $0x108] sm:$0xff]
  %v7140 = vld [vmem:[%s0 + $0x110] sm:$0xff]
  %v7141 = vld [vmem:[%s0 + $0x118] sm:$0xff]
  %v7142 = vld [vmem:[%s0 + $0x120] sm:$0xff]
  %v7143 = vld [vmem:[%s0 + $0x128] sm:$0xff]
  %v7144 = vld [vmem:[%s0 + $0x130] sm:$0xff]
  %v7145 = vld [vmem:[%s0 + $0x138] sm:$0xff]
  %v7146 = vld [vmem:[%s0 + $0x140] sm:$0xff]
  %v7147 = vld [vmem:[%s0 + $0x148] sm:$0xff]
  %v7148 = vld [vmem:[%s0 + $0x150] sm:$0xff]
  %v7149 = vld [vmem:[%s0 + $0x158] sm:$0xff]
  %v7150 = vld [vmem:[%s0 + $0x160] sm:$0xff]
  %v7151 = vld [vmem:[%s0 + $0x168] sm:$0xff]
  %v7152 = vld [vmem:[%s0 + $0x170] sm:$0xff]
  %v7153 = vld [vmem:[%s0 + $0x178] sm:$0xff]
  %v7154 = vld [vmem:[%s0 + $0x180] sm:$0xff]
  %v7155 = vld [vmem:[%s0 + $0x188] sm:$0xff]
  %v7156 = vld [vmem:[%s0 + $0x190] sm:$0xff]
  %v7157 = vld [vmem:[%s0 + $0x198] sm:$0xff]
  %v7158 = vld [vmem:[%s0 + $0x1a0] sm:$0xff]
  %v7159 = vld [vmem:[%s0 + $0x1a8] sm:$0xff]
  %v7160 = vld [vmem:[%s0 + $0x1b0] sm:$0xff]
  %v7161 = vld [vmem:[%s0 + $0x1b8] sm:$0xff]
  %v7162 = vld [vmem:[%s0 + $0x1c0] sm:$0xff]
  %v7163 = vld [vmem:[%s0 + $0x1c8] sm:$0xff]
  %v7164 = vld [vmem:[%s0 + $0x1d0] sm:$0xff]
  %v7165 = vld [vmem:[%s0 + $0x1d8] sm:$0xff]
  %v7166 = vld [vmem:[%s0 + $0x1e0] sm:$0xff]
  %v7167 = vld [vmem:[%s0 + $0x1e8] sm:$0xff]
  %v7168 = vld [vmem:[%s0 + $0x1f0] sm:$0xff]
  %v7169 = vld [vmem:[%s0 + $0x1f8] sm:$0xff]
  %v7170 = vadd.f32 %v7042, %v7106
  %v7171 = vadd.f32 %v7043, %v7107
  %v7172 = vadd.f32 %v7044, %v7108
  %v7173 = vadd.f32 %v7045, %v7109
  %v7174 = vadd.f32 %v7046, %v7110
  %v7175 = vadd.f32 %v7047, %v7111
  %v7176 = vadd.f32 %v7048, %v7112
  %v7177 = vadd.f32 %v7049, %v7113
  %v7178 = vadd.f32 %v7050, %v7114
  %v7179 = vadd.f32 %v7051, %v7115
  %v7180 = vadd.f32 %v7052, %v7116
  %v7181 = vadd.f32 %v7053, %v7117
  %v7182 = vadd.f32 %v7054, %v7118
  %v7183 = vadd.f32 %v7055, %v7119
  %v7184 = vadd.f32 %v7056, %v7120
  %v7185 = vadd.f32 %v7057, %v7121
  %v7186 = vadd.f32 %v7058, %v7122
  %v7187 = vadd.f32 %v7059, %v7123
  %v7188 = vadd.f32 %v7060, %v7124
  %v7189 = vadd.f32 %v7061, %v7125
  %v7190 = vadd.f32 %v7062, %v7126
  %v7191 = vadd.f32 %v7063, %v7127
  %v7192 = vadd.f32 %v7064, %v7128
  %v7193 = vadd.f32 %v7065, %v7129
  %v7194 = vadd.f32 %v7066, %v7130
  %v7195 = vadd.f32 %v7067, %v7131
  %v7196 = vadd.f32 %v7068, %v7132
  %v7197 = vadd.f32 %v7069, %v7133
  %v7198 = vadd.f32 %v7070, %v7134
  %v7199 = vadd.f32 %v7071, %v7135
  %v7200 = vadd.f32 %v7072, %v7136
  %v7201 = vadd.f32 %v7073, %v7137
  %v7202 = vadd.f32 %v7074, %v7138
  %v7203 = vadd.f32 %v7075, %v7139
  %v7204 = vadd.f32 %v7076, %v7140
  %v7205 = vadd.f32 %v7077, %v7141
  %v7206 = vadd.f32 %v7078, %v7142
  %v7207 = vadd.f32 %v7079, %v7143
  %v7208 = vadd.f32 %v7080, %v7144
  %v7209 = vadd.f32 %v7081, %v7145
  %v7210 = vadd.f32 %v7082, %v7146
  %v7211 = vadd.f32 %v7083, %v7147
  %v7212 = vadd.f32 %v7084, %v7148
  %v7213 = vadd.f32 %v7085, %v7149
  %v7214 = vadd.f32 %v7086, %v7150
  %v7215 = vadd.f32 %v7087, %v7151
  %v7216 = vadd.f32 %v7088, %v7152
  %v7217 = vadd.f32 %v7089, %v7153
  %v7218 = vadd.f32 %v7090, %v7154
  %v7219 = vadd.f32 %v7091, %v7155
  %v7220 = vadd.f32 %v7092, %v7156
  %v7221 = vadd.f32 %v7093, %v7157
  %v7222 = vadd.f32 %v7094, %v7158
  %v7223 = vadd.f32 %v7095, %v7159
  %v7224 = vadd.f32 %v7096, %v7160
  %v7225 = vadd.f32 %v7097, %v7161
  %v7226 = vadd.f32 %v7098, %v7162
  %v7227 = vadd.f32 %v7099, %v7163
  %v7228 = vadd.f32 %v7100, %v7164
  %v7229 = vadd.f32 %v7101, %v7165
  %v7230 = vadd.f32 %v7102, %v7166
  %v7231 = vadd.f32 %v7103, %v7167
  %v7232 = vadd.f32 %v7104, %v7168
  %v7233 = vadd.f32 %v7105, %v7169
  %v7234 = vmax.f32 %v7170, 0.0
  %v7235 = vmax.f32 %v7171, 0.0
  %v7236 = vmax.f32 %v7172, 0.0
  %v7237 = vmax.f32 %v7173, 0.0
  %v7238 = vmax.f32 %v7174, 0.0
  %v7239 = vmax.f32 %v7175, 0.0
  %v7240 = vmax.f32 %v7176, 0.0
  %v7241 = vmax.f32 %v7177, 0.0
  %v7242 = vmax.f32 %v7178, 0.0
  %v7243 = vmax.f32 %v7179, 0.0
  %v7244 = vmax.f32 %v7180, 0.0
  %v7245 = vmax.f32 %v7181, 0.0
  %v7246 = vmax.f32 %v7182, 0.0
  %v7247 = vmax.f32 %v7183, 0.0
  %v7248 = vmax.f32 %v7184, 0.0
  %v7249 = vmax.f32 %v7185, 0.0
  %v7250 = vmax.f32 %v7186, 0.0
  %v7251 = vmax.f32 %v7187, 0.0
  %v7252 = vmax.f32 %v7188, 0.0
  %v7253 = vmax.f32 %v7189, 0.0
  %v7254 = vmax.f32 %v7190, 0.0
  %v7255 = vmax.f32 %v7191, 0.0
  %v7256 = vmax.f32 %v7192, 0.0
  %v7257 = vmax.f32 %v7193, 0.0
  %v7258 = vmax.f32 %v7194, 0.0
  %v7259 = vmax.f32 %v7195, 0.0
  %v7260 = vmax.f32 %v7196, 0.0
  %v7261 = vmax.f32 %v7197, 0.0
  %v7262 = vmax.f32 %v7198, 0.0
  %v7263 = vmax.f32 %v7199, 0.0
  %v7264 = vmax.f32 %v7200, 0.0
  %v7265 = vmax.f32 %v7201, 0.0
  %v7266 = vmax.f32 %v7202, 0.0
  %v7267 = vmax.f32 %v7203, 0.0
  %v7268 = vmax.f32 %v7204, 0.0
  %v7269 = vmax.f32 %v7205, 0.0
  %v7270 = vmax.f32 %v7206, 0.0
  %v7271 = vmax.f32 %v7207, 0.0
  %v7272 = vmax.f32 %v7208, 0.0
  %v7273 = vmax.f32 %v7209, 0.0
  %v7274 = vmax.f32 %v7210, 0.0
  %v7275 = vmax.f32 %v7211, 0.0
  %v7276 = vmax.f32 %v7212, 0.0
  %v7277 = vmax.f32 %v7213, 0.0
  %v7278 = vmax.f32 %v7214, 0.0
  %v7279 = vmax.f32 %v7215, 0.0
  %v7280 = vmax.f32 %v7216, 0.0
  %v7281 = vmax.f32 %v7217, 0.0
  %v7282 = vmax.f32 %v7218, 0.0
  %v7283 = vmax.f32 %v7219, 0.0
  %v7284 = vmax.f32 %v7220, 0.0
  %v7285 = vmax.f32 %v7221, 0.0
  %v7286 = vmax.f32 %v7222, 0.0
  %v7287 = vmax.f32 %v7223, 0.0
  %v7288 = vmax.f32 %v7224, 0.0
  %v7289 = vmax.f32 %v7225, 0.0
  %v7290 = vmax.f32 %v7226, 0.0
  %v7291 = vmax.f32 %v7227, 0.0
  %v7292 = vmax.f32 %v7228, 0.0
  %v7293 = vmax.f32 %v7229, 0.0
  %v7294 = vmax.f32 %v7230, 0.0
  %v7295 = vmax.f32 %v7231, 0.0
  %v7296 = vmax.f32 %v7232, 0.0
  %v7297 = vmax.f32 %v7233, 0.0
  %7298 = vst [vmem:[%s10] sm:$0xff] %v7234
  %7299 = vst [vmem:[%s10 + $0x8] sm:$0xff] %v7235
  %7300 = vst [vmem:[%s10 + $0x10] sm:$0xff] %v7236
  %7301 = vst [vmem:[%s10 + $0x18] sm:$0xff] %v7237
  %7302 = vst [vmem:[%s10 + $0x20] sm:$0xff] %v7238
  %7303 = vst [vmem:[%s10 + $0x28] sm:$0xff] %v7239
  %7304 = vst [vmem:[%s10 + $0x30] sm:$0xff] %v7240
  %7305 = vst [vmem:[%s10 + $0x38] sm:$0xff] %v7241
  %7306 = vst [vmem:[%s10 + $0x40] sm:$0xff] %v7242
  %7307 = vst [vmem:[%s10 + $0x48] sm:$0xff] %v7243
  %7308 = vst [vmem:[%s10 + $0x50] sm:$0xff] %v7244
  %7309 = vst [vmem:[%s10 + $0x58] sm:$0xff] %v7245
  %7310 = vst [vmem:[%s10 + $0x60] sm:$0xff] %v7246
  %7311 = vst [vmem:[%s10 + $0x68] sm:$0xff] %v7247
  %7312 = vst [vmem:[%s10 + $0x70] sm:$0xff] %v7248
  %7313 = vst [vmem:[%s10 + $0x78] sm:$0xff] %v7249
  %7314 = vst [vmem:[%s10 + $0x80] sm:$0xff] %v7250
  %7315 = vst [vmem:[%s10 + $0x88] sm:$0xff] %v7251
  %7316 = vst [vmem:[%s10 + $0x90] sm:$0xff] %v7252
  %7317 = vst [vmem:[%s10 + $0x98] sm:$0xff] %v7253
  %7318 = vst [vmem:[%s10 + $0xa0] sm:$0xff] %v7254
  %7319 = vst [vmem:[%s10 + $0xa8] sm:$0xff] %v7255
  %7320 = vst [vmem:[%s10 + $0xb0] sm:$0xff] %v7256
  %7321 = vst [vmem:[%s10 + $0xb8] sm:$0xff] %v7257
  %7322 = vst [vmem:[%s10 + $0xc0] sm:$0xff] %v7258
  %7323 = vst [vmem:[%s10 + $0xc8] sm:$0xff] %v7259
  %7324 = vst [vmem:[%s10 + $0xd0] sm:$0xff] %v7260
  %7325 = vst [vmem:[%s10 + $0xd8] sm:$0xff] %v7261
  %7326 = vst [vmem:[%s10 + $0xe0] sm:$0xff] %v7262
  %7327 = vst [vmem:[%s10 + $0xe8] sm:$0xff] %v7263
  %7328 = vst [vmem:[%s10 + $0xf0] sm:$0xff] %v7264
  %7329 = vst [vmem:[%s10 + $0xf8] sm:$0xff] %v7265
  %7330 = vst [vmem:[%s10 + $0x100] sm:$0xff] %v7266
  %7331 = vst [vmem:[%s10 + $0x108] sm:$0xff] %v7267
  %7332 = vst [vmem:[%s10 + $0x110] sm:$0xff] %v7268
  %7333 = vst [vmem:[%s10 + $0x118] sm:$0xff] %v7269
  %7334 = vst [vmem:[%s10 + $0x120] sm:$0xff] %v7270
  %7335 = vst [vmem:[%s10 + $0x128] sm:$0xff] %v7271
  %7336 = vst [vmem:[%s10 + $0x130] sm:$0xff] %v7272
  %7337 = vst [vmem:[%s10 + $0x138] sm:$0xff] %v7273
  %7338 = vst [vmem:[%s10 + $0x140] sm:$0xff] %v7274
  %7339 = vst [vmem:[%s10 + $0x148] sm:$0xff] %v7275
  %7340 = vst [vmem:[%s10 + $0x150] sm:$0xff] %v7276
  %7341 = vst [vmem:[%s10 + $0x158] sm:$0xff] %v7277
  %7342 = vst [vmem:[%s10 + $0x160] sm:$0xff] %v7278
  %7343 = vst [vmem:[%s10 + $0x168] sm:$0xff] %v7279
  %7344 = vst [vmem:[%s10 + $0x170] sm:$0xff] %v7280
  %7345 = vst [vmem:[%s10 + $0x178] sm:$0xff] %v7281
  %7346 = vst [vmem:[%s10 + $0x180] sm:$0xff] %v7282
  %7347 = vst [vmem:[%s10 + $0x188] sm:$0xff] %v7283
  %7348 = vst [vmem:[%s10 + $0x190] sm:$0xff] %v7284
  %7349 = vst [vmem:[%s10 + $0x198] sm:$0xff] %v7285
  %7350 = vst [vmem:[%s10 + $0x1a0] sm:$0xff] %v7286
  %7351 = vst [vmem:[%s10 + $0x1a8] sm:$0xff] %v7287
  %7352 = vst [vmem:[%s10 + $0x1b0] sm:$0xff] %v7288
  %7353 = vst [vmem:[%s10 + $0x1b8] sm:$0xff] %v7289
  %7354 = vst [vmem:[%s10 + $0x1c0] sm:$0xff] %v7290
  %7355 = vst [vmem:[%s10 + $0x1c8] sm:$0xff] %v7291
  %7356 = vst [vmem:[%s10 + $0x1d0] sm:$0xff] %v7292
  %7357 = vst [vmem:[%s10 + $0x1d8] sm:$0xff] %v7293
  %7358 = vst [vmem:[%s10 + $0x1e0] sm:$0xff] %v7294
  %7359 = vst [vmem:[%s10 + $0x1e8] sm:$0xff] %v7295
  %7360 = vst [vmem:[%s10 + $0x1f0] sm:$0xff] %v7296
  %7361 = vst [vmem:[%s10 + $0x1f8] sm:$0xff] %v7297
  // Predicated region
  $region42: #{bottleneck_forward.1} parent=0 // pred_check
    _
  $region43: #{bottleneck_forward.1} parent=0 // pred_check_branch
    %7363 = sbr.rel (0) target = $region45
  $region44: #{bottleneck_forward.1} parent=0 // pred_region
    _
  $region45: #{bottleneck_forward.1} parent=0 // pred_fallthru
    _
  // Predicated region
  $region46: #{bottleneck_forward.1} parent=0 // pred_check
    _
  $region47: #{bottleneck_forward.1} parent=0 // pred_check_branch
    %7365 = sbr.rel (0) target = $region49
  $region48: #{bottleneck_forward.1} parent=0 // pred_region
    _
  $region49: #{bottleneck_forward.1} parent=0 // pred_fallthru
    _

</llo_original>
